<compile_context>
chip_gen: v7x
topology: tpu7x:2x2x1
jax: 0.10.0
libtpu: 0.0.40
codegen_flags: <defaults>
</compile_context>

<pallas_src>
import functools

import jax
import jax.numpy as jnp
from jax.experimental import pallas as pl
from jax.experimental.pallas import tpu as pltpu


def _round_up(n, m):
    return ((n + m - 1) // m) * m


def _mlp_kernel(x_ref, w1_ref, b1_ref, w2_ref, b2_ref, w3_ref, b3_ref, o_ref):
    # Full f32 MXU path (HIGHEST precision) -- kernel is HBM/overhead bound,
    # so exact math is free and matches the f32 PyTorch reference.
    hp = jax.lax.Precision.HIGHEST
    x = x_ref[...]
    h = jnp.dot(x, w1_ref[...], preferred_element_type=jnp.float32, precision=hp)
    h = jnp.maximum(h + b1_ref[...], 0.0)
    h = jnp.dot(h, w2_ref[...], preferred_element_type=jnp.float32, precision=hp)
    h = jnp.maximum(h + b2_ref[...], 0.0)
    out = jnp.dot(h, w3_ref[...], preferred_element_type=jnp.float32, precision=hp)
    o_ref[...] = (out + b3_ref[...]).astype(o_ref.dtype)


def prepare_params(w1, b1, w2, b2, w3, b3):
    """One-time parameter prep (call OUTSIDE the jitted forward).

    Takes PyTorch-shaped weights (out, in) / biases (out,), transposes weights
    to (in, out) and reshapes biases to (1, out).  No padding, no dtype cast:
    contraction/output dims stay true-width and math stays f32.
    """
    w1p = jnp.asarray(w1, jnp.float32).T          # (in_dim, 64)
    w2p = jnp.asarray(w2, jnp.float32).T          # (64, 64)
    w3p = jnp.asarray(w3, jnp.float32).T          # (64, output_dim)
    b1p = jnp.asarray(b1, jnp.float32).reshape(1, -1)
    b2p = jnp.asarray(b2, jnp.float32).reshape(1, -1)
    b3p = jnp.asarray(b3, jnp.float32).reshape(1, -1)
    return w1p, b1p, w2p, b2p, w3p, b3p


def _choose_batch_tile(batch, block_b):
    """Pick the batch tile size.

    v5e/v6e (1 TensorCore): prefer a single grid step when the batch fits one
    tile -- the grid is a serial loop there, extra steps are pure overhead.
    v7x (2 TensorCores): force an even >=2-step grid so both cores get
    balanced tiles under dimension_semantics=('parallel',).
    """
    try:
        kind = jax.devices()[0].device_kind.lower()
    except Exception:  # pragma: no cover - e.g. during AOT tracing
        kind = ""
    n_tc = 2 if "v7" in kind else 1

    steps = max(n_tc, pl.cdiv(batch, block_b))
    tb = pl.cdiv(batch, steps)
    if steps > 1:
        tb = _round_up(tb, 8)        # sublane alignment for partial-batch tiles
    return min(batch, tb)


@functools.partial(jax.jit, static_argnames=("block_b",))
def mlp_forward(x, w1p, b1p, w2p, b2p, w3p, b3p, *, block_b=1024):
    """Forward pass of Net on pre-prepared (transposed) params."""
    batch, in_dim = x.shape
    h1, h2, out_dim = w1p.shape[1], w2p.shape[1], w3p.shape[1]

    tb = _choose_batch_tile(batch, block_b)
    grid = (pl.cdiv(batch, tb),)

    resident = lambda a: pl.BlockSpec(a.shape, lambda i: (0,) * a.ndim)

    flops = 2 * batch * (in_dim * h1 + h1 * h2 + h2 * out_dim)
    bytes_accessed = (
        x.size * x.dtype.itemsize
        + sum(a.size * a.dtype.itemsize for a in (w1p, b1p, w2p, b2p, w3p, b3p))
        + batch * out_dim * 4
    )

    return pl.pallas_call(
        _mlp_kernel,
        # True-width f32 output: no padding, no wrapper slice afterwards.
        out_shape=jax.ShapeDtypeStruct((batch, out_dim), jnp.float32),
        grid=grid,
        in_specs=[
            pl.BlockSpec((tb, in_dim), lambda i: (i, 0)),   # x: tiled on batch
            resident(w1p), resident(b1p),                    # params: VMEM-resident
            resident(w2p), resident(b2p),
            resident(w3p), resident(b3p),
        ],
        out_specs=pl.BlockSpec((tb, out_dim), lambda i: (i, 0)),
        compiler_params=pltpu.CompilerParams(
            dimension_semantics=("parallel",),   # v7x: both TCs share the batch grid
        ),
        cost_estimate=pl.CostEstimate(
            flops=flops, transcendentals=0, bytes_accessed=bytes_accessed
        ),
    )(x, w1p, b1p, w2p, b2p, w3p, b3p)


def init_params(key, input_dim, output_dim):
    """Deterministic parameter init matching nn.Linear shapes (out, in)."""
    dims = [(64, input_dim), (64, 64), (output_dim, 64)]
    params = []
    for i, (out_f, in_f) in enumerate(dims):
        kw, kb, key = jax.random.split(jax.random.fold_in(key, i), 3)
        bound = 1.0 / jnp.sqrt(in_f)
        w = jax.random.uniform(kw, (out_f, in_f), jnp.float32, -bound, bound)
        b = jax.random.uniform(kb, (out_f,), jnp.float32, -bound, bound)
        params += [w, b]
    return params


def reference_forward(x, w1, b1, w2, b2, w3, b3):
    hp = jax.lax.Precision.HIGHEST
    h = jnp.maximum(jnp.dot(x, w1.T, precision=hp) + b1, 0.0)
    h = jnp.maximum(jnp.dot(h, w2.T, precision=hp) + b2, 0.0)
    return jnp.dot(h, w3.T, precision=hp) + b3


if __name__ == "__main__":
    input_dim, output_dim = 32, 16
    batch = 512   # 1 grid step on v5e/v6e; 2 even tiles of 256 on v7x

    key = jax.random.PRNGKey(0)
    kx, kp = jax.random.split(key)
    x = jax.random.normal(kx, (batch, input_dim), jnp.float32)
    w1, b1, w2, b2, w3, b3 = init_params(kp, input_dim, output_dim)

    packed = prepare_params(w1, b1, w2, b2, w3, b3)      # once, outside jit
    out = mlp_forward(x, *packed)
    out = jax.block_until_ready(out)

    ref = reference_forward(x, w1, b1, w2, b2, w3, b3)
    assert out.shape == (batch, output_dim)
    assert out.dtype == jnp.float32
    max_err = float(jnp.max(jnp.abs(out - ref)))
    assert jnp.allclose(out, ref, atol=1e-4, rtol=1e-4), max_err
    print("KERNEL_OK")
</pallas_src>

<mosaic_0001>
module attributes {stable_mosaic.version = 11 : i64} {
  func.func @_mlp_kernel(%arg0: i32, %arg1: memref<512x32xf32, #tpu.memory_space<vmem>>, %arg2: memref<32x64xf32, #tpu.memory_space<vmem>>, %arg3: memref<1x64xf32, #tpu.memory_space<vmem>>, %arg4: memref<64x64xf32, #tpu.memory_space<vmem>>, %arg5: memref<1x64xf32, #tpu.memory_space<vmem>>, %arg6: memref<64x16xf32, #tpu.memory_space<vmem>>, %arg7: memref<1x16xf32, #tpu.memory_space<vmem>>, %arg8: memref<512x16xf32, #tpu.memory_space<vmem>>) attributes {dimension_semantics = [#tpu.dimension_semantics<parallel>], iteration_bounds = array<i64: 1>, scalar_prefetch = 0 : i64, scratch_operands = 0 : i64, tpu.core_type = #tpu.core_type<tc>, window_params = [{transform_indices = @transform_0, window_bounds = array<i64: 512, 32>}, {pipeline_mode = #tpu.pipeline_mode<synchronous>, transform_indices = @transform_1, window_bounds = array<i64: 32, 64>}, {pipeline_mode = #tpu.pipeline_mode<synchronous>, transform_indices = @transform_2, window_bounds = array<i64: 1, 64>}, {pipeline_mode = #tpu.pipeline_mode<synchronous>, transform_indices = @transform_3, window_bounds = array<i64: 64, 64>}, {pipeline_mode = #tpu.pipeline_mode<synchronous>, transform_indices = @transform_4, window_bounds = array<i64: 1, 64>}, {pipeline_mode = #tpu.pipeline_mode<synchronous>, transform_indices = @transform_5, window_bounds = array<i64: 64, 16>}, {pipeline_mode = #tpu.pipeline_mode<synchronous>, transform_indices = @transform_6, window_bounds = array<i64: 1, 16>}, {transform_indices = @transform_7, window_bounds = array<i64: 512, 16>}]} {
    %c0 = arith.constant 0 : index
    %c0_0 = arith.constant 0 : index
    %0 = vector.load %arg1[%c0, %c0_0] : memref<512x32xf32, #tpu.memory_space<vmem>>, vector<512x32xf32>
    %c0_1 = arith.constant 0 : index
    %c0_2 = arith.constant 0 : index
    %1 = vector.load %arg2[%c0_1, %c0_2] : memref<32x64xf32, #tpu.memory_space<vmem>>, vector<32x64xf32>
    %cst = arith.constant dense<0.000000e+00> : vector<512x64xf32>
    %2 = tpu.matmul %0, %1, %cst {dimension_numbers = #tpu.dot_dimension_numbers<[1], [0], [0], [1], [0, 0, 1, 1], [], []>, precision = #tpu.contract_precision<fp32>} : vector<512x32xf32>, vector<32x64xf32>, vector<512x64xf32> -> vector<512x64xf32>
    %c0_3 = arith.constant 0 : index
    %c0_4 = arith.constant 0 : index
    %3 = vector.load %arg3[%c0_3, %c0_4] : memref<1x64xf32, #tpu.memory_space<vmem>>, vector<1x64xf32>
    %4 = vector.broadcast %3 : vector<1x64xf32> to vector<512x64xf32>
    %5 = arith.addf %2, %4 : vector<512x64xf32>
    %cst_5 = arith.constant 0.000000e+00 : f32
    %6 = vector.broadcast %cst_5 : f32 to vector<512x64xf32>
    %7 = arith.maximumf %5, %6 : vector<512x64xf32>
    %c0_6 = arith.constant 0 : index
    %c0_7 = arith.constant 0 : index
    %8 = vector.load %arg4[%c0_6, %c0_7] : memref<64x64xf32, #tpu.memory_space<vmem>>, vector<64x64xf32>
    %cst_8 = arith.constant dense<0.000000e+00> : vector<512x64xf32>
    %9 = tpu.matmul %7, %8, %cst_8 {dimension_numbers = #tpu.dot_dimension_numbers<[1], [0], [0], [1], [0, 0, 1, 1], [], []>, precision = #tpu.contract_precision<fp32>} : vector<512x64xf32>, vector<64x64xf32>, vector<512x64xf32> -> vector<512x64xf32>
    %c0_9 = arith.constant 0 : index
    %c0_10 = arith.constant 0 : index
    %10 = vector.load %arg5[%c0_9, %c0_10] : memref<1x64xf32, #tpu.memory_space<vmem>>, vector<1x64xf32>
    %11 = vector.broadcast %10 : vector<1x64xf32> to vector<512x64xf32>
    %12 = arith.addf %9, %11 : vector<512x64xf32>
    %cst_11 = arith.constant 0.000000e+00 : f32
    %13 = vector.broadcast %cst_11 : f32 to vector<512x64xf32>
    %14 = arith.maximumf %12, %13 : vector<512x64xf32>
    %c0_12 = arith.constant 0 : index
    %c0_13 = arith.constant 0 : index
    %15 = vector.load %arg6[%c0_12, %c0_13] : memref<64x16xf32, #tpu.memory_space<vmem>>, vector<64x16xf32>
    %cst_14 = arith.constant dense<0.000000e+00> : vector<512x16xf32>
    %16 = tpu.matmul %14, %15, %cst_14 {dimension_numbers = #tpu.dot_dimension_numbers<[1], [0], [0], [1], [0, 0, 1, 1], [], []>, precision = #tpu.contract_precision<fp32>} : vector<512x64xf32>, vector<64x16xf32>, vector<512x16xf32> -> vector<512x16xf32>
    %c0_15 = arith.constant 0 : index
    %c0_16 = arith.constant 0 : index
    %17 = vector.load %arg7[%c0_15, %c0_16] : memref<1x16xf32, #tpu.memory_space<vmem>>, vector<1x16xf32>
    %18 = vector.broadcast %17 : vector<1x16xf32> to vector<512x16xf32>
    %19 = arith.addf %16, %18 : vector<512x16xf32>
    %c0_17 = arith.constant 0 : index
    %c0_18 = arith.constant 0 : index
    %20 = vector.load %arg8[%c0_17, %c0_18] : memref<512x16xf32, #tpu.memory_space<vmem>>, vector<512x16xf32>
    tpu.vector_store %arg8[%c0_17, %c0_18], %19 {strides = array<i32>} : memref<512x16xf32, #tpu.memory_space<vmem>>, vector<512x16xf32>,
    return
  }
  func.func @transform_0(%arg0: i32) -> (i32, i32) {
    %c0_i32 = arith.constant 0 : i32
    %c0_i32_0 = arith.constant 0 : i32
    return %arg0, %c0_i32 : i32, i32
  }
  func.func @transform_1(%arg0: i32) -> (i32, i32) {
    %c0_i32 = arith.constant 0 : i32
    %c0_i32_0 = arith.constant 0 : i32
    %c0_i32_1 = arith.constant 0 : i32
    return %c0_i32, %c0_i32_0 : i32, i32
  }
  func.func @transform_2(%arg0: i32) -> (i32, i32) {
    %c0_i32 = arith.constant 0 : i32
    %c0_i32_0 = arith.constant 0 : i32
    %c0_i32_1 = arith.constant 0 : i32
    return %c0_i32, %c0_i32_0 : i32, i32
  }
  func.func @transform_3(%arg0: i32) -> (i32, i32) {
    %c0_i32 = arith.constant 0 : i32
    %c0_i32_0 = arith.constant 0 : i32
    %c0_i32_1 = arith.constant 0 : i32
    return %c0_i32, %c0_i32_0 : i32, i32
  }
  func.func @transform_4(%arg0: i32) -> (i32, i32) {
    %c0_i32 = arith.constant 0 : i32
    %c0_i32_0 = arith.constant 0 : i32
    %c0_i32_1 = arith.constant 0 : i32
    return %c0_i32, %c0_i32_0 : i32, i32
  }
  func.func @transform_5(%arg0: i32) -> (i32, i32) {
    %c0_i32 = arith.constant 0 : i32
    %c0_i32_0 = arith.constant 0 : i32
    %c0_i32_1 = arith.constant 0 : i32
    return %c0_i32, %c0_i32_0 : i32, i32
  }
  func.func @transform_6(%arg0: i32) -> (i32, i32) {
    %c0_i32 = arith.constant 0 : i32
    %c0_i32_0 = arith.constant 0 : i32
    %c0_i32_1 = arith.constant 0 : i32
    return %c0_i32, %c0_i32_0 : i32, i32
  }
  func.func @transform_7(%arg0: i32) -> (i32, i32) {
    %c0_i32 = arith.constant 0 : i32
    %c0_i32_0 = arith.constant 0 : i32
    return %arg0, %c0_i32 : i32, i32
  }
}

</mosaic_0001>

<llo_original>
// kernel: mlp_forward.1
$region0: #{mlp_forward.1}
  #allocation0 [shape = 'u32[]', space=smem, size = 0x4, offset = 0x4, fixed_abs, tag = 'smem constant byte address 0x4 - core index']
  #allocation1 [shape = 'u32[144,128]{1,0:T(1,128)}', space=vmem, size = 0x12000, scoped, tag = 'internal scratch']
  %s0 = inlined_call_operand.vmem [shape: f32[512,32], index: 0, kind: input, shape index: {}]
  %s1 = inlined_call_operand.vmem [shape: f32[32,64], index: 1, kind: input, shape index: {}]
  %s2 = inlined_call_operand.vmem [shape: f32[1,64], index: 2, kind: input, shape index: {}]
  %s3 = inlined_call_operand.vmem [shape: f32[64,64], index: 3, kind: input, shape index: {}]
  %s4 = inlined_call_operand.vmem [shape: f32[1,64], index: 4, kind: input, shape index: {}]
  %s5 = inlined_call_operand.vmem [shape: f32[64,16], index: 5, kind: input, shape index: {}]
  %s6 = inlined_call_operand.vmem [shape: f32[1,16], index: 6, kind: input, shape index: {}]
  %s7 = inlined_call_operand.vmem [shape: f32[512,16], index: 7, kind: output, shape index: {}]
  %s8 = sld [smem:[#allocation0]]
  $region38: #{mlp_forward.1} parent=0
    _
  %s10 = ssub.s32 1, %s8
  %s11 = scalar_select 0, %s10, %s8
  // Predicated region
  $region2: #{mlp_forward.1} parent=0 // pred_check
    _
  $region3: #{mlp_forward.1} parent=0 // pred_check_branch
    %13 = sbr.rel (0) target = $region5
  $region4: #{mlp_forward.1} parent=0 // pred_region
    _
  $region5: #{mlp_forward.1} parent=0 // pred_fallthru
    _
  // Predicated region
  $region6: #{mlp_forward.1} parent=0 // pred_check
    _
  $region7: #{mlp_forward.1} parent=0 // pred_check_branch
    %15 = sbr.rel (0) target = $region9
  $region8: #{mlp_forward.1} parent=0 // pred_region
    _
  $region9: #{mlp_forward.1} parent=0 // pred_fallthru
    _
  // Predicated region
  $region10: #{mlp_forward.1} parent=0 // pred_check
    _
  $region11: #{mlp_forward.1} parent=0 // pred_check_branch
    %17 = sbr.rel (0) target = $region13
  $region12: #{mlp_forward.1} parent=0 // pred_region
    _
  $region13: #{mlp_forward.1} parent=0 // pred_fallthru
    _
  // Predicated region
  $region14: #{mlp_forward.1} parent=0 // pred_check
    _
  $region15: #{mlp_forward.1} parent=0 // pred_check_branch
    %19 = sbr.rel (0) target = $region17
  $region16: #{mlp_forward.1} parent=0 // pred_region
    _
  $region17: #{mlp_forward.1} parent=0 // pred_fallthru
    _
  // Predicated region
  $region18: #{mlp_forward.1} parent=0 // pred_check
    _
  $region19: #{mlp_forward.1} parent=0 // pred_check_branch
    %21 = sbr.rel (0) target = $region21
  $region20: #{mlp_forward.1} parent=0 // pred_region
    _
  $region21: #{mlp_forward.1} parent=0 // pred_fallthru
    _
  // Predicated region
  $region22: #{mlp_forward.1} parent=0 // pred_check
    _
  $region23: #{mlp_forward.1} parent=0 // pred_check_branch
    %23 = sbr.rel (0) target = $region25
  $region24: #{mlp_forward.1} parent=0 // pred_region
    _
  $region25: #{mlp_forward.1} parent=0 // pred_fallthru
    _
  // Predicated region
  $region26: #{mlp_forward.1} parent=0 // pred_check
    _
  $region27: #{mlp_forward.1} parent=0 // pred_check_branch
    %25 = sbr.rel (0) target = $region29
  $region28: #{mlp_forward.1} parent=0 // pred_region
    _
  $region29: #{mlp_forward.1} parent=0 // pred_fallthru
    _
  %v26 = vld [vmem:[%s0] sm:$0xff]
  %v27 = vld [vmem:[%s0 + $0x8] sm:$0xff]
  %v28 = vld [vmem:[%s0 + $0x10] sm:$0xff]
  %v29 = vld [vmem:[%s0 + $0x18] sm:$0xff]
  %v30 = vld [vmem:[%s0 + $0x20] sm:$0xff]
  %v31 = vld [vmem:[%s0 + $0x28] sm:$0xff]
  %v32 = vld [vmem:[%s0 + $0x30] sm:$0xff]
  %v33 = vld [vmem:[%s0 + $0x38] sm:$0xff]
  %v34 = vld [vmem:[%s0 + $0x40] sm:$0xff]
  %v35 = vld [vmem:[%s0 + $0x48] sm:$0xff]
  %v36 = vld [vmem:[%s0 + $0x50] sm:$0xff]
  %v37 = vld [vmem:[%s0 + $0x58] sm:$0xff]
  %v38 = vld [vmem:[%s0 + $0x60] sm:$0xff]
  %v39 = vld [vmem:[%s0 + $0x68] sm:$0xff]
  %v40 = vld [vmem:[%s0 + $0x70] sm:$0xff]
  %v41 = vld [vmem:[%s0 + $0x78] sm:$0xff]
  %v42 = vld [vmem:[%s0 + $0x80] sm:$0xff]
  %v43 = vld [vmem:[%s0 + $0x88] sm:$0xff]
  %v44 = vld [vmem:[%s0 + $0x90] sm:$0xff]
  %v45 = vld [vmem:[%s0 + $0x98] sm:$0xff]
  %v46 = vld [vmem:[%s0 + $0xa0] sm:$0xff]
  %v47 = vld [vmem:[%s0 + $0xa8] sm:$0xff]
  %v48 = vld [vmem:[%s0 + $0xb0] sm:$0xff]
  %v49 = vld [vmem:[%s0 + $0xb8] sm:$0xff]
  %v50 = vld [vmem:[%s0 + $0xc0] sm:$0xff]
  %v51 = vld [vmem:[%s0 + $0xc8] sm:$0xff]
  %v52 = vld [vmem:[%s0 + $0xd0] sm:$0xff]
  %v53 = vld [vmem:[%s0 + $0xd8] sm:$0xff]
  %v54 = vld [vmem:[%s0 + $0xe0] sm:$0xff]
  %v55 = vld [vmem:[%s0 + $0xe8] sm:$0xff]
  %v56 = vld [vmem:[%s0 + $0xf0] sm:$0xff]
  %v57 = vld [vmem:[%s0 + $0xf8] sm:$0xff]
  %v58 = vld [vmem:[%s0 + $0x100] sm:$0xff]
  %v59 = vld [vmem:[%s0 + $0x108] sm:$0xff]
  %v60 = vld [vmem:[%s0 + $0x110] sm:$0xff]
  %v61 = vld [vmem:[%s0 + $0x118] sm:$0xff]
  %v62 = vld [vmem:[%s0 + $0x120] sm:$0xff]
  %v63 = vld [vmem:[%s0 + $0x128] sm:$0xff]
  %v64 = vld [vmem:[%s0 + $0x130] sm:$0xff]
  %v65 = vld [vmem:[%s0 + $0x138] sm:$0xff]
  %v66 = vld [vmem:[%s0 + $0x140] sm:$0xff]
  %v67 = vld [vmem:[%s0 + $0x148] sm:$0xff]
  %v68 = vld [vmem:[%s0 + $0x150] sm:$0xff]
  %v69 = vld [vmem:[%s0 + $0x158] sm:$0xff]
  %v70 = vld [vmem:[%s0 + $0x160] sm:$0xff]
  %v71 = vld [vmem:[%s0 + $0x168] sm:$0xff]
  %v72 = vld [vmem:[%s0 + $0x170] sm:$0xff]
  %v73 = vld [vmem:[%s0 + $0x178] sm:$0xff]
  %v74 = vld [vmem:[%s0 + $0x180] sm:$0xff]
  %v75 = vld [vmem:[%s0 + $0x188] sm:$0xff]
  %v76 = vld [vmem:[%s0 + $0x190] sm:$0xff]
  %v77 = vld [vmem:[%s0 + $0x198] sm:$0xff]
  %v78 = vld [vmem:[%s0 + $0x1a0] sm:$0xff]
  %v79 = vld [vmem:[%s0 + $0x1a8] sm:$0xff]
  %v80 = vld [vmem:[%s0 + $0x1b0] sm:$0xff]
  %v81 = vld [vmem:[%s0 + $0x1b8] sm:$0xff]
  %v82 = vld [vmem:[%s0 + $0x1c0] sm:$0xff]
  %v83 = vld [vmem:[%s0 + $0x1c8] sm:$0xff]
  %v84 = vld [vmem:[%s0 + $0x1d0] sm:$0xff]
  %v85 = vld [vmem:[%s0 + $0x1d8] sm:$0xff]
  %v86 = vld [vmem:[%s0 + $0x1e0] sm:$0xff]
  %v87 = vld [vmem:[%s0 + $0x1e8] sm:$0xff]
  %v88 = vld [vmem:[%s0 + $0x1f0] sm:$0xff]
  %v89 = vld [vmem:[%s0 + $0x1f8] sm:$0xff]
  %v90 = vld [vmem:[%s1] sm:$0xff]
  %v91 = vld [vmem:[%s1 + $0x8] sm:$0xff]
  %v92 = vld [vmem:[%s1 + $0x10] sm:$0xff]
  %v93 = vld [vmem:[%s1 + $0x18] sm:$0xff]
  %v94 = vld [vmem:[%s2] sm:$0x1]
  %v96 = vlaneseq
  %v97 = vshrl.u32 %v96, 7
  %v98 = vsub.s32 0, %v97
  %v99 = vrot.slane %v94, %v98
  %vm101 = vcmask 261120
  %v103 = vsel %vm101, %v26, 0
  %v106 = vsel %vm101, %v27, 0
  %v109 = vsel %vm101, %v28, 0
  %v112 = vsel %vm101, %v29, 0
  %v115 = vsel %vm101, %v30, 0
  %v118 = vsel %vm101, %v31, 0
  %v121 = vsel %vm101, %v32, 0
  %v124 = vsel %vm101, %v33, 0
  %v127 = vsel %vm101, %v34, 0
  %v130 = vsel %vm101, %v35, 0
  %v133 = vsel %vm101, %v36, 0
  %v136 = vsel %vm101, %v37, 0
  %v139 = vsel %vm101, %v38, 0
  %v142 = vsel %vm101, %v39, 0
  %v145 = vsel %vm101, %v40, 0
  %v148 = vsel %vm101, %v41, 0
  %v151 = vsel %vm101, %v42, 0
  %v154 = vsel %vm101, %v43, 0
  %v157 = vsel %vm101, %v44, 0
  %v160 = vsel %vm101, %v45, 0
  %v163 = vsel %vm101, %v46, 0
  %v166 = vsel %vm101, %v47, 0
  %v169 = vsel %vm101, %v48, 0
  %v172 = vsel %vm101, %v49, 0
  %v175 = vsel %vm101, %v50, 0
  %v178 = vsel %vm101, %v51, 0
  %v181 = vsel %vm101, %v52, 0
  %v184 = vsel %vm101, %v53, 0
  %v187 = vsel %vm101, %v54, 0
  %v190 = vsel %vm101, %v55, 0
  %v193 = vsel %vm101, %v56, 0
  %v196 = vsel %vm101, %v57, 0
  %v199 = vsel %vm101, %v58, 0
  %v202 = vsel %vm101, %v59, 0
  %v205 = vsel %vm101, %v60, 0
  %v208 = vsel %vm101, %v61, 0
  %v211 = vsel %vm101, %v62, 0
  %v214 = vsel %vm101, %v63, 0
  %v217 = vsel %vm101, %v64, 0
  %v220 = vsel %vm101, %v65, 0
  %v223 = vsel %vm101, %v66, 0
  %v226 = vsel %vm101, %v67, 0
  %v229 = vsel %vm101, %v68, 0
  %v232 = vsel %vm101, %v69, 0
  %v235 = vsel %vm101, %v70, 0
  %v238 = vsel %vm101, %v71, 0
  %v241 = vsel %vm101, %v72, 0
  %v244 = vsel %vm101, %v73, 0
  %v247 = vsel %vm101, %v74, 0
  %v250 = vsel %vm101, %v75, 0
  %v253 = vsel %vm101, %v76, 0
  %v256 = vsel %vm101, %v77, 0
  %v259 = vsel %vm101, %v78, 0
  %v262 = vsel %vm101, %v79, 0
  %v265 = vsel %vm101, %v80, 0
  %v268 = vsel %vm101, %v81, 0
  %v271 = vsel %vm101, %v82, 0
  %v274 = vsel %vm101, %v83, 0
  %v277 = vsel %vm101, %v84, 0
  %v280 = vsel %vm101, %v85, 0
  %v283 = vsel %vm101, %v86, 0
  %v286 = vsel %vm101, %v87, 0
  %v289 = vsel %vm101, %v88, 0
  %v292 = vsel %vm101, %v89, 0
  %294 = vmatprep.subr.mxu0 0.0
  %v295 = vand.u32 %v90, 4294901760
  %296 = vmatpush1.msra.mxu0 %v295
  %297 = vmatprep.subr.mxu0 0.0
  %v298 = vand.u32 %v91, 4294901760
  %299 = vmatpush1.msra.mxu0 %v298
  %300 = vmatprep.subr.mxu0 0.0
  %v301 = vand.u32 %v92, 4294901760
  %302 = vmatpush1.msra.mxu0 %v301
  %303 = vmatprep.subr.mxu0 0.0
  %v304 = vand.u32 %v93, 4294901760
  %305 = vmatpush1.msra.mxu0 %v304
  %306 = vmatprep.subr.mxu0 0.0
  %307 = vmatpush1.msra.mxu0 0.0
  %308 = vmatprep.subr.mxu0 0.0
  %309 = vmatpush1.msra.mxu0 0.0
  %310 = vmatprep.subr.mxu0 0.0
  %311 = vmatpush1.msra.mxu0 0.0
  %312 = vmatprep.subr.mxu0 0.0
  %313 = vmatpush1.msra.mxu0 0.0
  %314 = vmatprep.subr.mxu0 0.0
  %315 = vmatpush1.msra.mxu0 0.0
  %316 = vmatprep.subr.mxu0 0.0
  %317 = vmatpush1.msra.mxu0 0.0
  %318 = vmatprep.subr.mxu0 0.0
  %319 = vmatpush1.msra.mxu0 0.0
  %320 = vmatprep.subr.mxu0 0.0
  %321 = vmatpush1.msra.mxu0 0.0
  %322 = vmatprep.subr.mxu0 0.0
  %323 = vmatpush1.msra.mxu0 0.0
  %324 = vmatprep.subr.mxu0 0.0
  %325 = vmatpush1.msra.mxu0 0.0
  %326 = vmatprep.subr.mxu0 0.0
  %327 = vmatpush1.msra.mxu0 0.0
  %328 = vmatprep.subr.mxu0 0.0
  %329 = vmatpush1.msra.mxu0 0.0
  %330 = vmatprep.subr.mxu0 0.0
  %331 = vmatpush1.msra.mxu0 0.0
  %332 = vmatprep.subr.mxu0 0.0
  %333 = vmatpush1.msra.mxu0 0.0
  %334 = vmatprep.subr.mxu0 0.0
  %335 = vmatpush1.msra.mxu0 0.0
  %336 = vmatprep.subr.mxu0 0.0
  %337 = vmatpush1.msra.mxu0 0.0
  %338 = vmatprep.subr.mxu0 0.0
  %339 = vmatpush1.msra.mxu0 0.0
  %340 = vmatprep.subr.mxu0 0.0
  %341 = vmatpush1.msra.mxu0 0.0
  %342 = vmatprep.subr.mxu0 0.0
  %343 = vmatpush1.msra.mxu0 0.0
  %344 = vmatprep.subr.mxu0 0.0
  %345 = vmatpush1.msra.mxu0 0.0
  %346 = vmatprep.subr.mxu0 0.0
  %347 = vmatpush1.msra.mxu0 0.0
  %348 = vmatprep.subr.mxu0 0.0
  %349 = vmatpush1.msra.mxu0 0.0
  %350 = vmatprep.subr.mxu0 0.0
  %351 = vmatpush1.msra.mxu0 0.0
  %352 = vmatprep.subr.mxu0 0.0
  %353 = vmatpush1.msra.mxu0 0.0
  %354 = vmatprep.subr.mxu0 0.0
  %355 = vmatpush1.msra.mxu0 0.0
  %356 = vmatprep.subr.mxu0 0.0
  %357 = vmatpush1.msra.mxu0 0.0
  %358 = vmatprep.subr.mxu0 0.0
  %359 = vmatpush1.msra.mxu0 0.0
  %360 = vmatprep.subr.mxu0 0.0
  %361 = vmatpush1.msra.mxu0 0.0
  %362 = vmatprep.mubr.f32.mxu0 0.0
  %v363 = vand.u32 %v103, 4294901760
  %v364 = vsub.f32 %v103, %v363
  %v365 = vand.u32 %v364, 4294901760
  %v366 = vsub.f32 %v364, %v365
  %v367 = vand.u32 %v366, 4294901760
  %368 = vmatmul.mubr.f32.gmra.mrb[0].mxu0 %v367
  %v369 = vpop.f32.mrb[0].mxu0
  %v370 = vadd.f32 %v99, %v369
  %v371 = vpop.f32.mrb[0].mxu0
  %372 = vmatprep.mubr.f32.mxu0 0.0
  %v373 = vand.u32 %v106, 4294901760
  %v374 = vsub.f32 %v106, %v373
  %v375 = vand.u32 %v374, 4294901760
  %v376 = vsub.f32 %v374, %v375
  %v377 = vand.u32 %v376, 4294901760
  %378 = vmatmul.mubr.f32.gmra.mrb[0].mxu0 %v377
  %v379 = vpop.f32.mrb[0].mxu0
  %v380 = vadd.f32 %v99, %v379
  %v381 = vpop.f32.mrb[0].mxu0
  %382 = vmatprep.mubr.f32.mxu0 0.0
  %v383 = vand.u32 %v109, 4294901760
  %v384 = vsub.f32 %v109, %v383
  %v385 = vand.u32 %v384, 4294901760
  %v386 = vsub.f32 %v384, %v385
  %v387 = vand.u32 %v386, 4294901760
  %388 = vmatmul.mubr.f32.gmra.mrb[0].mxu0 %v387
  %v389 = vpop.f32.mrb[0].mxu0
  %v390 = vadd.f32 %v99, %v389
  %v391 = vpop.f32.mrb[0].mxu0
  %392 = vmatprep.mubr.f32.mxu0 0.0
  %v393 = vand.u32 %v112, 4294901760
  %v394 = vsub.f32 %v112, %v393
  %v395 = vand.u32 %v394, 4294901760
  %v396 = vsub.f32 %v394, %v395
  %v397 = vand.u32 %v396, 4294901760
  %398 = vmatmul.mubr.f32.gmra.mrb[0].mxu0 %v397
  %v399 = vpop.f32.mrb[0].mxu0
  %v400 = vadd.f32 %v99, %v399
  %v401 = vpop.f32.mrb[0].mxu0
  %402 = vmatprep.mubr.f32.mxu0 0.0
  %v403 = vand.u32 %v115, 4294901760
  %v404 = vsub.f32 %v115, %v403
  %v405 = vand.u32 %v404, 4294901760
  %v406 = vsub.f32 %v404, %v405
  %v407 = vand.u32 %v406, 4294901760
  %408 = vmatmul.mubr.f32.gmra.mrb[0].mxu0 %v407
  %v409 = vpop.f32.mrb[0].mxu0
  %v410 = vadd.f32 %v99, %v409
  %v411 = vpop.f32.mrb[0].mxu0
  %412 = vmatprep.mubr.f32.mxu0 0.0
  %v413 = vand.u32 %v118, 4294901760
  %v414 = vsub.f32 %v118, %v413
  %v415 = vand.u32 %v414, 4294901760
  %v416 = vsub.f32 %v414, %v415
  %v417 = vand.u32 %v416, 4294901760
  %418 = vmatmul.mubr.f32.gmra.mrb[0].mxu0 %v417
  %v419 = vpop.f32.mrb[0].mxu0
  %v420 = vadd.f32 %v99, %v419
  %v421 = vpop.f32.mrb[0].mxu0
  %422 = vmatprep.mubr.f32.mxu0 0.0
  %v423 = vand.u32 %v121, 4294901760
  %v424 = vsub.f32 %v121, %v423
  %v425 = vand.u32 %v424, 4294901760
  %v426 = vsub.f32 %v424, %v425
  %v427 = vand.u32 %v426, 4294901760
  %428 = vmatmul.mubr.f32.gmra.mrb[0].mxu0 %v427
  %v429 = vpop.f32.mrb[0].mxu0
  %v430 = vadd.f32 %v99, %v429
  %v431 = vpop.f32.mrb[0].mxu0
  %432 = vmatprep.mubr.f32.mxu0 0.0
  %v433 = vand.u32 %v124, 4294901760
  %v434 = vsub.f32 %v124, %v433
  %v435 = vand.u32 %v434, 4294901760
  %v436 = vsub.f32 %v434, %v435
  %v437 = vand.u32 %v436, 4294901760
  %438 = vmatmul.mubr.f32.gmra.mrb[0].mxu0 %v437
  %v439 = vpop.f32.mrb[0].mxu0
  %v440 = vadd.f32 %v99, %v439
  %v441 = vpop.f32.mrb[0].mxu0
  %442 = vmatprep.mubr.f32.mxu0 0.0
  %v443 = vand.u32 %v127, 4294901760
  %v444 = vsub.f32 %v127, %v443
  %v445 = vand.u32 %v444, 4294901760
  %v446 = vsub.f32 %v444, %v445
  %v447 = vand.u32 %v446, 4294901760
  %448 = vmatmul.mubr.f32.gmra.mrb[0].mxu0 %v447
  %v449 = vpop.f32.mrb[0].mxu0
  %v450 = vadd.f32 %v99, %v449
  %v451 = vpop.f32.mrb[0].mxu0
  %452 = vmatprep.mubr.f32.mxu0 0.0
  %v453 = vand.u32 %v130, 4294901760
  %v454 = vsub.f32 %v130, %v453
  %v455 = vand.u32 %v454, 4294901760
  %v456 = vsub.f32 %v454, %v455
  %v457 = vand.u32 %v456, 4294901760
  %458 = vmatmul.mubr.f32.gmra.mrb[0].mxu0 %v457
  %v459 = vpop.f32.mrb[0].mxu0
  %v460 = vadd.f32 %v99, %v459
  %v461 = vpop.f32.mrb[0].mxu0
  %462 = vmatprep.mubr.f32.mxu0 0.0
  %v463 = vand.u32 %v133, 4294901760
  %v464 = vsub.f32 %v133, %v463
  %v465 = vand.u32 %v464, 4294901760
  %v466 = vsub.f32 %v464, %v465
  %v467 = vand.u32 %v466, 4294901760
  %468 = vmatmul.mubr.f32.gmra.mrb[0].mxu0 %v467
  %v469 = vpop.f32.mrb[0].mxu0
  %v470 = vadd.f32 %v99, %v469
  %v471 = vpop.f32.mrb[0].mxu0
  %472 = vmatprep.mubr.f32.mxu0 0.0
  %v473 = vand.u32 %v136, 4294901760
  %v474 = vsub.f32 %v136, %v473
  %v475 = vand.u32 %v474, 4294901760
  %v476 = vsub.f32 %v474, %v475
  %v477 = vand.u32 %v476, 4294901760
  %478 = vmatmul.mubr.f32.gmra.mrb[0].mxu0 %v477
  %v479 = vpop.f32.mrb[0].mxu0
  %v480 = vadd.f32 %v99, %v479
  %v481 = vpop.f32.mrb[0].mxu0
  %482 = vmatprep.mubr.f32.mxu0 0.0
  %v483 = vand.u32 %v139, 4294901760
  %v484 = vsub.f32 %v139, %v483
  %v485 = vand.u32 %v484, 4294901760
  %v486 = vsub.f32 %v484, %v485
  %v487 = vand.u32 %v486, 4294901760
  %488 = vmatmul.mubr.f32.gmra.mrb[0].mxu0 %v487
  %v489 = vpop.f32.mrb[0].mxu0
  %v490 = vadd.f32 %v99, %v489
  %v491 = vpop.f32.mrb[0].mxu0
  %492 = vmatprep.mubr.f32.mxu0 0.0
  %v493 = vand.u32 %v142, 4294901760
  %v494 = vsub.f32 %v142, %v493
  %v495 = vand.u32 %v494, 4294901760
  %v496 = vsub.f32 %v494, %v495
  %v497 = vand.u32 %v496, 4294901760
  %498 = vmatmul.mubr.f32.gmra.mrb[0].mxu0 %v497
  %v499 = vpop.f32.mrb[0].mxu0
  %v500 = vadd.f32 %v99, %v499
  %v501 = vpop.f32.mrb[0].mxu0
  %502 = vmatprep.mubr.f32.mxu0 0.0
  %v503 = vand.u32 %v145, 4294901760
  %v504 = vsub.f32 %v145, %v503
  %v505 = vand.u32 %v504, 4294901760
  %v506 = vsub.f32 %v504, %v505
  %v507 = vand.u32 %v506, 4294901760
  %508 = vmatmul.mubr.f32.gmra.mrb[0].mxu0 %v507
  %v509 = vpop.f32.mrb[0].mxu0
  %v510 = vadd.f32 %v99, %v509
  %v511 = vpop.f32.mrb[0].mxu0
  %512 = vmatprep.mubr.f32.mxu0 0.0
  %v513 = vand.u32 %v148, 4294901760
  %v514 = vsub.f32 %v148, %v513
  %v515 = vand.u32 %v514, 4294901760
  %v516 = vsub.f32 %v514, %v515
  %v517 = vand.u32 %v516, 4294901760
  %518 = vmatmul.mubr.f32.gmra.mrb[0].mxu0 %v517
  %v519 = vpop.f32.mrb[0].mxu0
  %v520 = vadd.f32 %v99, %v519
  %v521 = vpop.f32.mrb[0].mxu0
  %522 = vmatprep.mubr.f32.mxu0 0.0
  %v523 = vand.u32 %v151, 4294901760
  %v524 = vsub.f32 %v151, %v523
  %v525 = vand.u32 %v524, 4294901760
  %v526 = vsub.f32 %v524, %v525
  %v527 = vand.u32 %v526, 4294901760
  %528 = vmatmul.mubr.f32.gmra.mrb[0].mxu0 %v527
  %v529 = vpop.f32.mrb[0].mxu0
  %v530 = vadd.f32 %v99, %v529
  %v531 = vpop.f32.mrb[0].mxu0
  %532 = vmatprep.mubr.f32.mxu0 0.0
  %v533 = vand.u32 %v154, 4294901760
  %v534 = vsub.f32 %v154, %v533
  %v535 = vand.u32 %v534, 4294901760
  %v536 = vsub.f32 %v534, %v535
  %v537 = vand.u32 %v536, 4294901760
  %538 = vmatmul.mubr.f32.gmra.mrb[0].mxu0 %v537
  %v539 = vpop.f32.mrb[0].mxu0
  %v540 = vadd.f32 %v99, %v539
  %v541 = vpop.f32.mrb[0].mxu0
  %542 = vmatprep.mubr.f32.mxu0 0.0
  %v543 = vand.u32 %v157, 4294901760
  %v544 = vsub.f32 %v157, %v543
  %v545 = vand.u32 %v544, 4294901760
  %v546 = vsub.f32 %v544, %v545
  %v547 = vand.u32 %v546, 4294901760
  %548 = vmatmul.mubr.f32.gmra.mrb[0].mxu0 %v547
  %v549 = vpop.f32.mrb[0].mxu0
  %v550 = vadd.f32 %v99, %v549
  %v551 = vpop.f32.mrb[0].mxu0
  %552 = vmatprep.mubr.f32.mxu0 0.0
  %v553 = vand.u32 %v160, 4294901760
  %v554 = vsub.f32 %v160, %v553
  %v555 = vand.u32 %v554, 4294901760
  %v556 = vsub.f32 %v554, %v555
  %v557 = vand.u32 %v556, 4294901760
  %558 = vmatmul.mubr.f32.gmra.mrb[0].mxu0 %v557
  %v559 = vpop.f32.mrb[0].mxu0
  %v560 = vadd.f32 %v99, %v559
  %v561 = vpop.f32.mrb[0].mxu0
  %562 = vmatprep.mubr.f32.mxu0 0.0
  %v563 = vand.u32 %v163, 4294901760
  %v564 = vsub.f32 %v163, %v563
  %v565 = vand.u32 %v564, 4294901760
  %v566 = vsub.f32 %v564, %v565
  %v567 = vand.u32 %v566, 4294901760
  %568 = vmatmul.mubr.f32.gmra.mrb[0].mxu0 %v567
  %v569 = vpop.f32.mrb[0].mxu0
  %v570 = vadd.f32 %v99, %v569
  %v571 = vpop.f32.mrb[0].mxu0
  %572 = vmatprep.mubr.f32.mxu0 0.0
  %v573 = vand.u32 %v166, 4294901760
  %v574 = vsub.f32 %v166, %v573
  %v575 = vand.u32 %v574, 4294901760
  %v576 = vsub.f32 %v574, %v575
  %v577 = vand.u32 %v576, 4294901760
  %578 = vmatmul.mubr.f32.gmra.mrb[0].mxu0 %v577
  %v579 = vpop.f32.mrb[0].mxu0
  %v580 = vadd.f32 %v99, %v579
  %v581 = vpop.f32.mrb[0].mxu0
  %582 = vmatprep.mubr.f32.mxu0 0.0
  %v583 = vand.u32 %v169, 4294901760
  %v584 = vsub.f32 %v169, %v583
  %v585 = vand.u32 %v584, 4294901760
  %v586 = vsub.f32 %v584, %v585
  %v587 = vand.u32 %v586, 4294901760
  %588 = vmatmul.mubr.f32.gmra.mrb[0].mxu0 %v587
  %v589 = vpop.f32.mrb[0].mxu0
  %v590 = vadd.f32 %v99, %v589
  %v591 = vpop.f32.mrb[0].mxu0
  %592 = vmatprep.mubr.f32.mxu0 0.0
  %v593 = vand.u32 %v172, 4294901760
  %v594 = vsub.f32 %v172, %v593
  %v595 = vand.u32 %v594, 4294901760
  %v596 = vsub.f32 %v594, %v595
  %v597 = vand.u32 %v596, 4294901760
  %598 = vmatmul.mubr.f32.gmra.mrb[0].mxu0 %v597
  %v599 = vpop.f32.mrb[0].mxu0
  %v600 = vadd.f32 %v99, %v599
  %v601 = vpop.f32.mrb[0].mxu0
  %602 = vmatprep.mubr.f32.mxu0 0.0
  %v603 = vand.u32 %v175, 4294901760
  %v604 = vsub.f32 %v175, %v603
  %v605 = vand.u32 %v604, 4294901760
  %v606 = vsub.f32 %v604, %v605
  %v607 = vand.u32 %v606, 4294901760
  %608 = vmatmul.mubr.f32.gmra.mrb[0].mxu0 %v607
  %v609 = vpop.f32.mrb[0].mxu0
  %v610 = vadd.f32 %v99, %v609
  %v611 = vpop.f32.mrb[0].mxu0
  %612 = vmatprep.mubr.f32.mxu0 0.0
  %v613 = vand.u32 %v178, 4294901760
  %v614 = vsub.f32 %v178, %v613
  %v615 = vand.u32 %v614, 4294901760
  %v616 = vsub.f32 %v614, %v615
  %v617 = vand.u32 %v616, 4294901760
  %618 = vmatmul.mubr.f32.gmra.mrb[0].mxu0 %v617
  %v619 = vpop.f32.mrb[0].mxu0
  %v620 = vadd.f32 %v99, %v619
  %v621 = vpop.f32.mrb[0].mxu0
  %622 = vmatprep.mubr.f32.mxu0 0.0
  %v623 = vand.u32 %v181, 4294901760
  %v624 = vsub.f32 %v181, %v623
  %v625 = vand.u32 %v624, 4294901760
  %v626 = vsub.f32 %v624, %v625
  %v627 = vand.u32 %v626, 4294901760
  %628 = vmatmul.mubr.f32.gmra.mrb[0].mxu0 %v627
  %v629 = vpop.f32.mrb[0].mxu0
  %v630 = vadd.f32 %v99, %v629
  %v631 = vpop.f32.mrb[0].mxu0
  %632 = vmatprep.mubr.f32.mxu0 0.0
  %v633 = vand.u32 %v184, 4294901760
  %v634 = vsub.f32 %v184, %v633
  %v635 = vand.u32 %v634, 4294901760
  %v636 = vsub.f32 %v634, %v635
  %v637 = vand.u32 %v636, 4294901760
  %638 = vmatmul.mubr.f32.gmra.mrb[0].mxu0 %v637
  %v639 = vpop.f32.mrb[0].mxu0
  %v640 = vadd.f32 %v99, %v639
  %v641 = vpop.f32.mrb[0].mxu0
  %642 = vmatprep.mubr.f32.mxu0 0.0
  %v643 = vand.u32 %v187, 4294901760
  %v644 = vsub.f32 %v187, %v643
  %v645 = vand.u32 %v644, 4294901760
  %v646 = vsub.f32 %v644, %v645
  %v647 = vand.u32 %v646, 4294901760
  %648 = vmatmul.mubr.f32.gmra.mrb[0].mxu0 %v647
  %v649 = vpop.f32.mrb[0].mxu0
  %v650 = vadd.f32 %v99, %v649
  %v651 = vpop.f32.mrb[0].mxu0
  %652 = vmatprep.mubr.f32.mxu0 0.0
  %v653 = vand.u32 %v190, 4294901760
  %v654 = vsub.f32 %v190, %v653
  %v655 = vand.u32 %v654, 4294901760
  %v656 = vsub.f32 %v654, %v655
  %v657 = vand.u32 %v656, 4294901760
  %658 = vmatmul.mubr.f32.gmra.mrb[0].mxu0 %v657
  %v659 = vpop.f32.mrb[0].mxu0
  %v660 = vadd.f32 %v99, %v659
  %v661 = vpop.f32.mrb[0].mxu0
  %662 = vmatprep.mubr.f32.mxu0 0.0
  %v663 = vand.u32 %v193, 4294901760
  %v664 = vsub.f32 %v193, %v663
  %v665 = vand.u32 %v664, 4294901760
  %v666 = vsub.f32 %v664, %v665
  %v667 = vand.u32 %v666, 4294901760
  %668 = vmatmul.mubr.f32.gmra.mrb[0].mxu0 %v667
  %v669 = vpop.f32.mrb[0].mxu0
  %v670 = vadd.f32 %v99, %v669
  %v671 = vpop.f32.mrb[0].mxu0
  %672 = vmatprep.mubr.f32.mxu0 0.0
  %v673 = vand.u32 %v196, 4294901760
  %v674 = vsub.f32 %v196, %v673
  %v675 = vand.u32 %v674, 4294901760
  %v676 = vsub.f32 %v674, %v675
  %v677 = vand.u32 %v676, 4294901760
  %678 = vmatmul.mubr.f32.gmra.mrb[0].mxu0 %v677
  %v679 = vpop.f32.mrb[0].mxu0
  %v680 = vadd.f32 %v99, %v679
  %v681 = vpop.f32.mrb[0].mxu0
  %682 = vmatprep.mubr.f32.mxu0 0.0
  %v683 = vand.u32 %v199, 4294901760
  %v684 = vsub.f32 %v199, %v683
  %v685 = vand.u32 %v684, 4294901760
  %v686 = vsub.f32 %v684, %v685
  %v687 = vand.u32 %v686, 4294901760
  %688 = vmatmul.mubr.f32.gmra.mrb[0].mxu0 %v687
  %v689 = vpop.f32.mrb[0].mxu0
  %v690 = vadd.f32 %v99, %v689
  %v691 = vpop.f32.mrb[0].mxu0
  %692 = vmatprep.mubr.f32.mxu0 0.0
  %v693 = vand.u32 %v202, 4294901760
  %v694 = vsub.f32 %v202, %v693
  %v695 = vand.u32 %v694, 4294901760
  %v696 = vsub.f32 %v694, %v695
  %v697 = vand.u32 %v696, 4294901760
  %698 = vmatmul.mubr.f32.gmra.mrb[0].mxu0 %v697
  %v699 = vpop.f32.mrb[0].mxu0
  %v700 = vadd.f32 %v99, %v699
  %v701 = vpop.f32.mrb[0].mxu0
  %702 = vmatprep.mubr.f32.mxu0 0.0
  %v703 = vand.u32 %v205, 4294901760
  %v704 = vsub.f32 %v205, %v703
  %v705 = vand.u32 %v704, 4294901760
  %v706 = vsub.f32 %v704, %v705
  %v707 = vand.u32 %v706, 4294901760
  %708 = vmatmul.mubr.f32.gmra.mrb[0].mxu0 %v707
  %v709 = vpop.f32.mrb[0].mxu0
  %v710 = vadd.f32 %v99, %v709
  %v711 = vpop.f32.mrb[0].mxu0
  %712 = vmatprep.mubr.f32.mxu0 0.0
  %v713 = vand.u32 %v208, 4294901760
  %v714 = vsub.f32 %v208, %v713
  %v715 = vand.u32 %v714, 4294901760
  %v716 = vsub.f32 %v714, %v715
  %v717 = vand.u32 %v716, 4294901760
  %718 = vmatmul.mubr.f32.gmra.mrb[0].mxu0 %v717
  %v719 = vpop.f32.mrb[0].mxu0
  %v720 = vadd.f32 %v99, %v719
  %v721 = vpop.f32.mrb[0].mxu0
  %722 = vmatprep.mubr.f32.mxu0 0.0
  %v723 = vand.u32 %v211, 4294901760
  %v724 = vsub.f32 %v211, %v723
  %v725 = vand.u32 %v724, 4294901760
  %v726 = vsub.f32 %v724, %v725
  %v727 = vand.u32 %v726, 4294901760
  %728 = vmatmul.mubr.f32.gmra.mrb[0].mxu0 %v727
  %v729 = vpop.f32.mrb[0].mxu0
  %v730 = vadd.f32 %v99, %v729
  %v731 = vpop.f32.mrb[0].mxu0
  %732 = vmatprep.mubr.f32.mxu0 0.0
  %v733 = vand.u32 %v214, 4294901760
  %v734 = vsub.f32 %v214, %v733
  %v735 = vand.u32 %v734, 4294901760
  %v736 = vsub.f32 %v734, %v735
  %v737 = vand.u32 %v736, 4294901760
  %738 = vmatmul.mubr.f32.gmra.mrb[0].mxu0 %v737
  %v739 = vpop.f32.mrb[0].mxu0
  %v740 = vadd.f32 %v99, %v739
  %v741 = vpop.f32.mrb[0].mxu0
  %742 = vmatprep.mubr.f32.mxu0 0.0
  %v743 = vand.u32 %v217, 4294901760
  %v744 = vsub.f32 %v217, %v743
  %v745 = vand.u32 %v744, 4294901760
  %v746 = vsub.f32 %v744, %v745
  %v747 = vand.u32 %v746, 4294901760
  %748 = vmatmul.mubr.f32.gmra.mrb[0].mxu0 %v747
  %v749 = vpop.f32.mrb[0].mxu0
  %v750 = vadd.f32 %v99, %v749
  %v751 = vpop.f32.mrb[0].mxu0
  %752 = vmatprep.mubr.f32.mxu0 0.0
  %v753 = vand.u32 %v220, 4294901760
  %v754 = vsub.f32 %v220, %v753
  %v755 = vand.u32 %v754, 4294901760
  %v756 = vsub.f32 %v754, %v755
  %v757 = vand.u32 %v756, 4294901760
  %758 = vmatmul.mubr.f32.gmra.mrb[0].mxu0 %v757
  %v759 = vpop.f32.mrb[0].mxu0
  %v760 = vadd.f32 %v99, %v759
  %v761 = vpop.f32.mrb[0].mxu0
  %762 = vmatprep.mubr.f32.mxu0 0.0
  %v763 = vand.u32 %v223, 4294901760
  %v764 = vsub.f32 %v223, %v763
  %v765 = vand.u32 %v764, 4294901760
  %v766 = vsub.f32 %v764, %v765
  %v767 = vand.u32 %v766, 4294901760
  %768 = vmatmul.mubr.f32.gmra.mrb[0].mxu0 %v767
  %v769 = vpop.f32.mrb[0].mxu0
  %v770 = vadd.f32 %v99, %v769
  %v771 = vpop.f32.mrb[0].mxu0
  %772 = vmatprep.mubr.f32.mxu0 0.0
  %v773 = vand.u32 %v226, 4294901760
  %v774 = vsub.f32 %v226, %v773
  %v775 = vand.u32 %v774, 4294901760
  %v776 = vsub.f32 %v774, %v775
  %v777 = vand.u32 %v776, 4294901760
  %778 = vmatmul.mubr.f32.gmra.mrb[0].mxu0 %v777
  %v779 = vpop.f32.mrb[0].mxu0
  %v780 = vadd.f32 %v99, %v779
  %v781 = vpop.f32.mrb[0].mxu0
  %782 = vmatprep.mubr.f32.mxu0 0.0
  %v783 = vand.u32 %v229, 4294901760
  %v784 = vsub.f32 %v229, %v783
  %v785 = vand.u32 %v784, 4294901760
  %v786 = vsub.f32 %v784, %v785
  %v787 = vand.u32 %v786, 4294901760
  %788 = vmatmul.mubr.f32.gmra.mrb[0].mxu0 %v787
  %v789 = vpop.f32.mrb[0].mxu0
  %v790 = vadd.f32 %v99, %v789
  %v791 = vpop.f32.mrb[0].mxu0
  %792 = vmatprep.mubr.f32.mxu0 0.0
  %v793 = vand.u32 %v232, 4294901760
  %v794 = vsub.f32 %v232, %v793
  %v795 = vand.u32 %v794, 4294901760
  %v796 = vsub.f32 %v794, %v795
  %v797 = vand.u32 %v796, 4294901760
  %798 = vmatmul.mubr.f32.gmra.mrb[0].mxu0 %v797
  %v799 = vpop.f32.mrb[0].mxu0
  %v800 = vadd.f32 %v99, %v799
  %v801 = vpop.f32.mrb[0].mxu0
  %802 = vmatprep.mubr.f32.mxu0 0.0
  %v803 = vand.u32 %v235, 4294901760
  %v804 = vsub.f32 %v235, %v803
  %v805 = vand.u32 %v804, 4294901760
  %v806 = vsub.f32 %v804, %v805
  %v807 = vand.u32 %v806, 4294901760
  %808 = vmatmul.mubr.f32.gmra.mrb[0].mxu0 %v807
  %v809 = vpop.f32.mrb[0].mxu0
  %v810 = vadd.f32 %v99, %v809
  %v811 = vpop.f32.mrb[0].mxu0
  %812 = vmatprep.mubr.f32.mxu0 0.0
  %v813 = vand.u32 %v238, 4294901760
  %v814 = vsub.f32 %v238, %v813
  %v815 = vand.u32 %v814, 4294901760
  %v816 = vsub.f32 %v814, %v815
  %v817 = vand.u32 %v816, 4294901760
  %818 = vmatmul.mubr.f32.gmra.mrb[0].mxu0 %v817
  %v819 = vpop.f32.mrb[0].mxu0
  %v820 = vadd.f32 %v99, %v819
  %v821 = vpop.f32.mrb[0].mxu0
  %822 = vmatprep.mubr.f32.mxu0 0.0
  %v823 = vand.u32 %v241, 4294901760
  %v824 = vsub.f32 %v241, %v823
  %v825 = vand.u32 %v824, 4294901760
  %v826 = vsub.f32 %v824, %v825
  %v827 = vand.u32 %v826, 4294901760
  %828 = vmatmul.mubr.f32.gmra.mrb[0].mxu0 %v827
  %v829 = vpop.f32.mrb[0].mxu0
  %v830 = vadd.f32 %v99, %v829
  %v831 = vpop.f32.mrb[0].mxu0
  %832 = vmatprep.mubr.f32.mxu0 0.0
  %v833 = vand.u32 %v244, 4294901760
  %v834 = vsub.f32 %v244, %v833
  %v835 = vand.u32 %v834, 4294901760
  %v836 = vsub.f32 %v834, %v835
  %v837 = vand.u32 %v836, 4294901760
  %838 = vmatmul.mubr.f32.gmra.mrb[0].mxu0 %v837
  %v839 = vpop.f32.mrb[0].mxu0
  %v840 = vadd.f32 %v99, %v839
  %v841 = vpop.f32.mrb[0].mxu0
  %842 = vmatprep.mubr.f32.mxu0 0.0
  %v843 = vand.u32 %v247, 4294901760
  %v844 = vsub.f32 %v247, %v843
  %v845 = vand.u32 %v844, 4294901760
  %v846 = vsub.f32 %v844, %v845
  %v847 = vand.u32 %v846, 4294901760
  %848 = vmatmul.mubr.f32.gmra.mrb[0].mxu0 %v847
  %v849 = vpop.f32.mrb[0].mxu0
  %v850 = vadd.f32 %v99, %v849
  %v851 = vpop.f32.mrb[0].mxu0
  %852 = vmatprep.mubr.f32.mxu0 0.0
  %v853 = vand.u32 %v250, 4294901760
  %v854 = vsub.f32 %v250, %v853
  %v855 = vand.u32 %v854, 4294901760
  %v856 = vsub.f32 %v854, %v855
  %v857 = vand.u32 %v856, 4294901760
  %858 = vmatmul.mubr.f32.gmra.mrb[0].mxu0 %v857
  %v859 = vpop.f32.mrb[0].mxu0
  %v860 = vadd.f32 %v99, %v859
  %v861 = vpop.f32.mrb[0].mxu0
  %862 = vmatprep.mubr.f32.mxu0 0.0
  %v863 = vand.u32 %v253, 4294901760
  %v864 = vsub.f32 %v253, %v863
  %v865 = vand.u32 %v864, 4294901760
  %v866 = vsub.f32 %v864, %v865
  %v867 = vand.u32 %v866, 4294901760
  %868 = vmatmul.mubr.f32.gmra.mrb[0].mxu0 %v867
  %v869 = vpop.f32.mrb[0].mxu0
  %v870 = vadd.f32 %v99, %v869
  %v871 = vpop.f32.mrb[0].mxu0
  %872 = vmatprep.mubr.f32.mxu0 0.0
  %v873 = vand.u32 %v256, 4294901760
  %v874 = vsub.f32 %v256, %v873
  %v875 = vand.u32 %v874, 4294901760
  %v876 = vsub.f32 %v874, %v875
  %v877 = vand.u32 %v876, 4294901760
  %878 = vmatmul.mubr.f32.gmra.mrb[0].mxu0 %v877
  %v879 = vpop.f32.mrb[0].mxu0
  %v880 = vadd.f32 %v99, %v879
  %v881 = vpop.f32.mrb[0].mxu0
  %882 = vmatprep.mubr.f32.mxu0 0.0
  %v883 = vand.u32 %v259, 4294901760
  %v884 = vsub.f32 %v259, %v883
  %v885 = vand.u32 %v884, 4294901760
  %v886 = vsub.f32 %v884, %v885
  %v887 = vand.u32 %v886, 4294901760
  %888 = vmatmul.mubr.f32.gmra.mrb[0].mxu0 %v887
  %v889 = vpop.f32.mrb[0].mxu0
  %v890 = vadd.f32 %v99, %v889
  %v891 = vpop.f32.mrb[0].mxu0
  %892 = vmatprep.mubr.f32.mxu0 0.0
  %v893 = vand.u32 %v262, 4294901760
  %v894 = vsub.f32 %v262, %v893
  %v895 = vand.u32 %v894, 4294901760
  %v896 = vsub.f32 %v894, %v895
  %v897 = vand.u32 %v896, 4294901760
  %898 = vmatmul.mubr.f32.gmra.mrb[0].mxu0 %v897
  %v899 = vpop.f32.mrb[0].mxu0
  %v900 = vadd.f32 %v99, %v899
  %v901 = vpop.f32.mrb[0].mxu0
  %902 = vmatprep.mubr.f32.mxu0 0.0
  %v903 = vand.u32 %v265, 4294901760
  %v904 = vsub.f32 %v265, %v903
  %v905 = vand.u32 %v904, 4294901760
  %v906 = vsub.f32 %v904, %v905
  %v907 = vand.u32 %v906, 4294901760
  %908 = vmatmul.mubr.f32.gmra.mrb[0].mxu0 %v907
  %v909 = vpop.f32.mrb[0].mxu0
  %v910 = vadd.f32 %v99, %v909
  %v911 = vpop.f32.mrb[0].mxu0
  %912 = vmatprep.mubr.f32.mxu0 0.0
  %v913 = vand.u32 %v268, 4294901760
  %v914 = vsub.f32 %v268, %v913
  %v915 = vand.u32 %v914, 4294901760
  %v916 = vsub.f32 %v914, %v915
  %v917 = vand.u32 %v916, 4294901760
  %918 = vmatmul.mubr.f32.gmra.mrb[0].mxu0 %v917
  %v919 = vpop.f32.mrb[0].mxu0
  %v920 = vadd.f32 %v99, %v919
  %v921 = vpop.f32.mrb[0].mxu0
  %922 = vmatprep.mubr.f32.mxu0 0.0
  %v923 = vand.u32 %v271, 4294901760
  %v924 = vsub.f32 %v271, %v923
  %v925 = vand.u32 %v924, 4294901760
  %v926 = vsub.f32 %v924, %v925
  %v927 = vand.u32 %v926, 4294901760
  %928 = vmatmul.mubr.f32.gmra.mrb[0].mxu0 %v927
  %v929 = vpop.f32.mrb[0].mxu0
  %v930 = vadd.f32 %v99, %v929
  %v931 = vpop.f32.mrb[0].mxu0
  %932 = vmatprep.mubr.f32.mxu0 0.0
  %v933 = vand.u32 %v274, 4294901760
  %v934 = vsub.f32 %v274, %v933
  %v935 = vand.u32 %v934, 4294901760
  %v936 = vsub.f32 %v934, %v935
  %v937 = vand.u32 %v936, 4294901760
  %938 = vmatmul.mubr.f32.gmra.mrb[0].mxu0 %v937
  %v939 = vpop.f32.mrb[0].mxu0
  %v940 = vadd.f32 %v99, %v939
  %v941 = vpop.f32.mrb[0].mxu0
  %942 = vmatprep.mubr.f32.mxu0 0.0
  %v943 = vand.u32 %v277, 4294901760
  %v944 = vsub.f32 %v277, %v943
  %v945 = vand.u32 %v944, 4294901760
  %v946 = vsub.f32 %v944, %v945
  %v947 = vand.u32 %v946, 4294901760
  %948 = vmatmul.mubr.f32.gmra.mrb[0].mxu0 %v947
  %v949 = vpop.f32.mrb[0].mxu0
  %v950 = vadd.f32 %v99, %v949
  %v951 = vpop.f32.mrb[0].mxu0
  %952 = vmatprep.mubr.f32.mxu0 0.0
  %v953 = vand.u32 %v280, 4294901760
  %v954 = vsub.f32 %v280, %v953
  %v955 = vand.u32 %v954, 4294901760
  %v956 = vsub.f32 %v954, %v955
  %v957 = vand.u32 %v956, 4294901760
  %958 = vmatmul.mubr.f32.gmra.mrb[0].mxu0 %v957
  %v959 = vpop.f32.mrb[0].mxu0
  %v960 = vadd.f32 %v99, %v959
  %v961 = vpop.f32.mrb[0].mxu0
  %962 = vmatprep.mubr.f32.mxu0 0.0
  %v963 = vand.u32 %v283, 4294901760
  %v964 = vsub.f32 %v283, %v963
  %v965 = vand.u32 %v964, 4294901760
  %v966 = vsub.f32 %v964, %v965
  %v967 = vand.u32 %v966, 4294901760
  %968 = vmatmul.mubr.f32.gmra.mrb[0].mxu0 %v967
  %v969 = vpop.f32.mrb[0].mxu0
  %v970 = vadd.f32 %v99, %v969
  %v971 = vpop.f32.mrb[0].mxu0
  %972 = vmatprep.mubr.f32.mxu0 0.0
  %v973 = vand.u32 %v286, 4294901760
  %v974 = vsub.f32 %v286, %v973
  %v975 = vand.u32 %v974, 4294901760
  %v976 = vsub.f32 %v974, %v975
  %v977 = vand.u32 %v976, 4294901760
  %978 = vmatmul.mubr.f32.gmra.mrb[0].mxu0 %v977
  %v979 = vpop.f32.mrb[0].mxu0
  %v980 = vadd.f32 %v99, %v979
  %v981 = vpop.f32.mrb[0].mxu0
  %982 = vmatprep.mubr.f32.mxu0 0.0
  %v983 = vand.u32 %v289, 4294901760
  %v984 = vsub.f32 %v289, %v983
  %v985 = vand.u32 %v984, 4294901760
  %v986 = vsub.f32 %v984, %v985
  %v987 = vand.u32 %v986, 4294901760
  %988 = vmatmul.mubr.f32.gmra.mrb[0].mxu0 %v987
  %v989 = vpop.f32.mrb[0].mxu0
  %v990 = vadd.f32 %v99, %v989
  %v991 = vpop.f32.mrb[0].mxu0
  %992 = vmatprep.mubr.f32.mxu0 0.0
  %v993 = vand.u32 %v292, 4294901760
  %v994 = vsub.f32 %v292, %v993
  %v995 = vand.u32 %v994, 4294901760
  %v996 = vsub.f32 %v994, %v995
  %v997 = vand.u32 %v996, 4294901760
  %998 = vmatmul.mubr.f32.gmra.mrb[0].mxu0 %v997
  %v999 = vpop.f32.mrb[0].mxu0
  %v1000 = vadd.f32 %v99, %v999
  %v1001 = vpop.f32.mrb[0].mxu0
  %1002 = vdwg.mxu0
  %1003 = vmatprep.subr.mxu0 0.0
  %v1004 = vand.u32 %v90, 4294901760
  %v1005 = vsub.f32 %v90, %v1004
  %v1006 = vand.u32 %v1005, 4294901760
  %v1007 = vsub.f32 %v1005, %v1006
  %v1008 = vand.u32 %v1007, 4294901760
  %1009 = vmatpush1.msra.mxu0 %v1008
  %1010 = vmatprep.subr.mxu0 0.0
  %v1011 = vand.u32 %v91, 4294901760
  %v1012 = vsub.f32 %v91, %v1011
  %v1013 = vand.u32 %v1012, 4294901760
  %v1014 = vsub.f32 %v1012, %v1013
  %v1015 = vand.u32 %v1014, 4294901760
  %1016 = vmatpush1.msra.mxu0 %v1015
  %1017 = vmatprep.subr.mxu0 0.0
  %v1018 = vand.u32 %v92, 4294901760
  %v1019 = vsub.f32 %v92, %v1018
  %v1020 = vand.u32 %v1019, 4294901760
  %v1021 = vsub.f32 %v1019, %v1020
  %v1022 = vand.u32 %v1021, 4294901760
  %1023 = vmatpush1.msra.mxu0 %v1022
  %1024 = vmatprep.subr.mxu0 0.0
  %v1025 = vand.u32 %v93, 4294901760
  %v1026 = vsub.f32 %v93, %v1025
  %v1027 = vand.u32 %v1026, 4294901760
  %v1028 = vsub.f32 %v1026, %v1027
  %v1029 = vand.u32 %v1028, 4294901760
  %1030 = vmatpush1.msra.mxu0 %v1029
  %1031 = vmatprep.subr.mxu0 0.0
  %1032 = vmatpush1.msra.mxu0 0.0
  %1033 = vmatprep.subr.mxu0 0.0
  %1034 = vmatpush1.msra.mxu0 0.0
  %1035 = vmatprep.subr.mxu0 0.0
  %1036 = vmatpush1.msra.mxu0 0.0
  %1037 = vmatprep.subr.mxu0 0.0
  %1038 = vmatpush1.msra.mxu0 0.0
  %1039 = vmatprep.subr.mxu0 0.0
  %1040 = vmatpush1.msra.mxu0 0.0
  %1041 = vmatprep.subr.mxu0 0.0
  %1042 = vmatpush1.msra.mxu0 0.0
  %1043 = vmatprep.subr.mxu0 0.0
  %1044 = vmatpush1.msra.mxu0 0.0
  %1045 = vmatprep.subr.mxu0 0.0
  %1046 = vmatpush1.msra.mxu0 0.0
  %1047 = vmatprep.subr.mxu0 0.0
  %1048 = vmatpush1.msra.mxu0 0.0
  %1049 = vmatprep.subr.mxu0 0.0
  %1050 = vmatpush1.msra.mxu0 0.0
  %1051 = vmatprep.subr.mxu0 0.0
  %1052 = vmatpush1.msra.mxu0 0.0
  %1053 = vmatprep.subr.mxu0 0.0
  %1054 = vmatpush1.msra.mxu0 0.0
  %1055 = vmatprep.subr.mxu0 0.0
  %1056 = vmatpush1.msra.mxu0 0.0
  %1057 = vmatprep.subr.mxu0 0.0
  %1058 = vmatpush1.msra.mxu0 0.0
  %1059 = vmatprep.subr.mxu0 0.0
  %1060 = vmatpush1.msra.mxu0 0.0
  %1061 = vmatprep.subr.mxu0 0.0
  %1062 = vmatpush1.msra.mxu0 0.0
  %1063 = vmatprep.subr.mxu0 0.0
  %1064 = vmatpush1.msra.mxu0 0.0
  %1065 = vmatprep.subr.mxu0 0.0
  %1066 = vmatpush1.msra.mxu0 0.0
  %1067 = vmatprep.subr.mxu0 0.0
  %1068 = vmatpush1.msra.mxu0 0.0
  %1069 = vmatprep.subr.mxu0 0.0
  %1070 = vmatpush1.msra.mxu0 0.0
  %1071 = vmatprep.subr.mxu0 0.0
  %1072 = vmatpush1.msra.mxu0 0.0
  %1073 = vmatprep.subr.mxu0 0.0
  %1074 = vmatpush1.msra.mxu0 0.0
  %1075 = vmatprep.subr.mxu0 0.0
  %1076 = vmatpush1.msra.mxu0 0.0
  %1077 = vmatprep.subr.mxu0 0.0
  %1078 = vmatpush1.msra.mxu0 0.0
  %1079 = vmatprep.subr.mxu0 0.0
  %1080 = vmatpush1.msra.mxu0 0.0
  %1081 = vmatprep.subr.mxu0 0.0
  %1082 = vmatpush1.msra.mxu0 0.0
  %1083 = vmatprep.subr.mxu0 0.0
  %1084 = vmatpush1.msra.mxu0 0.0
  %1085 = vmatprep.subr.mxu0 0.0
  %1086 = vmatpush1.msra.mxu0 0.0
  %1087 = vmatprep.mubr.f32.mxu0 0.0
  %v1088 = vand.u32 %v103, 4294901760
  %1089 = vmatmul.mubr.f32.gmra.mrb[0].mxu0 %v1088
  %v1090 = vpop.f32.mrb[0].mxu0
  %v1091 = vadd.f32 %v370, %v1090
  %v1092 = vpop.f32.mrb[0].mxu0
  %1093 = vmatprep.mubr.f32.mxu0 0.0
  %v1094 = vand.u32 %v106, 4294901760
  %1095 = vmatmul.mubr.f32.gmra.mrb[0].mxu0 %v1094
  %v1096 = vpop.f32.mrb[0].mxu0
  %v1097 = vadd.f32 %v380, %v1096
  %v1098 = vpop.f32.mrb[0].mxu0
  %1099 = vmatprep.mubr.f32.mxu0 0.0
  %v1100 = vand.u32 %v109, 4294901760
  %1101 = vmatmul.mubr.f32.gmra.mrb[0].mxu0 %v1100
  %v1102 = vpop.f32.mrb[0].mxu0
  %v1103 = vadd.f32 %v390, %v1102
  %v1104 = vpop.f32.mrb[0].mxu0
  %1105 = vmatprep.mubr.f32.mxu0 0.0
  %v1106 = vand.u32 %v112, 4294901760
  %1107 = vmatmul.mubr.f32.gmra.mrb[0].mxu0 %v1106
  %v1108 = vpop.f32.mrb[0].mxu0
  %v1109 = vadd.f32 %v400, %v1108
  %v1110 = vpop.f32.mrb[0].mxu0
  %1111 = vmatprep.mubr.f32.mxu0 0.0
  %v1112 = vand.u32 %v115, 4294901760
  %1113 = vmatmul.mubr.f32.gmra.mrb[0].mxu0 %v1112
  %v1114 = vpop.f32.mrb[0].mxu0
  %v1115 = vadd.f32 %v410, %v1114
  %v1116 = vpop.f32.mrb[0].mxu0
  %1117 = vmatprep.mubr.f32.mxu0 0.0
  %v1118 = vand.u32 %v118, 4294901760
  %1119 = vmatmul.mubr.f32.gmra.mrb[0].mxu0 %v1118
  %v1120 = vpop.f32.mrb[0].mxu0
  %v1121 = vadd.f32 %v420, %v1120
  %v1122 = vpop.f32.mrb[0].mxu0
  %1123 = vmatprep.mubr.f32.mxu0 0.0
  %v1124 = vand.u32 %v121, 4294901760
  %1125 = vmatmul.mubr.f32.gmra.mrb[0].mxu0 %v1124
  %v1126 = vpop.f32.mrb[0].mxu0
  %v1127 = vadd.f32 %v430, %v1126
  %v1128 = vpop.f32.mrb[0].mxu0
  %1129 = vmatprep.mubr.f32.mxu0 0.0
  %v1130 = vand.u32 %v124, 4294901760
  %1131 = vmatmul.mubr.f32.gmra.mrb[0].mxu0 %v1130
  %v1132 = vpop.f32.mrb[0].mxu0
  %v1133 = vadd.f32 %v440, %v1132
  %v1134 = vpop.f32.mrb[0].mxu0
  %1135 = vmatprep.mubr.f32.mxu0 0.0
  %v1136 = vand.u32 %v127, 4294901760
  %1137 = vmatmul.mubr.f32.gmra.mrb[0].mxu0 %v1136
  %v1138 = vpop.f32.mrb[0].mxu0
  %v1139 = vadd.f32 %v450, %v1138
  %v1140 = vpop.f32.mrb[0].mxu0
  %1141 = vmatprep.mubr.f32.mxu0 0.0
  %v1142 = vand.u32 %v130, 4294901760
  %1143 = vmatmul.mubr.f32.gmra.mrb[0].mxu0 %v1142
  %v1144 = vpop.f32.mrb[0].mxu0
  %v1145 = vadd.f32 %v460, %v1144
  %v1146 = vpop.f32.mrb[0].mxu0
  %1147 = vmatprep.mubr.f32.mxu0 0.0
  %v1148 = vand.u32 %v133, 4294901760
  %1149 = vmatmul.mubr.f32.gmra.mrb[0].mxu0 %v1148
  %v1150 = vpop.f32.mrb[0].mxu0
  %v1151 = vadd.f32 %v470, %v1150
  %v1152 = vpop.f32.mrb[0].mxu0
  %1153 = vmatprep.mubr.f32.mxu0 0.0
  %v1154 = vand.u32 %v136, 4294901760
  %1155 = vmatmul.mubr.f32.gmra.mrb[0].mxu0 %v1154
  %v1156 = vpop.f32.mrb[0].mxu0
  %v1157 = vadd.f32 %v480, %v1156
  %v1158 = vpop.f32.mrb[0].mxu0
  %1159 = vmatprep.mubr.f32.mxu0 0.0
  %v1160 = vand.u32 %v139, 4294901760
  %1161 = vmatmul.mubr.f32.gmra.mrb[0].mxu0 %v1160
  %v1162 = vpop.f32.mrb[0].mxu0
  %v1163 = vadd.f32 %v490, %v1162
  %v1164 = vpop.f32.mrb[0].mxu0
  %1165 = vmatprep.mubr.f32.mxu0 0.0
  %v1166 = vand.u32 %v142, 4294901760
  %1167 = vmatmul.mubr.f32.gmra.mrb[0].mxu0 %v1166
  %v1168 = vpop.f32.mrb[0].mxu0
  %v1169 = vadd.f32 %v500, %v1168
  %v1170 = vpop.f32.mrb[0].mxu0
  %1171 = vmatprep.mubr.f32.mxu0 0.0
  %v1172 = vand.u32 %v145, 4294901760
  %1173 = vmatmul.mubr.f32.gmra.mrb[0].mxu0 %v1172
  %v1174 = vpop.f32.mrb[0].mxu0
  %v1175 = vadd.f32 %v510, %v1174
  %v1176 = vpop.f32.mrb[0].mxu0
  %1177 = vmatprep.mubr.f32.mxu0 0.0
  %v1178 = vand.u32 %v148, 4294901760
  %1179 = vmatmul.mubr.f32.gmra.mrb[0].mxu0 %v1178
  %v1180 = vpop.f32.mrb[0].mxu0
  %v1181 = vadd.f32 %v520, %v1180
  %v1182 = vpop.f32.mrb[0].mxu0
  %1183 = vmatprep.mubr.f32.mxu0 0.0
  %v1184 = vand.u32 %v151, 4294901760
  %1185 = vmatmul.mubr.f32.gmra.mrb[0].mxu0 %v1184
  %v1186 = vpop.f32.mrb[0].mxu0
  %v1187 = vadd.f32 %v530, %v1186
  %v1188 = vpop.f32.mrb[0].mxu0
  %1189 = vmatprep.mubr.f32.mxu0 0.0
  %v1190 = vand.u32 %v154, 4294901760
  %1191 = vmatmul.mubr.f32.gmra.mrb[0].mxu0 %v1190
  %v1192 = vpop.f32.mrb[0].mxu0
  %v1193 = vadd.f32 %v540, %v1192
  %v1194 = vpop.f32.mrb[0].mxu0
  %1195 = vmatprep.mubr.f32.mxu0 0.0
  %v1196 = vand.u32 %v157, 4294901760
  %1197 = vmatmul.mubr.f32.gmra.mrb[0].mxu0 %v1196
  %v1198 = vpop.f32.mrb[0].mxu0
  %v1199 = vadd.f32 %v550, %v1198
  %v1200 = vpop.f32.mrb[0].mxu0
  %1201 = vmatprep.mubr.f32.mxu0 0.0
  %v1202 = vand.u32 %v160, 4294901760
  %1203 = vmatmul.mubr.f32.gmra.mrb[0].mxu0 %v1202
  %v1204 = vpop.f32.mrb[0].mxu0
  %v1205 = vadd.f32 %v560, %v1204
  %v1206 = vpop.f32.mrb[0].mxu0
  %1207 = vmatprep.mubr.f32.mxu0 0.0
  %v1208 = vand.u32 %v163, 4294901760
  %1209 = vmatmul.mubr.f32.gmra.mrb[0].mxu0 %v1208
  %v1210 = vpop.f32.mrb[0].mxu0
  %v1211 = vadd.f32 %v570, %v1210
  %v1212 = vpop.f32.mrb[0].mxu0
  %1213 = vmatprep.mubr.f32.mxu0 0.0
  %v1214 = vand.u32 %v166, 4294901760
  %1215 = vmatmul.mubr.f32.gmra.mrb[0].mxu0 %v1214
  %v1216 = vpop.f32.mrb[0].mxu0
  %v1217 = vadd.f32 %v580, %v1216
  %v1218 = vpop.f32.mrb[0].mxu0
  %1219 = vmatprep.mubr.f32.mxu0 0.0
  %v1220 = vand.u32 %v169, 4294901760
  %1221 = vmatmul.mubr.f32.gmra.mrb[0].mxu0 %v1220
  %v1222 = vpop.f32.mrb[0].mxu0
  %v1223 = vadd.f32 %v590, %v1222
  %v1224 = vpop.f32.mrb[0].mxu0
  %1225 = vmatprep.mubr.f32.mxu0 0.0
  %v1226 = vand.u32 %v172, 4294901760
  %1227 = vmatmul.mubr.f32.gmra.mrb[0].mxu0 %v1226
  %v1228 = vpop.f32.mrb[0].mxu0
  %v1229 = vadd.f32 %v600, %v1228
  %v1230 = vpop.f32.mrb[0].mxu0
  %1231 = vmatprep.mubr.f32.mxu0 0.0
  %v1232 = vand.u32 %v175, 4294901760
  %1233 = vmatmul.mubr.f32.gmra.mrb[0].mxu0 %v1232
  %v1234 = vpop.f32.mrb[0].mxu0
  %v1235 = vadd.f32 %v610, %v1234
  %v1236 = vpop.f32.mrb[0].mxu0
  %1237 = vmatprep.mubr.f32.mxu0 0.0
  %v1238 = vand.u32 %v178, 4294901760
  %1239 = vmatmul.mubr.f32.gmra.mrb[0].mxu0 %v1238
  %v1240 = vpop.f32.mrb[0].mxu0
  %v1241 = vadd.f32 %v620, %v1240
  %v1242 = vpop.f32.mrb[0].mxu0
  %1243 = vmatprep.mubr.f32.mxu0 0.0
  %v1244 = vand.u32 %v181, 4294901760
  %1245 = vmatmul.mubr.f32.gmra.mrb[0].mxu0 %v1244
  %v1246 = vpop.f32.mrb[0].mxu0
  %v1247 = vadd.f32 %v630, %v1246
  %v1248 = vpop.f32.mrb[0].mxu0
  %1249 = vmatprep.mubr.f32.mxu0 0.0
  %v1250 = vand.u32 %v184, 4294901760
  %1251 = vmatmul.mubr.f32.gmra.mrb[0].mxu0 %v1250
  %v1252 = vpop.f32.mrb[0].mxu0
  %v1253 = vadd.f32 %v640, %v1252
  %v1254 = vpop.f32.mrb[0].mxu0
  %1255 = vmatprep.mubr.f32.mxu0 0.0
  %v1256 = vand.u32 %v187, 4294901760
  %1257 = vmatmul.mubr.f32.gmra.mrb[0].mxu0 %v1256
  %v1258 = vpop.f32.mrb[0].mxu0
  %v1259 = vadd.f32 %v650, %v1258
  %v1260 = vpop.f32.mrb[0].mxu0
  %1261 = vmatprep.mubr.f32.mxu0 0.0
  %v1262 = vand.u32 %v190, 4294901760
  %1263 = vmatmul.mubr.f32.gmra.mrb[0].mxu0 %v1262
  %v1264 = vpop.f32.mrb[0].mxu0
  %v1265 = vadd.f32 %v660, %v1264
  %v1266 = vpop.f32.mrb[0].mxu0
  %1267 = vmatprep.mubr.f32.mxu0 0.0
  %v1268 = vand.u32 %v193, 4294901760
  %1269 = vmatmul.mubr.f32.gmra.mrb[0].mxu0 %v1268
  %v1270 = vpop.f32.mrb[0].mxu0
  %v1271 = vadd.f32 %v670, %v1270
  %v1272 = vpop.f32.mrb[0].mxu0
  %1273 = vmatprep.mubr.f32.mxu0 0.0
  %v1274 = vand.u32 %v196, 4294901760
  %1275 = vmatmul.mubr.f32.gmra.mrb[0].mxu0 %v1274
  %v1276 = vpop.f32.mrb[0].mxu0
  %v1277 = vadd.f32 %v680, %v1276
  %v1278 = vpop.f32.mrb[0].mxu0
  %1279 = vmatprep.mubr.f32.mxu0 0.0
  %v1280 = vand.u32 %v199, 4294901760
  %1281 = vmatmul.mubr.f32.gmra.mrb[0].mxu0 %v1280
  %v1282 = vpop.f32.mrb[0].mxu0
  %v1283 = vadd.f32 %v690, %v1282
  %v1284 = vpop.f32.mrb[0].mxu0
  %1285 = vmatprep.mubr.f32.mxu0 0.0
  %v1286 = vand.u32 %v202, 4294901760
  %1287 = vmatmul.mubr.f32.gmra.mrb[0].mxu0 %v1286
  %v1288 = vpop.f32.mrb[0].mxu0
  %v1289 = vadd.f32 %v700, %v1288
  %v1290 = vpop.f32.mrb[0].mxu0
  %1291 = vmatprep.mubr.f32.mxu0 0.0
  %v1292 = vand.u32 %v205, 4294901760
  %1293 = vmatmul.mubr.f32.gmra.mrb[0].mxu0 %v1292
  %v1294 = vpop.f32.mrb[0].mxu0
  %v1295 = vadd.f32 %v710, %v1294
  %v1296 = vpop.f32.mrb[0].mxu0
  %1297 = vmatprep.mubr.f32.mxu0 0.0
  %v1298 = vand.u32 %v208, 4294901760
  %1299 = vmatmul.mubr.f32.gmra.mrb[0].mxu0 %v1298
  %v1300 = vpop.f32.mrb[0].mxu0
  %v1301 = vadd.f32 %v720, %v1300
  %v1302 = vpop.f32.mrb[0].mxu0
  %1303 = vmatprep.mubr.f32.mxu0 0.0
  %v1304 = vand.u32 %v211, 4294901760
  %1305 = vmatmul.mubr.f32.gmra.mrb[0].mxu0 %v1304
  %v1306 = vpop.f32.mrb[0].mxu0
  %v1307 = vadd.f32 %v730, %v1306
  %v1308 = vpop.f32.mrb[0].mxu0
  %1309 = vmatprep.mubr.f32.mxu0 0.0
  %v1310 = vand.u32 %v214, 4294901760
  %1311 = vmatmul.mubr.f32.gmra.mrb[0].mxu0 %v1310
  %v1312 = vpop.f32.mrb[0].mxu0
  %v1313 = vadd.f32 %v740, %v1312
  %v1314 = vpop.f32.mrb[0].mxu0
  %1315 = vmatprep.mubr.f32.mxu0 0.0
  %v1316 = vand.u32 %v217, 4294901760
  %1317 = vmatmul.mubr.f32.gmra.mrb[0].mxu0 %v1316
  %v1318 = vpop.f32.mrb[0].mxu0
  %v1319 = vadd.f32 %v750, %v1318
  %v1320 = vpop.f32.mrb[0].mxu0
  %1321 = vmatprep.mubr.f32.mxu0 0.0
  %v1322 = vand.u32 %v220, 4294901760
  %1323 = vmatmul.mubr.f32.gmra.mrb[0].mxu0 %v1322
  %v1324 = vpop.f32.mrb[0].mxu0
  %v1325 = vadd.f32 %v760, %v1324
  %v1326 = vpop.f32.mrb[0].mxu0
  %1327 = vmatprep.mubr.f32.mxu0 0.0
  %v1328 = vand.u32 %v223, 4294901760
  %1329 = vmatmul.mubr.f32.gmra.mrb[0].mxu0 %v1328
  %v1330 = vpop.f32.mrb[0].mxu0
  %v1331 = vadd.f32 %v770, %v1330
  %v1332 = vpop.f32.mrb[0].mxu0
  %1333 = vmatprep.mubr.f32.mxu0 0.0
  %v1334 = vand.u32 %v226, 4294901760
  %1335 = vmatmul.mubr.f32.gmra.mrb[0].mxu0 %v1334
  %v1336 = vpop.f32.mrb[0].mxu0
  %v1337 = vadd.f32 %v780, %v1336
  %v1338 = vpop.f32.mrb[0].mxu0
  %1339 = vmatprep.mubr.f32.mxu0 0.0
  %v1340 = vand.u32 %v229, 4294901760
  %1341 = vmatmul.mubr.f32.gmra.mrb[0].mxu0 %v1340
  %v1342 = vpop.f32.mrb[0].mxu0
  %v1343 = vadd.f32 %v790, %v1342
  %v1344 = vpop.f32.mrb[0].mxu0
  %1345 = vmatprep.mubr.f32.mxu0 0.0
  %v1346 = vand.u32 %v232, 4294901760
  %1347 = vmatmul.mubr.f32.gmra.mrb[0].mxu0 %v1346
  %v1348 = vpop.f32.mrb[0].mxu0
  %v1349 = vadd.f32 %v800, %v1348
  %v1350 = vpop.f32.mrb[0].mxu0
  %1351 = vmatprep.mubr.f32.mxu0 0.0
  %v1352 = vand.u32 %v235, 4294901760
  %1353 = vmatmul.mubr.f32.gmra.mrb[0].mxu0 %v1352
  %v1354 = vpop.f32.mrb[0].mxu0
  %v1355 = vadd.f32 %v810, %v1354
  %v1356 = vpop.f32.mrb[0].mxu0
  %1357 = vmatprep.mubr.f32.mxu0 0.0
  %v1358 = vand.u32 %v238, 4294901760
  %1359 = vmatmul.mubr.f32.gmra.mrb[0].mxu0 %v1358
  %v1360 = vpop.f32.mrb[0].mxu0
  %v1361 = vadd.f32 %v820, %v1360
  %v1362 = vpop.f32.mrb[0].mxu0
  %1363 = vmatprep.mubr.f32.mxu0 0.0
  %v1364 = vand.u32 %v241, 4294901760
  %1365 = vmatmul.mubr.f32.gmra.mrb[0].mxu0 %v1364
  %v1366 = vpop.f32.mrb[0].mxu0
  %v1367 = vadd.f32 %v830, %v1366
  %v1368 = vpop.f32.mrb[0].mxu0
  %1369 = vmatprep.mubr.f32.mxu0 0.0
  %v1370 = vand.u32 %v244, 4294901760
  %1371 = vmatmul.mubr.f32.gmra.mrb[0].mxu0 %v1370
  %v1372 = vpop.f32.mrb[0].mxu0
  %v1373 = vadd.f32 %v840, %v1372
  %v1374 = vpop.f32.mrb[0].mxu0
  %1375 = vmatprep.mubr.f32.mxu0 0.0
  %v1376 = vand.u32 %v247, 4294901760
  %1377 = vmatmul.mubr.f32.gmra.mrb[0].mxu0 %v1376
  %v1378 = vpop.f32.mrb[0].mxu0
  %v1379 = vadd.f32 %v850, %v1378
  %v1380 = vpop.f32.mrb[0].mxu0
  %1381 = vmatprep.mubr.f32.mxu0 0.0
  %v1382 = vand.u32 %v250, 4294901760
  %1383 = vmatmul.mubr.f32.gmra.mrb[0].mxu0 %v1382
  %v1384 = vpop.f32.mrb[0].mxu0
  %v1385 = vadd.f32 %v860, %v1384
  %v1386 = vpop.f32.mrb[0].mxu0
  %1387 = vmatprep.mubr.f32.mxu0 0.0
  %v1388 = vand.u32 %v253, 4294901760
  %1389 = vmatmul.mubr.f32.gmra.mrb[0].mxu0 %v1388
  %v1390 = vpop.f32.mrb[0].mxu0
  %v1391 = vadd.f32 %v870, %v1390
  %v1392 = vpop.f32.mrb[0].mxu0
  %1393 = vmatprep.mubr.f32.mxu0 0.0
  %v1394 = vand.u32 %v256, 4294901760
  %1395 = vmatmul.mubr.f32.gmra.mrb[0].mxu0 %v1394
  %v1396 = vpop.f32.mrb[0].mxu0
  %v1397 = vadd.f32 %v880, %v1396
  %v1398 = vpop.f32.mrb[0].mxu0
  %1399 = vmatprep.mubr.f32.mxu0 0.0
  %v1400 = vand.u32 %v259, 4294901760
  %1401 = vmatmul.mubr.f32.gmra.mrb[0].mxu0 %v1400
  %v1402 = vpop.f32.mrb[0].mxu0
  %v1403 = vadd.f32 %v890, %v1402
  %v1404 = vpop.f32.mrb[0].mxu0
  %1405 = vmatprep.mubr.f32.mxu0 0.0
  %v1406 = vand.u32 %v262, 4294901760
  %1407 = vmatmul.mubr.f32.gmra.mrb[0].mxu0 %v1406
  %v1408 = vpop.f32.mrb[0].mxu0
  %v1409 = vadd.f32 %v900, %v1408
  %v1410 = vpop.f32.mrb[0].mxu0
  %1411 = vmatprep.mubr.f32.mxu0 0.0
  %v1412 = vand.u32 %v265, 4294901760
  %1413 = vmatmul.mubr.f32.gmra.mrb[0].mxu0 %v1412
  %v1414 = vpop.f32.mrb[0].mxu0
  %v1415 = vadd.f32 %v910, %v1414
  %v1416 = vpop.f32.mrb[0].mxu0
  %1417 = vmatprep.mubr.f32.mxu0 0.0
  %v1418 = vand.u32 %v268, 4294901760
  %1419 = vmatmul.mubr.f32.gmra.mrb[0].mxu0 %v1418
  %v1420 = vpop.f32.mrb[0].mxu0
  %v1421 = vadd.f32 %v920, %v1420
  %v1422 = vpop.f32.mrb[0].mxu0
  %1423 = vmatprep.mubr.f32.mxu0 0.0
  %v1424 = vand.u32 %v271, 4294901760
  %1425 = vmatmul.mubr.f32.gmra.mrb[0].mxu0 %v1424
  %v1426 = vpop.f32.mrb[0].mxu0
  %v1427 = vadd.f32 %v930, %v1426
  %v1428 = vpop.f32.mrb[0].mxu0
  %1429 = vmatprep.mubr.f32.mxu0 0.0
  %v1430 = vand.u32 %v274, 4294901760
  %1431 = vmatmul.mubr.f32.gmra.mrb[0].mxu0 %v1430
  %v1432 = vpop.f32.mrb[0].mxu0
  %v1433 = vadd.f32 %v940, %v1432
  %v1434 = vpop.f32.mrb[0].mxu0
  %1435 = vmatprep.mubr.f32.mxu0 0.0
  %v1436 = vand.u32 %v277, 4294901760
  %1437 = vmatmul.mubr.f32.gmra.mrb[0].mxu0 %v1436
  %v1438 = vpop.f32.mrb[0].mxu0
  %v1439 = vadd.f32 %v950, %v1438
  %v1440 = vpop.f32.mrb[0].mxu0
  %1441 = vmatprep.mubr.f32.mxu0 0.0
  %v1442 = vand.u32 %v280, 4294901760
  %1443 = vmatmul.mubr.f32.gmra.mrb[0].mxu0 %v1442
  %v1444 = vpop.f32.mrb[0].mxu0
  %v1445 = vadd.f32 %v960, %v1444
  %v1446 = vpop.f32.mrb[0].mxu0
  %1447 = vmatprep.mubr.f32.mxu0 0.0
  %v1448 = vand.u32 %v283, 4294901760
  %1449 = vmatmul.mubr.f32.gmra.mrb[0].mxu0 %v1448
  %v1450 = vpop.f32.mrb[0].mxu0
  %v1451 = vadd.f32 %v970, %v1450
  %v1452 = vpop.f32.mrb[0].mxu0
  %1453 = vmatprep.mubr.f32.mxu0 0.0
  %v1454 = vand.u32 %v286, 4294901760
  %1455 = vmatmul.mubr.f32.gmra.mrb[0].mxu0 %v1454
  %v1456 = vpop.f32.mrb[0].mxu0
  %v1457 = vadd.f32 %v980, %v1456
  %v1458 = vpop.f32.mrb[0].mxu0
  %1459 = vmatprep.mubr.f32.mxu0 0.0
  %v1460 = vand.u32 %v289, 4294901760
  %1461 = vmatmul.mubr.f32.gmra.mrb[0].mxu0 %v1460
  %v1462 = vpop.f32.mrb[0].mxu0
  %v1463 = vadd.f32 %v990, %v1462
  %v1464 = vpop.f32.mrb[0].mxu0
  %1465 = vmatprep.mubr.f32.mxu0 0.0
  %v1466 = vand.u32 %v292, 4294901760
  %1467 = vmatmul.mubr.f32.gmra.mrb[0].mxu0 %v1466
  %v1468 = vpop.f32.mrb[0].mxu0
  %v1469 = vadd.f32 %v1000, %v1468
  %v1470 = vpop.f32.mrb[0].mxu0
  %1471 = vdwg.mxu0
  %1472 = vmatprep.subr.mxu0 0.0
  %v1473 = vand.u32 %v90, 4294901760
  %v1474 = vsub.f32 %v90, %v1473
  %1475 = vmatpush1.msra.mxu0 %v1474
  %1476 = vmatprep.subr.mxu0 0.0
  %v1477 = vand.u32 %v91, 4294901760
  %v1478 = vsub.f32 %v91, %v1477
  %1479 = vmatpush1.msra.mxu0 %v1478
  %1480 = vmatprep.subr.mxu0 0.0
  %v1481 = vand.u32 %v92, 4294901760
  %v1482 = vsub.f32 %v92, %v1481
  %1483 = vmatpush1.msra.mxu0 %v1482
  %1484 = vmatprep.subr.mxu0 0.0
  %v1485 = vand.u32 %v93, 4294901760
  %v1486 = vsub.f32 %v93, %v1485
  %1487 = vmatpush1.msra.mxu0 %v1486
  %1488 = vmatprep.subr.mxu0 0.0
  %1489 = vmatpush1.msra.mxu0 0.0
  %1490 = vmatprep.subr.mxu0 0.0
  %1491 = vmatpush1.msra.mxu0 0.0
  %1492 = vmatprep.subr.mxu0 0.0
  %1493 = vmatpush1.msra.mxu0 0.0
  %1494 = vmatprep.subr.mxu0 0.0
  %1495 = vmatpush1.msra.mxu0 0.0
  %1496 = vmatprep.subr.mxu0 0.0
  %1497 = vmatpush1.msra.mxu0 0.0
  %1498 = vmatprep.subr.mxu0 0.0
  %1499 = vmatpush1.msra.mxu0 0.0
  %1500 = vmatprep.subr.mxu0 0.0
  %1501 = vmatpush1.msra.mxu0 0.0
  %1502 = vmatprep.subr.mxu0 0.0
  %1503 = vmatpush1.msra.mxu0 0.0
  %1504 = vmatprep.subr.mxu0 0.0
  %1505 = vmatpush1.msra.mxu0 0.0
  %1506 = vmatprep.subr.mxu0 0.0
  %1507 = vmatpush1.msra.mxu0 0.0
  %1508 = vmatprep.subr.mxu0 0.0
  %1509 = vmatpush1.msra.mxu0 0.0
  %1510 = vmatprep.subr.mxu0 0.0
  %1511 = vmatpush1.msra.mxu0 0.0
  %1512 = vmatprep.subr.mxu0 0.0
  %1513 = vmatpush1.msra.mxu0 0.0
  %1514 = vmatprep.subr.mxu0 0.0
  %1515 = vmatpush1.msra.mxu0 0.0
  %1516 = vmatprep.subr.mxu0 0.0
  %1517 = vmatpush1.msra.mxu0 0.0
  %1518 = vmatprep.subr.mxu0 0.0
  %1519 = vmatpush1.msra.mxu0 0.0
  %1520 = vmatprep.subr.mxu0 0.0
  %1521 = vmatpush1.msra.mxu0 0.0
  %1522 = vmatprep.subr.mxu0 0.0
  %1523 = vmatpush1.msra.mxu0 0.0
  %1524 = vmatprep.subr.mxu0 0.0
  %1525 = vmatpush1.msra.mxu0 0.0
  %1526 = vmatprep.subr.mxu0 0.0
  %1527 = vmatpush1.msra.mxu0 0.0
  %1528 = vmatprep.subr.mxu0 0.0
  %1529 = vmatpush1.msra.mxu0 0.0
  %1530 = vmatprep.subr.mxu0 0.0
  %1531 = vmatpush1.msra.mxu0 0.0
  %1532 = vmatprep.subr.mxu0 0.0
  %1533 = vmatpush1.msra.mxu0 0.0
  %1534 = vmatprep.subr.mxu0 0.0
  %1535 = vmatpush1.msra.mxu0 0.0
  %1536 = vmatprep.subr.mxu0 0.0
  %1537 = vmatpush1.msra.mxu0 0.0
  %1538 = vmatprep.subr.mxu0 0.0
  %1539 = vmatpush1.msra.mxu0 0.0
  %1540 = vmatprep.subr.mxu0 0.0
  %1541 = vmatpush1.msra.mxu0 0.0
  %1542 = vmatprep.subr.mxu0 0.0
  %1543 = vmatpush1.msra.mxu0 0.0
  %1544 = vmatprep.mubr.f32.mxu0 0.0
  %v1545 = vand.u32 %v103, 4294901760
  %v1546 = vsub.f32 %v103, %v1545
  %1547 = vmatmul.mubr.f32.gmra.mrb[0].mxu0 %v1546
  %v1548 = vpop.f32.mrb[0].mxu0
  %v1549 = vadd.f32 %v1091, %v1548
  %v1550 = vpop.f32.mrb[0].mxu0
  %1551 = vmatprep.mubr.f32.mxu0 0.0
  %v1552 = vand.u32 %v106, 4294901760
  %v1553 = vsub.f32 %v106, %v1552
  %1554 = vmatmul.mubr.f32.gmra.mrb[0].mxu0 %v1553
  %v1555 = vpop.f32.mrb[0].mxu0
  %v1556 = vadd.f32 %v1097, %v1555
  %v1557 = vpop.f32.mrb[0].mxu0
  %1558 = vmatprep.mubr.f32.mxu0 0.0
  %v1559 = vand.u32 %v109, 4294901760
  %v1560 = vsub.f32 %v109, %v1559
  %1561 = vmatmul.mubr.f32.gmra.mrb[0].mxu0 %v1560
  %v1562 = vpop.f32.mrb[0].mxu0
  %v1563 = vadd.f32 %v1103, %v1562
  %v1564 = vpop.f32.mrb[0].mxu0
  %1565 = vmatprep.mubr.f32.mxu0 0.0
  %v1566 = vand.u32 %v112, 4294901760
  %v1567 = vsub.f32 %v112, %v1566
  %1568 = vmatmul.mubr.f32.gmra.mrb[0].mxu0 %v1567
  %v1569 = vpop.f32.mrb[0].mxu0
  %v1570 = vadd.f32 %v1109, %v1569
  %v1571 = vpop.f32.mrb[0].mxu0
  %1572 = vmatprep.mubr.f32.mxu0 0.0
  %v1573 = vand.u32 %v115, 4294901760
  %v1574 = vsub.f32 %v115, %v1573
  %1575 = vmatmul.mubr.f32.gmra.mrb[0].mxu0 %v1574
  %v1576 = vpop.f32.mrb[0].mxu0
  %v1577 = vadd.f32 %v1115, %v1576
  %v1578 = vpop.f32.mrb[0].mxu0
  %1579 = vmatprep.mubr.f32.mxu0 0.0
  %v1580 = vand.u32 %v118, 4294901760
  %v1581 = vsub.f32 %v118, %v1580
  %1582 = vmatmul.mubr.f32.gmra.mrb[0].mxu0 %v1581
  %v1583 = vpop.f32.mrb[0].mxu0
  %v1584 = vadd.f32 %v1121, %v1583
  %v1585 = vpop.f32.mrb[0].mxu0
  %1586 = vmatprep.mubr.f32.mxu0 0.0
  %v1587 = vand.u32 %v121, 4294901760
  %v1588 = vsub.f32 %v121, %v1587
  %1589 = vmatmul.mubr.f32.gmra.mrb[0].mxu0 %v1588
  %v1590 = vpop.f32.mrb[0].mxu0
  %v1591 = vadd.f32 %v1127, %v1590
  %v1592 = vpop.f32.mrb[0].mxu0
  %1593 = vmatprep.mubr.f32.mxu0 0.0
  %v1594 = vand.u32 %v124, 4294901760
  %v1595 = vsub.f32 %v124, %v1594
  %1596 = vmatmul.mubr.f32.gmra.mrb[0].mxu0 %v1595
  %v1597 = vpop.f32.mrb[0].mxu0
  %v1598 = vadd.f32 %v1133, %v1597
  %v1599 = vpop.f32.mrb[0].mxu0
  %1600 = vmatprep.mubr.f32.mxu0 0.0
  %v1601 = vand.u32 %v127, 4294901760
  %v1602 = vsub.f32 %v127, %v1601
  %1603 = vmatmul.mubr.f32.gmra.mrb[0].mxu0 %v1602
  %v1604 = vpop.f32.mrb[0].mxu0
  %v1605 = vadd.f32 %v1139, %v1604
  %v1606 = vpop.f32.mrb[0].mxu0
  %1607 = vmatprep.mubr.f32.mxu0 0.0
  %v1608 = vand.u32 %v130, 4294901760
  %v1609 = vsub.f32 %v130, %v1608
  %1610 = vmatmul.mubr.f32.gmra.mrb[0].mxu0 %v1609
  %v1611 = vpop.f32.mrb[0].mxu0
  %v1612 = vadd.f32 %v1145, %v1611
  %v1613 = vpop.f32.mrb[0].mxu0
  %1614 = vmatprep.mubr.f32.mxu0 0.0
  %v1615 = vand.u32 %v133, 4294901760
  %v1616 = vsub.f32 %v133, %v1615
  %1617 = vmatmul.mubr.f32.gmra.mrb[0].mxu0 %v1616
  %v1618 = vpop.f32.mrb[0].mxu0
  %v1619 = vadd.f32 %v1151, %v1618
  %v1620 = vpop.f32.mrb[0].mxu0
  %1621 = vmatprep.mubr.f32.mxu0 0.0
  %v1622 = vand.u32 %v136, 4294901760
  %v1623 = vsub.f32 %v136, %v1622
  %1624 = vmatmul.mubr.f32.gmra.mrb[0].mxu0 %v1623
  %v1625 = vpop.f32.mrb[0].mxu0
  %v1626 = vadd.f32 %v1157, %v1625
  %v1627 = vpop.f32.mrb[0].mxu0
  %1628 = vmatprep.mubr.f32.mxu0 0.0
  %v1629 = vand.u32 %v139, 4294901760
  %v1630 = vsub.f32 %v139, %v1629
  %1631 = vmatmul.mubr.f32.gmra.mrb[0].mxu0 %v1630
  %v1632 = vpop.f32.mrb[0].mxu0
  %v1633 = vadd.f32 %v1163, %v1632
  %v1634 = vpop.f32.mrb[0].mxu0
  %1635 = vmatprep.mubr.f32.mxu0 0.0
  %v1636 = vand.u32 %v142, 4294901760
  %v1637 = vsub.f32 %v142, %v1636
  %1638 = vmatmul.mubr.f32.gmra.mrb[0].mxu0 %v1637
  %v1639 = vpop.f32.mrb[0].mxu0
  %v1640 = vadd.f32 %v1169, %v1639
  %v1641 = vpop.f32.mrb[0].mxu0
  %1642 = vmatprep.mubr.f32.mxu0 0.0
  %v1643 = vand.u32 %v145, 4294901760
  %v1644 = vsub.f32 %v145, %v1643
  %1645 = vmatmul.mubr.f32.gmra.mrb[0].mxu0 %v1644
  %v1646 = vpop.f32.mrb[0].mxu0
  %v1647 = vadd.f32 %v1175, %v1646
  %v1648 = vpop.f32.mrb[0].mxu0
  %1649 = vmatprep.mubr.f32.mxu0 0.0
  %v1650 = vand.u32 %v148, 4294901760
  %v1651 = vsub.f32 %v148, %v1650
  %1652 = vmatmul.mubr.f32.gmra.mrb[0].mxu0 %v1651
  %v1653 = vpop.f32.mrb[0].mxu0
  %v1654 = vadd.f32 %v1181, %v1653
  %v1655 = vpop.f32.mrb[0].mxu0
  %1656 = vmatprep.mubr.f32.mxu0 0.0
  %v1657 = vand.u32 %v151, 4294901760
  %v1658 = vsub.f32 %v151, %v1657
  %1659 = vmatmul.mubr.f32.gmra.mrb[0].mxu0 %v1658
  %v1660 = vpop.f32.mrb[0].mxu0
  %v1661 = vadd.f32 %v1187, %v1660
  %v1662 = vpop.f32.mrb[0].mxu0
  %1663 = vmatprep.mubr.f32.mxu0 0.0
  %v1664 = vand.u32 %v154, 4294901760
  %v1665 = vsub.f32 %v154, %v1664
  %1666 = vmatmul.mubr.f32.gmra.mrb[0].mxu0 %v1665
  %v1667 = vpop.f32.mrb[0].mxu0
  %v1668 = vadd.f32 %v1193, %v1667
  %v1669 = vpop.f32.mrb[0].mxu0
  %1670 = vmatprep.mubr.f32.mxu0 0.0
  %v1671 = vand.u32 %v157, 4294901760
  %v1672 = vsub.f32 %v157, %v1671
  %1673 = vmatmul.mubr.f32.gmra.mrb[0].mxu0 %v1672
  %v1674 = vpop.f32.mrb[0].mxu0
  %v1675 = vadd.f32 %v1199, %v1674
  %v1676 = vpop.f32.mrb[0].mxu0
  %1677 = vmatprep.mubr.f32.mxu0 0.0
  %v1678 = vand.u32 %v160, 4294901760
  %v1679 = vsub.f32 %v160, %v1678
  %1680 = vmatmul.mubr.f32.gmra.mrb[0].mxu0 %v1679
  %v1681 = vpop.f32.mrb[0].mxu0
  %v1682 = vadd.f32 %v1205, %v1681
  %v1683 = vpop.f32.mrb[0].mxu0
  %1684 = vmatprep.mubr.f32.mxu0 0.0
  %v1685 = vand.u32 %v163, 4294901760
  %v1686 = vsub.f32 %v163, %v1685
  %1687 = vmatmul.mubr.f32.gmra.mrb[0].mxu0 %v1686
  %v1688 = vpop.f32.mrb[0].mxu0
  %v1689 = vadd.f32 %v1211, %v1688
  %v1690 = vpop.f32.mrb[0].mxu0
  %1691 = vmatprep.mubr.f32.mxu0 0.0
  %v1692 = vand.u32 %v166, 4294901760
  %v1693 = vsub.f32 %v166, %v1692
  %1694 = vmatmul.mubr.f32.gmra.mrb[0].mxu0 %v1693
  %v1695 = vpop.f32.mrb[0].mxu0
  %v1696 = vadd.f32 %v1217, %v1695
  %v1697 = vpop.f32.mrb[0].mxu0
  %1698 = vmatprep.mubr.f32.mxu0 0.0
  %v1699 = vand.u32 %v169, 4294901760
  %v1700 = vsub.f32 %v169, %v1699
  %1701 = vmatmul.mubr.f32.gmra.mrb[0].mxu0 %v1700
  %v1702 = vpop.f32.mrb[0].mxu0
  %v1703 = vadd.f32 %v1223, %v1702
  %v1704 = vpop.f32.mrb[0].mxu0
  %1705 = vmatprep.mubr.f32.mxu0 0.0
  %v1706 = vand.u32 %v172, 4294901760
  %v1707 = vsub.f32 %v172, %v1706
  %1708 = vmatmul.mubr.f32.gmra.mrb[0].mxu0 %v1707
  %v1709 = vpop.f32.mrb[0].mxu0
  %v1710 = vadd.f32 %v1229, %v1709
  %v1711 = vpop.f32.mrb[0].mxu0
  %1712 = vmatprep.mubr.f32.mxu0 0.0
  %v1713 = vand.u32 %v175, 4294901760
  %v1714 = vsub.f32 %v175, %v1713
  %1715 = vmatmul.mubr.f32.gmra.mrb[0].mxu0 %v1714
  %v1716 = vpop.f32.mrb[0].mxu0
  %v1717 = vadd.f32 %v1235, %v1716
  %v1718 = vpop.f32.mrb[0].mxu0
  %1719 = vmatprep.mubr.f32.mxu0 0.0
  %v1720 = vand.u32 %v178, 4294901760
  %v1721 = vsub.f32 %v178, %v1720
  %1722 = vmatmul.mubr.f32.gmra.mrb[0].mxu0 %v1721
  %v1723 = vpop.f32.mrb[0].mxu0
  %v1724 = vadd.f32 %v1241, %v1723
  %v1725 = vpop.f32.mrb[0].mxu0
  %1726 = vmatprep.mubr.f32.mxu0 0.0
  %v1727 = vand.u32 %v181, 4294901760
  %v1728 = vsub.f32 %v181, %v1727
  %1729 = vmatmul.mubr.f32.gmra.mrb[0].mxu0 %v1728
  %v1730 = vpop.f32.mrb[0].mxu0
  %v1731 = vadd.f32 %v1247, %v1730
  %v1732 = vpop.f32.mrb[0].mxu0
  %1733 = vmatprep.mubr.f32.mxu0 0.0
  %v1734 = vand.u32 %v184, 4294901760
  %v1735 = vsub.f32 %v184, %v1734
  %1736 = vmatmul.mubr.f32.gmra.mrb[0].mxu0 %v1735
  %v1737 = vpop.f32.mrb[0].mxu0
  %v1738 = vadd.f32 %v1253, %v1737
  %v1739 = vpop.f32.mrb[0].mxu0
  %1740 = vmatprep.mubr.f32.mxu0 0.0
  %v1741 = vand.u32 %v187, 4294901760
  %v1742 = vsub.f32 %v187, %v1741
  %1743 = vmatmul.mubr.f32.gmra.mrb[0].mxu0 %v1742
  %v1744 = vpop.f32.mrb[0].mxu0
  %v1745 = vadd.f32 %v1259, %v1744
  %v1746 = vpop.f32.mrb[0].mxu0
  %1747 = vmatprep.mubr.f32.mxu0 0.0
  %v1748 = vand.u32 %v190, 4294901760
  %v1749 = vsub.f32 %v190, %v1748
  %1750 = vmatmul.mubr.f32.gmra.mrb[0].mxu0 %v1749
  %v1751 = vpop.f32.mrb[0].mxu0
  %v1752 = vadd.f32 %v1265, %v1751
  %v1753 = vpop.f32.mrb[0].mxu0
  %1754 = vmatprep.mubr.f32.mxu0 0.0
  %v1755 = vand.u32 %v193, 4294901760
  %v1756 = vsub.f32 %v193, %v1755
  %1757 = vmatmul.mubr.f32.gmra.mrb[0].mxu0 %v1756
  %v1758 = vpop.f32.mrb[0].mxu0
  %v1759 = vadd.f32 %v1271, %v1758
  %v1760 = vpop.f32.mrb[0].mxu0
  %1761 = vmatprep.mubr.f32.mxu0 0.0
  %v1762 = vand.u32 %v196, 4294901760
  %v1763 = vsub.f32 %v196, %v1762
  %1764 = vmatmul.mubr.f32.gmra.mrb[0].mxu0 %v1763
  %v1765 = vpop.f32.mrb[0].mxu0
  %v1766 = vadd.f32 %v1277, %v1765
  %v1767 = vpop.f32.mrb[0].mxu0
  %1768 = vmatprep.mubr.f32.mxu0 0.0
  %v1769 = vand.u32 %v199, 4294901760
  %v1770 = vsub.f32 %v199, %v1769
  %1771 = vmatmul.mubr.f32.gmra.mrb[0].mxu0 %v1770
  %v1772 = vpop.f32.mrb[0].mxu0
  %v1773 = vadd.f32 %v1283, %v1772
  %v1774 = vpop.f32.mrb[0].mxu0
  %1775 = vmatprep.mubr.f32.mxu0 0.0
  %v1776 = vand.u32 %v202, 4294901760
  %v1777 = vsub.f32 %v202, %v1776
  %1778 = vmatmul.mubr.f32.gmra.mrb[0].mxu0 %v1777
  %v1779 = vpop.f32.mrb[0].mxu0
  %v1780 = vadd.f32 %v1289, %v1779
  %v1781 = vpop.f32.mrb[0].mxu0
  %1782 = vmatprep.mubr.f32.mxu0 0.0
  %v1783 = vand.u32 %v205, 4294901760
  %v1784 = vsub.f32 %v205, %v1783
  %1785 = vmatmul.mubr.f32.gmra.mrb[0].mxu0 %v1784
  %v1786 = vpop.f32.mrb[0].mxu0
  %v1787 = vadd.f32 %v1295, %v1786
  %v1788 = vpop.f32.mrb[0].mxu0
  %1789 = vmatprep.mubr.f32.mxu0 0.0
  %v1790 = vand.u32 %v208, 4294901760
  %v1791 = vsub.f32 %v208, %v1790
  %1792 = vmatmul.mubr.f32.gmra.mrb[0].mxu0 %v1791
  %v1793 = vpop.f32.mrb[0].mxu0
  %v1794 = vadd.f32 %v1301, %v1793
  %v1795 = vpop.f32.mrb[0].mxu0
  %1796 = vmatprep.mubr.f32.mxu0 0.0
  %v1797 = vand.u32 %v211, 4294901760
  %v1798 = vsub.f32 %v211, %v1797
  %1799 = vmatmul.mubr.f32.gmra.mrb[0].mxu0 %v1798
  %v1800 = vpop.f32.mrb[0].mxu0
  %v1801 = vadd.f32 %v1307, %v1800
  %v1802 = vpop.f32.mrb[0].mxu0
  %1803 = vmatprep.mubr.f32.mxu0 0.0
  %v1804 = vand.u32 %v214, 4294901760
  %v1805 = vsub.f32 %v214, %v1804
  %1806 = vmatmul.mubr.f32.gmra.mrb[0].mxu0 %v1805
  %v1807 = vpop.f32.mrb[0].mxu0
  %v1808 = vadd.f32 %v1313, %v1807
  %v1809 = vpop.f32.mrb[0].mxu0
  %1810 = vmatprep.mubr.f32.mxu0 0.0
  %v1811 = vand.u32 %v217, 4294901760
  %v1812 = vsub.f32 %v217, %v1811
  %1813 = vmatmul.mubr.f32.gmra.mrb[0].mxu0 %v1812
  %v1814 = vpop.f32.mrb[0].mxu0
  %v1815 = vadd.f32 %v1319, %v1814
  %v1816 = vpop.f32.mrb[0].mxu0
  %1817 = vmatprep.mubr.f32.mxu0 0.0
  %v1818 = vand.u32 %v220, 4294901760
  %v1819 = vsub.f32 %v220, %v1818
  %1820 = vmatmul.mubr.f32.gmra.mrb[0].mxu0 %v1819
  %v1821 = vpop.f32.mrb[0].mxu0
  %v1822 = vadd.f32 %v1325, %v1821
  %v1823 = vpop.f32.mrb[0].mxu0
  %1824 = vmatprep.mubr.f32.mxu0 0.0
  %v1825 = vand.u32 %v223, 4294901760
  %v1826 = vsub.f32 %v223, %v1825
  %1827 = vmatmul.mubr.f32.gmra.mrb[0].mxu0 %v1826
  %v1828 = vpop.f32.mrb[0].mxu0
  %v1829 = vadd.f32 %v1331, %v1828
  %v1830 = vpop.f32.mrb[0].mxu0
  %1831 = vmatprep.mubr.f32.mxu0 0.0
  %v1832 = vand.u32 %v226, 4294901760
  %v1833 = vsub.f32 %v226, %v1832
  %1834 = vmatmul.mubr.f32.gmra.mrb[0].mxu0 %v1833
  %v1835 = vpop.f32.mrb[0].mxu0
  %v1836 = vadd.f32 %v1337, %v1835
  %v1837 = vpop.f32.mrb[0].mxu0
  %1838 = vmatprep.mubr.f32.mxu0 0.0
  %v1839 = vand.u32 %v229, 4294901760
  %v1840 = vsub.f32 %v229, %v1839
  %1841 = vmatmul.mubr.f32.gmra.mrb[0].mxu0 %v1840
  %v1842 = vpop.f32.mrb[0].mxu0
  %v1843 = vadd.f32 %v1343, %v1842
  %v1844 = vpop.f32.mrb[0].mxu0
  %1845 = vmatprep.mubr.f32.mxu0 0.0
  %v1846 = vand.u32 %v232, 4294901760
  %v1847 = vsub.f32 %v232, %v1846
  %1848 = vmatmul.mubr.f32.gmra.mrb[0].mxu0 %v1847
  %v1849 = vpop.f32.mrb[0].mxu0
  %v1850 = vadd.f32 %v1349, %v1849
  %v1851 = vpop.f32.mrb[0].mxu0
  %1852 = vmatprep.mubr.f32.mxu0 0.0
  %v1853 = vand.u32 %v235, 4294901760
  %v1854 = vsub.f32 %v235, %v1853
  %1855 = vmatmul.mubr.f32.gmra.mrb[0].mxu0 %v1854
  %v1856 = vpop.f32.mrb[0].mxu0
  %v1857 = vadd.f32 %v1355, %v1856
  %v1858 = vpop.f32.mrb[0].mxu0
  %1859 = vmatprep.mubr.f32.mxu0 0.0
  %v1860 = vand.u32 %v238, 4294901760
  %v1861 = vsub.f32 %v238, %v1860
  %1862 = vmatmul.mubr.f32.gmra.mrb[0].mxu0 %v1861
  %v1863 = vpop.f32.mrb[0].mxu0
  %v1864 = vadd.f32 %v1361, %v1863
  %v1865 = vpop.f32.mrb[0].mxu0
  %1866 = vmatprep.mubr.f32.mxu0 0.0
  %v1867 = vand.u32 %v241, 4294901760
  %v1868 = vsub.f32 %v241, %v1867
  %1869 = vmatmul.mubr.f32.gmra.mrb[0].mxu0 %v1868
  %v1870 = vpop.f32.mrb[0].mxu0
  %v1871 = vadd.f32 %v1367, %v1870
  %v1872 = vpop.f32.mrb[0].mxu0
  %1873 = vmatprep.mubr.f32.mxu0 0.0
  %v1874 = vand.u32 %v244, 4294901760
  %v1875 = vsub.f32 %v244, %v1874
  %1876 = vmatmul.mubr.f32.gmra.mrb[0].mxu0 %v1875
  %v1877 = vpop.f32.mrb[0].mxu0
  %v1878 = vadd.f32 %v1373, %v1877
  %v1879 = vpop.f32.mrb[0].mxu0
  %1880 = vmatprep.mubr.f32.mxu0 0.0
  %v1881 = vand.u32 %v247, 4294901760
  %v1882 = vsub.f32 %v247, %v1881
  %1883 = vmatmul.mubr.f32.gmra.mrb[0].mxu0 %v1882
  %v1884 = vpop.f32.mrb[0].mxu0
  %v1885 = vadd.f32 %v1379, %v1884
  %v1886 = vpop.f32.mrb[0].mxu0
  %1887 = vmatprep.mubr.f32.mxu0 0.0
  %v1888 = vand.u32 %v250, 4294901760
  %v1889 = vsub.f32 %v250, %v1888
  %1890 = vmatmul.mubr.f32.gmra.mrb[0].mxu0 %v1889
  %v1891 = vpop.f32.mrb[0].mxu0
  %v1892 = vadd.f32 %v1385, %v1891
  %v1893 = vpop.f32.mrb[0].mxu0
  %1894 = vmatprep.mubr.f32.mxu0 0.0
  %v1895 = vand.u32 %v253, 4294901760
  %v1896 = vsub.f32 %v253, %v1895
  %1897 = vmatmul.mubr.f32.gmra.mrb[0].mxu0 %v1896
  %v1898 = vpop.f32.mrb[0].mxu0
  %v1899 = vadd.f32 %v1391, %v1898
  %v1900 = vpop.f32.mrb[0].mxu0
  %1901 = vmatprep.mubr.f32.mxu0 0.0
  %v1902 = vand.u32 %v256, 4294901760
  %v1903 = vsub.f32 %v256, %v1902
  %1904 = vmatmul.mubr.f32.gmra.mrb[0].mxu0 %v1903
  %v1905 = vpop.f32.mrb[0].mxu0
  %v1906 = vadd.f32 %v1397, %v1905
  %v1907 = vpop.f32.mrb[0].mxu0
  %1908 = vmatprep.mubr.f32.mxu0 0.0
  %v1909 = vand.u32 %v259, 4294901760
  %v1910 = vsub.f32 %v259, %v1909
  %1911 = vmatmul.mubr.f32.gmra.mrb[0].mxu0 %v1910
  %v1912 = vpop.f32.mrb[0].mxu0
  %v1913 = vadd.f32 %v1403, %v1912
  %v1914 = vpop.f32.mrb[0].mxu0
  %1915 = vmatprep.mubr.f32.mxu0 0.0
  %v1916 = vand.u32 %v262, 4294901760
  %v1917 = vsub.f32 %v262, %v1916
  %1918 = vmatmul.mubr.f32.gmra.mrb[0].mxu0 %v1917
  %v1919 = vpop.f32.mrb[0].mxu0
  %v1920 = vadd.f32 %v1409, %v1919
  %v1921 = vpop.f32.mrb[0].mxu0
  %1922 = vmatprep.mubr.f32.mxu0 0.0
  %v1923 = vand.u32 %v265, 4294901760
  %v1924 = vsub.f32 %v265, %v1923
  %1925 = vmatmul.mubr.f32.gmra.mrb[0].mxu0 %v1924
  %v1926 = vpop.f32.mrb[0].mxu0
  %v1927 = vadd.f32 %v1415, %v1926
  %v1928 = vpop.f32.mrb[0].mxu0
  %1929 = vmatprep.mubr.f32.mxu0 0.0
  %v1930 = vand.u32 %v268, 4294901760
  %v1931 = vsub.f32 %v268, %v1930
  %1932 = vmatmul.mubr.f32.gmra.mrb[0].mxu0 %v1931
  %v1933 = vpop.f32.mrb[0].mxu0
  %v1934 = vadd.f32 %v1421, %v1933
  %v1935 = vpop.f32.mrb[0].mxu0
  %1936 = vmatprep.mubr.f32.mxu0 0.0
  %v1937 = vand.u32 %v271, 4294901760
  %v1938 = vsub.f32 %v271, %v1937
  %1939 = vmatmul.mubr.f32.gmra.mrb[0].mxu0 %v1938
  %v1940 = vpop.f32.mrb[0].mxu0
  %v1941 = vadd.f32 %v1427, %v1940
  %v1942 = vpop.f32.mrb[0].mxu0
  %1943 = vmatprep.mubr.f32.mxu0 0.0
  %v1944 = vand.u32 %v274, 4294901760
  %v1945 = vsub.f32 %v274, %v1944
  %1946 = vmatmul.mubr.f32.gmra.mrb[0].mxu0 %v1945
  %v1947 = vpop.f32.mrb[0].mxu0
  %v1948 = vadd.f32 %v1433, %v1947
  %v1949 = vpop.f32.mrb[0].mxu0
  %1950 = vmatprep.mubr.f32.mxu0 0.0
  %v1951 = vand.u32 %v277, 4294901760
  %v1952 = vsub.f32 %v277, %v1951
  %1953 = vmatmul.mubr.f32.gmra.mrb[0].mxu0 %v1952
  %v1954 = vpop.f32.mrb[0].mxu0
  %v1955 = vadd.f32 %v1439, %v1954
  %v1956 = vpop.f32.mrb[0].mxu0
  %1957 = vmatprep.mubr.f32.mxu0 0.0
  %v1958 = vand.u32 %v280, 4294901760
  %v1959 = vsub.f32 %v280, %v1958
  %1960 = vmatmul.mubr.f32.gmra.mrb[0].mxu0 %v1959
  %v1961 = vpop.f32.mrb[0].mxu0
  %v1962 = vadd.f32 %v1445, %v1961
  %v1963 = vpop.f32.mrb[0].mxu0
  %1964 = vmatprep.mubr.f32.mxu0 0.0
  %v1965 = vand.u32 %v283, 4294901760
  %v1966 = vsub.f32 %v283, %v1965
  %1967 = vmatmul.mubr.f32.gmra.mrb[0].mxu0 %v1966
  %v1968 = vpop.f32.mrb[0].mxu0
  %v1969 = vadd.f32 %v1451, %v1968
  %v1970 = vpop.f32.mrb[0].mxu0
  %1971 = vmatprep.mubr.f32.mxu0 0.0
  %v1972 = vand.u32 %v286, 4294901760
  %v1973 = vsub.f32 %v286, %v1972
  %1974 = vmatmul.mubr.f32.gmra.mrb[0].mxu0 %v1973
  %v1975 = vpop.f32.mrb[0].mxu0
  %v1976 = vadd.f32 %v1457, %v1975
  %v1977 = vpop.f32.mrb[0].mxu0
  %1978 = vmatprep.mubr.f32.mxu0 0.0
  %v1979 = vand.u32 %v289, 4294901760
  %v1980 = vsub.f32 %v289, %v1979
  %1981 = vmatmul.mubr.f32.gmra.mrb[0].mxu0 %v1980
  %v1982 = vpop.f32.mrb[0].mxu0
  %v1983 = vadd.f32 %v1463, %v1982
  %v1984 = vpop.f32.mrb[0].mxu0
  %1985 = vmatprep.mubr.f32.mxu0 0.0
  %v1986 = vand.u32 %v292, 4294901760
  %v1987 = vsub.f32 %v292, %v1986
  %1988 = vmatmul.mubr.f32.gmra.mrb[0].mxu0 %v1987
  %v1989 = vpop.f32.mrb[0].mxu0
  %v1990 = vadd.f32 %v1469, %v1989
  %v1991 = vpop.f32.mrb[0].mxu0
  %1992 = vdwg.mxu0
  %1993 = vmatprep.subr.mxu0 0.0
  %v1994 = vand.u32 %v90, 4294901760
  %1995 = vmatpush1.msra.mxu0 %v1994
  %1996 = vmatprep.subr.mxu0 0.0
  %v1997 = vand.u32 %v91, 4294901760
  %1998 = vmatpush1.msra.mxu0 %v1997
  %1999 = vmatprep.subr.mxu0 0.0
  %v2000 = vand.u32 %v92, 4294901760
  %2001 = vmatpush1.msra.mxu0 %v2000
  %2002 = vmatprep.subr.mxu0 0.0
  %v2003 = vand.u32 %v93, 4294901760
  %2004 = vmatpush1.msra.mxu0 %v2003
  %2005 = vmatprep.subr.mxu0 0.0
  %2006 = vmatpush1.msra.mxu0 0.0
  %2007 = vmatprep.subr.mxu0 0.0
  %2008 = vmatpush1.msra.mxu0 0.0
  %2009 = vmatprep.subr.mxu0 0.0
  %2010 = vmatpush1.msra.mxu0 0.0
  %2011 = vmatprep.subr.mxu0 0.0
  %2012 = vmatpush1.msra.mxu0 0.0
  %2013 = vmatprep.subr.mxu0 0.0
  %2014 = vmatpush1.msra.mxu0 0.0
  %2015 = vmatprep.subr.mxu0 0.0
  %2016 = vmatpush1.msra.mxu0 0.0
  %2017 = vmatprep.subr.mxu0 0.0
  %2018 = vmatpush1.msra.mxu0 0.0
  %2019 = vmatprep.subr.mxu0 0.0
  %2020 = vmatpush1.msra.mxu0 0.0
  %2021 = vmatprep.subr.mxu0 0.0
  %2022 = vmatpush1.msra.mxu0 0.0
  %2023 = vmatprep.subr.mxu0 0.0
  %2024 = vmatpush1.msra.mxu0 0.0
  %2025 = vmatprep.subr.mxu0 0.0
  %2026 = vmatpush1.msra.mxu0 0.0
  %2027 = vmatprep.subr.mxu0 0.0
  %2028 = vmatpush1.msra.mxu0 0.0
  %2029 = vmatprep.subr.mxu0 0.0
  %2030 = vmatpush1.msra.mxu0 0.0
  %2031 = vmatprep.subr.mxu0 0.0
  %2032 = vmatpush1.msra.mxu0 0.0
  %2033 = vmatprep.subr.mxu0 0.0
  %2034 = vmatpush1.msra.mxu0 0.0
  %2035 = vmatprep.subr.mxu0 0.0
  %2036 = vmatpush1.msra.mxu0 0.0
  %2037 = vmatprep.subr.mxu0 0.0
  %2038 = vmatpush1.msra.mxu0 0.0
  %2039 = vmatprep.subr.mxu0 0.0
  %2040 = vmatpush1.msra.mxu0 0.0
  %2041 = vmatprep.subr.mxu0 0.0
  %2042 = vmatpush1.msra.mxu0 0.0
  %2043 = vmatprep.subr.mxu0 0.0
  %2044 = vmatpush1.msra.mxu0 0.0
  %2045 = vmatprep.subr.mxu0 0.0
  %2046 = vmatpush1.msra.mxu0 0.0
  %2047 = vmatprep.subr.mxu0 0.0
  %2048 = vmatpush1.msra.mxu0 0.0
  %2049 = vmatprep.subr.mxu0 0.0
  %2050 = vmatpush1.msra.mxu0 0.0
  %2051 = vmatprep.subr.mxu0 0.0
  %2052 = vmatpush1.msra.mxu0 0.0
  %2053 = vmatprep.subr.mxu0 0.0
  %2054 = vmatpush1.msra.mxu0 0.0
  %2055 = vmatprep.subr.mxu0 0.0
  %2056 = vmatpush1.msra.mxu0 0.0
  %2057 = vmatprep.subr.mxu0 0.0
  %2058 = vmatpush1.msra.mxu0 0.0
  %2059 = vmatprep.subr.mxu0 0.0
  %2060 = vmatpush1.msra.mxu0 0.0
  %2061 = vmatprep.mubr.f32.mxu0 0.0
  %v2062 = vand.u32 %v103, 4294901760
  %v2063 = vsub.f32 %v103, %v2062
  %v2064 = vand.u32 %v2063, 4294901760
  %2065 = vmatmul.mubr.f32.gmra.mrb[0].mxu0 %v2064
  %v2066 = vpop.f32.mrb[0].mxu0
  %v2067 = vadd.f32 %v1549, %v2066
  %v2068 = vpop.f32.mrb[0].mxu0
  %2069 = vmatprep.mubr.f32.mxu0 0.0
  %v2070 = vand.u32 %v106, 4294901760
  %v2071 = vsub.f32 %v106, %v2070
  %v2072 = vand.u32 %v2071, 4294901760
  %2073 = vmatmul.mubr.f32.gmra.mrb[0].mxu0 %v2072
  %v2074 = vpop.f32.mrb[0].mxu0
  %v2075 = vadd.f32 %v1556, %v2074
  %v2076 = vpop.f32.mrb[0].mxu0
  %2077 = vmatprep.mubr.f32.mxu0 0.0
  %v2078 = vand.u32 %v109, 4294901760
  %v2079 = vsub.f32 %v109, %v2078
  %v2080 = vand.u32 %v2079, 4294901760
  %2081 = vmatmul.mubr.f32.gmra.mrb[0].mxu0 %v2080
  %v2082 = vpop.f32.mrb[0].mxu0
  %v2083 = vadd.f32 %v1563, %v2082
  %v2084 = vpop.f32.mrb[0].mxu0
  %2085 = vmatprep.mubr.f32.mxu0 0.0
  %v2086 = vand.u32 %v112, 4294901760
  %v2087 = vsub.f32 %v112, %v2086
  %v2088 = vand.u32 %v2087, 4294901760
  %2089 = vmatmul.mubr.f32.gmra.mrb[0].mxu0 %v2088
  %v2090 = vpop.f32.mrb[0].mxu0
  %v2091 = vadd.f32 %v1570, %v2090
  %v2092 = vpop.f32.mrb[0].mxu0
  %2093 = vmatprep.mubr.f32.mxu0 0.0
  %v2094 = vand.u32 %v115, 4294901760
  %v2095 = vsub.f32 %v115, %v2094
  %v2096 = vand.u32 %v2095, 4294901760
  %2097 = vmatmul.mubr.f32.gmra.mrb[0].mxu0 %v2096
  %v2098 = vpop.f32.mrb[0].mxu0
  %v2099 = vadd.f32 %v1577, %v2098
  %v2100 = vpop.f32.mrb[0].mxu0
  %2101 = vmatprep.mubr.f32.mxu0 0.0
  %v2102 = vand.u32 %v118, 4294901760
  %v2103 = vsub.f32 %v118, %v2102
  %v2104 = vand.u32 %v2103, 4294901760
  %2105 = vmatmul.mubr.f32.gmra.mrb[0].mxu0 %v2104
  %v2106 = vpop.f32.mrb[0].mxu0
  %v2107 = vadd.f32 %v1584, %v2106
  %v2108 = vpop.f32.mrb[0].mxu0
  %2109 = vmatprep.mubr.f32.mxu0 0.0
  %v2110 = vand.u32 %v121, 4294901760
  %v2111 = vsub.f32 %v121, %v2110
  %v2112 = vand.u32 %v2111, 4294901760
  %2113 = vmatmul.mubr.f32.gmra.mrb[0].mxu0 %v2112
  %v2114 = vpop.f32.mrb[0].mxu0
  %v2115 = vadd.f32 %v1591, %v2114
  %v2116 = vpop.f32.mrb[0].mxu0
  %2117 = vmatprep.mubr.f32.mxu0 0.0
  %v2118 = vand.u32 %v124, 4294901760
  %v2119 = vsub.f32 %v124, %v2118
  %v2120 = vand.u32 %v2119, 4294901760
  %2121 = vmatmul.mubr.f32.gmra.mrb[0].mxu0 %v2120
  %v2122 = vpop.f32.mrb[0].mxu0
  %v2123 = vadd.f32 %v1598, %v2122
  %v2124 = vpop.f32.mrb[0].mxu0
  %2125 = vmatprep.mubr.f32.mxu0 0.0
  %v2126 = vand.u32 %v127, 4294901760
  %v2127 = vsub.f32 %v127, %v2126
  %v2128 = vand.u32 %v2127, 4294901760
  %2129 = vmatmul.mubr.f32.gmra.mrb[0].mxu0 %v2128
  %v2130 = vpop.f32.mrb[0].mxu0
  %v2131 = vadd.f32 %v1605, %v2130
  %v2132 = vpop.f32.mrb[0].mxu0
  %2133 = vmatprep.mubr.f32.mxu0 0.0
  %v2134 = vand.u32 %v130, 4294901760
  %v2135 = vsub.f32 %v130, %v2134
  %v2136 = vand.u32 %v2135, 4294901760
  %2137 = vmatmul.mubr.f32.gmra.mrb[0].mxu0 %v2136
  %v2138 = vpop.f32.mrb[0].mxu0
  %v2139 = vadd.f32 %v1612, %v2138
  %v2140 = vpop.f32.mrb[0].mxu0
  %2141 = vmatprep.mubr.f32.mxu0 0.0
  %v2142 = vand.u32 %v133, 4294901760
  %v2143 = vsub.f32 %v133, %v2142
  %v2144 = vand.u32 %v2143, 4294901760
  %2145 = vmatmul.mubr.f32.gmra.mrb[0].mxu0 %v2144
  %v2146 = vpop.f32.mrb[0].mxu0
  %v2147 = vadd.f32 %v1619, %v2146
  %v2148 = vpop.f32.mrb[0].mxu0
  %2149 = vmatprep.mubr.f32.mxu0 0.0
  %v2150 = vand.u32 %v136, 4294901760
  %v2151 = vsub.f32 %v136, %v2150
  %v2152 = vand.u32 %v2151, 4294901760
  %2153 = vmatmul.mubr.f32.gmra.mrb[0].mxu0 %v2152
  %v2154 = vpop.f32.mrb[0].mxu0
  %v2155 = vadd.f32 %v1626, %v2154
  %v2156 = vpop.f32.mrb[0].mxu0
  %2157 = vmatprep.mubr.f32.mxu0 0.0
  %v2158 = vand.u32 %v139, 4294901760
  %v2159 = vsub.f32 %v139, %v2158
  %v2160 = vand.u32 %v2159, 4294901760
  %2161 = vmatmul.mubr.f32.gmra.mrb[0].mxu0 %v2160
  %v2162 = vpop.f32.mrb[0].mxu0
  %v2163 = vadd.f32 %v1633, %v2162
  %v2164 = vpop.f32.mrb[0].mxu0
  %2165 = vmatprep.mubr.f32.mxu0 0.0
  %v2166 = vand.u32 %v142, 4294901760
  %v2167 = vsub.f32 %v142, %v2166
  %v2168 = vand.u32 %v2167, 4294901760
  %2169 = vmatmul.mubr.f32.gmra.mrb[0].mxu0 %v2168
  %v2170 = vpop.f32.mrb[0].mxu0
  %v2171 = vadd.f32 %v1640, %v2170
  %v2172 = vpop.f32.mrb[0].mxu0
  %2173 = vmatprep.mubr.f32.mxu0 0.0
  %v2174 = vand.u32 %v145, 4294901760
  %v2175 = vsub.f32 %v145, %v2174
  %v2176 = vand.u32 %v2175, 4294901760
  %2177 = vmatmul.mubr.f32.gmra.mrb[0].mxu0 %v2176
  %v2178 = vpop.f32.mrb[0].mxu0
  %v2179 = vadd.f32 %v1647, %v2178
  %v2180 = vpop.f32.mrb[0].mxu0
  %2181 = vmatprep.mubr.f32.mxu0 0.0
  %v2182 = vand.u32 %v148, 4294901760
  %v2183 = vsub.f32 %v148, %v2182
  %v2184 = vand.u32 %v2183, 4294901760
  %2185 = vmatmul.mubr.f32.gmra.mrb[0].mxu0 %v2184
  %v2186 = vpop.f32.mrb[0].mxu0
  %v2187 = vadd.f32 %v1654, %v2186
  %v2188 = vpop.f32.mrb[0].mxu0
  %2189 = vmatprep.mubr.f32.mxu0 0.0
  %v2190 = vand.u32 %v151, 4294901760
  %v2191 = vsub.f32 %v151, %v2190
  %v2192 = vand.u32 %v2191, 4294901760
  %2193 = vmatmul.mubr.f32.gmra.mrb[0].mxu0 %v2192
  %v2194 = vpop.f32.mrb[0].mxu0
  %v2195 = vadd.f32 %v1661, %v2194
  %v2196 = vpop.f32.mrb[0].mxu0
  %2197 = vmatprep.mubr.f32.mxu0 0.0
  %v2198 = vand.u32 %v154, 4294901760
  %v2199 = vsub.f32 %v154, %v2198
  %v2200 = vand.u32 %v2199, 4294901760
  %2201 = vmatmul.mubr.f32.gmra.mrb[0].mxu0 %v2200
  %v2202 = vpop.f32.mrb[0].mxu0
  %v2203 = vadd.f32 %v1668, %v2202
  %v2204 = vpop.f32.mrb[0].mxu0
  %2205 = vmatprep.mubr.f32.mxu0 0.0
  %v2206 = vand.u32 %v157, 4294901760
  %v2207 = vsub.f32 %v157, %v2206
  %v2208 = vand.u32 %v2207, 4294901760
  %2209 = vmatmul.mubr.f32.gmra.mrb[0].mxu0 %v2208
  %v2210 = vpop.f32.mrb[0].mxu0
  %v2211 = vadd.f32 %v1675, %v2210
  %v2212 = vpop.f32.mrb[0].mxu0
  %2213 = vmatprep.mubr.f32.mxu0 0.0
  %v2214 = vand.u32 %v160, 4294901760
  %v2215 = vsub.f32 %v160, %v2214
  %v2216 = vand.u32 %v2215, 4294901760
  %2217 = vmatmul.mubr.f32.gmra.mrb[0].mxu0 %v2216
  %v2218 = vpop.f32.mrb[0].mxu0
  %v2219 = vadd.f32 %v1682, %v2218
  %v2220 = vpop.f32.mrb[0].mxu0
  %2221 = vmatprep.mubr.f32.mxu0 0.0
  %v2222 = vand.u32 %v163, 4294901760
  %v2223 = vsub.f32 %v163, %v2222
  %v2224 = vand.u32 %v2223, 4294901760
  %2225 = vmatmul.mubr.f32.gmra.mrb[0].mxu0 %v2224
  %v2226 = vpop.f32.mrb[0].mxu0
  %v2227 = vadd.f32 %v1689, %v2226
  %v2228 = vpop.f32.mrb[0].mxu0
  %2229 = vmatprep.mubr.f32.mxu0 0.0
  %v2230 = vand.u32 %v166, 4294901760
  %v2231 = vsub.f32 %v166, %v2230
  %v2232 = vand.u32 %v2231, 4294901760
  %2233 = vmatmul.mubr.f32.gmra.mrb[0].mxu0 %v2232
  %v2234 = vpop.f32.mrb[0].mxu0
  %v2235 = vadd.f32 %v1696, %v2234
  %v2236 = vpop.f32.mrb[0].mxu0
  %2237 = vmatprep.mubr.f32.mxu0 0.0
  %v2238 = vand.u32 %v169, 4294901760
  %v2239 = vsub.f32 %v169, %v2238
  %v2240 = vand.u32 %v2239, 4294901760
  %2241 = vmatmul.mubr.f32.gmra.mrb[0].mxu0 %v2240
  %v2242 = vpop.f32.mrb[0].mxu0
  %v2243 = vadd.f32 %v1703, %v2242
  %v2244 = vpop.f32.mrb[0].mxu0
  %2245 = vmatprep.mubr.f32.mxu0 0.0
  %v2246 = vand.u32 %v172, 4294901760
  %v2247 = vsub.f32 %v172, %v2246
  %v2248 = vand.u32 %v2247, 4294901760
  %2249 = vmatmul.mubr.f32.gmra.mrb[0].mxu0 %v2248
  %v2250 = vpop.f32.mrb[0].mxu0
  %v2251 = vadd.f32 %v1710, %v2250
  %v2252 = vpop.f32.mrb[0].mxu0
  %2253 = vmatprep.mubr.f32.mxu0 0.0
  %v2254 = vand.u32 %v175, 4294901760
  %v2255 = vsub.f32 %v175, %v2254
  %v2256 = vand.u32 %v2255, 4294901760
  %2257 = vmatmul.mubr.f32.gmra.mrb[0].mxu0 %v2256
  %v2258 = vpop.f32.mrb[0].mxu0
  %v2259 = vadd.f32 %v1717, %v2258
  %v2260 = vpop.f32.mrb[0].mxu0
  %2261 = vmatprep.mubr.f32.mxu0 0.0
  %v2262 = vand.u32 %v178, 4294901760
  %v2263 = vsub.f32 %v178, %v2262
  %v2264 = vand.u32 %v2263, 4294901760
  %2265 = vmatmul.mubr.f32.gmra.mrb[0].mxu0 %v2264
  %v2266 = vpop.f32.mrb[0].mxu0
  %v2267 = vadd.f32 %v1724, %v2266
  %v2268 = vpop.f32.mrb[0].mxu0
  %2269 = vmatprep.mubr.f32.mxu0 0.0
  %v2270 = vand.u32 %v181, 4294901760
  %v2271 = vsub.f32 %v181, %v2270
  %v2272 = vand.u32 %v2271, 4294901760
  %2273 = vmatmul.mubr.f32.gmra.mrb[0].mxu0 %v2272
  %v2274 = vpop.f32.mrb[0].mxu0
  %v2275 = vadd.f32 %v1731, %v2274
  %v2276 = vpop.f32.mrb[0].mxu0
  %2277 = vmatprep.mubr.f32.mxu0 0.0
  %v2278 = vand.u32 %v184, 4294901760
  %v2279 = vsub.f32 %v184, %v2278
  %v2280 = vand.u32 %v2279, 4294901760
  %2281 = vmatmul.mubr.f32.gmra.mrb[0].mxu0 %v2280
  %v2282 = vpop.f32.mrb[0].mxu0
  %v2283 = vadd.f32 %v1738, %v2282
  %v2284 = vpop.f32.mrb[0].mxu0
  %2285 = vmatprep.mubr.f32.mxu0 0.0
  %v2286 = vand.u32 %v187, 4294901760
  %v2287 = vsub.f32 %v187, %v2286
  %v2288 = vand.u32 %v2287, 4294901760
  %2289 = vmatmul.mubr.f32.gmra.mrb[0].mxu0 %v2288
  %v2290 = vpop.f32.mrb[0].mxu0
  %v2291 = vadd.f32 %v1745, %v2290
  %v2292 = vpop.f32.mrb[0].mxu0
  %2293 = vmatprep.mubr.f32.mxu0 0.0
  %v2294 = vand.u32 %v190, 4294901760
  %v2295 = vsub.f32 %v190, %v2294
  %v2296 = vand.u32 %v2295, 4294901760
  %2297 = vmatmul.mubr.f32.gmra.mrb[0].mxu0 %v2296
  %v2298 = vpop.f32.mrb[0].mxu0
  %v2299 = vadd.f32 %v1752, %v2298
  %v2300 = vpop.f32.mrb[0].mxu0
  %2301 = vmatprep.mubr.f32.mxu0 0.0
  %v2302 = vand.u32 %v193, 4294901760
  %v2303 = vsub.f32 %v193, %v2302
  %v2304 = vand.u32 %v2303, 4294901760
  %2305 = vmatmul.mubr.f32.gmra.mrb[0].mxu0 %v2304
  %v2306 = vpop.f32.mrb[0].mxu0
  %v2307 = vadd.f32 %v1759, %v2306
  %v2308 = vpop.f32.mrb[0].mxu0
  %2309 = vmatprep.mubr.f32.mxu0 0.0
  %v2310 = vand.u32 %v196, 4294901760
  %v2311 = vsub.f32 %v196, %v2310
  %v2312 = vand.u32 %v2311, 4294901760
  %2313 = vmatmul.mubr.f32.gmra.mrb[0].mxu0 %v2312
  %v2314 = vpop.f32.mrb[0].mxu0
  %v2315 = vadd.f32 %v1766, %v2314
  %v2316 = vpop.f32.mrb[0].mxu0
  %2317 = vmatprep.mubr.f32.mxu0 0.0
  %v2318 = vand.u32 %v199, 4294901760
  %v2319 = vsub.f32 %v199, %v2318
  %v2320 = vand.u32 %v2319, 4294901760
  %2321 = vmatmul.mubr.f32.gmra.mrb[0].mxu0 %v2320
  %v2322 = vpop.f32.mrb[0].mxu0
  %v2323 = vadd.f32 %v1773, %v2322
  %v2324 = vpop.f32.mrb[0].mxu0
  %2325 = vmatprep.mubr.f32.mxu0 0.0
  %v2326 = vand.u32 %v202, 4294901760
  %v2327 = vsub.f32 %v202, %v2326
  %v2328 = vand.u32 %v2327, 4294901760
  %2329 = vmatmul.mubr.f32.gmra.mrb[0].mxu0 %v2328
  %v2330 = vpop.f32.mrb[0].mxu0
  %v2331 = vadd.f32 %v1780, %v2330
  %v2332 = vpop.f32.mrb[0].mxu0
  %2333 = vmatprep.mubr.f32.mxu0 0.0
  %v2334 = vand.u32 %v205, 4294901760
  %v2335 = vsub.f32 %v205, %v2334
  %v2336 = vand.u32 %v2335, 4294901760
  %2337 = vmatmul.mubr.f32.gmra.mrb[0].mxu0 %v2336
  %v2338 = vpop.f32.mrb[0].mxu0
  %v2339 = vadd.f32 %v1787, %v2338
  %v2340 = vpop.f32.mrb[0].mxu0
  %2341 = vmatprep.mubr.f32.mxu0 0.0
  %v2342 = vand.u32 %v208, 4294901760
  %v2343 = vsub.f32 %v208, %v2342
  %v2344 = vand.u32 %v2343, 4294901760
  %2345 = vmatmul.mubr.f32.gmra.mrb[0].mxu0 %v2344
  %v2346 = vpop.f32.mrb[0].mxu0
  %v2347 = vadd.f32 %v1794, %v2346
  %v2348 = vpop.f32.mrb[0].mxu0
  %2349 = vmatprep.mubr.f32.mxu0 0.0
  %v2350 = vand.u32 %v211, 4294901760
  %v2351 = vsub.f32 %v211, %v2350
  %v2352 = vand.u32 %v2351, 4294901760
  %2353 = vmatmul.mubr.f32.gmra.mrb[0].mxu0 %v2352
  %v2354 = vpop.f32.mrb[0].mxu0
  %v2355 = vadd.f32 %v1801, %v2354
  %v2356 = vpop.f32.mrb[0].mxu0
  %2357 = vmatprep.mubr.f32.mxu0 0.0
  %v2358 = vand.u32 %v214, 4294901760
  %v2359 = vsub.f32 %v214, %v2358
  %v2360 = vand.u32 %v2359, 4294901760
  %2361 = vmatmul.mubr.f32.gmra.mrb[0].mxu0 %v2360
  %v2362 = vpop.f32.mrb[0].mxu0
  %v2363 = vadd.f32 %v1808, %v2362
  %v2364 = vpop.f32.mrb[0].mxu0
  %2365 = vmatprep.mubr.f32.mxu0 0.0
  %v2366 = vand.u32 %v217, 4294901760
  %v2367 = vsub.f32 %v217, %v2366
  %v2368 = vand.u32 %v2367, 4294901760
  %2369 = vmatmul.mubr.f32.gmra.mrb[0].mxu0 %v2368
  %v2370 = vpop.f32.mrb[0].mxu0
  %v2371 = vadd.f32 %v1815, %v2370
  %v2372 = vpop.f32.mrb[0].mxu0
  %2373 = vmatprep.mubr.f32.mxu0 0.0
  %v2374 = vand.u32 %v220, 4294901760
  %v2375 = vsub.f32 %v220, %v2374
  %v2376 = vand.u32 %v2375, 4294901760
  %2377 = vmatmul.mubr.f32.gmra.mrb[0].mxu0 %v2376
  %v2378 = vpop.f32.mrb[0].mxu0
  %v2379 = vadd.f32 %v1822, %v2378
  %v2380 = vpop.f32.mrb[0].mxu0
  %2381 = vmatprep.mubr.f32.mxu0 0.0
  %v2382 = vand.u32 %v223, 4294901760
  %v2383 = vsub.f32 %v223, %v2382
  %v2384 = vand.u32 %v2383, 4294901760
  %2385 = vmatmul.mubr.f32.gmra.mrb[0].mxu0 %v2384
  %v2386 = vpop.f32.mrb[0].mxu0
  %v2387 = vadd.f32 %v1829, %v2386
  %v2388 = vpop.f32.mrb[0].mxu0
  %2389 = vmatprep.mubr.f32.mxu0 0.0
  %v2390 = vand.u32 %v226, 4294901760
  %v2391 = vsub.f32 %v226, %v2390
  %v2392 = vand.u32 %v2391, 4294901760
  %2393 = vmatmul.mubr.f32.gmra.mrb[0].mxu0 %v2392
  %v2394 = vpop.f32.mrb[0].mxu0
  %v2395 = vadd.f32 %v1836, %v2394
  %v2396 = vpop.f32.mrb[0].mxu0
  %2397 = vmatprep.mubr.f32.mxu0 0.0
  %v2398 = vand.u32 %v229, 4294901760
  %v2399 = vsub.f32 %v229, %v2398
  %v2400 = vand.u32 %v2399, 4294901760
  %2401 = vmatmul.mubr.f32.gmra.mrb[0].mxu0 %v2400
  %v2402 = vpop.f32.mrb[0].mxu0
  %v2403 = vadd.f32 %v1843, %v2402
  %v2404 = vpop.f32.mrb[0].mxu0
  %2405 = vmatprep.mubr.f32.mxu0 0.0
  %v2406 = vand.u32 %v232, 4294901760
  %v2407 = vsub.f32 %v232, %v2406
  %v2408 = vand.u32 %v2407, 4294901760
  %2409 = vmatmul.mubr.f32.gmra.mrb[0].mxu0 %v2408
  %v2410 = vpop.f32.mrb[0].mxu0
  %v2411 = vadd.f32 %v1850, %v2410
  %v2412 = vpop.f32.mrb[0].mxu0
  %2413 = vmatprep.mubr.f32.mxu0 0.0
  %v2414 = vand.u32 %v235, 4294901760
  %v2415 = vsub.f32 %v235, %v2414
  %v2416 = vand.u32 %v2415, 4294901760
  %2417 = vmatmul.mubr.f32.gmra.mrb[0].mxu0 %v2416
  %v2418 = vpop.f32.mrb[0].mxu0
  %v2419 = vadd.f32 %v1857, %v2418
  %v2420 = vpop.f32.mrb[0].mxu0
  %2421 = vmatprep.mubr.f32.mxu0 0.0
  %v2422 = vand.u32 %v238, 4294901760
  %v2423 = vsub.f32 %v238, %v2422
  %v2424 = vand.u32 %v2423, 4294901760
  %2425 = vmatmul.mubr.f32.gmra.mrb[0].mxu0 %v2424
  %v2426 = vpop.f32.mrb[0].mxu0
  %v2427 = vadd.f32 %v1864, %v2426
  %v2428 = vpop.f32.mrb[0].mxu0
  %2429 = vmatprep.mubr.f32.mxu0 0.0
  %v2430 = vand.u32 %v241, 4294901760
  %v2431 = vsub.f32 %v241, %v2430
  %v2432 = vand.u32 %v2431, 4294901760
  %2433 = vmatmul.mubr.f32.gmra.mrb[0].mxu0 %v2432
  %v2434 = vpop.f32.mrb[0].mxu0
  %v2435 = vadd.f32 %v1871, %v2434
  %v2436 = vpop.f32.mrb[0].mxu0
  %2437 = vmatprep.mubr.f32.mxu0 0.0
  %v2438 = vand.u32 %v244, 4294901760
  %v2439 = vsub.f32 %v244, %v2438
  %v2440 = vand.u32 %v2439, 4294901760
  %2441 = vmatmul.mubr.f32.gmra.mrb[0].mxu0 %v2440
  %v2442 = vpop.f32.mrb[0].mxu0
  %v2443 = vadd.f32 %v1878, %v2442
  %v2444 = vpop.f32.mrb[0].mxu0
  %2445 = vmatprep.mubr.f32.mxu0 0.0
  %v2446 = vand.u32 %v247, 4294901760
  %v2447 = vsub.f32 %v247, %v2446
  %v2448 = vand.u32 %v2447, 4294901760
  %2449 = vmatmul.mubr.f32.gmra.mrb[0].mxu0 %v2448
  %v2450 = vpop.f32.mrb[0].mxu0
  %v2451 = vadd.f32 %v1885, %v2450
  %v2452 = vpop.f32.mrb[0].mxu0
  %2453 = vmatprep.mubr.f32.mxu0 0.0
  %v2454 = vand.u32 %v250, 4294901760
  %v2455 = vsub.f32 %v250, %v2454
  %v2456 = vand.u32 %v2455, 4294901760
  %2457 = vmatmul.mubr.f32.gmra.mrb[0].mxu0 %v2456
  %v2458 = vpop.f32.mrb[0].mxu0
  %v2459 = vadd.f32 %v1892, %v2458
  %v2460 = vpop.f32.mrb[0].mxu0
  %2461 = vmatprep.mubr.f32.mxu0 0.0
  %v2462 = vand.u32 %v253, 4294901760
  %v2463 = vsub.f32 %v253, %v2462
  %v2464 = vand.u32 %v2463, 4294901760
  %2465 = vmatmul.mubr.f32.gmra.mrb[0].mxu0 %v2464
  %v2466 = vpop.f32.mrb[0].mxu0
  %v2467 = vadd.f32 %v1899, %v2466
  %v2468 = vpop.f32.mrb[0].mxu0
  %2469 = vmatprep.mubr.f32.mxu0 0.0
  %v2470 = vand.u32 %v256, 4294901760
  %v2471 = vsub.f32 %v256, %v2470
  %v2472 = vand.u32 %v2471, 4294901760
  %2473 = vmatmul.mubr.f32.gmra.mrb[0].mxu0 %v2472
  %v2474 = vpop.f32.mrb[0].mxu0
  %v2475 = vadd.f32 %v1906, %v2474
  %v2476 = vpop.f32.mrb[0].mxu0
  %2477 = vmatprep.mubr.f32.mxu0 0.0
  %v2478 = vand.u32 %v259, 4294901760
  %v2479 = vsub.f32 %v259, %v2478
  %v2480 = vand.u32 %v2479, 4294901760
  %2481 = vmatmul.mubr.f32.gmra.mrb[0].mxu0 %v2480
  %v2482 = vpop.f32.mrb[0].mxu0
  %v2483 = vadd.f32 %v1913, %v2482
  %v2484 = vpop.f32.mrb[0].mxu0
  %2485 = vmatprep.mubr.f32.mxu0 0.0
  %v2486 = vand.u32 %v262, 4294901760
  %v2487 = vsub.f32 %v262, %v2486
  %v2488 = vand.u32 %v2487, 4294901760
  %2489 = vmatmul.mubr.f32.gmra.mrb[0].mxu0 %v2488
  %v2490 = vpop.f32.mrb[0].mxu0
  %v2491 = vadd.f32 %v1920, %v2490
  %v2492 = vpop.f32.mrb[0].mxu0
  %2493 = vmatprep.mubr.f32.mxu0 0.0
  %v2494 = vand.u32 %v265, 4294901760
  %v2495 = vsub.f32 %v265, %v2494
  %v2496 = vand.u32 %v2495, 4294901760
  %2497 = vmatmul.mubr.f32.gmra.mrb[0].mxu0 %v2496
  %v2498 = vpop.f32.mrb[0].mxu0
  %v2499 = vadd.f32 %v1927, %v2498
  %v2500 = vpop.f32.mrb[0].mxu0
  %2501 = vmatprep.mubr.f32.mxu0 0.0
  %v2502 = vand.u32 %v268, 4294901760
  %v2503 = vsub.f32 %v268, %v2502
  %v2504 = vand.u32 %v2503, 4294901760
  %2505 = vmatmul.mubr.f32.gmra.mrb[0].mxu0 %v2504
  %v2506 = vpop.f32.mrb[0].mxu0
  %v2507 = vadd.f32 %v1934, %v2506
  %v2508 = vpop.f32.mrb[0].mxu0
  %2509 = vmatprep.mubr.f32.mxu0 0.0
  %v2510 = vand.u32 %v271, 4294901760
  %v2511 = vsub.f32 %v271, %v2510
  %v2512 = vand.u32 %v2511, 4294901760
  %2513 = vmatmul.mubr.f32.gmra.mrb[0].mxu0 %v2512
  %v2514 = vpop.f32.mrb[0].mxu0
  %v2515 = vadd.f32 %v1941, %v2514
  %v2516 = vpop.f32.mrb[0].mxu0
  %2517 = vmatprep.mubr.f32.mxu0 0.0
  %v2518 = vand.u32 %v274, 4294901760
  %v2519 = vsub.f32 %v274, %v2518
  %v2520 = vand.u32 %v2519, 4294901760
  %2521 = vmatmul.mubr.f32.gmra.mrb[0].mxu0 %v2520
  %v2522 = vpop.f32.mrb[0].mxu0
  %v2523 = vadd.f32 %v1948, %v2522
  %v2524 = vpop.f32.mrb[0].mxu0
  %2525 = vmatprep.mubr.f32.mxu0 0.0
  %v2526 = vand.u32 %v277, 4294901760
  %v2527 = vsub.f32 %v277, %v2526
  %v2528 = vand.u32 %v2527, 4294901760
  %2529 = vmatmul.mubr.f32.gmra.mrb[0].mxu0 %v2528
  %v2530 = vpop.f32.mrb[0].mxu0
  %v2531 = vadd.f32 %v1955, %v2530
  %v2532 = vpop.f32.mrb[0].mxu0
  %2533 = vmatprep.mubr.f32.mxu0 0.0
  %v2534 = vand.u32 %v280, 4294901760
  %v2535 = vsub.f32 %v280, %v2534
  %v2536 = vand.u32 %v2535, 4294901760
  %2537 = vmatmul.mubr.f32.gmra.mrb[0].mxu0 %v2536
  %v2538 = vpop.f32.mrb[0].mxu0
  %v2539 = vadd.f32 %v1962, %v2538
  %v2540 = vpop.f32.mrb[0].mxu0
  %2541 = vmatprep.mubr.f32.mxu0 0.0
  %v2542 = vand.u32 %v283, 4294901760
  %v2543 = vsub.f32 %v283, %v2542
  %v2544 = vand.u32 %v2543, 4294901760
  %2545 = vmatmul.mubr.f32.gmra.mrb[0].mxu0 %v2544
  %v2546 = vpop.f32.mrb[0].mxu0
  %v2547 = vadd.f32 %v1969, %v2546
  %v2548 = vpop.f32.mrb[0].mxu0
  %2549 = vmatprep.mubr.f32.mxu0 0.0
  %v2550 = vand.u32 %v286, 4294901760
  %v2551 = vsub.f32 %v286, %v2550
  %v2552 = vand.u32 %v2551, 4294901760
  %2553 = vmatmul.mubr.f32.gmra.mrb[0].mxu0 %v2552
  %v2554 = vpop.f32.mrb[0].mxu0
  %v2555 = vadd.f32 %v1976, %v2554
  %v2556 = vpop.f32.mrb[0].mxu0
  %2557 = vmatprep.mubr.f32.mxu0 0.0
  %v2558 = vand.u32 %v289, 4294901760
  %v2559 = vsub.f32 %v289, %v2558
  %v2560 = vand.u32 %v2559, 4294901760
  %2561 = vmatmul.mubr.f32.gmra.mrb[0].mxu0 %v2560
  %v2562 = vpop.f32.mrb[0].mxu0
  %v2563 = vadd.f32 %v1983, %v2562
  %v2564 = vpop.f32.mrb[0].mxu0
  %2565 = vmatprep.mubr.f32.mxu0 0.0
  %v2566 = vand.u32 %v292, 4294901760
  %v2567 = vsub.f32 %v292, %v2566
  %v2568 = vand.u32 %v2567, 4294901760
  %2569 = vmatmul.mubr.f32.gmra.mrb[0].mxu0 %v2568
  %v2570 = vpop.f32.mrb[0].mxu0
  %v2571 = vadd.f32 %v1990, %v2570
  %v2572 = vpop.f32.mrb[0].mxu0
  %2573 = vdwg.mxu0
  %2574 = vmatprep.subr.mxu0 0.0
  %v2575 = vand.u32 %v90, 4294901760
  %v2576 = vsub.f32 %v90, %v2575
  %v2577 = vand.u32 %v2576, 4294901760
  %2578 = vmatpush1.msra.mxu0 %v2577
  %2579 = vmatprep.subr.mxu0 0.0
  %v2580 = vand.u32 %v91, 4294901760
  %v2581 = vsub.f32 %v91, %v2580
  %v2582 = vand.u32 %v2581, 4294901760
  %2583 = vmatpush1.msra.mxu0 %v2582
  %2584 = vmatprep.subr.mxu0 0.0
  %v2585 = vand.u32 %v92, 4294901760
  %v2586 = vsub.f32 %v92, %v2585
  %v2587 = vand.u32 %v2586, 4294901760
  %2588 = vmatpush1.msra.mxu0 %v2587
  %2589 = vmatprep.subr.mxu0 0.0
  %v2590 = vand.u32 %v93, 4294901760
  %v2591 = vsub.f32 %v93, %v2590
  %v2592 = vand.u32 %v2591, 4294901760
  %2593 = vmatpush1.msra.mxu0 %v2592
  %2594 = vmatprep.subr.mxu0 0.0
  %2595 = vmatpush1.msra.mxu0 0.0
  %2596 = vmatprep.subr.mxu0 0.0
  %2597 = vmatpush1.msra.mxu0 0.0
  %2598 = vmatprep.subr.mxu0 0.0
  %2599 = vmatpush1.msra.mxu0 0.0
  %2600 = vmatprep.subr.mxu0 0.0
  %2601 = vmatpush1.msra.mxu0 0.0
  %2602 = vmatprep.subr.mxu0 0.0
  %2603 = vmatpush1.msra.mxu0 0.0
  %2604 = vmatprep.subr.mxu0 0.0
  %2605 = vmatpush1.msra.mxu0 0.0
  %2606 = vmatprep.subr.mxu0 0.0
  %2607 = vmatpush1.msra.mxu0 0.0
  %2608 = vmatprep.subr.mxu0 0.0
  %2609 = vmatpush1.msra.mxu0 0.0
  %2610 = vmatprep.subr.mxu0 0.0
  %2611 = vmatpush1.msra.mxu0 0.0
  %2612 = vmatprep.subr.mxu0 0.0
  %2613 = vmatpush1.msra.mxu0 0.0
  %2614 = vmatprep.subr.mxu0 0.0
  %2615 = vmatpush1.msra.mxu0 0.0
  %2616 = vmatprep.subr.mxu0 0.0
  %2617 = vmatpush1.msra.mxu0 0.0
  %2618 = vmatprep.subr.mxu0 0.0
  %2619 = vmatpush1.msra.mxu0 0.0
  %2620 = vmatprep.subr.mxu0 0.0
  %2621 = vmatpush1.msra.mxu0 0.0
  %2622 = vmatprep.subr.mxu0 0.0
  %2623 = vmatpush1.msra.mxu0 0.0
  %2624 = vmatprep.subr.mxu0 0.0
  %2625 = vmatpush1.msra.mxu0 0.0
  %2626 = vmatprep.subr.mxu0 0.0
  %2627 = vmatpush1.msra.mxu0 0.0
  %2628 = vmatprep.subr.mxu0 0.0
  %2629 = vmatpush1.msra.mxu0 0.0
  %2630 = vmatprep.subr.mxu0 0.0
  %2631 = vmatpush1.msra.mxu0 0.0
  %2632 = vmatprep.subr.mxu0 0.0
  %2633 = vmatpush1.msra.mxu0 0.0
  %2634 = vmatprep.subr.mxu0 0.0
  %2635 = vmatpush1.msra.mxu0 0.0
  %2636 = vmatprep.subr.mxu0 0.0
  %2637 = vmatpush1.msra.mxu0 0.0
  %2638 = vmatprep.subr.mxu0 0.0
  %2639 = vmatpush1.msra.mxu0 0.0
  %2640 = vmatprep.subr.mxu0 0.0
  %2641 = vmatpush1.msra.mxu0 0.0
  %2642 = vmatprep.subr.mxu0 0.0
  %2643 = vmatpush1.msra.mxu0 0.0
  %2644 = vmatprep.subr.mxu0 0.0
  %2645 = vmatpush1.msra.mxu0 0.0
  %2646 = vmatprep.subr.mxu0 0.0
  %2647 = vmatpush1.msra.mxu0 0.0
  %2648 = vmatprep.subr.mxu0 0.0
  %2649 = vmatpush1.msra.mxu0 0.0
  %2650 = vmatprep.mubr.f32.mxu0 0.0
  %v2651 = vand.u32 %v103, 4294901760
  %2652 = vmatmul.mubr.f32.gmra.mrb[0].mxu0 %v2651
  %v2653 = vpop.f32.mrb[0].mxu0
  %v2654 = vadd.f32 %v2067, %v2653
  %v2655 = vpop.f32.mrb[0].mxu0
  %2656 = vmatprep.mubr.f32.mxu0 0.0
  %v2657 = vand.u32 %v106, 4294901760
  %2658 = vmatmul.mubr.f32.gmra.mrb[0].mxu0 %v2657
  %v2659 = vpop.f32.mrb[0].mxu0
  %v2660 = vadd.f32 %v2075, %v2659
  %v2661 = vpop.f32.mrb[0].mxu0
  %2662 = vmatprep.mubr.f32.mxu0 0.0
  %v2663 = vand.u32 %v109, 4294901760
  %2664 = vmatmul.mubr.f32.gmra.mrb[0].mxu0 %v2663
  %v2665 = vpop.f32.mrb[0].mxu0
  %v2666 = vadd.f32 %v2083, %v2665
  %v2667 = vpop.f32.mrb[0].mxu0
  %2668 = vmatprep.mubr.f32.mxu0 0.0
  %v2669 = vand.u32 %v112, 4294901760
  %2670 = vmatmul.mubr.f32.gmra.mrb[0].mxu0 %v2669
  %v2671 = vpop.f32.mrb[0].mxu0
  %v2672 = vadd.f32 %v2091, %v2671
  %v2673 = vpop.f32.mrb[0].mxu0
  %2674 = vmatprep.mubr.f32.mxu0 0.0
  %v2675 = vand.u32 %v115, 4294901760
  %2676 = vmatmul.mubr.f32.gmra.mrb[0].mxu0 %v2675
  %v2677 = vpop.f32.mrb[0].mxu0
  %v2678 = vadd.f32 %v2099, %v2677
  %v2679 = vpop.f32.mrb[0].mxu0
  %2680 = vmatprep.mubr.f32.mxu0 0.0
  %v2681 = vand.u32 %v118, 4294901760
  %2682 = vmatmul.mubr.f32.gmra.mrb[0].mxu0 %v2681
  %v2683 = vpop.f32.mrb[0].mxu0
  %v2684 = vadd.f32 %v2107, %v2683
  %v2685 = vpop.f32.mrb[0].mxu0
  %2686 = vmatprep.mubr.f32.mxu0 0.0
  %v2687 = vand.u32 %v121, 4294901760
  %2688 = vmatmul.mubr.f32.gmra.mrb[0].mxu0 %v2687
  %v2689 = vpop.f32.mrb[0].mxu0
  %v2690 = vadd.f32 %v2115, %v2689
  %v2691 = vpop.f32.mrb[0].mxu0
  %2692 = vmatprep.mubr.f32.mxu0 0.0
  %v2693 = vand.u32 %v124, 4294901760
  %2694 = vmatmul.mubr.f32.gmra.mrb[0].mxu0 %v2693
  %v2695 = vpop.f32.mrb[0].mxu0
  %v2696 = vadd.f32 %v2123, %v2695
  %v2697 = vpop.f32.mrb[0].mxu0
  %2698 = vmatprep.mubr.f32.mxu0 0.0
  %v2699 = vand.u32 %v127, 4294901760
  %2700 = vmatmul.mubr.f32.gmra.mrb[0].mxu0 %v2699
  %v2701 = vpop.f32.mrb[0].mxu0
  %v2702 = vadd.f32 %v2131, %v2701
  %v2703 = vpop.f32.mrb[0].mxu0
  %2704 = vmatprep.mubr.f32.mxu0 0.0
  %v2705 = vand.u32 %v130, 4294901760
  %2706 = vmatmul.mubr.f32.gmra.mrb[0].mxu0 %v2705
  %v2707 = vpop.f32.mrb[0].mxu0
  %v2708 = vadd.f32 %v2139, %v2707
  %v2709 = vpop.f32.mrb[0].mxu0
  %2710 = vmatprep.mubr.f32.mxu0 0.0
  %v2711 = vand.u32 %v133, 4294901760
  %2712 = vmatmul.mubr.f32.gmra.mrb[0].mxu0 %v2711
  %v2713 = vpop.f32.mrb[0].mxu0
  %v2714 = vadd.f32 %v2147, %v2713
  %v2715 = vpop.f32.mrb[0].mxu0
  %2716 = vmatprep.mubr.f32.mxu0 0.0
  %v2717 = vand.u32 %v136, 4294901760
  %2718 = vmatmul.mubr.f32.gmra.mrb[0].mxu0 %v2717
  %v2719 = vpop.f32.mrb[0].mxu0
  %v2720 = vadd.f32 %v2155, %v2719
  %v2721 = vpop.f32.mrb[0].mxu0
  %2722 = vmatprep.mubr.f32.mxu0 0.0
  %v2723 = vand.u32 %v139, 4294901760
  %2724 = vmatmul.mubr.f32.gmra.mrb[0].mxu0 %v2723
  %v2725 = vpop.f32.mrb[0].mxu0
  %v2726 = vadd.f32 %v2163, %v2725
  %v2727 = vpop.f32.mrb[0].mxu0
  %2728 = vmatprep.mubr.f32.mxu0 0.0
  %v2729 = vand.u32 %v142, 4294901760
  %2730 = vmatmul.mubr.f32.gmra.mrb[0].mxu0 %v2729
  %v2731 = vpop.f32.mrb[0].mxu0
  %v2732 = vadd.f32 %v2171, %v2731
  %v2733 = vpop.f32.mrb[0].mxu0
  %2734 = vmatprep.mubr.f32.mxu0 0.0
  %v2735 = vand.u32 %v145, 4294901760
  %2736 = vmatmul.mubr.f32.gmra.mrb[0].mxu0 %v2735
  %v2737 = vpop.f32.mrb[0].mxu0
  %v2738 = vadd.f32 %v2179, %v2737
  %v2739 = vpop.f32.mrb[0].mxu0
  %2740 = vmatprep.mubr.f32.mxu0 0.0
  %v2741 = vand.u32 %v148, 4294901760
  %2742 = vmatmul.mubr.f32.gmra.mrb[0].mxu0 %v2741
  %v2743 = vpop.f32.mrb[0].mxu0
  %v2744 = vadd.f32 %v2187, %v2743
  %v2745 = vpop.f32.mrb[0].mxu0
  %2746 = vmatprep.mubr.f32.mxu0 0.0
  %v2747 = vand.u32 %v151, 4294901760
  %2748 = vmatmul.mubr.f32.gmra.mrb[0].mxu0 %v2747
  %v2749 = vpop.f32.mrb[0].mxu0
  %v2750 = vadd.f32 %v2195, %v2749
  %v2751 = vpop.f32.mrb[0].mxu0
  %2752 = vmatprep.mubr.f32.mxu0 0.0
  %v2753 = vand.u32 %v154, 4294901760
  %2754 = vmatmul.mubr.f32.gmra.mrb[0].mxu0 %v2753
  %v2755 = vpop.f32.mrb[0].mxu0
  %v2756 = vadd.f32 %v2203, %v2755
  %v2757 = vpop.f32.mrb[0].mxu0
  %2758 = vmatprep.mubr.f32.mxu0 0.0
  %v2759 = vand.u32 %v157, 4294901760
  %2760 = vmatmul.mubr.f32.gmra.mrb[0].mxu0 %v2759
  %v2761 = vpop.f32.mrb[0].mxu0
  %v2762 = vadd.f32 %v2211, %v2761
  %v2763 = vpop.f32.mrb[0].mxu0
  %2764 = vmatprep.mubr.f32.mxu0 0.0
  %v2765 = vand.u32 %v160, 4294901760
  %2766 = vmatmul.mubr.f32.gmra.mrb[0].mxu0 %v2765
  %v2767 = vpop.f32.mrb[0].mxu0
  %v2768 = vadd.f32 %v2219, %v2767
  %v2769 = vpop.f32.mrb[0].mxu0
  %2770 = vmatprep.mubr.f32.mxu0 0.0
  %v2771 = vand.u32 %v163, 4294901760
  %2772 = vmatmul.mubr.f32.gmra.mrb[0].mxu0 %v2771
  %v2773 = vpop.f32.mrb[0].mxu0
  %v2774 = vadd.f32 %v2227, %v2773
  %v2775 = vpop.f32.mrb[0].mxu0
  %2776 = vmatprep.mubr.f32.mxu0 0.0
  %v2777 = vand.u32 %v166, 4294901760
  %2778 = vmatmul.mubr.f32.gmra.mrb[0].mxu0 %v2777
  %v2779 = vpop.f32.mrb[0].mxu0
  %v2780 = vadd.f32 %v2235, %v2779
  %v2781 = vpop.f32.mrb[0].mxu0
  %2782 = vmatprep.mubr.f32.mxu0 0.0
  %v2783 = vand.u32 %v169, 4294901760
  %2784 = vmatmul.mubr.f32.gmra.mrb[0].mxu0 %v2783
  %v2785 = vpop.f32.mrb[0].mxu0
  %v2786 = vadd.f32 %v2243, %v2785
  %v2787 = vpop.f32.mrb[0].mxu0
  %2788 = vmatprep.mubr.f32.mxu0 0.0
  %v2789 = vand.u32 %v172, 4294901760
  %2790 = vmatmul.mubr.f32.gmra.mrb[0].mxu0 %v2789
  %v2791 = vpop.f32.mrb[0].mxu0
  %v2792 = vadd.f32 %v2251, %v2791
  %v2793 = vpop.f32.mrb[0].mxu0
  %2794 = vmatprep.mubr.f32.mxu0 0.0
  %v2795 = vand.u32 %v175, 4294901760
  %2796 = vmatmul.mubr.f32.gmra.mrb[0].mxu0 %v2795
  %v2797 = vpop.f32.mrb[0].mxu0
  %v2798 = vadd.f32 %v2259, %v2797
  %v2799 = vpop.f32.mrb[0].mxu0
  %2800 = vmatprep.mubr.f32.mxu0 0.0
  %v2801 = vand.u32 %v178, 4294901760
  %2802 = vmatmul.mubr.f32.gmra.mrb[0].mxu0 %v2801
  %v2803 = vpop.f32.mrb[0].mxu0
  %v2804 = vadd.f32 %v2267, %v2803
  %v2805 = vpop.f32.mrb[0].mxu0
  %2806 = vmatprep.mubr.f32.mxu0 0.0
  %v2807 = vand.u32 %v181, 4294901760
  %2808 = vmatmul.mubr.f32.gmra.mrb[0].mxu0 %v2807
  %v2809 = vpop.f32.mrb[0].mxu0
  %v2810 = vadd.f32 %v2275, %v2809
  %v2811 = vpop.f32.mrb[0].mxu0
  %2812 = vmatprep.mubr.f32.mxu0 0.0
  %v2813 = vand.u32 %v184, 4294901760
  %2814 = vmatmul.mubr.f32.gmra.mrb[0].mxu0 %v2813
  %v2815 = vpop.f32.mrb[0].mxu0
  %v2816 = vadd.f32 %v2283, %v2815
  %v2817 = vpop.f32.mrb[0].mxu0
  %2818 = vmatprep.mubr.f32.mxu0 0.0
  %v2819 = vand.u32 %v187, 4294901760
  %2820 = vmatmul.mubr.f32.gmra.mrb[0].mxu0 %v2819
  %v2821 = vpop.f32.mrb[0].mxu0
  %v2822 = vadd.f32 %v2291, %v2821
  %v2823 = vpop.f32.mrb[0].mxu0
  %2824 = vmatprep.mubr.f32.mxu0 0.0
  %v2825 = vand.u32 %v190, 4294901760
  %2826 = vmatmul.mubr.f32.gmra.mrb[0].mxu0 %v2825
  %v2827 = vpop.f32.mrb[0].mxu0
  %v2828 = vadd.f32 %v2299, %v2827
  %v2829 = vpop.f32.mrb[0].mxu0
  %2830 = vmatprep.mubr.f32.mxu0 0.0
  %v2831 = vand.u32 %v193, 4294901760
  %2832 = vmatmul.mubr.f32.gmra.mrb[0].mxu0 %v2831
  %v2833 = vpop.f32.mrb[0].mxu0
  %v2834 = vadd.f32 %v2307, %v2833
  %v2835 = vpop.f32.mrb[0].mxu0
  %2836 = vmatprep.mubr.f32.mxu0 0.0
  %v2837 = vand.u32 %v196, 4294901760
  %2838 = vmatmul.mubr.f32.gmra.mrb[0].mxu0 %v2837
  %v2839 = vpop.f32.mrb[0].mxu0
  %v2840 = vadd.f32 %v2315, %v2839
  %v2841 = vpop.f32.mrb[0].mxu0
  %2842 = vmatprep.mubr.f32.mxu0 0.0
  %v2843 = vand.u32 %v199, 4294901760
  %2844 = vmatmul.mubr.f32.gmra.mrb[0].mxu0 %v2843
  %v2845 = vpop.f32.mrb[0].mxu0
  %v2846 = vadd.f32 %v2323, %v2845
  %v2847 = vpop.f32.mrb[0].mxu0
  %2848 = vmatprep.mubr.f32.mxu0 0.0
  %v2849 = vand.u32 %v202, 4294901760
  %2850 = vmatmul.mubr.f32.gmra.mrb[0].mxu0 %v2849
  %v2851 = vpop.f32.mrb[0].mxu0
  %v2852 = vadd.f32 %v2331, %v2851
  %v2853 = vpop.f32.mrb[0].mxu0
  %2854 = vmatprep.mubr.f32.mxu0 0.0
  %v2855 = vand.u32 %v205, 4294901760
  %2856 = vmatmul.mubr.f32.gmra.mrb[0].mxu0 %v2855
  %v2857 = vpop.f32.mrb[0].mxu0
  %v2858 = vadd.f32 %v2339, %v2857
  %v2859 = vpop.f32.mrb[0].mxu0
  %2860 = vmatprep.mubr.f32.mxu0 0.0
  %v2861 = vand.u32 %v208, 4294901760
  %2862 = vmatmul.mubr.f32.gmra.mrb[0].mxu0 %v2861
  %v2863 = vpop.f32.mrb[0].mxu0
  %v2864 = vadd.f32 %v2347, %v2863
  %v2865 = vpop.f32.mrb[0].mxu0
  %2866 = vmatprep.mubr.f32.mxu0 0.0
  %v2867 = vand.u32 %v211, 4294901760
  %2868 = vmatmul.mubr.f32.gmra.mrb[0].mxu0 %v2867
  %v2869 = vpop.f32.mrb[0].mxu0
  %v2870 = vadd.f32 %v2355, %v2869
  %v2871 = vpop.f32.mrb[0].mxu0
  %2872 = vmatprep.mubr.f32.mxu0 0.0
  %v2873 = vand.u32 %v214, 4294901760
  %2874 = vmatmul.mubr.f32.gmra.mrb[0].mxu0 %v2873
  %v2875 = vpop.f32.mrb[0].mxu0
  %v2876 = vadd.f32 %v2363, %v2875
  %v2877 = vpop.f32.mrb[0].mxu0
  %2878 = vmatprep.mubr.f32.mxu0 0.0
  %v2879 = vand.u32 %v217, 4294901760
  %2880 = vmatmul.mubr.f32.gmra.mrb[0].mxu0 %v2879
  %v2881 = vpop.f32.mrb[0].mxu0
  %v2882 = vadd.f32 %v2371, %v2881
  %v2883 = vpop.f32.mrb[0].mxu0
  %2884 = vmatprep.mubr.f32.mxu0 0.0
  %v2885 = vand.u32 %v220, 4294901760
  %2886 = vmatmul.mubr.f32.gmra.mrb[0].mxu0 %v2885
  %v2887 = vpop.f32.mrb[0].mxu0
  %v2888 = vadd.f32 %v2379, %v2887
  %v2889 = vpop.f32.mrb[0].mxu0
  %2890 = vmatprep.mubr.f32.mxu0 0.0
  %v2891 = vand.u32 %v223, 4294901760
  %2892 = vmatmul.mubr.f32.gmra.mrb[0].mxu0 %v2891
  %v2893 = vpop.f32.mrb[0].mxu0
  %v2894 = vadd.f32 %v2387, %v2893
  %v2895 = vpop.f32.mrb[0].mxu0
  %2896 = vmatprep.mubr.f32.mxu0 0.0
  %v2897 = vand.u32 %v226, 4294901760
  %2898 = vmatmul.mubr.f32.gmra.mrb[0].mxu0 %v2897
  %v2899 = vpop.f32.mrb[0].mxu0
  %v2900 = vadd.f32 %v2395, %v2899
  %v2901 = vpop.f32.mrb[0].mxu0
  %2902 = vmatprep.mubr.f32.mxu0 0.0
  %v2903 = vand.u32 %v229, 4294901760
  %2904 = vmatmul.mubr.f32.gmra.mrb[0].mxu0 %v2903
  %v2905 = vpop.f32.mrb[0].mxu0
  %v2906 = vadd.f32 %v2403, %v2905
  %v2907 = vpop.f32.mrb[0].mxu0
  %2908 = vmatprep.mubr.f32.mxu0 0.0
  %v2909 = vand.u32 %v232, 4294901760
  %2910 = vmatmul.mubr.f32.gmra.mrb[0].mxu0 %v2909
  %v2911 = vpop.f32.mrb[0].mxu0
  %v2912 = vadd.f32 %v2411, %v2911
  %v2913 = vpop.f32.mrb[0].mxu0
  %2914 = vmatprep.mubr.f32.mxu0 0.0
  %v2915 = vand.u32 %v235, 4294901760
  %2916 = vmatmul.mubr.f32.gmra.mrb[0].mxu0 %v2915
  %v2917 = vpop.f32.mrb[0].mxu0
  %v2918 = vadd.f32 %v2419, %v2917
  %v2919 = vpop.f32.mrb[0].mxu0
  %2920 = vmatprep.mubr.f32.mxu0 0.0
  %v2921 = vand.u32 %v238, 4294901760
  %2922 = vmatmul.mubr.f32.gmra.mrb[0].mxu0 %v2921
  %v2923 = vpop.f32.mrb[0].mxu0
  %v2924 = vadd.f32 %v2427, %v2923
  %v2925 = vpop.f32.mrb[0].mxu0
  %2926 = vmatprep.mubr.f32.mxu0 0.0
  %v2927 = vand.u32 %v241, 4294901760
  %2928 = vmatmul.mubr.f32.gmra.mrb[0].mxu0 %v2927
  %v2929 = vpop.f32.mrb[0].mxu0
  %v2930 = vadd.f32 %v2435, %v2929
  %v2931 = vpop.f32.mrb[0].mxu0
  %2932 = vmatprep.mubr.f32.mxu0 0.0
  %v2933 = vand.u32 %v244, 4294901760
  %2934 = vmatmul.mubr.f32.gmra.mrb[0].mxu0 %v2933
  %v2935 = vpop.f32.mrb[0].mxu0
  %v2936 = vadd.f32 %v2443, %v2935
  %v2937 = vpop.f32.mrb[0].mxu0
  %2938 = vmatprep.mubr.f32.mxu0 0.0
  %v2939 = vand.u32 %v247, 4294901760
  %2940 = vmatmul.mubr.f32.gmra.mrb[0].mxu0 %v2939
  %v2941 = vpop.f32.mrb[0].mxu0
  %v2942 = vadd.f32 %v2451, %v2941
  %v2943 = vpop.f32.mrb[0].mxu0
  %2944 = vmatprep.mubr.f32.mxu0 0.0
  %v2945 = vand.u32 %v250, 4294901760
  %2946 = vmatmul.mubr.f32.gmra.mrb[0].mxu0 %v2945
  %v2947 = vpop.f32.mrb[0].mxu0
  %v2948 = vadd.f32 %v2459, %v2947
  %v2949 = vpop.f32.mrb[0].mxu0
  %2950 = vmatprep.mubr.f32.mxu0 0.0
  %v2951 = vand.u32 %v253, 4294901760
  %2952 = vmatmul.mubr.f32.gmra.mrb[0].mxu0 %v2951
  %v2953 = vpop.f32.mrb[0].mxu0
  %v2954 = vadd.f32 %v2467, %v2953
  %v2955 = vpop.f32.mrb[0].mxu0
  %2956 = vmatprep.mubr.f32.mxu0 0.0
  %v2957 = vand.u32 %v256, 4294901760
  %2958 = vmatmul.mubr.f32.gmra.mrb[0].mxu0 %v2957
  %v2959 = vpop.f32.mrb[0].mxu0
  %v2960 = vadd.f32 %v2475, %v2959
  %v2961 = vpop.f32.mrb[0].mxu0
  %2962 = vmatprep.mubr.f32.mxu0 0.0
  %v2963 = vand.u32 %v259, 4294901760
  %2964 = vmatmul.mubr.f32.gmra.mrb[0].mxu0 %v2963
  %v2965 = vpop.f32.mrb[0].mxu0
  %v2966 = vadd.f32 %v2483, %v2965
  %v2967 = vpop.f32.mrb[0].mxu0
  %2968 = vmatprep.mubr.f32.mxu0 0.0
  %v2969 = vand.u32 %v262, 4294901760
  %2970 = vmatmul.mubr.f32.gmra.mrb[0].mxu0 %v2969
  %v2971 = vpop.f32.mrb[0].mxu0
  %v2972 = vadd.f32 %v2491, %v2971
  %v2973 = vpop.f32.mrb[0].mxu0
  %2974 = vmatprep.mubr.f32.mxu0 0.0
  %v2975 = vand.u32 %v265, 4294901760
  %2976 = vmatmul.mubr.f32.gmra.mrb[0].mxu0 %v2975
  %v2977 = vpop.f32.mrb[0].mxu0
  %v2978 = vadd.f32 %v2499, %v2977
  %v2979 = vpop.f32.mrb[0].mxu0
  %2980 = vmatprep.mubr.f32.mxu0 0.0
  %v2981 = vand.u32 %v268, 4294901760
  %2982 = vmatmul.mubr.f32.gmra.mrb[0].mxu0 %v2981
  %v2983 = vpop.f32.mrb[0].mxu0
  %v2984 = vadd.f32 %v2507, %v2983
  %v2985 = vpop.f32.mrb[0].mxu0
  %2986 = vmatprep.mubr.f32.mxu0 0.0
  %v2987 = vand.u32 %v271, 4294901760
  %2988 = vmatmul.mubr.f32.gmra.mrb[0].mxu0 %v2987
  %v2989 = vpop.f32.mrb[0].mxu0
  %v2990 = vadd.f32 %v2515, %v2989
  %v2991 = vpop.f32.mrb[0].mxu0
  %2992 = vmatprep.mubr.f32.mxu0 0.0
  %v2993 = vand.u32 %v274, 4294901760
  %2994 = vmatmul.mubr.f32.gmra.mrb[0].mxu0 %v2993
  %v2995 = vpop.f32.mrb[0].mxu0
  %v2996 = vadd.f32 %v2523, %v2995
  %v2997 = vpop.f32.mrb[0].mxu0
  %2998 = vmatprep.mubr.f32.mxu0 0.0
  %v2999 = vand.u32 %v277, 4294901760
  %3000 = vmatmul.mubr.f32.gmra.mrb[0].mxu0 %v2999
  %v3001 = vpop.f32.mrb[0].mxu0
  %v3002 = vadd.f32 %v2531, %v3001
  %v3003 = vpop.f32.mrb[0].mxu0
  %3004 = vmatprep.mubr.f32.mxu0 0.0
  %v3005 = vand.u32 %v280, 4294901760
  %3006 = vmatmul.mubr.f32.gmra.mrb[0].mxu0 %v3005
  %v3007 = vpop.f32.mrb[0].mxu0
  %v3008 = vadd.f32 %v2539, %v3007
  %v3009 = vpop.f32.mrb[0].mxu0
  %3010 = vmatprep.mubr.f32.mxu0 0.0
  %v3011 = vand.u32 %v283, 4294901760
  %3012 = vmatmul.mubr.f32.gmra.mrb[0].mxu0 %v3011
  %v3013 = vpop.f32.mrb[0].mxu0
  %v3014 = vadd.f32 %v2547, %v3013
  %v3015 = vpop.f32.mrb[0].mxu0
  %3016 = vmatprep.mubr.f32.mxu0 0.0
  %v3017 = vand.u32 %v286, 4294901760
  %3018 = vmatmul.mubr.f32.gmra.mrb[0].mxu0 %v3017
  %v3019 = vpop.f32.mrb[0].mxu0
  %v3020 = vadd.f32 %v2555, %v3019
  %v3021 = vpop.f32.mrb[0].mxu0
  %3022 = vmatprep.mubr.f32.mxu0 0.0
  %v3023 = vand.u32 %v289, 4294901760
  %3024 = vmatmul.mubr.f32.gmra.mrb[0].mxu0 %v3023
  %v3025 = vpop.f32.mrb[0].mxu0
  %v3026 = vadd.f32 %v2563, %v3025
  %v3027 = vpop.f32.mrb[0].mxu0
  %3028 = vmatprep.mubr.f32.mxu0 0.0
  %v3029 = vand.u32 %v292, 4294901760
  %3030 = vmatmul.mubr.f32.gmra.mrb[0].mxu0 %v3029
  %v3031 = vpop.f32.mrb[0].mxu0
  %v3032 = vadd.f32 %v2571, %v3031
  %v3033 = vpop.f32.mrb[0].mxu0
  %3034 = vdwg.mxu0
  %3035 = vmatprep.subr.mxu0 0.0
  %v3036 = vand.u32 %v90, 4294901760
  %3037 = vmatpush1.msra.mxu0 %v3036
  %3038 = vmatprep.subr.mxu0 0.0
  %v3039 = vand.u32 %v91, 4294901760
  %3040 = vmatpush1.msra.mxu0 %v3039
  %3041 = vmatprep.subr.mxu0 0.0
  %v3042 = vand.u32 %v92, 4294901760
  %3043 = vmatpush1.msra.mxu0 %v3042
  %3044 = vmatprep.subr.mxu0 0.0
  %v3045 = vand.u32 %v93, 4294901760
  %3046 = vmatpush1.msra.mxu0 %v3045
  %3047 = vmatprep.subr.mxu0 0.0
  %3048 = vmatpush1.msra.mxu0 0.0
  %3049 = vmatprep.subr.mxu0 0.0
  %3050 = vmatpush1.msra.mxu0 0.0
  %3051 = vmatprep.subr.mxu0 0.0
  %3052 = vmatpush1.msra.mxu0 0.0
  %3053 = vmatprep.subr.mxu0 0.0
  %3054 = vmatpush1.msra.mxu0 0.0
  %3055 = vmatprep.subr.mxu0 0.0
  %3056 = vmatpush1.msra.mxu0 0.0
  %3057 = vmatprep.subr.mxu0 0.0
  %3058 = vmatpush1.msra.mxu0 0.0
  %3059 = vmatprep.subr.mxu0 0.0
  %3060 = vmatpush1.msra.mxu0 0.0
  %3061 = vmatprep.subr.mxu0 0.0
  %3062 = vmatpush1.msra.mxu0 0.0
  %3063 = vmatprep.subr.mxu0 0.0
  %3064 = vmatpush1.msra.mxu0 0.0
  %3065 = vmatprep.subr.mxu0 0.0
  %3066 = vmatpush1.msra.mxu0 0.0
  %3067 = vmatprep.subr.mxu0 0.0
  %3068 = vmatpush1.msra.mxu0 0.0
  %3069 = vmatprep.subr.mxu0 0.0
  %3070 = vmatpush1.msra.mxu0 0.0
  %3071 = vmatprep.subr.mxu0 0.0
  %3072 = vmatpush1.msra.mxu0 0.0
  %3073 = vmatprep.subr.mxu0 0.0
  %3074 = vmatpush1.msra.mxu0 0.0
  %3075 = vmatprep.subr.mxu0 0.0
  %3076 = vmatpush1.msra.mxu0 0.0
  %3077 = vmatprep.subr.mxu0 0.0
  %3078 = vmatpush1.msra.mxu0 0.0
  %3079 = vmatprep.subr.mxu0 0.0
  %3080 = vmatpush1.msra.mxu0 0.0
  %3081 = vmatprep.subr.mxu0 0.0
  %3082 = vmatpush1.msra.mxu0 0.0
  %3083 = vmatprep.subr.mxu0 0.0
  %3084 = vmatpush1.msra.mxu0 0.0
  %3085 = vmatprep.subr.mxu0 0.0
  %3086 = vmatpush1.msra.mxu0 0.0
  %3087 = vmatprep.subr.mxu0 0.0
  %3088 = vmatpush1.msra.mxu0 0.0
  %3089 = vmatprep.subr.mxu0 0.0
  %3090 = vmatpush1.msra.mxu0 0.0
  %3091 = vmatprep.subr.mxu0 0.0
  %3092 = vmatpush1.msra.mxu0 0.0
  %3093 = vmatprep.subr.mxu0 0.0
  %3094 = vmatpush1.msra.mxu0 0.0
  %3095 = vmatprep.subr.mxu0 0.0
  %3096 = vmatpush1.msra.mxu0 0.0
  %3097 = vmatprep.subr.mxu0 0.0
  %3098 = vmatpush1.msra.mxu0 0.0
  %3099 = vmatprep.subr.mxu0 0.0
  %3100 = vmatpush1.msra.mxu0 0.0
  %3101 = vmatprep.subr.mxu0 0.0
  %3102 = vmatpush1.msra.mxu0 0.0
  %3103 = vmatprep.mubr.f32.mxu0 0.0
  %v3104 = vand.u32 %v103, 4294901760
  %3105 = vmatmul.mubr.f32.gmra.mrb[0].mxu0 %v3104
  %v3106 = vpop.f32.mrb[0].mxu0
  %v3107 = vadd.f32 %v2654, %v3106
  %v3108 = vpop.f32.mrb[0].mxu0
  %3109 = vmatprep.mubr.f32.mxu0 0.0
  %v3110 = vand.u32 %v106, 4294901760
  %3111 = vmatmul.mubr.f32.gmra.mrb[0].mxu0 %v3110
  %v3112 = vpop.f32.mrb[0].mxu0
  %v3113 = vadd.f32 %v2660, %v3112
  %v3114 = vpop.f32.mrb[0].mxu0
  %3115 = vmatprep.mubr.f32.mxu0 0.0
  %v3116 = vand.u32 %v109, 4294901760
  %3117 = vmatmul.mubr.f32.gmra.mrb[0].mxu0 %v3116
  %v3118 = vpop.f32.mrb[0].mxu0
  %v3119 = vadd.f32 %v2666, %v3118
  %v3120 = vpop.f32.mrb[0].mxu0
  %3121 = vmatprep.mubr.f32.mxu0 0.0
  %v3122 = vand.u32 %v112, 4294901760
  %3123 = vmatmul.mubr.f32.gmra.mrb[0].mxu0 %v3122
  %v3124 = vpop.f32.mrb[0].mxu0
  %v3125 = vadd.f32 %v2672, %v3124
  %v3126 = vpop.f32.mrb[0].mxu0
  %3127 = vmatprep.mubr.f32.mxu0 0.0
  %v3128 = vand.u32 %v115, 4294901760
  %3129 = vmatmul.mubr.f32.gmra.mrb[0].mxu0 %v3128
  %v3130 = vpop.f32.mrb[0].mxu0
  %v3131 = vadd.f32 %v2678, %v3130
  %v3132 = vpop.f32.mrb[0].mxu0
  %3133 = vmatprep.mubr.f32.mxu0 0.0
  %v3134 = vand.u32 %v118, 4294901760
  %3135 = vmatmul.mubr.f32.gmra.mrb[0].mxu0 %v3134
  %v3136 = vpop.f32.mrb[0].mxu0
  %v3137 = vadd.f32 %v2684, %v3136
  %v3138 = vpop.f32.mrb[0].mxu0
  %3139 = vmatprep.mubr.f32.mxu0 0.0
  %v3140 = vand.u32 %v121, 4294901760
  %3141 = vmatmul.mubr.f32.gmra.mrb[0].mxu0 %v3140
  %v3142 = vpop.f32.mrb[0].mxu0
  %v3143 = vadd.f32 %v2690, %v3142
  %v3144 = vpop.f32.mrb[0].mxu0
  %3145 = vmatprep.mubr.f32.mxu0 0.0
  %v3146 = vand.u32 %v124, 4294901760
  %3147 = vmatmul.mubr.f32.gmra.mrb[0].mxu0 %v3146
  %v3148 = vpop.f32.mrb[0].mxu0
  %v3149 = vadd.f32 %v2696, %v3148
  %v3150 = vpop.f32.mrb[0].mxu0
  %3151 = vmatprep.mubr.f32.mxu0 0.0
  %v3152 = vand.u32 %v127, 4294901760
  %3153 = vmatmul.mubr.f32.gmra.mrb[0].mxu0 %v3152
  %v3154 = vpop.f32.mrb[0].mxu0
  %v3155 = vadd.f32 %v2702, %v3154
  %v3156 = vpop.f32.mrb[0].mxu0
  %3157 = vmatprep.mubr.f32.mxu0 0.0
  %v3158 = vand.u32 %v130, 4294901760
  %3159 = vmatmul.mubr.f32.gmra.mrb[0].mxu0 %v3158
  %v3160 = vpop.f32.mrb[0].mxu0
  %v3161 = vadd.f32 %v2708, %v3160
  %v3162 = vpop.f32.mrb[0].mxu0
  %3163 = vmatprep.mubr.f32.mxu0 0.0
  %v3164 = vand.u32 %v133, 4294901760
  %3165 = vmatmul.mubr.f32.gmra.mrb[0].mxu0 %v3164
  %v3166 = vpop.f32.mrb[0].mxu0
  %v3167 = vadd.f32 %v2714, %v3166
  %v3168 = vpop.f32.mrb[0].mxu0
  %3169 = vmatprep.mubr.f32.mxu0 0.0
  %v3170 = vand.u32 %v136, 4294901760
  %3171 = vmatmul.mubr.f32.gmra.mrb[0].mxu0 %v3170
  %v3172 = vpop.f32.mrb[0].mxu0
  %v3173 = vadd.f32 %v2720, %v3172
  %v3174 = vpop.f32.mrb[0].mxu0
  %3175 = vmatprep.mubr.f32.mxu0 0.0
  %v3176 = vand.u32 %v139, 4294901760
  %3177 = vmatmul.mubr.f32.gmra.mrb[0].mxu0 %v3176
  %v3178 = vpop.f32.mrb[0].mxu0
  %v3179 = vadd.f32 %v2726, %v3178
  %v3180 = vpop.f32.mrb[0].mxu0
  %3181 = vmatprep.mubr.f32.mxu0 0.0
  %v3182 = vand.u32 %v142, 4294901760
  %3183 = vmatmul.mubr.f32.gmra.mrb[0].mxu0 %v3182
  %v3184 = vpop.f32.mrb[0].mxu0
  %v3185 = vadd.f32 %v2732, %v3184
  %v3186 = vpop.f32.mrb[0].mxu0
  %3187 = vmatprep.mubr.f32.mxu0 0.0
  %v3188 = vand.u32 %v145, 4294901760
  %3189 = vmatmul.mubr.f32.gmra.mrb[0].mxu0 %v3188
  %v3190 = vpop.f32.mrb[0].mxu0
  %v3191 = vadd.f32 %v2738, %v3190
  %v3192 = vpop.f32.mrb[0].mxu0
  %3193 = vmatprep.mubr.f32.mxu0 0.0
  %v3194 = vand.u32 %v148, 4294901760
  %3195 = vmatmul.mubr.f32.gmra.mrb[0].mxu0 %v3194
  %v3196 = vpop.f32.mrb[0].mxu0
  %v3197 = vadd.f32 %v2744, %v3196
  %v3198 = vpop.f32.mrb[0].mxu0
  %3199 = vmatprep.mubr.f32.mxu0 0.0
  %v3200 = vand.u32 %v151, 4294901760
  %3201 = vmatmul.mubr.f32.gmra.mrb[0].mxu0 %v3200
  %v3202 = vpop.f32.mrb[0].mxu0
  %v3203 = vadd.f32 %v2750, %v3202
  %v3204 = vpop.f32.mrb[0].mxu0
  %3205 = vmatprep.mubr.f32.mxu0 0.0
  %v3206 = vand.u32 %v154, 4294901760
  %3207 = vmatmul.mubr.f32.gmra.mrb[0].mxu0 %v3206
  %v3208 = vpop.f32.mrb[0].mxu0
  %v3209 = vadd.f32 %v2756, %v3208
  %v3210 = vpop.f32.mrb[0].mxu0
  %3211 = vmatprep.mubr.f32.mxu0 0.0
  %v3212 = vand.u32 %v157, 4294901760
  %3213 = vmatmul.mubr.f32.gmra.mrb[0].mxu0 %v3212
  %v3214 = vpop.f32.mrb[0].mxu0
  %v3215 = vadd.f32 %v2762, %v3214
  %v3216 = vpop.f32.mrb[0].mxu0
  %3217 = vmatprep.mubr.f32.mxu0 0.0
  %v3218 = vand.u32 %v160, 4294901760
  %3219 = vmatmul.mubr.f32.gmra.mrb[0].mxu0 %v3218
  %v3220 = vpop.f32.mrb[0].mxu0
  %v3221 = vadd.f32 %v2768, %v3220
  %v3222 = vpop.f32.mrb[0].mxu0
  %3223 = vmatprep.mubr.f32.mxu0 0.0
  %v3224 = vand.u32 %v163, 4294901760
  %3225 = vmatmul.mubr.f32.gmra.mrb[0].mxu0 %v3224
  %v3226 = vpop.f32.mrb[0].mxu0
  %v3227 = vadd.f32 %v2774, %v3226
  %v3228 = vpop.f32.mrb[0].mxu0
  %3229 = vmatprep.mubr.f32.mxu0 0.0
  %v3230 = vand.u32 %v166, 4294901760
  %3231 = vmatmul.mubr.f32.gmra.mrb[0].mxu0 %v3230
  %v3232 = vpop.f32.mrb[0].mxu0
  %v3233 = vadd.f32 %v2780, %v3232
  %v3234 = vpop.f32.mrb[0].mxu0
  %3235 = vmatprep.mubr.f32.mxu0 0.0
  %v3236 = vand.u32 %v169, 4294901760
  %3237 = vmatmul.mubr.f32.gmra.mrb[0].mxu0 %v3236
  %v3238 = vpop.f32.mrb[0].mxu0
  %v3239 = vadd.f32 %v2786, %v3238
  %v3240 = vpop.f32.mrb[0].mxu0
  %3241 = vmatprep.mubr.f32.mxu0 0.0
  %v3242 = vand.u32 %v172, 4294901760
  %3243 = vmatmul.mubr.f32.gmra.mrb[0].mxu0 %v3242
  %v3244 = vpop.f32.mrb[0].mxu0
  %v3245 = vadd.f32 %v2792, %v3244
  %v3246 = vpop.f32.mrb[0].mxu0
  %3247 = vmatprep.mubr.f32.mxu0 0.0
  %v3248 = vand.u32 %v175, 4294901760
  %3249 = vmatmul.mubr.f32.gmra.mrb[0].mxu0 %v3248
  %v3250 = vpop.f32.mrb[0].mxu0
  %v3251 = vadd.f32 %v2798, %v3250
  %v3252 = vpop.f32.mrb[0].mxu0
  %3253 = vmatprep.mubr.f32.mxu0 0.0
  %v3254 = vand.u32 %v178, 4294901760
  %3255 = vmatmul.mubr.f32.gmra.mrb[0].mxu0 %v3254
  %v3256 = vpop.f32.mrb[0].mxu0
  %v3257 = vadd.f32 %v2804, %v3256
  %v3258 = vpop.f32.mrb[0].mxu0
  %3259 = vmatprep.mubr.f32.mxu0 0.0
  %v3260 = vand.u32 %v181, 4294901760
  %3261 = vmatmul.mubr.f32.gmra.mrb[0].mxu0 %v3260
  %v3262 = vpop.f32.mrb[0].mxu0
  %v3263 = vadd.f32 %v2810, %v3262
  %v3264 = vpop.f32.mrb[0].mxu0
  %3265 = vmatprep.mubr.f32.mxu0 0.0
  %v3266 = vand.u32 %v184, 4294901760
  %3267 = vmatmul.mubr.f32.gmra.mrb[0].mxu0 %v3266
  %v3268 = vpop.f32.mrb[0].mxu0
  %v3269 = vadd.f32 %v2816, %v3268
  %v3270 = vpop.f32.mrb[0].mxu0
  %3271 = vmatprep.mubr.f32.mxu0 0.0
  %v3272 = vand.u32 %v187, 4294901760
  %3273 = vmatmul.mubr.f32.gmra.mrb[0].mxu0 %v3272
  %v3274 = vpop.f32.mrb[0].mxu0
  %v3275 = vadd.f32 %v2822, %v3274
  %v3276 = vpop.f32.mrb[0].mxu0
  %3277 = vmatprep.mubr.f32.mxu0 0.0
  %v3278 = vand.u32 %v190, 4294901760
  %3279 = vmatmul.mubr.f32.gmra.mrb[0].mxu0 %v3278
  %v3280 = vpop.f32.mrb[0].mxu0
  %v3281 = vadd.f32 %v2828, %v3280
  %v3282 = vpop.f32.mrb[0].mxu0
  %3283 = vmatprep.mubr.f32.mxu0 0.0
  %v3284 = vand.u32 %v193, 4294901760
  %3285 = vmatmul.mubr.f32.gmra.mrb[0].mxu0 %v3284
  %v3286 = vpop.f32.mrb[0].mxu0
  %v3287 = vadd.f32 %v2834, %v3286
  %v3288 = vpop.f32.mrb[0].mxu0
  %3289 = vmatprep.mubr.f32.mxu0 0.0
  %v3290 = vand.u32 %v196, 4294901760
  %3291 = vmatmul.mubr.f32.gmra.mrb[0].mxu0 %v3290
  %v3292 = vpop.f32.mrb[0].mxu0
  %v3293 = vadd.f32 %v2840, %v3292
  %v3294 = vpop.f32.mrb[0].mxu0
  %3295 = vmatprep.mubr.f32.mxu0 0.0
  %v3296 = vand.u32 %v199, 4294901760
  %3297 = vmatmul.mubr.f32.gmra.mrb[0].mxu0 %v3296
  %v3298 = vpop.f32.mrb[0].mxu0
  %v3299 = vadd.f32 %v2846, %v3298
  %v3300 = vpop.f32.mrb[0].mxu0
  %3301 = vmatprep.mubr.f32.mxu0 0.0
  %v3302 = vand.u32 %v202, 4294901760
  %3303 = vmatmul.mubr.f32.gmra.mrb[0].mxu0 %v3302
  %v3304 = vpop.f32.mrb[0].mxu0
  %v3305 = vadd.f32 %v2852, %v3304
  %v3306 = vpop.f32.mrb[0].mxu0
  %3307 = vmatprep.mubr.f32.mxu0 0.0
  %v3308 = vand.u32 %v205, 4294901760
  %3309 = vmatmul.mubr.f32.gmra.mrb[0].mxu0 %v3308
  %v3310 = vpop.f32.mrb[0].mxu0
  %v3311 = vadd.f32 %v2858, %v3310
  %v3312 = vpop.f32.mrb[0].mxu0
  %3313 = vmatprep.mubr.f32.mxu0 0.0
  %v3314 = vand.u32 %v208, 4294901760
  %3315 = vmatmul.mubr.f32.gmra.mrb[0].mxu0 %v3314
  %v3316 = vpop.f32.mrb[0].mxu0
  %v3317 = vadd.f32 %v2864, %v3316
  %v3318 = vpop.f32.mrb[0].mxu0
  %3319 = vmatprep.mubr.f32.mxu0 0.0
  %v3320 = vand.u32 %v211, 4294901760
  %3321 = vmatmul.mubr.f32.gmra.mrb[0].mxu0 %v3320
  %v3322 = vpop.f32.mrb[0].mxu0
  %v3323 = vadd.f32 %v2870, %v3322
  %v3324 = vpop.f32.mrb[0].mxu0
  %3325 = vmatprep.mubr.f32.mxu0 0.0
  %v3326 = vand.u32 %v214, 4294901760
  %3327 = vmatmul.mubr.f32.gmra.mrb[0].mxu0 %v3326
  %v3328 = vpop.f32.mrb[0].mxu0
  %v3329 = vadd.f32 %v2876, %v3328
  %v3330 = vpop.f32.mrb[0].mxu0
  %3331 = vmatprep.mubr.f32.mxu0 0.0
  %v3332 = vand.u32 %v217, 4294901760
  %3333 = vmatmul.mubr.f32.gmra.mrb[0].mxu0 %v3332
  %v3334 = vpop.f32.mrb[0].mxu0
  %v3335 = vadd.f32 %v2882, %v3334
  %v3336 = vpop.f32.mrb[0].mxu0
  %3337 = vmatprep.mubr.f32.mxu0 0.0
  %v3338 = vand.u32 %v220, 4294901760
  %3339 = vmatmul.mubr.f32.gmra.mrb[0].mxu0 %v3338
  %v3340 = vpop.f32.mrb[0].mxu0
  %v3341 = vadd.f32 %v2888, %v3340
  %v3342 = vpop.f32.mrb[0].mxu0
  %3343 = vmatprep.mubr.f32.mxu0 0.0
  %v3344 = vand.u32 %v223, 4294901760
  %3345 = vmatmul.mubr.f32.gmra.mrb[0].mxu0 %v3344
  %v3346 = vpop.f32.mrb[0].mxu0
  %v3347 = vadd.f32 %v2894, %v3346
  %v3348 = vpop.f32.mrb[0].mxu0
  %3349 = vmatprep.mubr.f32.mxu0 0.0
  %v3350 = vand.u32 %v226, 4294901760
  %3351 = vmatmul.mubr.f32.gmra.mrb[0].mxu0 %v3350
  %v3352 = vpop.f32.mrb[0].mxu0
  %v3353 = vadd.f32 %v2900, %v3352
  %v3354 = vpop.f32.mrb[0].mxu0
  %3355 = vmatprep.mubr.f32.mxu0 0.0
  %v3356 = vand.u32 %v229, 4294901760
  %3357 = vmatmul.mubr.f32.gmra.mrb[0].mxu0 %v3356
  %v3358 = vpop.f32.mrb[0].mxu0
  %v3359 = vadd.f32 %v2906, %v3358
  %v3360 = vpop.f32.mrb[0].mxu0
  %3361 = vmatprep.mubr.f32.mxu0 0.0
  %v3362 = vand.u32 %v232, 4294901760
  %3363 = vmatmul.mubr.f32.gmra.mrb[0].mxu0 %v3362
  %v3364 = vpop.f32.mrb[0].mxu0
  %v3365 = vadd.f32 %v2912, %v3364
  %v3366 = vpop.f32.mrb[0].mxu0
  %3367 = vmatprep.mubr.f32.mxu0 0.0
  %v3368 = vand.u32 %v235, 4294901760
  %3369 = vmatmul.mubr.f32.gmra.mrb[0].mxu0 %v3368
  %v3370 = vpop.f32.mrb[0].mxu0
  %v3371 = vadd.f32 %v2918, %v3370
  %v3372 = vpop.f32.mrb[0].mxu0
  %3373 = vmatprep.mubr.f32.mxu0 0.0
  %v3374 = vand.u32 %v238, 4294901760
  %3375 = vmatmul.mubr.f32.gmra.mrb[0].mxu0 %v3374
  %v3376 = vpop.f32.mrb[0].mxu0
  %v3377 = vadd.f32 %v2924, %v3376
  %v3378 = vpop.f32.mrb[0].mxu0
  %3379 = vmatprep.mubr.f32.mxu0 0.0
  %v3380 = vand.u32 %v241, 4294901760
  %3381 = vmatmul.mubr.f32.gmra.mrb[0].mxu0 %v3380
  %v3382 = vpop.f32.mrb[0].mxu0
  %v3383 = vadd.f32 %v2930, %v3382
  %v3384 = vpop.f32.mrb[0].mxu0
  %3385 = vmatprep.mubr.f32.mxu0 0.0
  %v3386 = vand.u32 %v244, 4294901760
  %3387 = vmatmul.mubr.f32.gmra.mrb[0].mxu0 %v3386
  %v3388 = vpop.f32.mrb[0].mxu0
  %v3389 = vadd.f32 %v2936, %v3388
  %v3390 = vpop.f32.mrb[0].mxu0
  %3391 = vmatprep.mubr.f32.mxu0 0.0
  %v3392 = vand.u32 %v247, 4294901760
  %3393 = vmatmul.mubr.f32.gmra.mrb[0].mxu0 %v3392
  %v3394 = vpop.f32.mrb[0].mxu0
  %v3395 = vadd.f32 %v2942, %v3394
  %v3396 = vpop.f32.mrb[0].mxu0
  %3397 = vmatprep.mubr.f32.mxu0 0.0
  %v3398 = vand.u32 %v250, 4294901760
  %3399 = vmatmul.mubr.f32.gmra.mrb[0].mxu0 %v3398
  %v3400 = vpop.f32.mrb[0].mxu0
  %v3401 = vadd.f32 %v2948, %v3400
  %v3402 = vpop.f32.mrb[0].mxu0
  %3403 = vmatprep.mubr.f32.mxu0 0.0
  %v3404 = vand.u32 %v253, 4294901760
  %3405 = vmatmul.mubr.f32.gmra.mrb[0].mxu0 %v3404
  %v3406 = vpop.f32.mrb[0].mxu0
  %v3407 = vadd.f32 %v2954, %v3406
  %v3408 = vpop.f32.mrb[0].mxu0
  %3409 = vmatprep.mubr.f32.mxu0 0.0
  %v3410 = vand.u32 %v256, 4294901760
  %3411 = vmatmul.mubr.f32.gmra.mrb[0].mxu0 %v3410
  %v3412 = vpop.f32.mrb[0].mxu0
  %v3413 = vadd.f32 %v2960, %v3412
  %v3414 = vpop.f32.mrb[0].mxu0
  %3415 = vmatprep.mubr.f32.mxu0 0.0
  %v3416 = vand.u32 %v259, 4294901760
  %3417 = vmatmul.mubr.f32.gmra.mrb[0].mxu0 %v3416
  %v3418 = vpop.f32.mrb[0].mxu0
  %v3419 = vadd.f32 %v2966, %v3418
  %v3420 = vpop.f32.mrb[0].mxu0
  %3421 = vmatprep.mubr.f32.mxu0 0.0
  %v3422 = vand.u32 %v262, 4294901760
  %3423 = vmatmul.mubr.f32.gmra.mrb[0].mxu0 %v3422
  %v3424 = vpop.f32.mrb[0].mxu0
  %v3425 = vadd.f32 %v2972, %v3424
  %v3426 = vpop.f32.mrb[0].mxu0
  %3427 = vmatprep.mubr.f32.mxu0 0.0
  %v3428 = vand.u32 %v265, 4294901760
  %3429 = vmatmul.mubr.f32.gmra.mrb[0].mxu0 %v3428
  %v3430 = vpop.f32.mrb[0].mxu0
  %v3431 = vadd.f32 %v2978, %v3430
  %v3432 = vpop.f32.mrb[0].mxu0
  %3433 = vmatprep.mubr.f32.mxu0 0.0
  %v3434 = vand.u32 %v268, 4294901760
  %3435 = vmatmul.mubr.f32.gmra.mrb[0].mxu0 %v3434
  %v3436 = vpop.f32.mrb[0].mxu0
  %v3437 = vadd.f32 %v2984, %v3436
  %v3438 = vpop.f32.mrb[0].mxu0
  %3439 = vmatprep.mubr.f32.mxu0 0.0
  %v3440 = vand.u32 %v271, 4294901760
  %3441 = vmatmul.mubr.f32.gmra.mrb[0].mxu0 %v3440
  %v3442 = vpop.f32.mrb[0].mxu0
  %v3443 = vadd.f32 %v2990, %v3442
  %v3444 = vpop.f32.mrb[0].mxu0
  %3445 = vmatprep.mubr.f32.mxu0 0.0
  %v3446 = vand.u32 %v274, 4294901760
  %3447 = vmatmul.mubr.f32.gmra.mrb[0].mxu0 %v3446
  %v3448 = vpop.f32.mrb[0].mxu0
  %v3449 = vadd.f32 %v2996, %v3448
  %v3450 = vpop.f32.mrb[0].mxu0
  %3451 = vmatprep.mubr.f32.mxu0 0.0
  %v3452 = vand.u32 %v277, 4294901760
  %3453 = vmatmul.mubr.f32.gmra.mrb[0].mxu0 %v3452
  %v3454 = vpop.f32.mrb[0].mxu0
  %v3455 = vadd.f32 %v3002, %v3454
  %v3456 = vpop.f32.mrb[0].mxu0
  %3457 = vmatprep.mubr.f32.mxu0 0.0
  %v3458 = vand.u32 %v280, 4294901760
  %3459 = vmatmul.mubr.f32.gmra.mrb[0].mxu0 %v3458
  %v3460 = vpop.f32.mrb[0].mxu0
  %v3461 = vadd.f32 %v3008, %v3460
  %v3462 = vpop.f32.mrb[0].mxu0
  %3463 = vmatprep.mubr.f32.mxu0 0.0
  %v3464 = vand.u32 %v283, 4294901760
  %3465 = vmatmul.mubr.f32.gmra.mrb[0].mxu0 %v3464
  %v3466 = vpop.f32.mrb[0].mxu0
  %v3467 = vadd.f32 %v3014, %v3466
  %v3468 = vpop.f32.mrb[0].mxu0
  %3469 = vmatprep.mubr.f32.mxu0 0.0
  %v3470 = vand.u32 %v286, 4294901760
  %3471 = vmatmul.mubr.f32.gmra.mrb[0].mxu0 %v3470
  %v3472 = vpop.f32.mrb[0].mxu0
  %v3473 = vadd.f32 %v3020, %v3472
  %v3474 = vpop.f32.mrb[0].mxu0
  %3475 = vmatprep.mubr.f32.mxu0 0.0
  %v3476 = vand.u32 %v289, 4294901760
  %3477 = vmatmul.mubr.f32.gmra.mrb[0].mxu0 %v3476
  %v3478 = vpop.f32.mrb[0].mxu0
  %v3479 = vadd.f32 %v3026, %v3478
  %v3480 = vpop.f32.mrb[0].mxu0
  %3481 = vmatprep.mubr.f32.mxu0 0.0
  %v3482 = vand.u32 %v292, 4294901760
  %3483 = vmatmul.mubr.f32.gmra.mrb[0].mxu0 %v3482
  %v3484 = vpop.f32.mrb[0].mxu0
  %v3485 = vadd.f32 %v3032, %v3484
  %v3486 = vpop.f32.mrb[0].mxu0
  %3487 = vdwg.mxu0
  %v3488 = vmax.f32 %v3107, 0.0
  %v3489 = vmax.f32 %v3113, 0.0
  %v3490 = vmax.f32 %v3119, 0.0
  %v3491 = vmax.f32 %v3125, 0.0
  %v3492 = vmax.f32 %v3131, 0.0
  %v3493 = vmax.f32 %v3137, 0.0
  %v3494 = vmax.f32 %v3143, 0.0
  %v3495 = vmax.f32 %v3149, 0.0
  %v3496 = vmax.f32 %v3155, 0.0
  %v3497 = vmax.f32 %v3161, 0.0
  %v3498 = vmax.f32 %v3167, 0.0
  %v3499 = vmax.f32 %v3173, 0.0
  %v3500 = vmax.f32 %v3179, 0.0
  %v3501 = vmax.f32 %v3185, 0.0
  %v3502 = vmax.f32 %v3191, 0.0
  %v3503 = vmax.f32 %v3197, 0.0
  %v3504 = vmax.f32 %v3203, 0.0
  %v3505 = vmax.f32 %v3209, 0.0
  %v3506 = vmax.f32 %v3215, 0.0
  %v3507 = vmax.f32 %v3221, 0.0
  %v3508 = vmax.f32 %v3227, 0.0
  %v3509 = vmax.f32 %v3233, 0.0
  %v3510 = vmax.f32 %v3239, 0.0
  %v3511 = vmax.f32 %v3245, 0.0
  %v3512 = vmax.f32 %v3251, 0.0
  %v3513 = vmax.f32 %v3257, 0.0
  %v3514 = vmax.f32 %v3263, 0.0
  %v3515 = vmax.f32 %v3269, 0.0
  %v3516 = vmax.f32 %v3275, 0.0
  %v3517 = vmax.f32 %v3281, 0.0
  %v3518 = vmax.f32 %v3287, 0.0
  %v3519 = vmax.f32 %v3293, 0.0
  %v3520 = vmax.f32 %v3299, 0.0
  %v3521 = vmax.f32 %v3305, 0.0
  %v3522 = vmax.f32 %v3311, 0.0
  %v3523 = vmax.f32 %v3317, 0.0
  %v3524 = vmax.f32 %v3323, 0.0
  %v3525 = vmax.f32 %v3329, 0.0
  %v3526 = vmax.f32 %v3335, 0.0
  %v3527 = vmax.f32 %v3341, 0.0
  %v3528 = vmax.f32 %v3347, 0.0
  %v3529 = vmax.f32 %v3353, 0.0
  %v3530 = vmax.f32 %v3359, 0.0
  %v3531 = vmax.f32 %v3365, 0.0
  %v3532 = vmax.f32 %v3371, 0.0
  %v3533 = vmax.f32 %v3377, 0.0
  %v3534 = vmax.f32 %v3383, 0.0
  %v3535 = vmax.f32 %v3389, 0.0
  %v3536 = vmax.f32 %v3395, 0.0
  %v3537 = vmax.f32 %v3401, 0.0
  %v3538 = vmax.f32 %v3407, 0.0
  %v3539 = vmax.f32 %v3413, 0.0
  %v3540 = vmax.f32 %v3419, 0.0
  %v3541 = vmax.f32 %v3425, 0.0
  %v3542 = vmax.f32 %v3431, 0.0
  %v3543 = vmax.f32 %v3437, 0.0
  %v3544 = vmax.f32 %v3443, 0.0
  %v3545 = vmax.f32 %v3449, 0.0
  %v3546 = vmax.f32 %v3455, 0.0
  %v3547 = vmax.f32 %v3461, 0.0
  %v3548 = vmax.f32 %v3467, 0.0
  %v3549 = vmax.f32 %v3473, 0.0
  %v3550 = vmax.f32 %v3479, 0.0
  %v3551 = vmax.f32 %v3485, 0.0
  %v3552 = vld [vmem:[%s3] sm:$0xff]
  %v3553 = vld [vmem:[%s3 + $0x8] sm:$0xff]
  %v3554 = vld [vmem:[%s3 + $0x10] sm:$0xff]
  %v3555 = vld [vmem:[%s3 + $0x18] sm:$0xff]
  %v3556 = vld [vmem:[%s3 + $0x20] sm:$0xff]
  %v3557 = vld [vmem:[%s3 + $0x28] sm:$0xff]
  %v3558 = vld [vmem:[%s3 + $0x30] sm:$0xff]
  %v3559 = vld [vmem:[%s3 + $0x38] sm:$0xff]
  %v3560 = vld [vmem:[%s4] sm:$0x1]
  %v3562 = vlaneseq
  %v3563 = vshrl.u32 %v3562, 7
  %v3564 = vsub.s32 0, %v3563
  %v3565 = vrot.slane %v3560, %v3564
  %vm3567 = vcmask 523264
  %v3569 = vsel %vm3567, %v3488, 0
  %v3572 = vsel %vm3567, %v3489, 0
  %v3575 = vsel %vm3567, %v3490, 0
  %v3578 = vsel %vm3567, %v3491, 0
  %v3581 = vsel %vm3567, %v3492, 0
  %v3584 = vsel %vm3567, %v3493, 0
  %v3587 = vsel %vm3567, %v3494, 0
  %v3590 = vsel %vm3567, %v3495, 0
  %v3593 = vsel %vm3567, %v3496, 0
  %v3596 = vsel %vm3567, %v3497, 0
  %v3599 = vsel %vm3567, %v3498, 0
  %v3602 = vsel %vm3567, %v3499, 0
  %v3605 = vsel %vm3567, %v3500, 0
  %v3608 = vsel %vm3567, %v3501, 0
  %v3611 = vsel %vm3567, %v3502, 0
  %v3614 = vsel %vm3567, %v3503, 0
  %v3617 = vsel %vm3567, %v3504, 0
  %v3620 = vsel %vm3567, %v3505, 0
  %v3623 = vsel %vm3567, %v3506, 0
  %v3626 = vsel %vm3567, %v3507, 0
  %v3629 = vsel %vm3567, %v3508, 0
  %v3632 = vsel %vm3567, %v3509, 0
  %v3635 = vsel %vm3567, %v3510, 0
  %v3638 = vsel %vm3567, %v3511, 0
  %v3641 = vsel %vm3567, %v3512, 0
  %v3644 = vsel %vm3567, %v3513, 0
  %v3647 = vsel %vm3567, %v3514, 0
  %v3650 = vsel %vm3567, %v3515, 0
  %v3653 = vsel %vm3567, %v3516, 0
  %v3656 = vsel %vm3567, %v3517, 0
  %v3659 = vsel %vm3567, %v3518, 0
  %v3662 = vsel %vm3567, %v3519, 0
  %v3665 = vsel %vm3567, %v3520, 0
  %v3668 = vsel %vm3567, %v3521, 0
  %v3671 = vsel %vm3567, %v3522, 0
  %v3674 = vsel %vm3567, %v3523, 0
  %v3677 = vsel %vm3567, %v3524, 0
  %v3680 = vsel %vm3567, %v3525, 0
  %v3683 = vsel %vm3567, %v3526, 0
  %v3686 = vsel %vm3567, %v3527, 0
  %v3689 = vsel %vm3567, %v3528, 0
  %v3692 = vsel %vm3567, %v3529, 0
  %v3695 = vsel %vm3567, %v3530, 0
  %v3698 = vsel %vm3567, %v3531, 0
  %v3701 = vsel %vm3567, %v3532, 0
  %v3704 = vsel %vm3567, %v3533, 0
  %v3707 = vsel %vm3567, %v3534, 0
  %v3710 = vsel %vm3567, %v3535, 0
  %v3713 = vsel %vm3567, %v3536, 0
  %v3716 = vsel %vm3567, %v3537, 0
  %v3719 = vsel %vm3567, %v3538, 0
  %v3722 = vsel %vm3567, %v3539, 0
  %v3725 = vsel %vm3567, %v3540, 0
  %v3728 = vsel %vm3567, %v3541, 0
  %v3731 = vsel %vm3567, %v3542, 0
  %v3734 = vsel %vm3567, %v3543, 0
  %v3737 = vsel %vm3567, %v3544, 0
  %v3740 = vsel %vm3567, %v3545, 0
  %v3743 = vsel %vm3567, %v3546, 0
  %v3746 = vsel %vm3567, %v3547, 0
  %v3749 = vsel %vm3567, %v3548, 0
  %v3752 = vsel %vm3567, %v3549, 0
  %v3755 = vsel %vm3567, %v3550, 0
  %v3758 = vsel %vm3567, %v3551, 0
  %3760 = vmatprep.subr.mxu0 0.0
  %v3761 = vand.u32 %v3552, 4294901760
  %3762 = vmatpush1.msra.mxu0 %v3761
  %3763 = vmatprep.subr.mxu0 0.0
  %v3764 = vand.u32 %v3553, 4294901760
  %3765 = vmatpush1.msra.mxu0 %v3764
  %3766 = vmatprep.subr.mxu0 0.0
  %v3767 = vand.u32 %v3554, 4294901760
  %3768 = vmatpush1.msra.mxu0 %v3767
  %3769 = vmatprep.subr.mxu0 0.0
  %v3770 = vand.u32 %v3555, 4294901760
  %3771 = vmatpush1.msra.mxu0 %v3770
  %3772 = vmatprep.subr.mxu0 0.0
  %v3773 = vand.u32 %v3556, 4294901760
  %3774 = vmatpush1.msra.mxu0 %v3773
  %3775 = vmatprep.subr.mxu0 0.0
  %v3776 = vand.u32 %v3557, 4294901760
  %3777 = vmatpush1.msra.mxu0 %v3776
  %3778 = vmatprep.subr.mxu0 0.0
  %v3779 = vand.u32 %v3558, 4294901760
  %3780 = vmatpush1.msra.mxu0 %v3779
  %3781 = vmatprep.subr.mxu0 0.0
  %v3782 = vand.u32 %v3559, 4294901760
  %3783 = vmatpush1.msra.mxu0 %v3782
  %3784 = vmatprep.subr.mxu0 0.0
  %3785 = vmatpush1.msra.mxu0 0.0
  %3786 = vmatprep.subr.mxu0 0.0
  %3787 = vmatpush1.msra.mxu0 0.0
  %3788 = vmatprep.subr.mxu0 0.0
  %3789 = vmatpush1.msra.mxu0 0.0
  %3790 = vmatprep.subr.mxu0 0.0
  %3791 = vmatpush1.msra.mxu0 0.0
  %3792 = vmatprep.subr.mxu0 0.0
  %3793 = vmatpush1.msra.mxu0 0.0
  %3794 = vmatprep.subr.mxu0 0.0
  %3795 = vmatpush1.msra.mxu0 0.0
  %3796 = vmatprep.subr.mxu0 0.0
  %3797 = vmatpush1.msra.mxu0 0.0
  %3798 = vmatprep.subr.mxu0 0.0
  %3799 = vmatpush1.msra.mxu0 0.0
  %3800 = vmatprep.subr.mxu0 0.0
  %3801 = vmatpush1.msra.mxu0 0.0
  %3802 = vmatprep.subr.mxu0 0.0
  %3803 = vmatpush1.msra.mxu0 0.0
  %3804 = vmatprep.subr.mxu0 0.0
  %3805 = vmatpush1.msra.mxu0 0.0
  %3806 = vmatprep.subr.mxu0 0.0
  %3807 = vmatpush1.msra.mxu0 0.0
  %3808 = vmatprep.subr.mxu0 0.0
  %3809 = vmatpush1.msra.mxu0 0.0
  %3810 = vmatprep.subr.mxu0 0.0
  %3811 = vmatpush1.msra.mxu0 0.0
  %3812 = vmatprep.subr.mxu0 0.0
  %3813 = vmatpush1.msra.mxu0 0.0
  %3814 = vmatprep.subr.mxu0 0.0
  %3815 = vmatpush1.msra.mxu0 0.0
  %3816 = vmatprep.subr.mxu0 0.0
  %3817 = vmatpush1.msra.mxu0 0.0
  %3818 = vmatprep.subr.mxu0 0.0
  %3819 = vmatpush1.msra.mxu0 0.0
  %3820 = vmatprep.subr.mxu0 0.0
  %3821 = vmatpush1.msra.mxu0 0.0
  %3822 = vmatprep.subr.mxu0 0.0
  %3823 = vmatpush1.msra.mxu0 0.0
  %3824 = vmatprep.subr.mxu0 0.0
  %3825 = vmatpush1.msra.mxu0 0.0
  %3826 = vmatprep.subr.mxu0 0.0
  %3827 = vmatpush1.msra.mxu0 0.0
  %3828 = vmatprep.subr.mxu0 0.0
  %3829 = vmatpush1.msra.mxu0 0.0
  %3830 = vmatprep.subr.mxu0 0.0
  %3831 = vmatpush1.msra.mxu0 0.0
  %3832 = vmatprep.mubr.f32.mxu0 0.0
  %v3833 = vand.u32 %v3569, 4294901760
  %v3834 = vsub.f32 %v3569, %v3833
  %v3835 = vand.u32 %v3834, 4294901760
  %v3836 = vsub.f32 %v3834, %v3835
  %v3837 = vand.u32 %v3836, 4294901760
  %3838 = vmatmul.mubr.f32.gmra.mrb[0].mxu0 %v3837
  %v3839 = vpop.f32.mrb[0].mxu0
  %v3840 = vadd.f32 %v3565, %v3839
  %v3841 = vpop.f32.mrb[0].mxu0
  %3842 = vmatprep.mubr.f32.mxu0 0.0
  %v3843 = vand.u32 %v3572, 4294901760
  %v3844 = vsub.f32 %v3572, %v3843
  %v3845 = vand.u32 %v3844, 4294901760
  %v3846 = vsub.f32 %v3844, %v3845
  %v3847 = vand.u32 %v3846, 4294901760
  %3848 = vmatmul.mubr.f32.gmra.mrb[0].mxu0 %v3847
  %v3849 = vpop.f32.mrb[0].mxu0
  %v3850 = vadd.f32 %v3565, %v3849
  %v3851 = vpop.f32.mrb[0].mxu0
  %3852 = vmatprep.mubr.f32.mxu0 0.0
  %v3853 = vand.u32 %v3575, 4294901760
  %v3854 = vsub.f32 %v3575, %v3853
  %v3855 = vand.u32 %v3854, 4294901760
  %v3856 = vsub.f32 %v3854, %v3855
  %v3857 = vand.u32 %v3856, 4294901760
  %3858 = vmatmul.mubr.f32.gmra.mrb[0].mxu0 %v3857
  %v3859 = vpop.f32.mrb[0].mxu0
  %v3860 = vadd.f32 %v3565, %v3859
  %v3861 = vpop.f32.mrb[0].mxu0
  %3862 = vmatprep.mubr.f32.mxu0 0.0
  %v3863 = vand.u32 %v3578, 4294901760
  %v3864 = vsub.f32 %v3578, %v3863
  %v3865 = vand.u32 %v3864, 4294901760
  %v3866 = vsub.f32 %v3864, %v3865
  %v3867 = vand.u32 %v3866, 4294901760
  %3868 = vmatmul.mubr.f32.gmra.mrb[0].mxu0 %v3867
  %v3869 = vpop.f32.mrb[0].mxu0
  %v3870 = vadd.f32 %v3565, %v3869
  %v3871 = vpop.f32.mrb[0].mxu0
  %3872 = vmatprep.mubr.f32.mxu0 0.0
  %v3873 = vand.u32 %v3581, 4294901760
  %v3874 = vsub.f32 %v3581, %v3873
  %v3875 = vand.u32 %v3874, 4294901760
  %v3876 = vsub.f32 %v3874, %v3875
  %v3877 = vand.u32 %v3876, 4294901760
  %3878 = vmatmul.mubr.f32.gmra.mrb[0].mxu0 %v3877
  %v3879 = vpop.f32.mrb[0].mxu0
  %v3880 = vadd.f32 %v3565, %v3879
  %v3881 = vpop.f32.mrb[0].mxu0
  %3882 = vmatprep.mubr.f32.mxu0 0.0
  %v3883 = vand.u32 %v3584, 4294901760
  %v3884 = vsub.f32 %v3584, %v3883
  %v3885 = vand.u32 %v3884, 4294901760
  %v3886 = vsub.f32 %v3884, %v3885
  %v3887 = vand.u32 %v3886, 4294901760
  %3888 = vmatmul.mubr.f32.gmra.mrb[0].mxu0 %v3887
  %v3889 = vpop.f32.mrb[0].mxu0
  %v3890 = vadd.f32 %v3565, %v3889
  %v3891 = vpop.f32.mrb[0].mxu0
  %3892 = vmatprep.mubr.f32.mxu0 0.0
  %v3893 = vand.u32 %v3587, 4294901760
  %v3894 = vsub.f32 %v3587, %v3893
  %v3895 = vand.u32 %v3894, 4294901760
  %v3896 = vsub.f32 %v3894, %v3895
  %v3897 = vand.u32 %v3896, 4294901760
  %3898 = vmatmul.mubr.f32.gmra.mrb[0].mxu0 %v3897
  %v3899 = vpop.f32.mrb[0].mxu0
  %v3900 = vadd.f32 %v3565, %v3899
  %v3901 = vpop.f32.mrb[0].mxu0
  %3902 = vmatprep.mubr.f32.mxu0 0.0
  %v3903 = vand.u32 %v3590, 4294901760
  %v3904 = vsub.f32 %v3590, %v3903
  %v3905 = vand.u32 %v3904, 4294901760
  %v3906 = vsub.f32 %v3904, %v3905
  %v3907 = vand.u32 %v3906, 4294901760
  %3908 = vmatmul.mubr.f32.gmra.mrb[0].mxu0 %v3907
  %v3909 = vpop.f32.mrb[0].mxu0
  %v3910 = vadd.f32 %v3565, %v3909
  %v3911 = vpop.f32.mrb[0].mxu0
  %3912 = vmatprep.mubr.f32.mxu0 0.0
  %v3913 = vand.u32 %v3593, 4294901760
  %v3914 = vsub.f32 %v3593, %v3913
  %v3915 = vand.u32 %v3914, 4294901760
  %v3916 = vsub.f32 %v3914, %v3915
  %v3917 = vand.u32 %v3916, 4294901760
  %3918 = vmatmul.mubr.f32.gmra.mrb[0].mxu0 %v3917
  %v3919 = vpop.f32.mrb[0].mxu0
  %v3920 = vadd.f32 %v3565, %v3919
  %v3921 = vpop.f32.mrb[0].mxu0
  %3922 = vmatprep.mubr.f32.mxu0 0.0
  %v3923 = vand.u32 %v3596, 4294901760
  %v3924 = vsub.f32 %v3596, %v3923
  %v3925 = vand.u32 %v3924, 4294901760
  %v3926 = vsub.f32 %v3924, %v3925
  %v3927 = vand.u32 %v3926, 4294901760
  %3928 = vmatmul.mubr.f32.gmra.mrb[0].mxu0 %v3927
  %v3929 = vpop.f32.mrb[0].mxu0
  %v3930 = vadd.f32 %v3565, %v3929
  %v3931 = vpop.f32.mrb[0].mxu0
  %3932 = vmatprep.mubr.f32.mxu0 0.0
  %v3933 = vand.u32 %v3599, 4294901760
  %v3934 = vsub.f32 %v3599, %v3933
  %v3935 = vand.u32 %v3934, 4294901760
  %v3936 = vsub.f32 %v3934, %v3935
  %v3937 = vand.u32 %v3936, 4294901760
  %3938 = vmatmul.mubr.f32.gmra.mrb[0].mxu0 %v3937
  %v3939 = vpop.f32.mrb[0].mxu0
  %v3940 = vadd.f32 %v3565, %v3939
  %v3941 = vpop.f32.mrb[0].mxu0
  %3942 = vmatprep.mubr.f32.mxu0 0.0
  %v3943 = vand.u32 %v3602, 4294901760
  %v3944 = vsub.f32 %v3602, %v3943
  %v3945 = vand.u32 %v3944, 4294901760
  %v3946 = vsub.f32 %v3944, %v3945
  %v3947 = vand.u32 %v3946, 4294901760
  %3948 = vmatmul.mubr.f32.gmra.mrb[0].mxu0 %v3947
  %v3949 = vpop.f32.mrb[0].mxu0
  %v3950 = vadd.f32 %v3565, %v3949
  %v3951 = vpop.f32.mrb[0].mxu0
  %3952 = vmatprep.mubr.f32.mxu0 0.0
  %v3953 = vand.u32 %v3605, 4294901760
  %v3954 = vsub.f32 %v3605, %v3953
  %v3955 = vand.u32 %v3954, 4294901760
  %v3956 = vsub.f32 %v3954, %v3955
  %v3957 = vand.u32 %v3956, 4294901760
  %3958 = vmatmul.mubr.f32.gmra.mrb[0].mxu0 %v3957
  %v3959 = vpop.f32.mrb[0].mxu0
  %v3960 = vadd.f32 %v3565, %v3959
  %v3961 = vpop.f32.mrb[0].mxu0
  %3962 = vmatprep.mubr.f32.mxu0 0.0
  %v3963 = vand.u32 %v3608, 4294901760
  %v3964 = vsub.f32 %v3608, %v3963
  %v3965 = vand.u32 %v3964, 4294901760
  %v3966 = vsub.f32 %v3964, %v3965
  %v3967 = vand.u32 %v3966, 4294901760
  %3968 = vmatmul.mubr.f32.gmra.mrb[0].mxu0 %v3967
  %v3969 = vpop.f32.mrb[0].mxu0
  %v3970 = vadd.f32 %v3565, %v3969
  %v3971 = vpop.f32.mrb[0].mxu0
  %3972 = vmatprep.mubr.f32.mxu0 0.0
  %v3973 = vand.u32 %v3611, 4294901760
  %v3974 = vsub.f32 %v3611, %v3973
  %v3975 = vand.u32 %v3974, 4294901760
  %v3976 = vsub.f32 %v3974, %v3975
  %v3977 = vand.u32 %v3976, 4294901760
  %3978 = vmatmul.mubr.f32.gmra.mrb[0].mxu0 %v3977
  %v3979 = vpop.f32.mrb[0].mxu0
  %v3980 = vadd.f32 %v3565, %v3979
  %v3981 = vpop.f32.mrb[0].mxu0
  %3982 = vmatprep.mubr.f32.mxu0 0.0
  %v3983 = vand.u32 %v3614, 4294901760
  %v3984 = vsub.f32 %v3614, %v3983
  %v3985 = vand.u32 %v3984, 4294901760
  %v3986 = vsub.f32 %v3984, %v3985
  %v3987 = vand.u32 %v3986, 4294901760
  %3988 = vmatmul.mubr.f32.gmra.mrb[0].mxu0 %v3987
  %v3989 = vpop.f32.mrb[0].mxu0
  %v3990 = vadd.f32 %v3565, %v3989
  %v3991 = vpop.f32.mrb[0].mxu0
  %3992 = vmatprep.mubr.f32.mxu0 0.0
  %v3993 = vand.u32 %v3617, 4294901760
  %v3994 = vsub.f32 %v3617, %v3993
  %v3995 = vand.u32 %v3994, 4294901760
  %v3996 = vsub.f32 %v3994, %v3995
  %v3997 = vand.u32 %v3996, 4294901760
  %3998 = vmatmul.mubr.f32.gmra.mrb[0].mxu0 %v3997
  %v3999 = vpop.f32.mrb[0].mxu0
  %v4000 = vadd.f32 %v3565, %v3999
  %v4001 = vpop.f32.mrb[0].mxu0
  %4002 = vmatprep.mubr.f32.mxu0 0.0
  %v4003 = vand.u32 %v3620, 4294901760
  %v4004 = vsub.f32 %v3620, %v4003
  %v4005 = vand.u32 %v4004, 4294901760
  %v4006 = vsub.f32 %v4004, %v4005
  %v4007 = vand.u32 %v4006, 4294901760
  %4008 = vmatmul.mubr.f32.gmra.mrb[0].mxu0 %v4007
  %v4009 = vpop.f32.mrb[0].mxu0
  %v4010 = vadd.f32 %v3565, %v4009
  %v4011 = vpop.f32.mrb[0].mxu0
  %4012 = vmatprep.mubr.f32.mxu0 0.0
  %v4013 = vand.u32 %v3623, 4294901760
  %v4014 = vsub.f32 %v3623, %v4013
  %v4015 = vand.u32 %v4014, 4294901760
  %v4016 = vsub.f32 %v4014, %v4015
  %v4017 = vand.u32 %v4016, 4294901760
  %4018 = vmatmul.mubr.f32.gmra.mrb[0].mxu0 %v4017
  %v4019 = vpop.f32.mrb[0].mxu0
  %v4020 = vadd.f32 %v3565, %v4019
  %v4021 = vpop.f32.mrb[0].mxu0
  %4022 = vmatprep.mubr.f32.mxu0 0.0
  %v4023 = vand.u32 %v3626, 4294901760
  %v4024 = vsub.f32 %v3626, %v4023
  %v4025 = vand.u32 %v4024, 4294901760
  %v4026 = vsub.f32 %v4024, %v4025
  %v4027 = vand.u32 %v4026, 4294901760
  %4028 = vmatmul.mubr.f32.gmra.mrb[0].mxu0 %v4027
  %v4029 = vpop.f32.mrb[0].mxu0
  %v4030 = vadd.f32 %v3565, %v4029
  %v4031 = vpop.f32.mrb[0].mxu0
  %4032 = vmatprep.mubr.f32.mxu0 0.0
  %v4033 = vand.u32 %v3629, 4294901760
  %v4034 = vsub.f32 %v3629, %v4033
  %v4035 = vand.u32 %v4034, 4294901760
  %v4036 = vsub.f32 %v4034, %v4035
  %v4037 = vand.u32 %v4036, 4294901760
  %4038 = vmatmul.mubr.f32.gmra.mrb[0].mxu0 %v4037
  %v4039 = vpop.f32.mrb[0].mxu0
  %v4040 = vadd.f32 %v3565, %v4039
  %v4041 = vpop.f32.mrb[0].mxu0
  %4042 = vmatprep.mubr.f32.mxu0 0.0
  %v4043 = vand.u32 %v3632, 4294901760
  %v4044 = vsub.f32 %v3632, %v4043
  %v4045 = vand.u32 %v4044, 4294901760
  %v4046 = vsub.f32 %v4044, %v4045
  %v4047 = vand.u32 %v4046, 4294901760
  %4048 = vmatmul.mubr.f32.gmra.mrb[0].mxu0 %v4047
  %v4049 = vpop.f32.mrb[0].mxu0
  %v4050 = vadd.f32 %v3565, %v4049
  %v4051 = vpop.f32.mrb[0].mxu0
  %4052 = vmatprep.mubr.f32.mxu0 0.0
  %v4053 = vand.u32 %v3635, 4294901760
  %v4054 = vsub.f32 %v3635, %v4053
  %v4055 = vand.u32 %v4054, 4294901760
  %v4056 = vsub.f32 %v4054, %v4055
  %v4057 = vand.u32 %v4056, 4294901760
  %4058 = vmatmul.mubr.f32.gmra.mrb[0].mxu0 %v4057
  %v4059 = vpop.f32.mrb[0].mxu0
  %v4060 = vadd.f32 %v3565, %v4059
  %v4061 = vpop.f32.mrb[0].mxu0
  %4062 = vmatprep.mubr.f32.mxu0 0.0
  %v4063 = vand.u32 %v3638, 4294901760
  %v4064 = vsub.f32 %v3638, %v4063
  %v4065 = vand.u32 %v4064, 4294901760
  %v4066 = vsub.f32 %v4064, %v4065
  %v4067 = vand.u32 %v4066, 4294901760
  %4068 = vmatmul.mubr.f32.gmra.mrb[0].mxu0 %v4067
  %v4069 = vpop.f32.mrb[0].mxu0
  %v4070 = vadd.f32 %v3565, %v4069
  %v4071 = vpop.f32.mrb[0].mxu0
  %4072 = vmatprep.mubr.f32.mxu0 0.0
  %v4073 = vand.u32 %v3641, 4294901760
  %v4074 = vsub.f32 %v3641, %v4073
  %v4075 = vand.u32 %v4074, 4294901760
  %v4076 = vsub.f32 %v4074, %v4075
  %v4077 = vand.u32 %v4076, 4294901760
  %4078 = vmatmul.mubr.f32.gmra.mrb[0].mxu0 %v4077
  %v4079 = vpop.f32.mrb[0].mxu0
  %v4080 = vadd.f32 %v3565, %v4079
  %v4081 = vpop.f32.mrb[0].mxu0
  %4082 = vmatprep.mubr.f32.mxu0 0.0
  %v4083 = vand.u32 %v3644, 4294901760
  %v4084 = vsub.f32 %v3644, %v4083
  %v4085 = vand.u32 %v4084, 4294901760
  %v4086 = vsub.f32 %v4084, %v4085
  %v4087 = vand.u32 %v4086, 4294901760
  %4088 = vmatmul.mubr.f32.gmra.mrb[0].mxu0 %v4087
  %v4089 = vpop.f32.mrb[0].mxu0
  %v4090 = vadd.f32 %v3565, %v4089
  %v4091 = vpop.f32.mrb[0].mxu0
  %4092 = vmatprep.mubr.f32.mxu0 0.0
  %v4093 = vand.u32 %v3647, 4294901760
  %v4094 = vsub.f32 %v3647, %v4093
  %v4095 = vand.u32 %v4094, 4294901760
  %v4096 = vsub.f32 %v4094, %v4095
  %v4097 = vand.u32 %v4096, 4294901760
  %4098 = vmatmul.mubr.f32.gmra.mrb[0].mxu0 %v4097
  %v4099 = vpop.f32.mrb[0].mxu0
  %v4100 = vadd.f32 %v3565, %v4099
  %v4101 = vpop.f32.mrb[0].mxu0
  %4102 = vmatprep.mubr.f32.mxu0 0.0
  %v4103 = vand.u32 %v3650, 4294901760
  %v4104 = vsub.f32 %v3650, %v4103
  %v4105 = vand.u32 %v4104, 4294901760
  %v4106 = vsub.f32 %v4104, %v4105
  %v4107 = vand.u32 %v4106, 4294901760
  %4108 = vmatmul.mubr.f32.gmra.mrb[0].mxu0 %v4107
  %v4109 = vpop.f32.mrb[0].mxu0
  %v4110 = vadd.f32 %v3565, %v4109
  %v4111 = vpop.f32.mrb[0].mxu0
  %4112 = vmatprep.mubr.f32.mxu0 0.0
  %v4113 = vand.u32 %v3653, 4294901760
  %v4114 = vsub.f32 %v3653, %v4113
  %v4115 = vand.u32 %v4114, 4294901760
  %v4116 = vsub.f32 %v4114, %v4115
  %v4117 = vand.u32 %v4116, 4294901760
  %4118 = vmatmul.mubr.f32.gmra.mrb[0].mxu0 %v4117
  %v4119 = vpop.f32.mrb[0].mxu0
  %v4120 = vadd.f32 %v3565, %v4119
  %v4121 = vpop.f32.mrb[0].mxu0
  %4122 = vmatprep.mubr.f32.mxu0 0.0
  %v4123 = vand.u32 %v3656, 4294901760
  %v4124 = vsub.f32 %v3656, %v4123
  %v4125 = vand.u32 %v4124, 4294901760
  %v4126 = vsub.f32 %v4124, %v4125
  %v4127 = vand.u32 %v4126, 4294901760
  %4128 = vmatmul.mubr.f32.gmra.mrb[0].mxu0 %v4127
  %v4129 = vpop.f32.mrb[0].mxu0
  %v4130 = vadd.f32 %v3565, %v4129
  %v4131 = vpop.f32.mrb[0].mxu0
  %4132 = vmatprep.mubr.f32.mxu0 0.0
  %v4133 = vand.u32 %v3659, 4294901760
  %v4134 = vsub.f32 %v3659, %v4133
  %v4135 = vand.u32 %v4134, 4294901760
  %v4136 = vsub.f32 %v4134, %v4135
  %v4137 = vand.u32 %v4136, 4294901760
  %4138 = vmatmul.mubr.f32.gmra.mrb[0].mxu0 %v4137
  %v4139 = vpop.f32.mrb[0].mxu0
  %v4140 = vadd.f32 %v3565, %v4139
  %v4141 = vpop.f32.mrb[0].mxu0
  %4142 = vmatprep.mubr.f32.mxu0 0.0
  %v4143 = vand.u32 %v3662, 4294901760
  %v4144 = vsub.f32 %v3662, %v4143
  %v4145 = vand.u32 %v4144, 4294901760
  %v4146 = vsub.f32 %v4144, %v4145
  %v4147 = vand.u32 %v4146, 4294901760
  %4148 = vmatmul.mubr.f32.gmra.mrb[0].mxu0 %v4147
  %v4149 = vpop.f32.mrb[0].mxu0
  %v4150 = vadd.f32 %v3565, %v4149
  %v4151 = vpop.f32.mrb[0].mxu0
  %4152 = vmatprep.mubr.f32.mxu0 0.0
  %v4153 = vand.u32 %v3665, 4294901760
  %v4154 = vsub.f32 %v3665, %v4153
  %v4155 = vand.u32 %v4154, 4294901760
  %v4156 = vsub.f32 %v4154, %v4155
  %v4157 = vand.u32 %v4156, 4294901760
  %4158 = vmatmul.mubr.f32.gmra.mrb[0].mxu0 %v4157
  %v4159 = vpop.f32.mrb[0].mxu0
  %v4160 = vadd.f32 %v3565, %v4159
  %v4161 = vpop.f32.mrb[0].mxu0
  %4162 = vmatprep.mubr.f32.mxu0 0.0
  %v4163 = vand.u32 %v3668, 4294901760
  %v4164 = vsub.f32 %v3668, %v4163
  %v4165 = vand.u32 %v4164, 4294901760
  %v4166 = vsub.f32 %v4164, %v4165
  %v4167 = vand.u32 %v4166, 4294901760
  %4168 = vmatmul.mubr.f32.gmra.mrb[0].mxu0 %v4167
  %v4169 = vpop.f32.mrb[0].mxu0
  %v4170 = vadd.f32 %v3565, %v4169
  %v4171 = vpop.f32.mrb[0].mxu0
  %4172 = vmatprep.mubr.f32.mxu0 0.0
  %v4173 = vand.u32 %v3671, 4294901760
  %v4174 = vsub.f32 %v3671, %v4173
  %v4175 = vand.u32 %v4174, 4294901760
  %v4176 = vsub.f32 %v4174, %v4175
  %v4177 = vand.u32 %v4176, 4294901760
  %4178 = vmatmul.mubr.f32.gmra.mrb[0].mxu0 %v4177
  %v4179 = vpop.f32.mrb[0].mxu0
  %v4180 = vadd.f32 %v3565, %v4179
  %v4181 = vpop.f32.mrb[0].mxu0
  %4182 = vmatprep.mubr.f32.mxu0 0.0
  %v4183 = vand.u32 %v3674, 4294901760
  %v4184 = vsub.f32 %v3674, %v4183
  %v4185 = vand.u32 %v4184, 4294901760
  %v4186 = vsub.f32 %v4184, %v4185
  %v4187 = vand.u32 %v4186, 4294901760
  %4188 = vmatmul.mubr.f32.gmra.mrb[0].mxu0 %v4187
  %v4189 = vpop.f32.mrb[0].mxu0
  %v4190 = vadd.f32 %v3565, %v4189
  %v4191 = vpop.f32.mrb[0].mxu0
  %4192 = vmatprep.mubr.f32.mxu0 0.0
  %v4193 = vand.u32 %v3677, 4294901760
  %v4194 = vsub.f32 %v3677, %v4193
  %v4195 = vand.u32 %v4194, 4294901760
  %v4196 = vsub.f32 %v4194, %v4195
  %v4197 = vand.u32 %v4196, 4294901760
  %4198 = vmatmul.mubr.f32.gmra.mrb[0].mxu0 %v4197
  %v4199 = vpop.f32.mrb[0].mxu0
  %v4200 = vadd.f32 %v3565, %v4199
  %v4201 = vpop.f32.mrb[0].mxu0
  %4202 = vmatprep.mubr.f32.mxu0 0.0
  %v4203 = vand.u32 %v3680, 4294901760
  %v4204 = vsub.f32 %v3680, %v4203
  %v4205 = vand.u32 %v4204, 4294901760
  %v4206 = vsub.f32 %v4204, %v4205
  %v4207 = vand.u32 %v4206, 4294901760
  %4208 = vmatmul.mubr.f32.gmra.mrb[0].mxu0 %v4207
  %v4209 = vpop.f32.mrb[0].mxu0
  %v4210 = vadd.f32 %v3565, %v4209
  %v4211 = vpop.f32.mrb[0].mxu0
  %4212 = vmatprep.mubr.f32.mxu0 0.0
  %v4213 = vand.u32 %v3683, 4294901760
  %v4214 = vsub.f32 %v3683, %v4213
  %v4215 = vand.u32 %v4214, 4294901760
  %v4216 = vsub.f32 %v4214, %v4215
  %v4217 = vand.u32 %v4216, 4294901760
  %4218 = vmatmul.mubr.f32.gmra.mrb[0].mxu0 %v4217
  %v4219 = vpop.f32.mrb[0].mxu0
  %v4220 = vadd.f32 %v3565, %v4219
  %v4221 = vpop.f32.mrb[0].mxu0
  %4222 = vmatprep.mubr.f32.mxu0 0.0
  %v4223 = vand.u32 %v3686, 4294901760
  %v4224 = vsub.f32 %v3686, %v4223
  %v4225 = vand.u32 %v4224, 4294901760
  %v4226 = vsub.f32 %v4224, %v4225
  %v4227 = vand.u32 %v4226, 4294901760
  %4228 = vmatmul.mubr.f32.gmra.mrb[0].mxu0 %v4227
  %v4229 = vpop.f32.mrb[0].mxu0
  %v4230 = vadd.f32 %v3565, %v4229
  %v4231 = vpop.f32.mrb[0].mxu0
  %4232 = vmatprep.mubr.f32.mxu0 0.0
  %v4233 = vand.u32 %v3689, 4294901760
  %v4234 = vsub.f32 %v3689, %v4233
  %v4235 = vand.u32 %v4234, 4294901760
  %v4236 = vsub.f32 %v4234, %v4235
  %v4237 = vand.u32 %v4236, 4294901760
  %4238 = vmatmul.mubr.f32.gmra.mrb[0].mxu0 %v4237
  %v4239 = vpop.f32.mrb[0].mxu0
  %v4240 = vadd.f32 %v3565, %v4239
  %v4241 = vpop.f32.mrb[0].mxu0
  %4242 = vmatprep.mubr.f32.mxu0 0.0
  %v4243 = vand.u32 %v3692, 4294901760
  %v4244 = vsub.f32 %v3692, %v4243
  %v4245 = vand.u32 %v4244, 4294901760
  %v4246 = vsub.f32 %v4244, %v4245
  %v4247 = vand.u32 %v4246, 4294901760
  %4248 = vmatmul.mubr.f32.gmra.mrb[0].mxu0 %v4247
  %v4249 = vpop.f32.mrb[0].mxu0
  %v4250 = vadd.f32 %v3565, %v4249
  %v4251 = vpop.f32.mrb[0].mxu0
  %4252 = vmatprep.mubr.f32.mxu0 0.0
  %v4253 = vand.u32 %v3695, 4294901760
  %v4254 = vsub.f32 %v3695, %v4253
  %v4255 = vand.u32 %v4254, 4294901760
  %v4256 = vsub.f32 %v4254, %v4255
  %v4257 = vand.u32 %v4256, 4294901760
  %4258 = vmatmul.mubr.f32.gmra.mrb[0].mxu0 %v4257
  %v4259 = vpop.f32.mrb[0].mxu0
  %v4260 = vadd.f32 %v3565, %v4259
  %v4261 = vpop.f32.mrb[0].mxu0
  %4262 = vmatprep.mubr.f32.mxu0 0.0
  %v4263 = vand.u32 %v3698, 4294901760
  %v4264 = vsub.f32 %v3698, %v4263
  %v4265 = vand.u32 %v4264, 4294901760
  %v4266 = vsub.f32 %v4264, %v4265
  %v4267 = vand.u32 %v4266, 4294901760
  %4268 = vmatmul.mubr.f32.gmra.mrb[0].mxu0 %v4267
  %v4269 = vpop.f32.mrb[0].mxu0
  %v4270 = vadd.f32 %v3565, %v4269
  %v4271 = vpop.f32.mrb[0].mxu0
  %4272 = vmatprep.mubr.f32.mxu0 0.0
  %v4273 = vand.u32 %v3701, 4294901760
  %v4274 = vsub.f32 %v3701, %v4273
  %v4275 = vand.u32 %v4274, 4294901760
  %v4276 = vsub.f32 %v4274, %v4275
  %v4277 = vand.u32 %v4276, 4294901760
  %4278 = vmatmul.mubr.f32.gmra.mrb[0].mxu0 %v4277
  %v4279 = vpop.f32.mrb[0].mxu0
  %v4280 = vadd.f32 %v3565, %v4279
  %v4281 = vpop.f32.mrb[0].mxu0
  %4282 = vmatprep.mubr.f32.mxu0 0.0
  %v4283 = vand.u32 %v3704, 4294901760
  %v4284 = vsub.f32 %v3704, %v4283
  %v4285 = vand.u32 %v4284, 4294901760
  %v4286 = vsub.f32 %v4284, %v4285
  %v4287 = vand.u32 %v4286, 4294901760
  %4288 = vmatmul.mubr.f32.gmra.mrb[0].mxu0 %v4287
  %v4289 = vpop.f32.mrb[0].mxu0
  %v4290 = vadd.f32 %v3565, %v4289
  %v4291 = vpop.f32.mrb[0].mxu0
  %4292 = vmatprep.mubr.f32.mxu0 0.0
  %v4293 = vand.u32 %v3707, 4294901760
  %v4294 = vsub.f32 %v3707, %v4293
  %v4295 = vand.u32 %v4294, 4294901760
  %v4296 = vsub.f32 %v4294, %v4295
  %v4297 = vand.u32 %v4296, 4294901760
  %4298 = vmatmul.mubr.f32.gmra.mrb[0].mxu0 %v4297
  %v4299 = vpop.f32.mrb[0].mxu0
  %v4300 = vadd.f32 %v3565, %v4299
  %v4301 = vpop.f32.mrb[0].mxu0
  %4302 = vmatprep.mubr.f32.mxu0 0.0
  %v4303 = vand.u32 %v3710, 4294901760
  %v4304 = vsub.f32 %v3710, %v4303
  %v4305 = vand.u32 %v4304, 4294901760
  %v4306 = vsub.f32 %v4304, %v4305
  %v4307 = vand.u32 %v4306, 4294901760
  %4308 = vmatmul.mubr.f32.gmra.mrb[0].mxu0 %v4307
  %v4309 = vpop.f32.mrb[0].mxu0
  %v4310 = vadd.f32 %v3565, %v4309
  %v4311 = vpop.f32.mrb[0].mxu0
  %4312 = vmatprep.mubr.f32.mxu0 0.0
  %v4313 = vand.u32 %v3713, 4294901760
  %v4314 = vsub.f32 %v3713, %v4313
  %v4315 = vand.u32 %v4314, 4294901760
  %v4316 = vsub.f32 %v4314, %v4315
  %v4317 = vand.u32 %v4316, 4294901760
  %4318 = vmatmul.mubr.f32.gmra.mrb[0].mxu0 %v4317
  %v4319 = vpop.f32.mrb[0].mxu0
  %v4320 = vadd.f32 %v3565, %v4319
  %v4321 = vpop.f32.mrb[0].mxu0
  %4322 = vmatprep.mubr.f32.mxu0 0.0
  %v4323 = vand.u32 %v3716, 4294901760
  %v4324 = vsub.f32 %v3716, %v4323
  %v4325 = vand.u32 %v4324, 4294901760
  %v4326 = vsub.f32 %v4324, %v4325
  %v4327 = vand.u32 %v4326, 4294901760
  %4328 = vmatmul.mubr.f32.gmra.mrb[0].mxu0 %v4327
  %v4329 = vpop.f32.mrb[0].mxu0
  %v4330 = vadd.f32 %v3565, %v4329
  %v4331 = vpop.f32.mrb[0].mxu0
  %4332 = vmatprep.mubr.f32.mxu0 0.0
  %v4333 = vand.u32 %v3719, 4294901760
  %v4334 = vsub.f32 %v3719, %v4333
  %v4335 = vand.u32 %v4334, 4294901760
  %v4336 = vsub.f32 %v4334, %v4335
  %v4337 = vand.u32 %v4336, 4294901760
  %4338 = vmatmul.mubr.f32.gmra.mrb[0].mxu0 %v4337
  %v4339 = vpop.f32.mrb[0].mxu0
  %v4340 = vadd.f32 %v3565, %v4339
  %v4341 = vpop.f32.mrb[0].mxu0
  %4342 = vmatprep.mubr.f32.mxu0 0.0
  %v4343 = vand.u32 %v3722, 4294901760
  %v4344 = vsub.f32 %v3722, %v4343
  %v4345 = vand.u32 %v4344, 4294901760
  %v4346 = vsub.f32 %v4344, %v4345
  %v4347 = vand.u32 %v4346, 4294901760
  %4348 = vmatmul.mubr.f32.gmra.mrb[0].mxu0 %v4347
  %v4349 = vpop.f32.mrb[0].mxu0
  %v4350 = vadd.f32 %v3565, %v4349
  %v4351 = vpop.f32.mrb[0].mxu0
  %4352 = vmatprep.mubr.f32.mxu0 0.0
  %v4353 = vand.u32 %v3725, 4294901760
  %v4354 = vsub.f32 %v3725, %v4353
  %v4355 = vand.u32 %v4354, 4294901760
  %v4356 = vsub.f32 %v4354, %v4355
  %v4357 = vand.u32 %v4356, 4294901760
  %4358 = vmatmul.mubr.f32.gmra.mrb[0].mxu0 %v4357
  %v4359 = vpop.f32.mrb[0].mxu0
  %v4360 = vadd.f32 %v3565, %v4359
  %v4361 = vpop.f32.mrb[0].mxu0
  %4362 = vmatprep.mubr.f32.mxu0 0.0
  %v4363 = vand.u32 %v3728, 4294901760
  %v4364 = vsub.f32 %v3728, %v4363
  %v4365 = vand.u32 %v4364, 4294901760
  %v4366 = vsub.f32 %v4364, %v4365
  %v4367 = vand.u32 %v4366, 4294901760
  %4368 = vmatmul.mubr.f32.gmra.mrb[0].mxu0 %v4367
  %v4369 = vpop.f32.mrb[0].mxu0
  %v4370 = vadd.f32 %v3565, %v4369
  %v4371 = vpop.f32.mrb[0].mxu0
  %4372 = vmatprep.mubr.f32.mxu0 0.0
  %v4373 = vand.u32 %v3731, 4294901760
  %v4374 = vsub.f32 %v3731, %v4373
  %v4375 = vand.u32 %v4374, 4294901760
  %v4376 = vsub.f32 %v4374, %v4375
  %v4377 = vand.u32 %v4376, 4294901760
  %4378 = vmatmul.mubr.f32.gmra.mrb[0].mxu0 %v4377
  %v4379 = vpop.f32.mrb[0].mxu0
  %v4380 = vadd.f32 %v3565, %v4379
  %v4381 = vpop.f32.mrb[0].mxu0
  %4382 = vmatprep.mubr.f32.mxu0 0.0
  %v4383 = vand.u32 %v3734, 4294901760
  %v4384 = vsub.f32 %v3734, %v4383
  %v4385 = vand.u32 %v4384, 4294901760
  %v4386 = vsub.f32 %v4384, %v4385
  %v4387 = vand.u32 %v4386, 4294901760
  %4388 = vmatmul.mubr.f32.gmra.mrb[0].mxu0 %v4387
  %v4389 = vpop.f32.mrb[0].mxu0
  %v4390 = vadd.f32 %v3565, %v4389
  %v4391 = vpop.f32.mrb[0].mxu0
  %4392 = vmatprep.mubr.f32.mxu0 0.0
  %v4393 = vand.u32 %v3737, 4294901760
  %v4394 = vsub.f32 %v3737, %v4393
  %v4395 = vand.u32 %v4394, 4294901760
  %v4396 = vsub.f32 %v4394, %v4395
  %v4397 = vand.u32 %v4396, 4294901760
  %4398 = vmatmul.mubr.f32.gmra.mrb[0].mxu0 %v4397
  %v4399 = vpop.f32.mrb[0].mxu0
  %v4400 = vadd.f32 %v3565, %v4399
  %v4401 = vpop.f32.mrb[0].mxu0
  %4402 = vmatprep.mubr.f32.mxu0 0.0
  %v4403 = vand.u32 %v3740, 4294901760
  %v4404 = vsub.f32 %v3740, %v4403
  %v4405 = vand.u32 %v4404, 4294901760
  %v4406 = vsub.f32 %v4404, %v4405
  %v4407 = vand.u32 %v4406, 4294901760
  %4408 = vmatmul.mubr.f32.gmra.mrb[0].mxu0 %v4407
  %v4409 = vpop.f32.mrb[0].mxu0
  %v4410 = vadd.f32 %v3565, %v4409
  %v4411 = vpop.f32.mrb[0].mxu0
  %4412 = vmatprep.mubr.f32.mxu0 0.0
  %v4413 = vand.u32 %v3743, 4294901760
  %v4414 = vsub.f32 %v3743, %v4413
  %v4415 = vand.u32 %v4414, 4294901760
  %v4416 = vsub.f32 %v4414, %v4415
  %v4417 = vand.u32 %v4416, 4294901760
  %4418 = vmatmul.mubr.f32.gmra.mrb[0].mxu0 %v4417
  %v4419 = vpop.f32.mrb[0].mxu0
  %v4420 = vadd.f32 %v3565, %v4419
  %v4421 = vpop.f32.mrb[0].mxu0
  %4422 = vmatprep.mubr.f32.mxu0 0.0
  %v4423 = vand.u32 %v3746, 4294901760
  %v4424 = vsub.f32 %v3746, %v4423
  %v4425 = vand.u32 %v4424, 4294901760
  %v4426 = vsub.f32 %v4424, %v4425
  %v4427 = vand.u32 %v4426, 4294901760
  %4428 = vmatmul.mubr.f32.gmra.mrb[0].mxu0 %v4427
  %v4429 = vpop.f32.mrb[0].mxu0
  %v4430 = vadd.f32 %v3565, %v4429
  %v4431 = vpop.f32.mrb[0].mxu0
  %4432 = vmatprep.mubr.f32.mxu0 0.0
  %v4433 = vand.u32 %v3749, 4294901760
  %v4434 = vsub.f32 %v3749, %v4433
  %v4435 = vand.u32 %v4434, 4294901760
  %v4436 = vsub.f32 %v4434, %v4435
  %v4437 = vand.u32 %v4436, 4294901760
  %4438 = vmatmul.mubr.f32.gmra.mrb[0].mxu0 %v4437
  %v4439 = vpop.f32.mrb[0].mxu0
  %v4440 = vadd.f32 %v3565, %v4439
  %v4441 = vpop.f32.mrb[0].mxu0
  %4442 = vmatprep.mubr.f32.mxu0 0.0
  %v4443 = vand.u32 %v3752, 4294901760
  %v4444 = vsub.f32 %v3752, %v4443
  %v4445 = vand.u32 %v4444, 4294901760
  %v4446 = vsub.f32 %v4444, %v4445
  %v4447 = vand.u32 %v4446, 4294901760
  %4448 = vmatmul.mubr.f32.gmra.mrb[0].mxu0 %v4447
  %v4449 = vpop.f32.mrb[0].mxu0
  %v4450 = vadd.f32 %v3565, %v4449
  %v4451 = vpop.f32.mrb[0].mxu0
  %4452 = vmatprep.mubr.f32.mxu0 0.0
  %v4453 = vand.u32 %v3755, 4294901760
  %v4454 = vsub.f32 %v3755, %v4453
  %v4455 = vand.u32 %v4454, 4294901760
  %v4456 = vsub.f32 %v4454, %v4455
  %v4457 = vand.u32 %v4456, 4294901760
  %4458 = vmatmul.mubr.f32.gmra.mrb[0].mxu0 %v4457
  %v4459 = vpop.f32.mrb[0].mxu0
  %v4460 = vadd.f32 %v3565, %v4459
  %v4461 = vpop.f32.mrb[0].mxu0
  %4462 = vmatprep.mubr.f32.mxu0 0.0
  %v4463 = vand.u32 %v3758, 4294901760
  %v4464 = vsub.f32 %v3758, %v4463
  %v4465 = vand.u32 %v4464, 4294901760
  %v4466 = vsub.f32 %v4464, %v4465
  %v4467 = vand.u32 %v4466, 4294901760
  %4468 = vmatmul.mubr.f32.gmra.mrb[0].mxu0 %v4467
  %v4469 = vpop.f32.mrb[0].mxu0
  %v4470 = vadd.f32 %v3565, %v4469
  %v4471 = vpop.f32.mrb[0].mxu0
  %4472 = vdwg.mxu0
  %4473 = vmatprep.subr.mxu0 0.0
  %v4474 = vand.u32 %v3552, 4294901760
  %v4475 = vsub.f32 %v3552, %v4474
  %v4476 = vand.u32 %v4475, 4294901760
  %v4477 = vsub.f32 %v4475, %v4476
  %v4478 = vand.u32 %v4477, 4294901760
  %4479 = vmatpush1.msra.mxu0 %v4478
  %4480 = vmatprep.subr.mxu0 0.0
  %v4481 = vand.u32 %v3553, 4294901760
  %v4482 = vsub.f32 %v3553, %v4481
  %v4483 = vand.u32 %v4482, 4294901760
  %v4484 = vsub.f32 %v4482, %v4483
  %v4485 = vand.u32 %v4484, 4294901760
  %4486 = vmatpush1.msra.mxu0 %v4485
  %4487 = vmatprep.subr.mxu0 0.0
  %v4488 = vand.u32 %v3554, 4294901760
  %v4489 = vsub.f32 %v3554, %v4488
  %v4490 = vand.u32 %v4489, 4294901760
  %v4491 = vsub.f32 %v4489, %v4490
  %v4492 = vand.u32 %v4491, 4294901760
  %4493 = vmatpush1.msra.mxu0 %v4492
  %4494 = vmatprep.subr.mxu0 0.0
  %v4495 = vand.u32 %v3555, 4294901760
  %v4496 = vsub.f32 %v3555, %v4495
  %v4497 = vand.u32 %v4496, 4294901760
  %v4498 = vsub.f32 %v4496, %v4497
  %v4499 = vand.u32 %v4498, 4294901760
  %4500 = vmatpush1.msra.mxu0 %v4499
  %4501 = vmatprep.subr.mxu0 0.0
  %v4502 = vand.u32 %v3556, 4294901760
  %v4503 = vsub.f32 %v3556, %v4502
  %v4504 = vand.u32 %v4503, 4294901760
  %v4505 = vsub.f32 %v4503, %v4504
  %v4506 = vand.u32 %v4505, 4294901760
  %4507 = vmatpush1.msra.mxu0 %v4506
  %4508 = vmatprep.subr.mxu0 0.0
  %v4509 = vand.u32 %v3557, 4294901760
  %v4510 = vsub.f32 %v3557, %v4509
  %v4511 = vand.u32 %v4510, 4294901760
  %v4512 = vsub.f32 %v4510, %v4511
  %v4513 = vand.u32 %v4512, 4294901760
  %4514 = vmatpush1.msra.mxu0 %v4513
  %4515 = vmatprep.subr.mxu0 0.0
  %v4516 = vand.u32 %v3558, 4294901760
  %v4517 = vsub.f32 %v3558, %v4516
  %v4518 = vand.u32 %v4517, 4294901760
  %v4519 = vsub.f32 %v4517, %v4518
  %v4520 = vand.u32 %v4519, 4294901760
  %4521 = vmatpush1.msra.mxu0 %v4520
  %4522 = vmatprep.subr.mxu0 0.0
  %v4523 = vand.u32 %v3559, 4294901760
  %v4524 = vsub.f32 %v3559, %v4523
  %v4525 = vand.u32 %v4524, 4294901760
  %v4526 = vsub.f32 %v4524, %v4525
  %v4527 = vand.u32 %v4526, 4294901760
  %4528 = vmatpush1.msra.mxu0 %v4527
  %4529 = vmatprep.subr.mxu0 0.0
  %4530 = vmatpush1.msra.mxu0 0.0
  %4531 = vmatprep.subr.mxu0 0.0
  %4532 = vmatpush1.msra.mxu0 0.0
  %4533 = vmatprep.subr.mxu0 0.0
  %4534 = vmatpush1.msra.mxu0 0.0
  %4535 = vmatprep.subr.mxu0 0.0
  %4536 = vmatpush1.msra.mxu0 0.0
  %4537 = vmatprep.subr.mxu0 0.0
  %4538 = vmatpush1.msra.mxu0 0.0
  %4539 = vmatprep.subr.mxu0 0.0
  %4540 = vmatpush1.msra.mxu0 0.0
  %4541 = vmatprep.subr.mxu0 0.0
  %4542 = vmatpush1.msra.mxu0 0.0
  %4543 = vmatprep.subr.mxu0 0.0
  %4544 = vmatpush1.msra.mxu0 0.0
  %4545 = vmatprep.subr.mxu0 0.0
  %4546 = vmatpush1.msra.mxu0 0.0
  %4547 = vmatprep.subr.mxu0 0.0
  %4548 = vmatpush1.msra.mxu0 0.0
  %4549 = vmatprep.subr.mxu0 0.0
  %4550 = vmatpush1.msra.mxu0 0.0
  %4551 = vmatprep.subr.mxu0 0.0
  %4552 = vmatpush1.msra.mxu0 0.0
  %4553 = vmatprep.subr.mxu0 0.0
  %4554 = vmatpush1.msra.mxu0 0.0
  %4555 = vmatprep.subr.mxu0 0.0
  %4556 = vmatpush1.msra.mxu0 0.0
  %4557 = vmatprep.subr.mxu0 0.0
  %4558 = vmatpush1.msra.mxu0 0.0
  %4559 = vmatprep.subr.mxu0 0.0
  %4560 = vmatpush1.msra.mxu0 0.0
  %4561 = vmatprep.subr.mxu0 0.0
  %4562 = vmatpush1.msra.mxu0 0.0
  %4563 = vmatprep.subr.mxu0 0.0
  %4564 = vmatpush1.msra.mxu0 0.0
  %4565 = vmatprep.subr.mxu0 0.0
  %4566 = vmatpush1.msra.mxu0 0.0
  %4567 = vmatprep.subr.mxu0 0.0
  %4568 = vmatpush1.msra.mxu0 0.0
  %4569 = vmatprep.subr.mxu0 0.0
  %4570 = vmatpush1.msra.mxu0 0.0
  %4571 = vmatprep.subr.mxu0 0.0
  %4572 = vmatpush1.msra.mxu0 0.0
  %4573 = vmatprep.subr.mxu0 0.0
  %4574 = vmatpush1.msra.mxu0 0.0
  %4575 = vmatprep.subr.mxu0 0.0
  %4576 = vmatpush1.msra.mxu0 0.0
  %4577 = vmatprep.mubr.f32.mxu0 0.0
  %v4578 = vand.u32 %v3569, 4294901760
  %4579 = vmatmul.mubr.f32.gmra.mrb[0].mxu0 %v4578
  %v4580 = vpop.f32.mrb[0].mxu0
  %v4581 = vadd.f32 %v3840, %v4580
  %v4582 = vpop.f32.mrb[0].mxu0
  %4583 = vmatprep.mubr.f32.mxu0 0.0
  %v4584 = vand.u32 %v3572, 4294901760
  %4585 = vmatmul.mubr.f32.gmra.mrb[0].mxu0 %v4584
  %v4586 = vpop.f32.mrb[0].mxu0
  %v4587 = vadd.f32 %v3850, %v4586
  %v4588 = vpop.f32.mrb[0].mxu0
  %4589 = vmatprep.mubr.f32.mxu0 0.0
  %v4590 = vand.u32 %v3575, 4294901760
  %4591 = vmatmul.mubr.f32.gmra.mrb[0].mxu0 %v4590
  %v4592 = vpop.f32.mrb[0].mxu0
  %v4593 = vadd.f32 %v3860, %v4592
  %v4594 = vpop.f32.mrb[0].mxu0
  %4595 = vmatprep.mubr.f32.mxu0 0.0
  %v4596 = vand.u32 %v3578, 4294901760
  %4597 = vmatmul.mubr.f32.gmra.mrb[0].mxu0 %v4596
  %v4598 = vpop.f32.mrb[0].mxu0
  %v4599 = vadd.f32 %v3870, %v4598
  %v4600 = vpop.f32.mrb[0].mxu0
  %4601 = vmatprep.mubr.f32.mxu0 0.0
  %v4602 = vand.u32 %v3581, 4294901760
  %4603 = vmatmul.mubr.f32.gmra.mrb[0].mxu0 %v4602
  %v4604 = vpop.f32.mrb[0].mxu0
  %v4605 = vadd.f32 %v3880, %v4604
  %v4606 = vpop.f32.mrb[0].mxu0
  %4607 = vmatprep.mubr.f32.mxu0 0.0
  %v4608 = vand.u32 %v3584, 4294901760
  %4609 = vmatmul.mubr.f32.gmra.mrb[0].mxu0 %v4608
  %v4610 = vpop.f32.mrb[0].mxu0
  %v4611 = vadd.f32 %v3890, %v4610
  %v4612 = vpop.f32.mrb[0].mxu0
  %4613 = vmatprep.mubr.f32.mxu0 0.0
  %v4614 = vand.u32 %v3587, 4294901760
  %4615 = vmatmul.mubr.f32.gmra.mrb[0].mxu0 %v4614
  %v4616 = vpop.f32.mrb[0].mxu0
  %v4617 = vadd.f32 %v3900, %v4616
  %v4618 = vpop.f32.mrb[0].mxu0
  %4619 = vmatprep.mubr.f32.mxu0 0.0
  %v4620 = vand.u32 %v3590, 4294901760
  %4621 = vmatmul.mubr.f32.gmra.mrb[0].mxu0 %v4620
  %v4622 = vpop.f32.mrb[0].mxu0
  %v4623 = vadd.f32 %v3910, %v4622
  %v4624 = vpop.f32.mrb[0].mxu0
  %4625 = vmatprep.mubr.f32.mxu0 0.0
  %v4626 = vand.u32 %v3593, 4294901760
  %4627 = vmatmul.mubr.f32.gmra.mrb[0].mxu0 %v4626
  %v4628 = vpop.f32.mrb[0].mxu0
  %v4629 = vadd.f32 %v3920, %v4628
  %v4630 = vpop.f32.mrb[0].mxu0
  %4631 = vmatprep.mubr.f32.mxu0 0.0
  %v4632 = vand.u32 %v3596, 4294901760
  %4633 = vmatmul.mubr.f32.gmra.mrb[0].mxu0 %v4632
  %v4634 = vpop.f32.mrb[0].mxu0
  %v4635 = vadd.f32 %v3930, %v4634
  %v4636 = vpop.f32.mrb[0].mxu0
  %4637 = vmatprep.mubr.f32.mxu0 0.0
  %v4638 = vand.u32 %v3599, 4294901760
  %4639 = vmatmul.mubr.f32.gmra.mrb[0].mxu0 %v4638
  %v4640 = vpop.f32.mrb[0].mxu0
  %v4641 = vadd.f32 %v3940, %v4640
  %v4642 = vpop.f32.mrb[0].mxu0
  %4643 = vmatprep.mubr.f32.mxu0 0.0
  %v4644 = vand.u32 %v3602, 4294901760
  %4645 = vmatmul.mubr.f32.gmra.mrb[0].mxu0 %v4644
  %v4646 = vpop.f32.mrb[0].mxu0
  %v4647 = vadd.f32 %v3950, %v4646
  %v4648 = vpop.f32.mrb[0].mxu0
  %4649 = vmatprep.mubr.f32.mxu0 0.0
  %v4650 = vand.u32 %v3605, 4294901760
  %4651 = vmatmul.mubr.f32.gmra.mrb[0].mxu0 %v4650
  %v4652 = vpop.f32.mrb[0].mxu0
  %v4653 = vadd.f32 %v3960, %v4652
  %v4654 = vpop.f32.mrb[0].mxu0
  %4655 = vmatprep.mubr.f32.mxu0 0.0
  %v4656 = vand.u32 %v3608, 4294901760
  %4657 = vmatmul.mubr.f32.gmra.mrb[0].mxu0 %v4656
  %v4658 = vpop.f32.mrb[0].mxu0
  %v4659 = vadd.f32 %v3970, %v4658
  %v4660 = vpop.f32.mrb[0].mxu0
  %4661 = vmatprep.mubr.f32.mxu0 0.0
  %v4662 = vand.u32 %v3611, 4294901760
  %4663 = vmatmul.mubr.f32.gmra.mrb[0].mxu0 %v4662
  %v4664 = vpop.f32.mrb[0].mxu0
  %v4665 = vadd.f32 %v3980, %v4664
  %v4666 = vpop.f32.mrb[0].mxu0
  %4667 = vmatprep.mubr.f32.mxu0 0.0
  %v4668 = vand.u32 %v3614, 4294901760
  %4669 = vmatmul.mubr.f32.gmra.mrb[0].mxu0 %v4668
  %v4670 = vpop.f32.mrb[0].mxu0
  %v4671 = vadd.f32 %v3990, %v4670
  %v4672 = vpop.f32.mrb[0].mxu0
  %4673 = vmatprep.mubr.f32.mxu0 0.0
  %v4674 = vand.u32 %v3617, 4294901760
  %4675 = vmatmul.mubr.f32.gmra.mrb[0].mxu0 %v4674
  %v4676 = vpop.f32.mrb[0].mxu0
  %v4677 = vadd.f32 %v4000, %v4676
  %v4678 = vpop.f32.mrb[0].mxu0
  %4679 = vmatprep.mubr.f32.mxu0 0.0
  %v4680 = vand.u32 %v3620, 4294901760
  %4681 = vmatmul.mubr.f32.gmra.mrb[0].mxu0 %v4680
  %v4682 = vpop.f32.mrb[0].mxu0
  %v4683 = vadd.f32 %v4010, %v4682
  %v4684 = vpop.f32.mrb[0].mxu0
  %4685 = vmatprep.mubr.f32.mxu0 0.0
  %v4686 = vand.u32 %v3623, 4294901760
  %4687 = vmatmul.mubr.f32.gmra.mrb[0].mxu0 %v4686
  %v4688 = vpop.f32.mrb[0].mxu0
  %v4689 = vadd.f32 %v4020, %v4688
  %v4690 = vpop.f32.mrb[0].mxu0
  %4691 = vmatprep.mubr.f32.mxu0 0.0
  %v4692 = vand.u32 %v3626, 4294901760
  %4693 = vmatmul.mubr.f32.gmra.mrb[0].mxu0 %v4692
  %v4694 = vpop.f32.mrb[0].mxu0
  %v4695 = vadd.f32 %v4030, %v4694
  %v4696 = vpop.f32.mrb[0].mxu0
  %4697 = vmatprep.mubr.f32.mxu0 0.0
  %v4698 = vand.u32 %v3629, 4294901760
  %4699 = vmatmul.mubr.f32.gmra.mrb[0].mxu0 %v4698
  %v4700 = vpop.f32.mrb[0].mxu0
  %v4701 = vadd.f32 %v4040, %v4700
  %v4702 = vpop.f32.mrb[0].mxu0
  %4703 = vmatprep.mubr.f32.mxu0 0.0
  %v4704 = vand.u32 %v3632, 4294901760
  %4705 = vmatmul.mubr.f32.gmra.mrb[0].mxu0 %v4704
  %v4706 = vpop.f32.mrb[0].mxu0
  %v4707 = vadd.f32 %v4050, %v4706
  %v4708 = vpop.f32.mrb[0].mxu0
  %4709 = vmatprep.mubr.f32.mxu0 0.0
  %v4710 = vand.u32 %v3635, 4294901760
  %4711 = vmatmul.mubr.f32.gmra.mrb[0].mxu0 %v4710
  %v4712 = vpop.f32.mrb[0].mxu0
  %v4713 = vadd.f32 %v4060, %v4712
  %v4714 = vpop.f32.mrb[0].mxu0
  %4715 = vmatprep.mubr.f32.mxu0 0.0
  %v4716 = vand.u32 %v3638, 4294901760
  %4717 = vmatmul.mubr.f32.gmra.mrb[0].mxu0 %v4716
  %v4718 = vpop.f32.mrb[0].mxu0
  %v4719 = vadd.f32 %v4070, %v4718
  %v4720 = vpop.f32.mrb[0].mxu0
  %4721 = vmatprep.mubr.f32.mxu0 0.0
  %v4722 = vand.u32 %v3641, 4294901760
  %4723 = vmatmul.mubr.f32.gmra.mrb[0].mxu0 %v4722
  %v4724 = vpop.f32.mrb[0].mxu0
  %v4725 = vadd.f32 %v4080, %v4724
  %v4726 = vpop.f32.mrb[0].mxu0
  %4727 = vmatprep.mubr.f32.mxu0 0.0
  %v4728 = vand.u32 %v3644, 4294901760
  %4729 = vmatmul.mubr.f32.gmra.mrb[0].mxu0 %v4728
  %v4730 = vpop.f32.mrb[0].mxu0
  %v4731 = vadd.f32 %v4090, %v4730
  %v4732 = vpop.f32.mrb[0].mxu0
  %4733 = vmatprep.mubr.f32.mxu0 0.0
  %v4734 = vand.u32 %v3647, 4294901760
  %4735 = vmatmul.mubr.f32.gmra.mrb[0].mxu0 %v4734
  %v4736 = vpop.f32.mrb[0].mxu0
  %v4737 = vadd.f32 %v4100, %v4736
  %v4738 = vpop.f32.mrb[0].mxu0
  %4739 = vmatprep.mubr.f32.mxu0 0.0
  %v4740 = vand.u32 %v3650, 4294901760
  %4741 = vmatmul.mubr.f32.gmra.mrb[0].mxu0 %v4740
  %v4742 = vpop.f32.mrb[0].mxu0
  %v4743 = vadd.f32 %v4110, %v4742
  %v4744 = vpop.f32.mrb[0].mxu0
  %4745 = vmatprep.mubr.f32.mxu0 0.0
  %v4746 = vand.u32 %v3653, 4294901760
  %4747 = vmatmul.mubr.f32.gmra.mrb[0].mxu0 %v4746
  %v4748 = vpop.f32.mrb[0].mxu0
  %v4749 = vadd.f32 %v4120, %v4748
  %v4750 = vpop.f32.mrb[0].mxu0
  %4751 = vmatprep.mubr.f32.mxu0 0.0
  %v4752 = vand.u32 %v3656, 4294901760
  %4753 = vmatmul.mubr.f32.gmra.mrb[0].mxu0 %v4752
  %v4754 = vpop.f32.mrb[0].mxu0
  %v4755 = vadd.f32 %v4130, %v4754
  %v4756 = vpop.f32.mrb[0].mxu0
  %4757 = vmatprep.mubr.f32.mxu0 0.0
  %v4758 = vand.u32 %v3659, 4294901760
  %4759 = vmatmul.mubr.f32.gmra.mrb[0].mxu0 %v4758
  %v4760 = vpop.f32.mrb[0].mxu0
  %v4761 = vadd.f32 %v4140, %v4760
  %v4762 = vpop.f32.mrb[0].mxu0
  %4763 = vmatprep.mubr.f32.mxu0 0.0
  %v4764 = vand.u32 %v3662, 4294901760
  %4765 = vmatmul.mubr.f32.gmra.mrb[0].mxu0 %v4764
  %v4766 = vpop.f32.mrb[0].mxu0
  %v4767 = vadd.f32 %v4150, %v4766
  %v4768 = vpop.f32.mrb[0].mxu0
  %4769 = vmatprep.mubr.f32.mxu0 0.0
  %v4770 = vand.u32 %v3665, 4294901760
  %4771 = vmatmul.mubr.f32.gmra.mrb[0].mxu0 %v4770
  %v4772 = vpop.f32.mrb[0].mxu0
  %v4773 = vadd.f32 %v4160, %v4772
  %v4774 = vpop.f32.mrb[0].mxu0
  %4775 = vmatprep.mubr.f32.mxu0 0.0
  %v4776 = vand.u32 %v3668, 4294901760
  %4777 = vmatmul.mubr.f32.gmra.mrb[0].mxu0 %v4776
  %v4778 = vpop.f32.mrb[0].mxu0
  %v4779 = vadd.f32 %v4170, %v4778
  %v4780 = vpop.f32.mrb[0].mxu0
  %4781 = vmatprep.mubr.f32.mxu0 0.0
  %v4782 = vand.u32 %v3671, 4294901760
  %4783 = vmatmul.mubr.f32.gmra.mrb[0].mxu0 %v4782
  %v4784 = vpop.f32.mrb[0].mxu0
  %v4785 = vadd.f32 %v4180, %v4784
  %v4786 = vpop.f32.mrb[0].mxu0
  %4787 = vmatprep.mubr.f32.mxu0 0.0
  %v4788 = vand.u32 %v3674, 4294901760
  %4789 = vmatmul.mubr.f32.gmra.mrb[0].mxu0 %v4788
  %v4790 = vpop.f32.mrb[0].mxu0
  %v4791 = vadd.f32 %v4190, %v4790
  %v4792 = vpop.f32.mrb[0].mxu0
  %4793 = vmatprep.mubr.f32.mxu0 0.0
  %v4794 = vand.u32 %v3677, 4294901760
  %4795 = vmatmul.mubr.f32.gmra.mrb[0].mxu0 %v4794
  %v4796 = vpop.f32.mrb[0].mxu0
  %v4797 = vadd.f32 %v4200, %v4796
  %v4798 = vpop.f32.mrb[0].mxu0
  %4799 = vmatprep.mubr.f32.mxu0 0.0
  %v4800 = vand.u32 %v3680, 4294901760
  %4801 = vmatmul.mubr.f32.gmra.mrb[0].mxu0 %v4800
  %v4802 = vpop.f32.mrb[0].mxu0
  %v4803 = vadd.f32 %v4210, %v4802
  %v4804 = vpop.f32.mrb[0].mxu0
  %4805 = vmatprep.mubr.f32.mxu0 0.0
  %v4806 = vand.u32 %v3683, 4294901760
  %4807 = vmatmul.mubr.f32.gmra.mrb[0].mxu0 %v4806
  %v4808 = vpop.f32.mrb[0].mxu0
  %v4809 = vadd.f32 %v4220, %v4808
  %v4810 = vpop.f32.mrb[0].mxu0
  %4811 = vmatprep.mubr.f32.mxu0 0.0
  %v4812 = vand.u32 %v3686, 4294901760
  %4813 = vmatmul.mubr.f32.gmra.mrb[0].mxu0 %v4812
  %v4814 = vpop.f32.mrb[0].mxu0
  %v4815 = vadd.f32 %v4230, %v4814
  %v4816 = vpop.f32.mrb[0].mxu0
  %4817 = vmatprep.mubr.f32.mxu0 0.0
  %v4818 = vand.u32 %v3689, 4294901760
  %4819 = vmatmul.mubr.f32.gmra.mrb[0].mxu0 %v4818
  %v4820 = vpop.f32.mrb[0].mxu0
  %v4821 = vadd.f32 %v4240, %v4820
  %v4822 = vpop.f32.mrb[0].mxu0
  %4823 = vmatprep.mubr.f32.mxu0 0.0
  %v4824 = vand.u32 %v3692, 4294901760
  %4825 = vmatmul.mubr.f32.gmra.mrb[0].mxu0 %v4824
  %v4826 = vpop.f32.mrb[0].mxu0
  %v4827 = vadd.f32 %v4250, %v4826
  %v4828 = vpop.f32.mrb[0].mxu0
  %4829 = vmatprep.mubr.f32.mxu0 0.0
  %v4830 = vand.u32 %v3695, 4294901760
  %4831 = vmatmul.mubr.f32.gmra.mrb[0].mxu0 %v4830
  %v4832 = vpop.f32.mrb[0].mxu0
  %v4833 = vadd.f32 %v4260, %v4832
  %v4834 = vpop.f32.mrb[0].mxu0
  %4835 = vmatprep.mubr.f32.mxu0 0.0
  %v4836 = vand.u32 %v3698, 4294901760
  %4837 = vmatmul.mubr.f32.gmra.mrb[0].mxu0 %v4836
  %v4838 = vpop.f32.mrb[0].mxu0
  %v4839 = vadd.f32 %v4270, %v4838
  %v4840 = vpop.f32.mrb[0].mxu0
  %4841 = vmatprep.mubr.f32.mxu0 0.0
  %v4842 = vand.u32 %v3701, 4294901760
  %4843 = vmatmul.mubr.f32.gmra.mrb[0].mxu0 %v4842
  %v4844 = vpop.f32.mrb[0].mxu0
  %v4845 = vadd.f32 %v4280, %v4844
  %v4846 = vpop.f32.mrb[0].mxu0
  %4847 = vmatprep.mubr.f32.mxu0 0.0
  %v4848 = vand.u32 %v3704, 4294901760
  %4849 = vmatmul.mubr.f32.gmra.mrb[0].mxu0 %v4848
  %v4850 = vpop.f32.mrb[0].mxu0
  %v4851 = vadd.f32 %v4290, %v4850
  %v4852 = vpop.f32.mrb[0].mxu0
  %4853 = vmatprep.mubr.f32.mxu0 0.0
  %v4854 = vand.u32 %v3707, 4294901760
  %4855 = vmatmul.mubr.f32.gmra.mrb[0].mxu0 %v4854
  %v4856 = vpop.f32.mrb[0].mxu0
  %v4857 = vadd.f32 %v4300, %v4856
  %v4858 = vpop.f32.mrb[0].mxu0
  %4859 = vmatprep.mubr.f32.mxu0 0.0
  %v4860 = vand.u32 %v3710, 4294901760
  %4861 = vmatmul.mubr.f32.gmra.mrb[0].mxu0 %v4860
  %v4862 = vpop.f32.mrb[0].mxu0
  %v4863 = vadd.f32 %v4310, %v4862
  %v4864 = vpop.f32.mrb[0].mxu0
  %4865 = vmatprep.mubr.f32.mxu0 0.0
  %v4866 = vand.u32 %v3713, 4294901760
  %4867 = vmatmul.mubr.f32.gmra.mrb[0].mxu0 %v4866
  %v4868 = vpop.f32.mrb[0].mxu0
  %v4869 = vadd.f32 %v4320, %v4868
  %v4870 = vpop.f32.mrb[0].mxu0
  %4871 = vmatprep.mubr.f32.mxu0 0.0
  %v4872 = vand.u32 %v3716, 4294901760
  %4873 = vmatmul.mubr.f32.gmra.mrb[0].mxu0 %v4872
  %v4874 = vpop.f32.mrb[0].mxu0
  %v4875 = vadd.f32 %v4330, %v4874
  %v4876 = vpop.f32.mrb[0].mxu0
  %4877 = vmatprep.mubr.f32.mxu0 0.0
  %v4878 = vand.u32 %v3719, 4294901760
  %4879 = vmatmul.mubr.f32.gmra.mrb[0].mxu0 %v4878
  %v4880 = vpop.f32.mrb[0].mxu0
  %v4881 = vadd.f32 %v4340, %v4880
  %v4882 = vpop.f32.mrb[0].mxu0
  %4883 = vmatprep.mubr.f32.mxu0 0.0
  %v4884 = vand.u32 %v3722, 4294901760
  %4885 = vmatmul.mubr.f32.gmra.mrb[0].mxu0 %v4884
  %v4886 = vpop.f32.mrb[0].mxu0
  %v4887 = vadd.f32 %v4350, %v4886
  %v4888 = vpop.f32.mrb[0].mxu0
  %4889 = vmatprep.mubr.f32.mxu0 0.0
  %v4890 = vand.u32 %v3725, 4294901760
  %4891 = vmatmul.mubr.f32.gmra.mrb[0].mxu0 %v4890
  %v4892 = vpop.f32.mrb[0].mxu0
  %v4893 = vadd.f32 %v4360, %v4892
  %v4894 = vpop.f32.mrb[0].mxu0
  %4895 = vmatprep.mubr.f32.mxu0 0.0
  %v4896 = vand.u32 %v3728, 4294901760
  %4897 = vmatmul.mubr.f32.gmra.mrb[0].mxu0 %v4896
  %v4898 = vpop.f32.mrb[0].mxu0
  %v4899 = vadd.f32 %v4370, %v4898
  %v4900 = vpop.f32.mrb[0].mxu0
  %4901 = vmatprep.mubr.f32.mxu0 0.0
  %v4902 = vand.u32 %v3731, 4294901760
  %4903 = vmatmul.mubr.f32.gmra.mrb[0].mxu0 %v4902
  %v4904 = vpop.f32.mrb[0].mxu0
  %v4905 = vadd.f32 %v4380, %v4904
  %v4906 = vpop.f32.mrb[0].mxu0
  %4907 = vmatprep.mubr.f32.mxu0 0.0
  %v4908 = vand.u32 %v3734, 4294901760
  %4909 = vmatmul.mubr.f32.gmra.mrb[0].mxu0 %v4908
  %v4910 = vpop.f32.mrb[0].mxu0
  %v4911 = vadd.f32 %v4390, %v4910
  %v4912 = vpop.f32.mrb[0].mxu0
  %4913 = vmatprep.mubr.f32.mxu0 0.0
  %v4914 = vand.u32 %v3737, 4294901760
  %4915 = vmatmul.mubr.f32.gmra.mrb[0].mxu0 %v4914
  %v4916 = vpop.f32.mrb[0].mxu0
  %v4917 = vadd.f32 %v4400, %v4916
  %v4918 = vpop.f32.mrb[0].mxu0
  %4919 = vmatprep.mubr.f32.mxu0 0.0
  %v4920 = vand.u32 %v3740, 4294901760
  %4921 = vmatmul.mubr.f32.gmra.mrb[0].mxu0 %v4920
  %v4922 = vpop.f32.mrb[0].mxu0
  %v4923 = vadd.f32 %v4410, %v4922
  %v4924 = vpop.f32.mrb[0].mxu0
  %4925 = vmatprep.mubr.f32.mxu0 0.0
  %v4926 = vand.u32 %v3743, 4294901760
  %4927 = vmatmul.mubr.f32.gmra.mrb[0].mxu0 %v4926
  %v4928 = vpop.f32.mrb[0].mxu0
  %v4929 = vadd.f32 %v4420, %v4928
  %v4930 = vpop.f32.mrb[0].mxu0
  %4931 = vmatprep.mubr.f32.mxu0 0.0
  %v4932 = vand.u32 %v3746, 4294901760
  %4933 = vmatmul.mubr.f32.gmra.mrb[0].mxu0 %v4932
  %v4934 = vpop.f32.mrb[0].mxu0
  %v4935 = vadd.f32 %v4430, %v4934
  %v4936 = vpop.f32.mrb[0].mxu0
  %4937 = vmatprep.mubr.f32.mxu0 0.0
  %v4938 = vand.u32 %v3749, 4294901760
  %4939 = vmatmul.mubr.f32.gmra.mrb[0].mxu0 %v4938
  %v4940 = vpop.f32.mrb[0].mxu0
  %v4941 = vadd.f32 %v4440, %v4940
  %v4942 = vpop.f32.mrb[0].mxu0
  %4943 = vmatprep.mubr.f32.mxu0 0.0
  %v4944 = vand.u32 %v3752, 4294901760
  %4945 = vmatmul.mubr.f32.gmra.mrb[0].mxu0 %v4944
  %v4946 = vpop.f32.mrb[0].mxu0
  %v4947 = vadd.f32 %v4450, %v4946
  %v4948 = vpop.f32.mrb[0].mxu0
  %4949 = vmatprep.mubr.f32.mxu0 0.0
  %v4950 = vand.u32 %v3755, 4294901760
  %4951 = vmatmul.mubr.f32.gmra.mrb[0].mxu0 %v4950
  %v4952 = vpop.f32.mrb[0].mxu0
  %v4953 = vadd.f32 %v4460, %v4952
  %v4954 = vpop.f32.mrb[0].mxu0
  %4955 = vmatprep.mubr.f32.mxu0 0.0
  %v4956 = vand.u32 %v3758, 4294901760
  %4957 = vmatmul.mubr.f32.gmra.mrb[0].mxu0 %v4956
  %v4958 = vpop.f32.mrb[0].mxu0
  %v4959 = vadd.f32 %v4470, %v4958
  %v4960 = vpop.f32.mrb[0].mxu0
  %4961 = vdwg.mxu0
  %4962 = vmatprep.subr.mxu0 0.0
  %v4963 = vand.u32 %v3552, 4294901760
  %v4964 = vsub.f32 %v3552, %v4963
  %4965 = vmatpush1.msra.mxu0 %v4964
  %4966 = vmatprep.subr.mxu0 0.0
  %v4967 = vand.u32 %v3553, 4294901760
  %v4968 = vsub.f32 %v3553, %v4967
  %4969 = vmatpush1.msra.mxu0 %v4968
  %4970 = vmatprep.subr.mxu0 0.0
  %v4971 = vand.u32 %v3554, 4294901760
  %v4972 = vsub.f32 %v3554, %v4971
  %4973 = vmatpush1.msra.mxu0 %v4972
  %4974 = vmatprep.subr.mxu0 0.0
  %v4975 = vand.u32 %v3555, 4294901760
  %v4976 = vsub.f32 %v3555, %v4975
  %4977 = vmatpush1.msra.mxu0 %v4976
  %4978 = vmatprep.subr.mxu0 0.0
  %v4979 = vand.u32 %v3556, 4294901760
  %v4980 = vsub.f32 %v3556, %v4979
  %4981 = vmatpush1.msra.mxu0 %v4980
  %4982 = vmatprep.subr.mxu0 0.0
  %v4983 = vand.u32 %v3557, 4294901760
  %v4984 = vsub.f32 %v3557, %v4983
  %4985 = vmatpush1.msra.mxu0 %v4984
  %4986 = vmatprep.subr.mxu0 0.0
  %v4987 = vand.u32 %v3558, 4294901760
  %v4988 = vsub.f32 %v3558, %v4987
  %4989 = vmatpush1.msra.mxu0 %v4988
  %4990 = vmatprep.subr.mxu0 0.0
  %v4991 = vand.u32 %v3559, 4294901760
  %v4992 = vsub.f32 %v3559, %v4991
  %4993 = vmatpush1.msra.mxu0 %v4992
  %4994 = vmatprep.subr.mxu0 0.0
  %4995 = vmatpush1.msra.mxu0 0.0
  %4996 = vmatprep.subr.mxu0 0.0
  %4997 = vmatpush1.msra.mxu0 0.0
  %4998 = vmatprep.subr.mxu0 0.0
  %4999 = vmatpush1.msra.mxu0 0.0
  %5000 = vmatprep.subr.mxu0 0.0
  %5001 = vmatpush1.msra.mxu0 0.0
  %5002 = vmatprep.subr.mxu0 0.0
  %5003 = vmatpush1.msra.mxu0 0.0
  %5004 = vmatprep.subr.mxu0 0.0
  %5005 = vmatpush1.msra.mxu0 0.0
  %5006 = vmatprep.subr.mxu0 0.0
  %5007 = vmatpush1.msra.mxu0 0.0
  %5008 = vmatprep.subr.mxu0 0.0
  %5009 = vmatpush1.msra.mxu0 0.0
  %5010 = vmatprep.subr.mxu0 0.0
  %5011 = vmatpush1.msra.mxu0 0.0
  %5012 = vmatprep.subr.mxu0 0.0
  %5013 = vmatpush1.msra.mxu0 0.0
  %5014 = vmatprep.subr.mxu0 0.0
  %5015 = vmatpush1.msra.mxu0 0.0
  %5016 = vmatprep.subr.mxu0 0.0
  %5017 = vmatpush1.msra.mxu0 0.0
  %5018 = vmatprep.subr.mxu0 0.0
  %5019 = vmatpush1.msra.mxu0 0.0
  %5020 = vmatprep.subr.mxu0 0.0
  %5021 = vmatpush1.msra.mxu0 0.0
  %5022 = vmatprep.subr.mxu0 0.0
  %5023 = vmatpush1.msra.mxu0 0.0
  %5024 = vmatprep.subr.mxu0 0.0
  %5025 = vmatpush1.msra.mxu0 0.0
  %5026 = vmatprep.subr.mxu0 0.0
  %5027 = vmatpush1.msra.mxu0 0.0
  %5028 = vmatprep.subr.mxu0 0.0
  %5029 = vmatpush1.msra.mxu0 0.0
  %5030 = vmatprep.subr.mxu0 0.0
  %5031 = vmatpush1.msra.mxu0 0.0
  %5032 = vmatprep.subr.mxu0 0.0
  %5033 = vmatpush1.msra.mxu0 0.0
  %5034 = vmatprep.subr.mxu0 0.0
  %5035 = vmatpush1.msra.mxu0 0.0
  %5036 = vmatprep.subr.mxu0 0.0
  %5037 = vmatpush1.msra.mxu0 0.0
  %5038 = vmatprep.subr.mxu0 0.0
  %5039 = vmatpush1.msra.mxu0 0.0
  %5040 = vmatprep.subr.mxu0 0.0
  %5041 = vmatpush1.msra.mxu0 0.0
  %5042 = vmatprep.mubr.f32.mxu0 0.0
  %v5043 = vand.u32 %v3569, 4294901760
  %v5044 = vsub.f32 %v3569, %v5043
  %5045 = vmatmul.mubr.f32.gmra.mrb[0].mxu0 %v5044
  %v5046 = vpop.f32.mrb[0].mxu0
  %v5047 = vadd.f32 %v4581, %v5046
  %v5048 = vpop.f32.mrb[0].mxu0
  %5049 = vmatprep.mubr.f32.mxu0 0.0
  %v5050 = vand.u32 %v3572, 4294901760
  %v5051 = vsub.f32 %v3572, %v5050
  %5052 = vmatmul.mubr.f32.gmra.mrb[0].mxu0 %v5051
  %v5053 = vpop.f32.mrb[0].mxu0
  %v5054 = vadd.f32 %v4587, %v5053
  %v5055 = vpop.f32.mrb[0].mxu0
  %5056 = vmatprep.mubr.f32.mxu0 0.0
  %v5057 = vand.u32 %v3575, 4294901760
  %v5058 = vsub.f32 %v3575, %v5057
  %5059 = vmatmul.mubr.f32.gmra.mrb[0].mxu0 %v5058
  %v5060 = vpop.f32.mrb[0].mxu0
  %v5061 = vadd.f32 %v4593, %v5060
  %v5062 = vpop.f32.mrb[0].mxu0
  %5063 = vmatprep.mubr.f32.mxu0 0.0
  %v5064 = vand.u32 %v3578, 4294901760
  %v5065 = vsub.f32 %v3578, %v5064
  %5066 = vmatmul.mubr.f32.gmra.mrb[0].mxu0 %v5065
  %v5067 = vpop.f32.mrb[0].mxu0
  %v5068 = vadd.f32 %v4599, %v5067
  %v5069 = vpop.f32.mrb[0].mxu0
  %5070 = vmatprep.mubr.f32.mxu0 0.0
  %v5071 = vand.u32 %v3581, 4294901760
  %v5072 = vsub.f32 %v3581, %v5071
  %5073 = vmatmul.mubr.f32.gmra.mrb[0].mxu0 %v5072
  %v5074 = vpop.f32.mrb[0].mxu0
  %v5075 = vadd.f32 %v4605, %v5074
  %v5076 = vpop.f32.mrb[0].mxu0
  %5077 = vmatprep.mubr.f32.mxu0 0.0
  %v5078 = vand.u32 %v3584, 4294901760
  %v5079 = vsub.f32 %v3584, %v5078
  %5080 = vmatmul.mubr.f32.gmra.mrb[0].mxu0 %v5079
  %v5081 = vpop.f32.mrb[0].mxu0
  %v5082 = vadd.f32 %v4611, %v5081
  %v5083 = vpop.f32.mrb[0].mxu0
  %5084 = vmatprep.mubr.f32.mxu0 0.0
  %v5085 = vand.u32 %v3587, 4294901760
  %v5086 = vsub.f32 %v3587, %v5085
  %5087 = vmatmul.mubr.f32.gmra.mrb[0].mxu0 %v5086
  %v5088 = vpop.f32.mrb[0].mxu0
  %v5089 = vadd.f32 %v4617, %v5088
  %v5090 = vpop.f32.mrb[0].mxu0
  %5091 = vmatprep.mubr.f32.mxu0 0.0
  %v5092 = vand.u32 %v3590, 4294901760
  %v5093 = vsub.f32 %v3590, %v5092
  %5094 = vmatmul.mubr.f32.gmra.mrb[0].mxu0 %v5093
  %v5095 = vpop.f32.mrb[0].mxu0
  %v5096 = vadd.f32 %v4623, %v5095
  %v5097 = vpop.f32.mrb[0].mxu0
  %5098 = vmatprep.mubr.f32.mxu0 0.0
  %v5099 = vand.u32 %v3593, 4294901760
  %v5100 = vsub.f32 %v3593, %v5099
  %5101 = vmatmul.mubr.f32.gmra.mrb[0].mxu0 %v5100
  %v5102 = vpop.f32.mrb[0].mxu0
  %v5103 = vadd.f32 %v4629, %v5102
  %v5104 = vpop.f32.mrb[0].mxu0
  %5105 = vmatprep.mubr.f32.mxu0 0.0
  %v5106 = vand.u32 %v3596, 4294901760
  %v5107 = vsub.f32 %v3596, %v5106
  %5108 = vmatmul.mubr.f32.gmra.mrb[0].mxu0 %v5107
  %v5109 = vpop.f32.mrb[0].mxu0
  %v5110 = vadd.f32 %v4635, %v5109
  %v5111 = vpop.f32.mrb[0].mxu0
  %5112 = vmatprep.mubr.f32.mxu0 0.0
  %v5113 = vand.u32 %v3599, 4294901760
  %v5114 = vsub.f32 %v3599, %v5113
  %5115 = vmatmul.mubr.f32.gmra.mrb[0].mxu0 %v5114
  %v5116 = vpop.f32.mrb[0].mxu0
  %v5117 = vadd.f32 %v4641, %v5116
  %v5118 = vpop.f32.mrb[0].mxu0
  %5119 = vmatprep.mubr.f32.mxu0 0.0
  %v5120 = vand.u32 %v3602, 4294901760
  %v5121 = vsub.f32 %v3602, %v5120
  %5122 = vmatmul.mubr.f32.gmra.mrb[0].mxu0 %v5121
  %v5123 = vpop.f32.mrb[0].mxu0
  %v5124 = vadd.f32 %v4647, %v5123
  %v5125 = vpop.f32.mrb[0].mxu0
  %5126 = vmatprep.mubr.f32.mxu0 0.0
  %v5127 = vand.u32 %v3605, 4294901760
  %v5128 = vsub.f32 %v3605, %v5127
  %5129 = vmatmul.mubr.f32.gmra.mrb[0].mxu0 %v5128
  %v5130 = vpop.f32.mrb[0].mxu0
  %v5131 = vadd.f32 %v4653, %v5130
  %v5132 = vpop.f32.mrb[0].mxu0
  %5133 = vmatprep.mubr.f32.mxu0 0.0
  %v5134 = vand.u32 %v3608, 4294901760
  %v5135 = vsub.f32 %v3608, %v5134
  %5136 = vmatmul.mubr.f32.gmra.mrb[0].mxu0 %v5135
  %v5137 = vpop.f32.mrb[0].mxu0
  %v5138 = vadd.f32 %v4659, %v5137
  %v5139 = vpop.f32.mrb[0].mxu0
  %5140 = vmatprep.mubr.f32.mxu0 0.0
  %v5141 = vand.u32 %v3611, 4294901760
  %v5142 = vsub.f32 %v3611, %v5141
  %5143 = vmatmul.mubr.f32.gmra.mrb[0].mxu0 %v5142
  %v5144 = vpop.f32.mrb[0].mxu0
  %v5145 = vadd.f32 %v4665, %v5144
  %v5146 = vpop.f32.mrb[0].mxu0
  %5147 = vmatprep.mubr.f32.mxu0 0.0
  %v5148 = vand.u32 %v3614, 4294901760
  %v5149 = vsub.f32 %v3614, %v5148
  %5150 = vmatmul.mubr.f32.gmra.mrb[0].mxu0 %v5149
  %v5151 = vpop.f32.mrb[0].mxu0
  %v5152 = vadd.f32 %v4671, %v5151
  %v5153 = vpop.f32.mrb[0].mxu0
  %5154 = vmatprep.mubr.f32.mxu0 0.0
  %v5155 = vand.u32 %v3617, 4294901760
  %v5156 = vsub.f32 %v3617, %v5155
  %5157 = vmatmul.mubr.f32.gmra.mrb[0].mxu0 %v5156
  %v5158 = vpop.f32.mrb[0].mxu0
  %v5159 = vadd.f32 %v4677, %v5158
  %v5160 = vpop.f32.mrb[0].mxu0
  %5161 = vmatprep.mubr.f32.mxu0 0.0
  %v5162 = vand.u32 %v3620, 4294901760
  %v5163 = vsub.f32 %v3620, %v5162
  %5164 = vmatmul.mubr.f32.gmra.mrb[0].mxu0 %v5163
  %v5165 = vpop.f32.mrb[0].mxu0
  %v5166 = vadd.f32 %v4683, %v5165
  %v5167 = vpop.f32.mrb[0].mxu0
  %5168 = vmatprep.mubr.f32.mxu0 0.0
  %v5169 = vand.u32 %v3623, 4294901760
  %v5170 = vsub.f32 %v3623, %v5169
  %5171 = vmatmul.mubr.f32.gmra.mrb[0].mxu0 %v5170
  %v5172 = vpop.f32.mrb[0].mxu0
  %v5173 = vadd.f32 %v4689, %v5172
  %v5174 = vpop.f32.mrb[0].mxu0
  %5175 = vmatprep.mubr.f32.mxu0 0.0
  %v5176 = vand.u32 %v3626, 4294901760
  %v5177 = vsub.f32 %v3626, %v5176
  %5178 = vmatmul.mubr.f32.gmra.mrb[0].mxu0 %v5177
  %v5179 = vpop.f32.mrb[0].mxu0
  %v5180 = vadd.f32 %v4695, %v5179
  %v5181 = vpop.f32.mrb[0].mxu0
  %5182 = vmatprep.mubr.f32.mxu0 0.0
  %v5183 = vand.u32 %v3629, 4294901760
  %v5184 = vsub.f32 %v3629, %v5183
  %5185 = vmatmul.mubr.f32.gmra.mrb[0].mxu0 %v5184
  %v5186 = vpop.f32.mrb[0].mxu0
  %v5187 = vadd.f32 %v4701, %v5186
  %v5188 = vpop.f32.mrb[0].mxu0
  %5189 = vmatprep.mubr.f32.mxu0 0.0
  %v5190 = vand.u32 %v3632, 4294901760
  %v5191 = vsub.f32 %v3632, %v5190
  %5192 = vmatmul.mubr.f32.gmra.mrb[0].mxu0 %v5191
  %v5193 = vpop.f32.mrb[0].mxu0
  %v5194 = vadd.f32 %v4707, %v5193
  %v5195 = vpop.f32.mrb[0].mxu0
  %5196 = vmatprep.mubr.f32.mxu0 0.0
  %v5197 = vand.u32 %v3635, 4294901760
  %v5198 = vsub.f32 %v3635, %v5197
  %5199 = vmatmul.mubr.f32.gmra.mrb[0].mxu0 %v5198
  %v5200 = vpop.f32.mrb[0].mxu0
  %v5201 = vadd.f32 %v4713, %v5200
  %v5202 = vpop.f32.mrb[0].mxu0
  %5203 = vmatprep.mubr.f32.mxu0 0.0
  %v5204 = vand.u32 %v3638, 4294901760
  %v5205 = vsub.f32 %v3638, %v5204
  %5206 = vmatmul.mubr.f32.gmra.mrb[0].mxu0 %v5205
  %v5207 = vpop.f32.mrb[0].mxu0
  %v5208 = vadd.f32 %v4719, %v5207
  %v5209 = vpop.f32.mrb[0].mxu0
  %5210 = vmatprep.mubr.f32.mxu0 0.0
  %v5211 = vand.u32 %v3641, 4294901760
  %v5212 = vsub.f32 %v3641, %v5211
  %5213 = vmatmul.mubr.f32.gmra.mrb[0].mxu0 %v5212
  %v5214 = vpop.f32.mrb[0].mxu0
  %v5215 = vadd.f32 %v4725, %v5214
  %v5216 = vpop.f32.mrb[0].mxu0
  %5217 = vmatprep.mubr.f32.mxu0 0.0
  %v5218 = vand.u32 %v3644, 4294901760
  %v5219 = vsub.f32 %v3644, %v5218
  %5220 = vmatmul.mubr.f32.gmra.mrb[0].mxu0 %v5219
  %v5221 = vpop.f32.mrb[0].mxu0
  %v5222 = vadd.f32 %v4731, %v5221
  %v5223 = vpop.f32.mrb[0].mxu0
  %5224 = vmatprep.mubr.f32.mxu0 0.0
  %v5225 = vand.u32 %v3647, 4294901760
  %v5226 = vsub.f32 %v3647, %v5225
  %5227 = vmatmul.mubr.f32.gmra.mrb[0].mxu0 %v5226
  %v5228 = vpop.f32.mrb[0].mxu0
  %v5229 = vadd.f32 %v4737, %v5228
  %v5230 = vpop.f32.mrb[0].mxu0
  %5231 = vmatprep.mubr.f32.mxu0 0.0
  %v5232 = vand.u32 %v3650, 4294901760
  %v5233 = vsub.f32 %v3650, %v5232
  %5234 = vmatmul.mubr.f32.gmra.mrb[0].mxu0 %v5233
  %v5235 = vpop.f32.mrb[0].mxu0
  %v5236 = vadd.f32 %v4743, %v5235
  %v5237 = vpop.f32.mrb[0].mxu0
  %5238 = vmatprep.mubr.f32.mxu0 0.0
  %v5239 = vand.u32 %v3653, 4294901760
  %v5240 = vsub.f32 %v3653, %v5239
  %5241 = vmatmul.mubr.f32.gmra.mrb[0].mxu0 %v5240
  %v5242 = vpop.f32.mrb[0].mxu0
  %v5243 = vadd.f32 %v4749, %v5242
  %v5244 = vpop.f32.mrb[0].mxu0
  %5245 = vmatprep.mubr.f32.mxu0 0.0
  %v5246 = vand.u32 %v3656, 4294901760
  %v5247 = vsub.f32 %v3656, %v5246
  %5248 = vmatmul.mubr.f32.gmra.mrb[0].mxu0 %v5247
  %v5249 = vpop.f32.mrb[0].mxu0
  %v5250 = vadd.f32 %v4755, %v5249
  %v5251 = vpop.f32.mrb[0].mxu0
  %5252 = vmatprep.mubr.f32.mxu0 0.0
  %v5253 = vand.u32 %v3659, 4294901760
  %v5254 = vsub.f32 %v3659, %v5253
  %5255 = vmatmul.mubr.f32.gmra.mrb[0].mxu0 %v5254
  %v5256 = vpop.f32.mrb[0].mxu0
  %v5257 = vadd.f32 %v4761, %v5256
  %v5258 = vpop.f32.mrb[0].mxu0
  %5259 = vmatprep.mubr.f32.mxu0 0.0
  %v5260 = vand.u32 %v3662, 4294901760
  %v5261 = vsub.f32 %v3662, %v5260
  %5262 = vmatmul.mubr.f32.gmra.mrb[0].mxu0 %v5261
  %v5263 = vpop.f32.mrb[0].mxu0
  %v5264 = vadd.f32 %v4767, %v5263
  %v5265 = vpop.f32.mrb[0].mxu0
  %5266 = vmatprep.mubr.f32.mxu0 0.0
  %v5267 = vand.u32 %v3665, 4294901760
  %v5268 = vsub.f32 %v3665, %v5267
  %5269 = vmatmul.mubr.f32.gmra.mrb[0].mxu0 %v5268
  %v5270 = vpop.f32.mrb[0].mxu0
  %v5271 = vadd.f32 %v4773, %v5270
  %v5272 = vpop.f32.mrb[0].mxu0
  %5273 = vmatprep.mubr.f32.mxu0 0.0
  %v5274 = vand.u32 %v3668, 4294901760
  %v5275 = vsub.f32 %v3668, %v5274
  %5276 = vmatmul.mubr.f32.gmra.mrb[0].mxu0 %v5275
  %v5277 = vpop.f32.mrb[0].mxu0
  %v5278 = vadd.f32 %v4779, %v5277
  %v5279 = vpop.f32.mrb[0].mxu0
  %5280 = vmatprep.mubr.f32.mxu0 0.0
  %v5281 = vand.u32 %v3671, 4294901760
  %v5282 = vsub.f32 %v3671, %v5281
  %5283 = vmatmul.mubr.f32.gmra.mrb[0].mxu0 %v5282
  %v5284 = vpop.f32.mrb[0].mxu0
  %v5285 = vadd.f32 %v4785, %v5284
  %v5286 = vpop.f32.mrb[0].mxu0
  %5287 = vmatprep.mubr.f32.mxu0 0.0
  %v5288 = vand.u32 %v3674, 4294901760
  %v5289 = vsub.f32 %v3674, %v5288
  %5290 = vmatmul.mubr.f32.gmra.mrb[0].mxu0 %v5289
  %v5291 = vpop.f32.mrb[0].mxu0
  %v5292 = vadd.f32 %v4791, %v5291
  %v5293 = vpop.f32.mrb[0].mxu0
  %5294 = vmatprep.mubr.f32.mxu0 0.0
  %v5295 = vand.u32 %v3677, 4294901760
  %v5296 = vsub.f32 %v3677, %v5295
  %5297 = vmatmul.mubr.f32.gmra.mrb[0].mxu0 %v5296
  %v5298 = vpop.f32.mrb[0].mxu0
  %v5299 = vadd.f32 %v4797, %v5298
  %v5300 = vpop.f32.mrb[0].mxu0
  %5301 = vmatprep.mubr.f32.mxu0 0.0
  %v5302 = vand.u32 %v3680, 4294901760
  %v5303 = vsub.f32 %v3680, %v5302
  %5304 = vmatmul.mubr.f32.gmra.mrb[0].mxu0 %v5303
  %v5305 = vpop.f32.mrb[0].mxu0
  %v5306 = vadd.f32 %v4803, %v5305
  %v5307 = vpop.f32.mrb[0].mxu0
  %5308 = vmatprep.mubr.f32.mxu0 0.0
  %v5309 = vand.u32 %v3683, 4294901760
  %v5310 = vsub.f32 %v3683, %v5309
  %5311 = vmatmul.mubr.f32.gmra.mrb[0].mxu0 %v5310
  %v5312 = vpop.f32.mrb[0].mxu0
  %v5313 = vadd.f32 %v4809, %v5312
  %v5314 = vpop.f32.mrb[0].mxu0
  %5315 = vmatprep.mubr.f32.mxu0 0.0
  %v5316 = vand.u32 %v3686, 4294901760
  %v5317 = vsub.f32 %v3686, %v5316
  %5318 = vmatmul.mubr.f32.gmra.mrb[0].mxu0 %v5317
  %v5319 = vpop.f32.mrb[0].mxu0
  %v5320 = vadd.f32 %v4815, %v5319
  %v5321 = vpop.f32.mrb[0].mxu0
  %5322 = vmatprep.mubr.f32.mxu0 0.0
  %v5323 = vand.u32 %v3689, 4294901760
  %v5324 = vsub.f32 %v3689, %v5323
  %5325 = vmatmul.mubr.f32.gmra.mrb[0].mxu0 %v5324
  %v5326 = vpop.f32.mrb[0].mxu0
  %v5327 = vadd.f32 %v4821, %v5326
  %v5328 = vpop.f32.mrb[0].mxu0
  %5329 = vmatprep.mubr.f32.mxu0 0.0
  %v5330 = vand.u32 %v3692, 4294901760
  %v5331 = vsub.f32 %v3692, %v5330
  %5332 = vmatmul.mubr.f32.gmra.mrb[0].mxu0 %v5331
  %v5333 = vpop.f32.mrb[0].mxu0
  %v5334 = vadd.f32 %v4827, %v5333
  %v5335 = vpop.f32.mrb[0].mxu0
  %5336 = vmatprep.mubr.f32.mxu0 0.0
  %v5337 = vand.u32 %v3695, 4294901760
  %v5338 = vsub.f32 %v3695, %v5337
  %5339 = vmatmul.mubr.f32.gmra.mrb[0].mxu0 %v5338
  %v5340 = vpop.f32.mrb[0].mxu0
  %v5341 = vadd.f32 %v4833, %v5340
  %v5342 = vpop.f32.mrb[0].mxu0
  %5343 = vmatprep.mubr.f32.mxu0 0.0
  %v5344 = vand.u32 %v3698, 4294901760
  %v5345 = vsub.f32 %v3698, %v5344
  %5346 = vmatmul.mubr.f32.gmra.mrb[0].mxu0 %v5345
  %v5347 = vpop.f32.mrb[0].mxu0
  %v5348 = vadd.f32 %v4839, %v5347
  %v5349 = vpop.f32.mrb[0].mxu0
  %5350 = vmatprep.mubr.f32.mxu0 0.0
  %v5351 = vand.u32 %v3701, 4294901760
  %v5352 = vsub.f32 %v3701, %v5351
  %5353 = vmatmul.mubr.f32.gmra.mrb[0].mxu0 %v5352
  %v5354 = vpop.f32.mrb[0].mxu0
  %v5355 = vadd.f32 %v4845, %v5354
  %v5356 = vpop.f32.mrb[0].mxu0
  %5357 = vmatprep.mubr.f32.mxu0 0.0
  %v5358 = vand.u32 %v3704, 4294901760
  %v5359 = vsub.f32 %v3704, %v5358
  %5360 = vmatmul.mubr.f32.gmra.mrb[0].mxu0 %v5359
  %v5361 = vpop.f32.mrb[0].mxu0
  %v5362 = vadd.f32 %v4851, %v5361
  %v5363 = vpop.f32.mrb[0].mxu0
  %5364 = vmatprep.mubr.f32.mxu0 0.0
  %v5365 = vand.u32 %v3707, 4294901760
  %v5366 = vsub.f32 %v3707, %v5365
  %5367 = vmatmul.mubr.f32.gmra.mrb[0].mxu0 %v5366
  %v5368 = vpop.f32.mrb[0].mxu0
  %v5369 = vadd.f32 %v4857, %v5368
  %v5370 = vpop.f32.mrb[0].mxu0
  %5371 = vmatprep.mubr.f32.mxu0 0.0
  %v5372 = vand.u32 %v3710, 4294901760
  %v5373 = vsub.f32 %v3710, %v5372
  %5374 = vmatmul.mubr.f32.gmra.mrb[0].mxu0 %v5373
  %v5375 = vpop.f32.mrb[0].mxu0
  %v5376 = vadd.f32 %v4863, %v5375
  %v5377 = vpop.f32.mrb[0].mxu0
  %5378 = vmatprep.mubr.f32.mxu0 0.0
  %v5379 = vand.u32 %v3713, 4294901760
  %v5380 = vsub.f32 %v3713, %v5379
  %5381 = vmatmul.mubr.f32.gmra.mrb[0].mxu0 %v5380
  %v5382 = vpop.f32.mrb[0].mxu0
  %v5383 = vadd.f32 %v4869, %v5382
  %v5384 = vpop.f32.mrb[0].mxu0
  %5385 = vmatprep.mubr.f32.mxu0 0.0
  %v5386 = vand.u32 %v3716, 4294901760
  %v5387 = vsub.f32 %v3716, %v5386
  %5388 = vmatmul.mubr.f32.gmra.mrb[0].mxu0 %v5387
  %v5389 = vpop.f32.mrb[0].mxu0
  %v5390 = vadd.f32 %v4875, %v5389
  %v5391 = vpop.f32.mrb[0].mxu0
  %5392 = vmatprep.mubr.f32.mxu0 0.0
  %v5393 = vand.u32 %v3719, 4294901760
  %v5394 = vsub.f32 %v3719, %v5393
  %5395 = vmatmul.mubr.f32.gmra.mrb[0].mxu0 %v5394
  %v5396 = vpop.f32.mrb[0].mxu0
  %v5397 = vadd.f32 %v4881, %v5396
  %v5398 = vpop.f32.mrb[0].mxu0
  %5399 = vmatprep.mubr.f32.mxu0 0.0
  %v5400 = vand.u32 %v3722, 4294901760
  %v5401 = vsub.f32 %v3722, %v5400
  %5402 = vmatmul.mubr.f32.gmra.mrb[0].mxu0 %v5401
  %v5403 = vpop.f32.mrb[0].mxu0
  %v5404 = vadd.f32 %v4887, %v5403
  %v5405 = vpop.f32.mrb[0].mxu0
  %5406 = vmatprep.mubr.f32.mxu0 0.0
  %v5407 = vand.u32 %v3725, 4294901760
  %v5408 = vsub.f32 %v3725, %v5407
  %5409 = vmatmul.mubr.f32.gmra.mrb[0].mxu0 %v5408
  %v5410 = vpop.f32.mrb[0].mxu0
  %v5411 = vadd.f32 %v4893, %v5410
  %v5412 = vpop.f32.mrb[0].mxu0
  %5413 = vmatprep.mubr.f32.mxu0 0.0
  %v5414 = vand.u32 %v3728, 4294901760
  %v5415 = vsub.f32 %v3728, %v5414
  %5416 = vmatmul.mubr.f32.gmra.mrb[0].mxu0 %v5415
  %v5417 = vpop.f32.mrb[0].mxu0
  %v5418 = vadd.f32 %v4899, %v5417
  %v5419 = vpop.f32.mrb[0].mxu0
  %5420 = vmatprep.mubr.f32.mxu0 0.0
  %v5421 = vand.u32 %v3731, 4294901760
  %v5422 = vsub.f32 %v3731, %v5421
  %5423 = vmatmul.mubr.f32.gmra.mrb[0].mxu0 %v5422
  %v5424 = vpop.f32.mrb[0].mxu0
  %v5425 = vadd.f32 %v4905, %v5424
  %v5426 = vpop.f32.mrb[0].mxu0
  %5427 = vmatprep.mubr.f32.mxu0 0.0
  %v5428 = vand.u32 %v3734, 4294901760
  %v5429 = vsub.f32 %v3734, %v5428
  %5430 = vmatmul.mubr.f32.gmra.mrb[0].mxu0 %v5429
  %v5431 = vpop.f32.mrb[0].mxu0
  %v5432 = vadd.f32 %v4911, %v5431
  %v5433 = vpop.f32.mrb[0].mxu0
  %5434 = vmatprep.mubr.f32.mxu0 0.0
  %v5435 = vand.u32 %v3737, 4294901760
  %v5436 = vsub.f32 %v3737, %v5435
  %5437 = vmatmul.mubr.f32.gmra.mrb[0].mxu0 %v5436
  %v5438 = vpop.f32.mrb[0].mxu0
  %v5439 = vadd.f32 %v4917, %v5438
  %v5440 = vpop.f32.mrb[0].mxu0
  %5441 = vmatprep.mubr.f32.mxu0 0.0
  %v5442 = vand.u32 %v3740, 4294901760
  %v5443 = vsub.f32 %v3740, %v5442
  %5444 = vmatmul.mubr.f32.gmra.mrb[0].mxu0 %v5443
  %v5445 = vpop.f32.mrb[0].mxu0
  %v5446 = vadd.f32 %v4923, %v5445
  %v5447 = vpop.f32.mrb[0].mxu0
  %5448 = vmatprep.mubr.f32.mxu0 0.0
  %v5449 = vand.u32 %v3743, 4294901760
  %v5450 = vsub.f32 %v3743, %v5449
  %5451 = vmatmul.mubr.f32.gmra.mrb[0].mxu0 %v5450
  %v5452 = vpop.f32.mrb[0].mxu0
  %v5453 = vadd.f32 %v4929, %v5452
  %v5454 = vpop.f32.mrb[0].mxu0
  %5455 = vmatprep.mubr.f32.mxu0 0.0
  %v5456 = vand.u32 %v3746, 4294901760
  %v5457 = vsub.f32 %v3746, %v5456
  %5458 = vmatmul.mubr.f32.gmra.mrb[0].mxu0 %v5457
  %v5459 = vpop.f32.mrb[0].mxu0
  %v5460 = vadd.f32 %v4935, %v5459
  %v5461 = vpop.f32.mrb[0].mxu0
  %5462 = vmatprep.mubr.f32.mxu0 0.0
  %v5463 = vand.u32 %v3749, 4294901760
  %v5464 = vsub.f32 %v3749, %v5463
  %5465 = vmatmul.mubr.f32.gmra.mrb[0].mxu0 %v5464
  %v5466 = vpop.f32.mrb[0].mxu0
  %v5467 = vadd.f32 %v4941, %v5466
  %v5468 = vpop.f32.mrb[0].mxu0
  %5469 = vmatprep.mubr.f32.mxu0 0.0
  %v5470 = vand.u32 %v3752, 4294901760
  %v5471 = vsub.f32 %v3752, %v5470
  %5472 = vmatmul.mubr.f32.gmra.mrb[0].mxu0 %v5471
  %v5473 = vpop.f32.mrb[0].mxu0
  %v5474 = vadd.f32 %v4947, %v5473
  %v5475 = vpop.f32.mrb[0].mxu0
  %5476 = vmatprep.mubr.f32.mxu0 0.0
  %v5477 = vand.u32 %v3755, 4294901760
  %v5478 = vsub.f32 %v3755, %v5477
  %5479 = vmatmul.mubr.f32.gmra.mrb[0].mxu0 %v5478
  %v5480 = vpop.f32.mrb[0].mxu0
  %v5481 = vadd.f32 %v4953, %v5480
  %v5482 = vpop.f32.mrb[0].mxu0
  %5483 = vmatprep.mubr.f32.mxu0 0.0
  %v5484 = vand.u32 %v3758, 4294901760
  %v5485 = vsub.f32 %v3758, %v5484
  %5486 = vmatmul.mubr.f32.gmra.mrb[0].mxu0 %v5485
  %v5487 = vpop.f32.mrb[0].mxu0
  %v5488 = vadd.f32 %v4959, %v5487
  %v5489 = vpop.f32.mrb[0].mxu0
  %5490 = vdwg.mxu0
  %5491 = vmatprep.subr.mxu0 0.0
  %v5492 = vand.u32 %v3552, 4294901760
  %5493 = vmatpush1.msra.mxu0 %v5492
  %5494 = vmatprep.subr.mxu0 0.0
  %v5495 = vand.u32 %v3553, 4294901760
  %5496 = vmatpush1.msra.mxu0 %v5495
  %5497 = vmatprep.subr.mxu0 0.0
  %v5498 = vand.u32 %v3554, 4294901760
  %5499 = vmatpush1.msra.mxu0 %v5498
  %5500 = vmatprep.subr.mxu0 0.0
  %v5501 = vand.u32 %v3555, 4294901760
  %5502 = vmatpush1.msra.mxu0 %v5501
  %5503 = vmatprep.subr.mxu0 0.0
  %v5504 = vand.u32 %v3556, 4294901760
  %5505 = vmatpush1.msra.mxu0 %v5504
  %5506 = vmatprep.subr.mxu0 0.0
  %v5507 = vand.u32 %v3557, 4294901760
  %5508 = vmatpush1.msra.mxu0 %v5507
  %5509 = vmatprep.subr.mxu0 0.0
  %v5510 = vand.u32 %v3558, 4294901760
  %5511 = vmatpush1.msra.mxu0 %v5510
  %5512 = vmatprep.subr.mxu0 0.0
  %v5513 = vand.u32 %v3559, 4294901760
  %5514 = vmatpush1.msra.mxu0 %v5513
  %5515 = vmatprep.subr.mxu0 0.0
  %5516 = vmatpush1.msra.mxu0 0.0
  %5517 = vmatprep.subr.mxu0 0.0
  %5518 = vmatpush1.msra.mxu0 0.0
  %5519 = vmatprep.subr.mxu0 0.0
  %5520 = vmatpush1.msra.mxu0 0.0
  %5521 = vmatprep.subr.mxu0 0.0
  %5522 = vmatpush1.msra.mxu0 0.0
  %5523 = vmatprep.subr.mxu0 0.0
  %5524 = vmatpush1.msra.mxu0 0.0
  %5525 = vmatprep.subr.mxu0 0.0
  %5526 = vmatpush1.msra.mxu0 0.0
  %5527 = vmatprep.subr.mxu0 0.0
  %5528 = vmatpush1.msra.mxu0 0.0
  %5529 = vmatprep.subr.mxu0 0.0
  %5530 = vmatpush1.msra.mxu0 0.0
  %5531 = vmatprep.subr.mxu0 0.0
  %5532 = vmatpush1.msra.mxu0 0.0
  %5533 = vmatprep.subr.mxu0 0.0
  %5534 = vmatpush1.msra.mxu0 0.0
  %5535 = vmatprep.subr.mxu0 0.0
  %5536 = vmatpush1.msra.mxu0 0.0
  %5537 = vmatprep.subr.mxu0 0.0
  %5538 = vmatpush1.msra.mxu0 0.0
  %5539 = vmatprep.subr.mxu0 0.0
  %5540 = vmatpush1.msra.mxu0 0.0
  %5541 = vmatprep.subr.mxu0 0.0
  %5542 = vmatpush1.msra.mxu0 0.0
  %5543 = vmatprep.subr.mxu0 0.0
  %5544 = vmatpush1.msra.mxu0 0.0
  %5545 = vmatprep.subr.mxu0 0.0
  %5546 = vmatpush1.msra.mxu0 0.0
  %5547 = vmatprep.subr.mxu0 0.0
  %5548 = vmatpush1.msra.mxu0 0.0
  %5549 = vmatprep.subr.mxu0 0.0
  %5550 = vmatpush1.msra.mxu0 0.0
  %5551 = vmatprep.subr.mxu0 0.0
  %5552 = vmatpush1.msra.mxu0 0.0
  %5553 = vmatprep.subr.mxu0 0.0
  %5554 = vmatpush1.msra.mxu0 0.0
  %5555 = vmatprep.subr.mxu0 0.0
  %5556 = vmatpush1.msra.mxu0 0.0
  %5557 = vmatprep.subr.mxu0 0.0
  %5558 = vmatpush1.msra.mxu0 0.0
  %5559 = vmatprep.subr.mxu0 0.0
  %5560 = vmatpush1.msra.mxu0 0.0
  %5561 = vmatprep.subr.mxu0 0.0
  %5562 = vmatpush1.msra.mxu0 0.0
  %5563 = vmatprep.mubr.f32.mxu0 0.0
  %v5564 = vand.u32 %v3569, 4294901760
  %v5565 = vsub.f32 %v3569, %v5564
  %v5566 = vand.u32 %v5565, 4294901760
  %5567 = vmatmul.mubr.f32.gmra.mrb[0].mxu0 %v5566
  %v5568 = vpop.f32.mrb[0].mxu0
  %v5569 = vadd.f32 %v5047, %v5568
  %v5570 = vpop.f32.mrb[0].mxu0
  %5571 = vmatprep.mubr.f32.mxu0 0.0
  %v5572 = vand.u32 %v3572, 4294901760
  %v5573 = vsub.f32 %v3572, %v5572
  %v5574 = vand.u32 %v5573, 4294901760
  %5575 = vmatmul.mubr.f32.gmra.mrb[0].mxu0 %v5574
  %v5576 = vpop.f32.mrb[0].mxu0
  %v5577 = vadd.f32 %v5054, %v5576
  %v5578 = vpop.f32.mrb[0].mxu0
  %5579 = vmatprep.mubr.f32.mxu0 0.0
  %v5580 = vand.u32 %v3575, 4294901760
  %v5581 = vsub.f32 %v3575, %v5580
  %v5582 = vand.u32 %v5581, 4294901760
  %5583 = vmatmul.mubr.f32.gmra.mrb[0].mxu0 %v5582
  %v5584 = vpop.f32.mrb[0].mxu0
  %v5585 = vadd.f32 %v5061, %v5584
  %v5586 = vpop.f32.mrb[0].mxu0
  %5587 = vmatprep.mubr.f32.mxu0 0.0
  %v5588 = vand.u32 %v3578, 4294901760
  %v5589 = vsub.f32 %v3578, %v5588
  %v5590 = vand.u32 %v5589, 4294901760
  %5591 = vmatmul.mubr.f32.gmra.mrb[0].mxu0 %v5590
  %v5592 = vpop.f32.mrb[0].mxu0
  %v5593 = vadd.f32 %v5068, %v5592
  %v5594 = vpop.f32.mrb[0].mxu0
  %5595 = vmatprep.mubr.f32.mxu0 0.0
  %v5596 = vand.u32 %v3581, 4294901760
  %v5597 = vsub.f32 %v3581, %v5596
  %v5598 = vand.u32 %v5597, 4294901760
  %5599 = vmatmul.mubr.f32.gmra.mrb[0].mxu0 %v5598
  %v5600 = vpop.f32.mrb[0].mxu0
  %v5601 = vadd.f32 %v5075, %v5600
  %v5602 = vpop.f32.mrb[0].mxu0
  %5603 = vmatprep.mubr.f32.mxu0 0.0
  %v5604 = vand.u32 %v3584, 4294901760
  %v5605 = vsub.f32 %v3584, %v5604
  %v5606 = vand.u32 %v5605, 4294901760
  %5607 = vmatmul.mubr.f32.gmra.mrb[0].mxu0 %v5606
  %v5608 = vpop.f32.mrb[0].mxu0
  %v5609 = vadd.f32 %v5082, %v5608
  %v5610 = vpop.f32.mrb[0].mxu0
  %5611 = vmatprep.mubr.f32.mxu0 0.0
  %v5612 = vand.u32 %v3587, 4294901760
  %v5613 = vsub.f32 %v3587, %v5612
  %v5614 = vand.u32 %v5613, 4294901760
  %5615 = vmatmul.mubr.f32.gmra.mrb[0].mxu0 %v5614
  %v5616 = vpop.f32.mrb[0].mxu0
  %v5617 = vadd.f32 %v5089, %v5616
  %v5618 = vpop.f32.mrb[0].mxu0
  %5619 = vmatprep.mubr.f32.mxu0 0.0
  %v5620 = vand.u32 %v3590, 4294901760
  %v5621 = vsub.f32 %v3590, %v5620
  %v5622 = vand.u32 %v5621, 4294901760
  %5623 = vmatmul.mubr.f32.gmra.mrb[0].mxu0 %v5622
  %v5624 = vpop.f32.mrb[0].mxu0
  %v5625 = vadd.f32 %v5096, %v5624
  %v5626 = vpop.f32.mrb[0].mxu0
  %5627 = vmatprep.mubr.f32.mxu0 0.0
  %v5628 = vand.u32 %v3593, 4294901760
  %v5629 = vsub.f32 %v3593, %v5628
  %v5630 = vand.u32 %v5629, 4294901760
  %5631 = vmatmul.mubr.f32.gmra.mrb[0].mxu0 %v5630
  %v5632 = vpop.f32.mrb[0].mxu0
  %v5633 = vadd.f32 %v5103, %v5632
  %v5634 = vpop.f32.mrb[0].mxu0
  %5635 = vmatprep.mubr.f32.mxu0 0.0
  %v5636 = vand.u32 %v3596, 4294901760
  %v5637 = vsub.f32 %v3596, %v5636
  %v5638 = vand.u32 %v5637, 4294901760
  %5639 = vmatmul.mubr.f32.gmra.mrb[0].mxu0 %v5638
  %v5640 = vpop.f32.mrb[0].mxu0
  %v5641 = vadd.f32 %v5110, %v5640
  %v5642 = vpop.f32.mrb[0].mxu0
  %5643 = vmatprep.mubr.f32.mxu0 0.0
  %v5644 = vand.u32 %v3599, 4294901760
  %v5645 = vsub.f32 %v3599, %v5644
  %v5646 = vand.u32 %v5645, 4294901760
  %5647 = vmatmul.mubr.f32.gmra.mrb[0].mxu0 %v5646
  %v5648 = vpop.f32.mrb[0].mxu0
  %v5649 = vadd.f32 %v5117, %v5648
  %v5650 = vpop.f32.mrb[0].mxu0
  %5651 = vmatprep.mubr.f32.mxu0 0.0
  %v5652 = vand.u32 %v3602, 4294901760
  %v5653 = vsub.f32 %v3602, %v5652
  %v5654 = vand.u32 %v5653, 4294901760
  %5655 = vmatmul.mubr.f32.gmra.mrb[0].mxu0 %v5654
  %v5656 = vpop.f32.mrb[0].mxu0
  %v5657 = vadd.f32 %v5124, %v5656
  %v5658 = vpop.f32.mrb[0].mxu0
  %5659 = vmatprep.mubr.f32.mxu0 0.0
  %v5660 = vand.u32 %v3605, 4294901760
  %v5661 = vsub.f32 %v3605, %v5660
  %v5662 = vand.u32 %v5661, 4294901760
  %5663 = vmatmul.mubr.f32.gmra.mrb[0].mxu0 %v5662
  %v5664 = vpop.f32.mrb[0].mxu0
  %v5665 = vadd.f32 %v5131, %v5664
  %v5666 = vpop.f32.mrb[0].mxu0
  %5667 = vmatprep.mubr.f32.mxu0 0.0
  %v5668 = vand.u32 %v3608, 4294901760
  %v5669 = vsub.f32 %v3608, %v5668
  %v5670 = vand.u32 %v5669, 4294901760
  %5671 = vmatmul.mubr.f32.gmra.mrb[0].mxu0 %v5670
  %v5672 = vpop.f32.mrb[0].mxu0
  %v5673 = vadd.f32 %v5138, %v5672
  %v5674 = vpop.f32.mrb[0].mxu0
  %5675 = vmatprep.mubr.f32.mxu0 0.0
  %v5676 = vand.u32 %v3611, 4294901760
  %v5677 = vsub.f32 %v3611, %v5676
  %v5678 = vand.u32 %v5677, 4294901760
  %5679 = vmatmul.mubr.f32.gmra.mrb[0].mxu0 %v5678
  %v5680 = vpop.f32.mrb[0].mxu0
  %v5681 = vadd.f32 %v5145, %v5680
  %v5682 = vpop.f32.mrb[0].mxu0
  %5683 = vmatprep.mubr.f32.mxu0 0.0
  %v5684 = vand.u32 %v3614, 4294901760
  %v5685 = vsub.f32 %v3614, %v5684
  %v5686 = vand.u32 %v5685, 4294901760
  %5687 = vmatmul.mubr.f32.gmra.mrb[0].mxu0 %v5686
  %v5688 = vpop.f32.mrb[0].mxu0
  %v5689 = vadd.f32 %v5152, %v5688
  %v5690 = vpop.f32.mrb[0].mxu0
  %5691 = vmatprep.mubr.f32.mxu0 0.0
  %v5692 = vand.u32 %v3617, 4294901760
  %v5693 = vsub.f32 %v3617, %v5692
  %v5694 = vand.u32 %v5693, 4294901760
  %5695 = vmatmul.mubr.f32.gmra.mrb[0].mxu0 %v5694
  %v5696 = vpop.f32.mrb[0].mxu0
  %v5697 = vadd.f32 %v5159, %v5696
  %v5698 = vpop.f32.mrb[0].mxu0
  %5699 = vmatprep.mubr.f32.mxu0 0.0
  %v5700 = vand.u32 %v3620, 4294901760
  %v5701 = vsub.f32 %v3620, %v5700
  %v5702 = vand.u32 %v5701, 4294901760
  %5703 = vmatmul.mubr.f32.gmra.mrb[0].mxu0 %v5702
  %v5704 = vpop.f32.mrb[0].mxu0
  %v5705 = vadd.f32 %v5166, %v5704
  %v5706 = vpop.f32.mrb[0].mxu0
  %5707 = vmatprep.mubr.f32.mxu0 0.0
  %v5708 = vand.u32 %v3623, 4294901760
  %v5709 = vsub.f32 %v3623, %v5708
  %v5710 = vand.u32 %v5709, 4294901760
  %5711 = vmatmul.mubr.f32.gmra.mrb[0].mxu0 %v5710
  %v5712 = vpop.f32.mrb[0].mxu0
  %v5713 = vadd.f32 %v5173, %v5712
  %v5714 = vpop.f32.mrb[0].mxu0
  %5715 = vmatprep.mubr.f32.mxu0 0.0
  %v5716 = vand.u32 %v3626, 4294901760
  %v5717 = vsub.f32 %v3626, %v5716
  %v5718 = vand.u32 %v5717, 4294901760
  %5719 = vmatmul.mubr.f32.gmra.mrb[0].mxu0 %v5718
  %v5720 = vpop.f32.mrb[0].mxu0
  %v5721 = vadd.f32 %v5180, %v5720
  %v5722 = vpop.f32.mrb[0].mxu0
  %5723 = vmatprep.mubr.f32.mxu0 0.0
  %v5724 = vand.u32 %v3629, 4294901760
  %v5725 = vsub.f32 %v3629, %v5724
  %v5726 = vand.u32 %v5725, 4294901760
  %5727 = vmatmul.mubr.f32.gmra.mrb[0].mxu0 %v5726
  %v5728 = vpop.f32.mrb[0].mxu0
  %v5729 = vadd.f32 %v5187, %v5728
  %v5730 = vpop.f32.mrb[0].mxu0
  %5731 = vmatprep.mubr.f32.mxu0 0.0
  %v5732 = vand.u32 %v3632, 4294901760
  %v5733 = vsub.f32 %v3632, %v5732
  %v5734 = vand.u32 %v5733, 4294901760
  %5735 = vmatmul.mubr.f32.gmra.mrb[0].mxu0 %v5734
  %v5736 = vpop.f32.mrb[0].mxu0
  %v5737 = vadd.f32 %v5194, %v5736
  %v5738 = vpop.f32.mrb[0].mxu0
  %5739 = vmatprep.mubr.f32.mxu0 0.0
  %v5740 = vand.u32 %v3635, 4294901760
  %v5741 = vsub.f32 %v3635, %v5740
  %v5742 = vand.u32 %v5741, 4294901760
  %5743 = vmatmul.mubr.f32.gmra.mrb[0].mxu0 %v5742
  %v5744 = vpop.f32.mrb[0].mxu0
  %v5745 = vadd.f32 %v5201, %v5744
  %v5746 = vpop.f32.mrb[0].mxu0
  %5747 = vmatprep.mubr.f32.mxu0 0.0
  %v5748 = vand.u32 %v3638, 4294901760
  %v5749 = vsub.f32 %v3638, %v5748
  %v5750 = vand.u32 %v5749, 4294901760
  %5751 = vmatmul.mubr.f32.gmra.mrb[0].mxu0 %v5750
  %v5752 = vpop.f32.mrb[0].mxu0
  %v5753 = vadd.f32 %v5208, %v5752
  %v5754 = vpop.f32.mrb[0].mxu0
  %5755 = vmatprep.mubr.f32.mxu0 0.0
  %v5756 = vand.u32 %v3641, 4294901760
  %v5757 = vsub.f32 %v3641, %v5756
  %v5758 = vand.u32 %v5757, 4294901760
  %5759 = vmatmul.mubr.f32.gmra.mrb[0].mxu0 %v5758
  %v5760 = vpop.f32.mrb[0].mxu0
  %v5761 = vadd.f32 %v5215, %v5760
  %v5762 = vpop.f32.mrb[0].mxu0
  %5763 = vmatprep.mubr.f32.mxu0 0.0
  %v5764 = vand.u32 %v3644, 4294901760
  %v5765 = vsub.f32 %v3644, %v5764
  %v5766 = vand.u32 %v5765, 4294901760
  %5767 = vmatmul.mubr.f32.gmra.mrb[0].mxu0 %v5766
  %v5768 = vpop.f32.mrb[0].mxu0
  %v5769 = vadd.f32 %v5222, %v5768
  %v5770 = vpop.f32.mrb[0].mxu0
  %5771 = vmatprep.mubr.f32.mxu0 0.0
  %v5772 = vand.u32 %v3647, 4294901760
  %v5773 = vsub.f32 %v3647, %v5772
  %v5774 = vand.u32 %v5773, 4294901760
  %5775 = vmatmul.mubr.f32.gmra.mrb[0].mxu0 %v5774
  %v5776 = vpop.f32.mrb[0].mxu0
  %v5777 = vadd.f32 %v5229, %v5776
  %v5778 = vpop.f32.mrb[0].mxu0
  %5779 = vmatprep.mubr.f32.mxu0 0.0
  %v5780 = vand.u32 %v3650, 4294901760
  %v5781 = vsub.f32 %v3650, %v5780
  %v5782 = vand.u32 %v5781, 4294901760
  %5783 = vmatmul.mubr.f32.gmra.mrb[0].mxu0 %v5782
  %v5784 = vpop.f32.mrb[0].mxu0
  %v5785 = vadd.f32 %v5236, %v5784
  %v5786 = vpop.f32.mrb[0].mxu0
  %5787 = vmatprep.mubr.f32.mxu0 0.0
  %v5788 = vand.u32 %v3653, 4294901760
  %v5789 = vsub.f32 %v3653, %v5788
  %v5790 = vand.u32 %v5789, 4294901760
  %5791 = vmatmul.mubr.f32.gmra.mrb[0].mxu0 %v5790
  %v5792 = vpop.f32.mrb[0].mxu0
  %v5793 = vadd.f32 %v5243, %v5792
  %v5794 = vpop.f32.mrb[0].mxu0
  %5795 = vmatprep.mubr.f32.mxu0 0.0
  %v5796 = vand.u32 %v3656, 4294901760
  %v5797 = vsub.f32 %v3656, %v5796
  %v5798 = vand.u32 %v5797, 4294901760
  %5799 = vmatmul.mubr.f32.gmra.mrb[0].mxu0 %v5798
  %v5800 = vpop.f32.mrb[0].mxu0
  %v5801 = vadd.f32 %v5250, %v5800
  %v5802 = vpop.f32.mrb[0].mxu0
  %5803 = vmatprep.mubr.f32.mxu0 0.0
  %v5804 = vand.u32 %v3659, 4294901760
  %v5805 = vsub.f32 %v3659, %v5804
  %v5806 = vand.u32 %v5805, 4294901760
  %5807 = vmatmul.mubr.f32.gmra.mrb[0].mxu0 %v5806
  %v5808 = vpop.f32.mrb[0].mxu0
  %v5809 = vadd.f32 %v5257, %v5808
  %v5810 = vpop.f32.mrb[0].mxu0
  %5811 = vmatprep.mubr.f32.mxu0 0.0
  %v5812 = vand.u32 %v3662, 4294901760
  %v5813 = vsub.f32 %v3662, %v5812
  %v5814 = vand.u32 %v5813, 4294901760
  %5815 = vmatmul.mubr.f32.gmra.mrb[0].mxu0 %v5814
  %v5816 = vpop.f32.mrb[0].mxu0
  %v5817 = vadd.f32 %v5264, %v5816
  %v5818 = vpop.f32.mrb[0].mxu0
  %5819 = vmatprep.mubr.f32.mxu0 0.0
  %v5820 = vand.u32 %v3665, 4294901760
  %v5821 = vsub.f32 %v3665, %v5820
  %v5822 = vand.u32 %v5821, 4294901760
  %5823 = vmatmul.mubr.f32.gmra.mrb[0].mxu0 %v5822
  %v5824 = vpop.f32.mrb[0].mxu0
  %v5825 = vadd.f32 %v5271, %v5824
  %v5826 = vpop.f32.mrb[0].mxu0
  %5827 = vmatprep.mubr.f32.mxu0 0.0
  %v5828 = vand.u32 %v3668, 4294901760
  %v5829 = vsub.f32 %v3668, %v5828
  %v5830 = vand.u32 %v5829, 4294901760
  %5831 = vmatmul.mubr.f32.gmra.mrb[0].mxu0 %v5830
  %v5832 = vpop.f32.mrb[0].mxu0
  %v5833 = vadd.f32 %v5278, %v5832
  %v5834 = vpop.f32.mrb[0].mxu0
  %5835 = vmatprep.mubr.f32.mxu0 0.0
  %v5836 = vand.u32 %v3671, 4294901760
  %v5837 = vsub.f32 %v3671, %v5836
  %v5838 = vand.u32 %v5837, 4294901760
  %5839 = vmatmul.mubr.f32.gmra.mrb[0].mxu0 %v5838
  %v5840 = vpop.f32.mrb[0].mxu0
  %v5841 = vadd.f32 %v5285, %v5840
  %v5842 = vpop.f32.mrb[0].mxu0
  %5843 = vmatprep.mubr.f32.mxu0 0.0
  %v5844 = vand.u32 %v3674, 4294901760
  %v5845 = vsub.f32 %v3674, %v5844
  %v5846 = vand.u32 %v5845, 4294901760
  %5847 = vmatmul.mubr.f32.gmra.mrb[0].mxu0 %v5846
  %v5848 = vpop.f32.mrb[0].mxu0
  %v5849 = vadd.f32 %v5292, %v5848
  %v5850 = vpop.f32.mrb[0].mxu0
  %5851 = vmatprep.mubr.f32.mxu0 0.0
  %v5852 = vand.u32 %v3677, 4294901760
  %v5853 = vsub.f32 %v3677, %v5852
  %v5854 = vand.u32 %v5853, 4294901760
  %5855 = vmatmul.mubr.f32.gmra.mrb[0].mxu0 %v5854
  %v5856 = vpop.f32.mrb[0].mxu0
  %v5857 = vadd.f32 %v5299, %v5856
  %v5858 = vpop.f32.mrb[0].mxu0
  %5859 = vmatprep.mubr.f32.mxu0 0.0
  %v5860 = vand.u32 %v3680, 4294901760
  %v5861 = vsub.f32 %v3680, %v5860
  %v5862 = vand.u32 %v5861, 4294901760
  %5863 = vmatmul.mubr.f32.gmra.mrb[0].mxu0 %v5862
  %v5864 = vpop.f32.mrb[0].mxu0
  %v5865 = vadd.f32 %v5306, %v5864
  %v5866 = vpop.f32.mrb[0].mxu0
  %5867 = vmatprep.mubr.f32.mxu0 0.0
  %v5868 = vand.u32 %v3683, 4294901760
  %v5869 = vsub.f32 %v3683, %v5868
  %v5870 = vand.u32 %v5869, 4294901760
  %5871 = vmatmul.mubr.f32.gmra.mrb[0].mxu0 %v5870
  %v5872 = vpop.f32.mrb[0].mxu0
  %v5873 = vadd.f32 %v5313, %v5872
  %v5874 = vpop.f32.mrb[0].mxu0
  %5875 = vmatprep.mubr.f32.mxu0 0.0
  %v5876 = vand.u32 %v3686, 4294901760
  %v5877 = vsub.f32 %v3686, %v5876
  %v5878 = vand.u32 %v5877, 4294901760
  %5879 = vmatmul.mubr.f32.gmra.mrb[0].mxu0 %v5878
  %v5880 = vpop.f32.mrb[0].mxu0
  %v5881 = vadd.f32 %v5320, %v5880
  %v5882 = vpop.f32.mrb[0].mxu0
  %5883 = vmatprep.mubr.f32.mxu0 0.0
  %v5884 = vand.u32 %v3689, 4294901760
  %v5885 = vsub.f32 %v3689, %v5884
  %v5886 = vand.u32 %v5885, 4294901760
  %5887 = vmatmul.mubr.f32.gmra.mrb[0].mxu0 %v5886
  %v5888 = vpop.f32.mrb[0].mxu0
  %v5889 = vadd.f32 %v5327, %v5888
  %v5890 = vpop.f32.mrb[0].mxu0
  %5891 = vmatprep.mubr.f32.mxu0 0.0
  %v5892 = vand.u32 %v3692, 4294901760
  %v5893 = vsub.f32 %v3692, %v5892
  %v5894 = vand.u32 %v5893, 4294901760
  %5895 = vmatmul.mubr.f32.gmra.mrb[0].mxu0 %v5894
  %v5896 = vpop.f32.mrb[0].mxu0
  %v5897 = vadd.f32 %v5334, %v5896
  %v5898 = vpop.f32.mrb[0].mxu0
  %5899 = vmatprep.mubr.f32.mxu0 0.0
  %v5900 = vand.u32 %v3695, 4294901760
  %v5901 = vsub.f32 %v3695, %v5900
  %v5902 = vand.u32 %v5901, 4294901760
  %5903 = vmatmul.mubr.f32.gmra.mrb[0].mxu0 %v5902
  %v5904 = vpop.f32.mrb[0].mxu0
  %v5905 = vadd.f32 %v5341, %v5904
  %v5906 = vpop.f32.mrb[0].mxu0
  %5907 = vmatprep.mubr.f32.mxu0 0.0
  %v5908 = vand.u32 %v3698, 4294901760
  %v5909 = vsub.f32 %v3698, %v5908
  %v5910 = vand.u32 %v5909, 4294901760
  %5911 = vmatmul.mubr.f32.gmra.mrb[0].mxu0 %v5910
  %v5912 = vpop.f32.mrb[0].mxu0
  %v5913 = vadd.f32 %v5348, %v5912
  %v5914 = vpop.f32.mrb[0].mxu0
  %5915 = vmatprep.mubr.f32.mxu0 0.0
  %v5916 = vand.u32 %v3701, 4294901760
  %v5917 = vsub.f32 %v3701, %v5916
  %v5918 = vand.u32 %v5917, 4294901760
  %5919 = vmatmul.mubr.f32.gmra.mrb[0].mxu0 %v5918
  %v5920 = vpop.f32.mrb[0].mxu0
  %v5921 = vadd.f32 %v5355, %v5920
  %v5922 = vpop.f32.mrb[0].mxu0
  %5923 = vmatprep.mubr.f32.mxu0 0.0
  %v5924 = vand.u32 %v3704, 4294901760
  %v5925 = vsub.f32 %v3704, %v5924
  %v5926 = vand.u32 %v5925, 4294901760
  %5927 = vmatmul.mubr.f32.gmra.mrb[0].mxu0 %v5926
  %v5928 = vpop.f32.mrb[0].mxu0
  %v5929 = vadd.f32 %v5362, %v5928
  %v5930 = vpop.f32.mrb[0].mxu0
  %5931 = vmatprep.mubr.f32.mxu0 0.0
  %v5932 = vand.u32 %v3707, 4294901760
  %v5933 = vsub.f32 %v3707, %v5932
  %v5934 = vand.u32 %v5933, 4294901760
  %5935 = vmatmul.mubr.f32.gmra.mrb[0].mxu0 %v5934
  %v5936 = vpop.f32.mrb[0].mxu0
  %v5937 = vadd.f32 %v5369, %v5936
  %v5938 = vpop.f32.mrb[0].mxu0
  %5939 = vmatprep.mubr.f32.mxu0 0.0
  %v5940 = vand.u32 %v3710, 4294901760
  %v5941 = vsub.f32 %v3710, %v5940
  %v5942 = vand.u32 %v5941, 4294901760
  %5943 = vmatmul.mubr.f32.gmra.mrb[0].mxu0 %v5942
  %v5944 = vpop.f32.mrb[0].mxu0
  %v5945 = vadd.f32 %v5376, %v5944
  %v5946 = vpop.f32.mrb[0].mxu0
  %5947 = vmatprep.mubr.f32.mxu0 0.0
  %v5948 = vand.u32 %v3713, 4294901760
  %v5949 = vsub.f32 %v3713, %v5948
  %v5950 = vand.u32 %v5949, 4294901760
  %5951 = vmatmul.mubr.f32.gmra.mrb[0].mxu0 %v5950
  %v5952 = vpop.f32.mrb[0].mxu0
  %v5953 = vadd.f32 %v5383, %v5952
  %v5954 = vpop.f32.mrb[0].mxu0
  %5955 = vmatprep.mubr.f32.mxu0 0.0
  %v5956 = vand.u32 %v3716, 4294901760
  %v5957 = vsub.f32 %v3716, %v5956
  %v5958 = vand.u32 %v5957, 4294901760
  %5959 = vmatmul.mubr.f32.gmra.mrb[0].mxu0 %v5958
  %v5960 = vpop.f32.mrb[0].mxu0
  %v5961 = vadd.f32 %v5390, %v5960
  %v5962 = vpop.f32.mrb[0].mxu0
  %5963 = vmatprep.mubr.f32.mxu0 0.0
  %v5964 = vand.u32 %v3719, 4294901760
  %v5965 = vsub.f32 %v3719, %v5964
  %v5966 = vand.u32 %v5965, 4294901760
  %5967 = vmatmul.mubr.f32.gmra.mrb[0].mxu0 %v5966
  %v5968 = vpop.f32.mrb[0].mxu0
  %v5969 = vadd.f32 %v5397, %v5968
  %v5970 = vpop.f32.mrb[0].mxu0
  %5971 = vmatprep.mubr.f32.mxu0 0.0
  %v5972 = vand.u32 %v3722, 4294901760
  %v5973 = vsub.f32 %v3722, %v5972
  %v5974 = vand.u32 %v5973, 4294901760
  %5975 = vmatmul.mubr.f32.gmra.mrb[0].mxu0 %v5974
  %v5976 = vpop.f32.mrb[0].mxu0
  %v5977 = vadd.f32 %v5404, %v5976
  %v5978 = vpop.f32.mrb[0].mxu0
  %5979 = vmatprep.mubr.f32.mxu0 0.0
  %v5980 = vand.u32 %v3725, 4294901760
  %v5981 = vsub.f32 %v3725, %v5980
  %v5982 = vand.u32 %v5981, 4294901760
  %5983 = vmatmul.mubr.f32.gmra.mrb[0].mxu0 %v5982
  %v5984 = vpop.f32.mrb[0].mxu0
  %v5985 = vadd.f32 %v5411, %v5984
  %v5986 = vpop.f32.mrb[0].mxu0
  %5987 = vmatprep.mubr.f32.mxu0 0.0
  %v5988 = vand.u32 %v3728, 4294901760
  %v5989 = vsub.f32 %v3728, %v5988
  %v5990 = vand.u32 %v5989, 4294901760
  %5991 = vmatmul.mubr.f32.gmra.mrb[0].mxu0 %v5990
  %v5992 = vpop.f32.mrb[0].mxu0
  %v5993 = vadd.f32 %v5418, %v5992
  %v5994 = vpop.f32.mrb[0].mxu0
  %5995 = vmatprep.mubr.f32.mxu0 0.0
  %v5996 = vand.u32 %v3731, 4294901760
  %v5997 = vsub.f32 %v3731, %v5996
  %v5998 = vand.u32 %v5997, 4294901760
  %5999 = vmatmul.mubr.f32.gmra.mrb[0].mxu0 %v5998
  %v6000 = vpop.f32.mrb[0].mxu0
  %v6001 = vadd.f32 %v5425, %v6000
  %v6002 = vpop.f32.mrb[0].mxu0
  %6003 = vmatprep.mubr.f32.mxu0 0.0
  %v6004 = vand.u32 %v3734, 4294901760
  %v6005 = vsub.f32 %v3734, %v6004
  %v6006 = vand.u32 %v6005, 4294901760
  %6007 = vmatmul.mubr.f32.gmra.mrb[0].mxu0 %v6006
  %v6008 = vpop.f32.mrb[0].mxu0
  %v6009 = vadd.f32 %v5432, %v6008
  %v6010 = vpop.f32.mrb[0].mxu0
  %6011 = vmatprep.mubr.f32.mxu0 0.0
  %v6012 = vand.u32 %v3737, 4294901760
  %v6013 = vsub.f32 %v3737, %v6012
  %v6014 = vand.u32 %v6013, 4294901760
  %6015 = vmatmul.mubr.f32.gmra.mrb[0].mxu0 %v6014
  %v6016 = vpop.f32.mrb[0].mxu0
  %v6017 = vadd.f32 %v5439, %v6016
  %v6018 = vpop.f32.mrb[0].mxu0
  %6019 = vmatprep.mubr.f32.mxu0 0.0
  %v6020 = vand.u32 %v3740, 4294901760
  %v6021 = vsub.f32 %v3740, %v6020
  %v6022 = vand.u32 %v6021, 4294901760
  %6023 = vmatmul.mubr.f32.gmra.mrb[0].mxu0 %v6022
  %v6024 = vpop.f32.mrb[0].mxu0
  %v6025 = vadd.f32 %v5446, %v6024
  %v6026 = vpop.f32.mrb[0].mxu0
  %6027 = vmatprep.mubr.f32.mxu0 0.0
  %v6028 = vand.u32 %v3743, 4294901760
  %v6029 = vsub.f32 %v3743, %v6028
  %v6030 = vand.u32 %v6029, 4294901760
  %6031 = vmatmul.mubr.f32.gmra.mrb[0].mxu0 %v6030
  %v6032 = vpop.f32.mrb[0].mxu0
  %v6033 = vadd.f32 %v5453, %v6032
  %v6034 = vpop.f32.mrb[0].mxu0
  %6035 = vmatprep.mubr.f32.mxu0 0.0
  %v6036 = vand.u32 %v3746, 4294901760
  %v6037 = vsub.f32 %v3746, %v6036
  %v6038 = vand.u32 %v6037, 4294901760
  %6039 = vmatmul.mubr.f32.gmra.mrb[0].mxu0 %v6038
  %v6040 = vpop.f32.mrb[0].mxu0
  %v6041 = vadd.f32 %v5460, %v6040
  %v6042 = vpop.f32.mrb[0].mxu0
  %6043 = vmatprep.mubr.f32.mxu0 0.0
  %v6044 = vand.u32 %v3749, 4294901760
  %v6045 = vsub.f32 %v3749, %v6044
  %v6046 = vand.u32 %v6045, 4294901760
  %6047 = vmatmul.mubr.f32.gmra.mrb[0].mxu0 %v6046
  %v6048 = vpop.f32.mrb[0].mxu0
  %v6049 = vadd.f32 %v5467, %v6048
  %v6050 = vpop.f32.mrb[0].mxu0
  %6051 = vmatprep.mubr.f32.mxu0 0.0
  %v6052 = vand.u32 %v3752, 4294901760
  %v6053 = vsub.f32 %v3752, %v6052
  %v6054 = vand.u32 %v6053, 4294901760
  %6055 = vmatmul.mubr.f32.gmra.mrb[0].mxu0 %v6054
  %v6056 = vpop.f32.mrb[0].mxu0
  %v6057 = vadd.f32 %v5474, %v6056
  %v6058 = vpop.f32.mrb[0].mxu0
  %6059 = vmatprep.mubr.f32.mxu0 0.0
  %v6060 = vand.u32 %v3755, 4294901760
  %v6061 = vsub.f32 %v3755, %v6060
  %v6062 = vand.u32 %v6061, 4294901760
  %6063 = vmatmul.mubr.f32.gmra.mrb[0].mxu0 %v6062
  %v6064 = vpop.f32.mrb[0].mxu0
  %v6065 = vadd.f32 %v5481, %v6064
  %v6066 = vpop.f32.mrb[0].mxu0
  %6067 = vmatprep.mubr.f32.mxu0 0.0
  %v6068 = vand.u32 %v3758, 4294901760
  %v6069 = vsub.f32 %v3758, %v6068
  %v6070 = vand.u32 %v6069, 4294901760
  %6071 = vmatmul.mubr.f32.gmra.mrb[0].mxu0 %v6070
  %v6072 = vpop.f32.mrb[0].mxu0
  %v6073 = vadd.f32 %v5488, %v6072
  %v6074 = vpop.f32.mrb[0].mxu0
  %6075 = vdwg.mxu0
  %6076 = vmatprep.subr.mxu0 0.0
  %v6077 = vand.u32 %v3552, 4294901760
  %v6078 = vsub.f32 %v3552, %v6077
  %v6079 = vand.u32 %v6078, 4294901760
  %6080 = vmatpush1.msra.mxu0 %v6079
  %6081 = vmatprep.subr.mxu0 0.0
  %v6082 = vand.u32 %v3553, 4294901760
  %v6083 = vsub.f32 %v3553, %v6082
  %v6084 = vand.u32 %v6083, 4294901760
  %6085 = vmatpush1.msra.mxu0 %v6084
  %6086 = vmatprep.subr.mxu0 0.0
  %v6087 = vand.u32 %v3554, 4294901760
  %v6088 = vsub.f32 %v3554, %v6087
  %v6089 = vand.u32 %v6088, 4294901760
  %6090 = vmatpush1.msra.mxu0 %v6089
  %6091 = vmatprep.subr.mxu0 0.0
  %v6092 = vand.u32 %v3555, 4294901760
  %v6093 = vsub.f32 %v3555, %v6092
  %v6094 = vand.u32 %v6093, 4294901760
  %6095 = vmatpush1.msra.mxu0 %v6094
  %6096 = vmatprep.subr.mxu0 0.0
  %v6097 = vand.u32 %v3556, 4294901760
  %v6098 = vsub.f32 %v3556, %v6097
  %v6099 = vand.u32 %v6098, 4294901760
  %6100 = vmatpush1.msra.mxu0 %v6099
  %6101 = vmatprep.subr.mxu0 0.0
  %v6102 = vand.u32 %v3557, 4294901760
  %v6103 = vsub.f32 %v3557, %v6102
  %v6104 = vand.u32 %v6103, 4294901760
  %6105 = vmatpush1.msra.mxu0 %v6104
  %6106 = vmatprep.subr.mxu0 0.0
  %v6107 = vand.u32 %v3558, 4294901760
  %v6108 = vsub.f32 %v3558, %v6107
  %v6109 = vand.u32 %v6108, 4294901760
  %6110 = vmatpush1.msra.mxu0 %v6109
  %6111 = vmatprep.subr.mxu0 0.0
  %v6112 = vand.u32 %v3559, 4294901760
  %v6113 = vsub.f32 %v3559, %v6112
  %v6114 = vand.u32 %v6113, 4294901760
  %6115 = vmatpush1.msra.mxu0 %v6114
  %6116 = vmatprep.subr.mxu0 0.0
  %6117 = vmatpush1.msra.mxu0 0.0
  %6118 = vmatprep.subr.mxu0 0.0
  %6119 = vmatpush1.msra.mxu0 0.0
  %6120 = vmatprep.subr.mxu0 0.0
  %6121 = vmatpush1.msra.mxu0 0.0
  %6122 = vmatprep.subr.mxu0 0.0
  %6123 = vmatpush1.msra.mxu0 0.0
  %6124 = vmatprep.subr.mxu0 0.0
  %6125 = vmatpush1.msra.mxu0 0.0
  %6126 = vmatprep.subr.mxu0 0.0
  %6127 = vmatpush1.msra.mxu0 0.0
  %6128 = vmatprep.subr.mxu0 0.0
  %6129 = vmatpush1.msra.mxu0 0.0
  %6130 = vmatprep.subr.mxu0 0.0
  %6131 = vmatpush1.msra.mxu0 0.0
  %6132 = vmatprep.subr.mxu0 0.0
  %6133 = vmatpush1.msra.mxu0 0.0
  %6134 = vmatprep.subr.mxu0 0.0
  %6135 = vmatpush1.msra.mxu0 0.0
  %6136 = vmatprep.subr.mxu0 0.0
  %6137 = vmatpush1.msra.mxu0 0.0
  %6138 = vmatprep.subr.mxu0 0.0
  %6139 = vmatpush1.msra.mxu0 0.0
  %6140 = vmatprep.subr.mxu0 0.0
  %6141 = vmatpush1.msra.mxu0 0.0
  %6142 = vmatprep.subr.mxu0 0.0
  %6143 = vmatpush1.msra.mxu0 0.0
  %6144 = vmatprep.subr.mxu0 0.0
  %6145 = vmatpush1.msra.mxu0 0.0
  %6146 = vmatprep.subr.mxu0 0.0
  %6147 = vmatpush1.msra.mxu0 0.0
  %6148 = vmatprep.subr.mxu0 0.0
  %6149 = vmatpush1.msra.mxu0 0.0
  %6150 = vmatprep.subr.mxu0 0.0
  %6151 = vmatpush1.msra.mxu0 0.0
  %6152 = vmatprep.subr.mxu0 0.0
  %6153 = vmatpush1.msra.mxu0 0.0
  %6154 = vmatprep.subr.mxu0 0.0
  %6155 = vmatpush1.msra.mxu0 0.0
  %6156 = vmatprep.subr.mxu0 0.0
  %6157 = vmatpush1.msra.mxu0 0.0
  %6158 = vmatprep.subr.mxu0 0.0
  %6159 = vmatpush1.msra.mxu0 0.0
  %6160 = vmatprep.subr.mxu0 0.0
  %6161 = vmatpush1.msra.mxu0 0.0
  %6162 = vmatprep.subr.mxu0 0.0
  %6163 = vmatpush1.msra.mxu0 0.0
  %6164 = vmatprep.mubr.f32.mxu0 0.0
  %v6165 = vand.u32 %v3569, 4294901760
  %6166 = vmatmul.mubr.f32.gmra.mrb[0].mxu0 %v6165
  %v6167 = vpop.f32.mrb[0].mxu0
  %v6168 = vadd.f32 %v5569, %v6167
  %v6169 = vpop.f32.mrb[0].mxu0
  %6170 = vmatprep.mubr.f32.mxu0 0.0
  %v6171 = vand.u32 %v3572, 4294901760
  %6172 = vmatmul.mubr.f32.gmra.mrb[0].mxu0 %v6171
  %v6173 = vpop.f32.mrb[0].mxu0
  %v6174 = vadd.f32 %v5577, %v6173
  %v6175 = vpop.f32.mrb[0].mxu0
  %6176 = vmatprep.mubr.f32.mxu0 0.0
  %v6177 = vand.u32 %v3575, 4294901760
  %6178 = vmatmul.mubr.f32.gmra.mrb[0].mxu0 %v6177
  %v6179 = vpop.f32.mrb[0].mxu0
  %v6180 = vadd.f32 %v5585, %v6179
  %v6181 = vpop.f32.mrb[0].mxu0
  %6182 = vmatprep.mubr.f32.mxu0 0.0
  %v6183 = vand.u32 %v3578, 4294901760
  %6184 = vmatmul.mubr.f32.gmra.mrb[0].mxu0 %v6183
  %v6185 = vpop.f32.mrb[0].mxu0
  %v6186 = vadd.f32 %v5593, %v6185
  %v6187 = vpop.f32.mrb[0].mxu0
  %6188 = vmatprep.mubr.f32.mxu0 0.0
  %v6189 = vand.u32 %v3581, 4294901760
  %6190 = vmatmul.mubr.f32.gmra.mrb[0].mxu0 %v6189
  %v6191 = vpop.f32.mrb[0].mxu0
  %v6192 = vadd.f32 %v5601, %v6191
  %v6193 = vpop.f32.mrb[0].mxu0
  %6194 = vmatprep.mubr.f32.mxu0 0.0
  %v6195 = vand.u32 %v3584, 4294901760
  %6196 = vmatmul.mubr.f32.gmra.mrb[0].mxu0 %v6195
  %v6197 = vpop.f32.mrb[0].mxu0
  %v6198 = vadd.f32 %v5609, %v6197
  %v6199 = vpop.f32.mrb[0].mxu0
  %6200 = vmatprep.mubr.f32.mxu0 0.0
  %v6201 = vand.u32 %v3587, 4294901760
  %6202 = vmatmul.mubr.f32.gmra.mrb[0].mxu0 %v6201
  %v6203 = vpop.f32.mrb[0].mxu0
  %v6204 = vadd.f32 %v5617, %v6203
  %v6205 = vpop.f32.mrb[0].mxu0
  %6206 = vmatprep.mubr.f32.mxu0 0.0
  %v6207 = vand.u32 %v3590, 4294901760
  %6208 = vmatmul.mubr.f32.gmra.mrb[0].mxu0 %v6207
  %v6209 = vpop.f32.mrb[0].mxu0
  %v6210 = vadd.f32 %v5625, %v6209
  %v6211 = vpop.f32.mrb[0].mxu0
  %6212 = vmatprep.mubr.f32.mxu0 0.0
  %v6213 = vand.u32 %v3593, 4294901760
  %6214 = vmatmul.mubr.f32.gmra.mrb[0].mxu0 %v6213
  %v6215 = vpop.f32.mrb[0].mxu0
  %v6216 = vadd.f32 %v5633, %v6215
  %v6217 = vpop.f32.mrb[0].mxu0
  %6218 = vmatprep.mubr.f32.mxu0 0.0
  %v6219 = vand.u32 %v3596, 4294901760
  %6220 = vmatmul.mubr.f32.gmra.mrb[0].mxu0 %v6219
  %v6221 = vpop.f32.mrb[0].mxu0
  %v6222 = vadd.f32 %v5641, %v6221
  %v6223 = vpop.f32.mrb[0].mxu0
  %6224 = vmatprep.mubr.f32.mxu0 0.0
  %v6225 = vand.u32 %v3599, 4294901760
  %6226 = vmatmul.mubr.f32.gmra.mrb[0].mxu0 %v6225
  %v6227 = vpop.f32.mrb[0].mxu0
  %v6228 = vadd.f32 %v5649, %v6227
  %v6229 = vpop.f32.mrb[0].mxu0
  %6230 = vmatprep.mubr.f32.mxu0 0.0
  %v6231 = vand.u32 %v3602, 4294901760
  %6232 = vmatmul.mubr.f32.gmra.mrb[0].mxu0 %v6231
  %v6233 = vpop.f32.mrb[0].mxu0
  %v6234 = vadd.f32 %v5657, %v6233
  %v6235 = vpop.f32.mrb[0].mxu0
  %6236 = vmatprep.mubr.f32.mxu0 0.0
  %v6237 = vand.u32 %v3605, 4294901760
  %6238 = vmatmul.mubr.f32.gmra.mrb[0].mxu0 %v6237
  %v6239 = vpop.f32.mrb[0].mxu0
  %v6240 = vadd.f32 %v5665, %v6239
  %v6241 = vpop.f32.mrb[0].mxu0
  %6242 = vmatprep.mubr.f32.mxu0 0.0
  %v6243 = vand.u32 %v3608, 4294901760
  %6244 = vmatmul.mubr.f32.gmra.mrb[0].mxu0 %v6243
  %v6245 = vpop.f32.mrb[0].mxu0
  %v6246 = vadd.f32 %v5673, %v6245
  %v6247 = vpop.f32.mrb[0].mxu0
  %6248 = vmatprep.mubr.f32.mxu0 0.0
  %v6249 = vand.u32 %v3611, 4294901760
  %6250 = vmatmul.mubr.f32.gmra.mrb[0].mxu0 %v6249
  %v6251 = vpop.f32.mrb[0].mxu0
  %v6252 = vadd.f32 %v5681, %v6251
  %v6253 = vpop.f32.mrb[0].mxu0
  %6254 = vmatprep.mubr.f32.mxu0 0.0
  %v6255 = vand.u32 %v3614, 4294901760
  %6256 = vmatmul.mubr.f32.gmra.mrb[0].mxu0 %v6255
  %v6257 = vpop.f32.mrb[0].mxu0
  %v6258 = vadd.f32 %v5689, %v6257
  %v6259 = vpop.f32.mrb[0].mxu0
  %6260 = vmatprep.mubr.f32.mxu0 0.0
  %v6261 = vand.u32 %v3617, 4294901760
  %6262 = vmatmul.mubr.f32.gmra.mrb[0].mxu0 %v6261
  %v6263 = vpop.f32.mrb[0].mxu0
  %v6264 = vadd.f32 %v5697, %v6263
  %v6265 = vpop.f32.mrb[0].mxu0
  %6266 = vmatprep.mubr.f32.mxu0 0.0
  %v6267 = vand.u32 %v3620, 4294901760
  %6268 = vmatmul.mubr.f32.gmra.mrb[0].mxu0 %v6267
  %v6269 = vpop.f32.mrb[0].mxu0
  %v6270 = vadd.f32 %v5705, %v6269
  %v6271 = vpop.f32.mrb[0].mxu0
  %6272 = vmatprep.mubr.f32.mxu0 0.0
  %v6273 = vand.u32 %v3623, 4294901760
  %6274 = vmatmul.mubr.f32.gmra.mrb[0].mxu0 %v6273
  %v6275 = vpop.f32.mrb[0].mxu0
  %v6276 = vadd.f32 %v5713, %v6275
  %v6277 = vpop.f32.mrb[0].mxu0
  %6278 = vmatprep.mubr.f32.mxu0 0.0
  %v6279 = vand.u32 %v3626, 4294901760
  %6280 = vmatmul.mubr.f32.gmra.mrb[0].mxu0 %v6279
  %v6281 = vpop.f32.mrb[0].mxu0
  %v6282 = vadd.f32 %v5721, %v6281
  %v6283 = vpop.f32.mrb[0].mxu0
  %6284 = vmatprep.mubr.f32.mxu0 0.0
  %v6285 = vand.u32 %v3629, 4294901760
  %6286 = vmatmul.mubr.f32.gmra.mrb[0].mxu0 %v6285
  %v6287 = vpop.f32.mrb[0].mxu0
  %v6288 = vadd.f32 %v5729, %v6287
  %v6289 = vpop.f32.mrb[0].mxu0
  %6290 = vmatprep.mubr.f32.mxu0 0.0
  %v6291 = vand.u32 %v3632, 4294901760
  %6292 = vmatmul.mubr.f32.gmra.mrb[0].mxu0 %v6291
  %v6293 = vpop.f32.mrb[0].mxu0
  %v6294 = vadd.f32 %v5737, %v6293
  %v6295 = vpop.f32.mrb[0].mxu0
  %6296 = vmatprep.mubr.f32.mxu0 0.0
  %v6297 = vand.u32 %v3635, 4294901760
  %6298 = vmatmul.mubr.f32.gmra.mrb[0].mxu0 %v6297
  %v6299 = vpop.f32.mrb[0].mxu0
  %v6300 = vadd.f32 %v5745, %v6299
  %v6301 = vpop.f32.mrb[0].mxu0
  %6302 = vmatprep.mubr.f32.mxu0 0.0
  %v6303 = vand.u32 %v3638, 4294901760
  %6304 = vmatmul.mubr.f32.gmra.mrb[0].mxu0 %v6303
  %v6305 = vpop.f32.mrb[0].mxu0
  %v6306 = vadd.f32 %v5753, %v6305
  %v6307 = vpop.f32.mrb[0].mxu0
  %6308 = vmatprep.mubr.f32.mxu0 0.0
  %v6309 = vand.u32 %v3641, 4294901760
  %6310 = vmatmul.mubr.f32.gmra.mrb[0].mxu0 %v6309
  %v6311 = vpop.f32.mrb[0].mxu0
  %v6312 = vadd.f32 %v5761, %v6311
  %v6313 = vpop.f32.mrb[0].mxu0
  %6314 = vmatprep.mubr.f32.mxu0 0.0
  %v6315 = vand.u32 %v3644, 4294901760
  %6316 = vmatmul.mubr.f32.gmra.mrb[0].mxu0 %v6315
  %v6317 = vpop.f32.mrb[0].mxu0
  %v6318 = vadd.f32 %v5769, %v6317
  %v6319 = vpop.f32.mrb[0].mxu0
  %6320 = vmatprep.mubr.f32.mxu0 0.0
  %v6321 = vand.u32 %v3647, 4294901760
  %6322 = vmatmul.mubr.f32.gmra.mrb[0].mxu0 %v6321
  %v6323 = vpop.f32.mrb[0].mxu0
  %v6324 = vadd.f32 %v5777, %v6323
  %v6325 = vpop.f32.mrb[0].mxu0
  %6326 = vmatprep.mubr.f32.mxu0 0.0
  %v6327 = vand.u32 %v3650, 4294901760
  %6328 = vmatmul.mubr.f32.gmra.mrb[0].mxu0 %v6327
  %v6329 = vpop.f32.mrb[0].mxu0
  %v6330 = vadd.f32 %v5785, %v6329
  %v6331 = vpop.f32.mrb[0].mxu0
  %6332 = vmatprep.mubr.f32.mxu0 0.0
  %v6333 = vand.u32 %v3653, 4294901760
  %6334 = vmatmul.mubr.f32.gmra.mrb[0].mxu0 %v6333
  %v6335 = vpop.f32.mrb[0].mxu0
  %v6336 = vadd.f32 %v5793, %v6335
  %v6337 = vpop.f32.mrb[0].mxu0
  %6338 = vmatprep.mubr.f32.mxu0 0.0
  %v6339 = vand.u32 %v3656, 4294901760
  %6340 = vmatmul.mubr.f32.gmra.mrb[0].mxu0 %v6339
  %v6341 = vpop.f32.mrb[0].mxu0
  %v6342 = vadd.f32 %v5801, %v6341
  %v6343 = vpop.f32.mrb[0].mxu0
  %6344 = vmatprep.mubr.f32.mxu0 0.0
  %v6345 = vand.u32 %v3659, 4294901760
  %6346 = vmatmul.mubr.f32.gmra.mrb[0].mxu0 %v6345
  %v6347 = vpop.f32.mrb[0].mxu0
  %v6348 = vadd.f32 %v5809, %v6347
  %v6349 = vpop.f32.mrb[0].mxu0
  %6350 = vmatprep.mubr.f32.mxu0 0.0
  %v6351 = vand.u32 %v3662, 4294901760
  %6352 = vmatmul.mubr.f32.gmra.mrb[0].mxu0 %v6351
  %v6353 = vpop.f32.mrb[0].mxu0
  %v6354 = vadd.f32 %v5817, %v6353
  %v6355 = vpop.f32.mrb[0].mxu0
  %6356 = vmatprep.mubr.f32.mxu0 0.0
  %v6357 = vand.u32 %v3665, 4294901760
  %6358 = vmatmul.mubr.f32.gmra.mrb[0].mxu0 %v6357
  %v6359 = vpop.f32.mrb[0].mxu0
  %v6360 = vadd.f32 %v5825, %v6359
  %v6361 = vpop.f32.mrb[0].mxu0
  %6362 = vmatprep.mubr.f32.mxu0 0.0
  %v6363 = vand.u32 %v3668, 4294901760
  %6364 = vmatmul.mubr.f32.gmra.mrb[0].mxu0 %v6363
  %v6365 = vpop.f32.mrb[0].mxu0
  %v6366 = vadd.f32 %v5833, %v6365
  %v6367 = vpop.f32.mrb[0].mxu0
  %6368 = vmatprep.mubr.f32.mxu0 0.0
  %v6369 = vand.u32 %v3671, 4294901760
  %6370 = vmatmul.mubr.f32.gmra.mrb[0].mxu0 %v6369
  %v6371 = vpop.f32.mrb[0].mxu0
  %v6372 = vadd.f32 %v5841, %v6371
  %v6373 = vpop.f32.mrb[0].mxu0
  %6374 = vmatprep.mubr.f32.mxu0 0.0
  %v6375 = vand.u32 %v3674, 4294901760
  %6376 = vmatmul.mubr.f32.gmra.mrb[0].mxu0 %v6375
  %v6377 = vpop.f32.mrb[0].mxu0
  %v6378 = vadd.f32 %v5849, %v6377
  %v6379 = vpop.f32.mrb[0].mxu0
  %6380 = vmatprep.mubr.f32.mxu0 0.0
  %v6381 = vand.u32 %v3677, 4294901760
  %6382 = vmatmul.mubr.f32.gmra.mrb[0].mxu0 %v6381
  %v6383 = vpop.f32.mrb[0].mxu0
  %v6384 = vadd.f32 %v5857, %v6383
  %v6385 = vpop.f32.mrb[0].mxu0
  %6386 = vmatprep.mubr.f32.mxu0 0.0
  %v6387 = vand.u32 %v3680, 4294901760
  %6388 = vmatmul.mubr.f32.gmra.mrb[0].mxu0 %v6387
  %v6389 = vpop.f32.mrb[0].mxu0
  %v6390 = vadd.f32 %v5865, %v6389
  %v6391 = vpop.f32.mrb[0].mxu0
  %6392 = vmatprep.mubr.f32.mxu0 0.0
  %v6393 = vand.u32 %v3683, 4294901760
  %6394 = vmatmul.mubr.f32.gmra.mrb[0].mxu0 %v6393
  %v6395 = vpop.f32.mrb[0].mxu0
  %v6396 = vadd.f32 %v5873, %v6395
  %v6397 = vpop.f32.mrb[0].mxu0
  %6398 = vmatprep.mubr.f32.mxu0 0.0
  %v6399 = vand.u32 %v3686, 4294901760
  %6400 = vmatmul.mubr.f32.gmra.mrb[0].mxu0 %v6399
  %v6401 = vpop.f32.mrb[0].mxu0
  %v6402 = vadd.f32 %v5881, %v6401
  %v6403 = vpop.f32.mrb[0].mxu0
  %6404 = vmatprep.mubr.f32.mxu0 0.0
  %v6405 = vand.u32 %v3689, 4294901760
  %6406 = vmatmul.mubr.f32.gmra.mrb[0].mxu0 %v6405
  %v6407 = vpop.f32.mrb[0].mxu0
  %v6408 = vadd.f32 %v5889, %v6407
  %v6409 = vpop.f32.mrb[0].mxu0
  %6410 = vmatprep.mubr.f32.mxu0 0.0
  %v6411 = vand.u32 %v3692, 4294901760
  %6412 = vmatmul.mubr.f32.gmra.mrb[0].mxu0 %v6411
  %v6413 = vpop.f32.mrb[0].mxu0
  %v6414 = vadd.f32 %v5897, %v6413
  %v6415 = vpop.f32.mrb[0].mxu0
  %6416 = vmatprep.mubr.f32.mxu0 0.0
  %v6417 = vand.u32 %v3695, 4294901760
  %6418 = vmatmul.mubr.f32.gmra.mrb[0].mxu0 %v6417
  %v6419 = vpop.f32.mrb[0].mxu0
  %v6420 = vadd.f32 %v5905, %v6419
  %v6421 = vpop.f32.mrb[0].mxu0
  %6422 = vmatprep.mubr.f32.mxu0 0.0
  %v6423 = vand.u32 %v3698, 4294901760
  %6424 = vmatmul.mubr.f32.gmra.mrb[0].mxu0 %v6423
  %v6425 = vpop.f32.mrb[0].mxu0
  %v6426 = vadd.f32 %v5913, %v6425
  %v6427 = vpop.f32.mrb[0].mxu0
  %6428 = vmatprep.mubr.f32.mxu0 0.0
  %v6429 = vand.u32 %v3701, 4294901760
  %6430 = vmatmul.mubr.f32.gmra.mrb[0].mxu0 %v6429
  %v6431 = vpop.f32.mrb[0].mxu0
  %v6432 = vadd.f32 %v5921, %v6431
  %v6433 = vpop.f32.mrb[0].mxu0
  %6434 = vmatprep.mubr.f32.mxu0 0.0
  %v6435 = vand.u32 %v3704, 4294901760
  %6436 = vmatmul.mubr.f32.gmra.mrb[0].mxu0 %v6435
  %v6437 = vpop.f32.mrb[0].mxu0
  %v6438 = vadd.f32 %v5929, %v6437
  %v6439 = vpop.f32.mrb[0].mxu0
  %6440 = vmatprep.mubr.f32.mxu0 0.0
  %v6441 = vand.u32 %v3707, 4294901760
  %6442 = vmatmul.mubr.f32.gmra.mrb[0].mxu0 %v6441
  %v6443 = vpop.f32.mrb[0].mxu0
  %v6444 = vadd.f32 %v5937, %v6443
  %v6445 = vpop.f32.mrb[0].mxu0
  %6446 = vmatprep.mubr.f32.mxu0 0.0
  %v6447 = vand.u32 %v3710, 4294901760
  %6448 = vmatmul.mubr.f32.gmra.mrb[0].mxu0 %v6447
  %v6449 = vpop.f32.mrb[0].mxu0
  %v6450 = vadd.f32 %v5945, %v6449
  %v6451 = vpop.f32.mrb[0].mxu0
  %6452 = vmatprep.mubr.f32.mxu0 0.0
  %v6453 = vand.u32 %v3713, 4294901760
  %6454 = vmatmul.mubr.f32.gmra.mrb[0].mxu0 %v6453
  %v6455 = vpop.f32.mrb[0].mxu0
  %v6456 = vadd.f32 %v5953, %v6455
  %v6457 = vpop.f32.mrb[0].mxu0
  %6458 = vmatprep.mubr.f32.mxu0 0.0
  %v6459 = vand.u32 %v3716, 4294901760
  %6460 = vmatmul.mubr.f32.gmra.mrb[0].mxu0 %v6459
  %v6461 = vpop.f32.mrb[0].mxu0
  %v6462 = vadd.f32 %v5961, %v6461
  %v6463 = vpop.f32.mrb[0].mxu0
  %6464 = vmatprep.mubr.f32.mxu0 0.0
  %v6465 = vand.u32 %v3719, 4294901760
  %6466 = vmatmul.mubr.f32.gmra.mrb[0].mxu0 %v6465
  %v6467 = vpop.f32.mrb[0].mxu0
  %v6468 = vadd.f32 %v5969, %v6467
  %v6469 = vpop.f32.mrb[0].mxu0
  %6470 = vmatprep.mubr.f32.mxu0 0.0
  %v6471 = vand.u32 %v3722, 4294901760
  %6472 = vmatmul.mubr.f32.gmra.mrb[0].mxu0 %v6471
  %v6473 = vpop.f32.mrb[0].mxu0
  %v6474 = vadd.f32 %v5977, %v6473
  %v6475 = vpop.f32.mrb[0].mxu0
  %6476 = vmatprep.mubr.f32.mxu0 0.0
  %v6477 = vand.u32 %v3725, 4294901760
  %6478 = vmatmul.mubr.f32.gmra.mrb[0].mxu0 %v6477
  %v6479 = vpop.f32.mrb[0].mxu0
  %v6480 = vadd.f32 %v5985, %v6479
  %v6481 = vpop.f32.mrb[0].mxu0
  %6482 = vmatprep.mubr.f32.mxu0 0.0
  %v6483 = vand.u32 %v3728, 4294901760
  %6484 = vmatmul.mubr.f32.gmra.mrb[0].mxu0 %v6483
  %v6485 = vpop.f32.mrb[0].mxu0
  %v6486 = vadd.f32 %v5993, %v6485
  %v6487 = vpop.f32.mrb[0].mxu0
  %6488 = vmatprep.mubr.f32.mxu0 0.0
  %v6489 = vand.u32 %v3731, 4294901760
  %6490 = vmatmul.mubr.f32.gmra.mrb[0].mxu0 %v6489
  %v6491 = vpop.f32.mrb[0].mxu0
  %v6492 = vadd.f32 %v6001, %v6491
  %v6493 = vpop.f32.mrb[0].mxu0
  %6494 = vmatprep.mubr.f32.mxu0 0.0
  %v6495 = vand.u32 %v3734, 4294901760
  %6496 = vmatmul.mubr.f32.gmra.mrb[0].mxu0 %v6495
  %v6497 = vpop.f32.mrb[0].mxu0
  %v6498 = vadd.f32 %v6009, %v6497
  %v6499 = vpop.f32.mrb[0].mxu0
  %6500 = vmatprep.mubr.f32.mxu0 0.0
  %v6501 = vand.u32 %v3737, 4294901760
  %6502 = vmatmul.mubr.f32.gmra.mrb[0].mxu0 %v6501
  %v6503 = vpop.f32.mrb[0].mxu0
  %v6504 = vadd.f32 %v6017, %v6503
  %v6505 = vpop.f32.mrb[0].mxu0
  %6506 = vmatprep.mubr.f32.mxu0 0.0
  %v6507 = vand.u32 %v3740, 4294901760
  %6508 = vmatmul.mubr.f32.gmra.mrb[0].mxu0 %v6507
  %v6509 = vpop.f32.mrb[0].mxu0
  %v6510 = vadd.f32 %v6025, %v6509
  %v6511 = vpop.f32.mrb[0].mxu0
  %6512 = vmatprep.mubr.f32.mxu0 0.0
  %v6513 = vand.u32 %v3743, 4294901760
  %6514 = vmatmul.mubr.f32.gmra.mrb[0].mxu0 %v6513
  %v6515 = vpop.f32.mrb[0].mxu0
  %v6516 = vadd.f32 %v6033, %v6515
  %v6517 = vpop.f32.mrb[0].mxu0
  %6518 = vmatprep.mubr.f32.mxu0 0.0
  %v6519 = vand.u32 %v3746, 4294901760
  %6520 = vmatmul.mubr.f32.gmra.mrb[0].mxu0 %v6519
  %v6521 = vpop.f32.mrb[0].mxu0
  %v6522 = vadd.f32 %v6041, %v6521
  %v6523 = vpop.f32.mrb[0].mxu0
  %6524 = vmatprep.mubr.f32.mxu0 0.0
  %v6525 = vand.u32 %v3749, 4294901760
  %6526 = vmatmul.mubr.f32.gmra.mrb[0].mxu0 %v6525
  %v6527 = vpop.f32.mrb[0].mxu0
  %v6528 = vadd.f32 %v6049, %v6527
  %v6529 = vpop.f32.mrb[0].mxu0
  %6530 = vmatprep.mubr.f32.mxu0 0.0
  %v6531 = vand.u32 %v3752, 4294901760
  %6532 = vmatmul.mubr.f32.gmra.mrb[0].mxu0 %v6531
  %v6533 = vpop.f32.mrb[0].mxu0
  %v6534 = vadd.f32 %v6057, %v6533
  %v6535 = vpop.f32.mrb[0].mxu0
  %6536 = vmatprep.mubr.f32.mxu0 0.0
  %v6537 = vand.u32 %v3755, 4294901760
  %6538 = vmatmul.mubr.f32.gmra.mrb[0].mxu0 %v6537
  %v6539 = vpop.f32.mrb[0].mxu0
  %v6540 = vadd.f32 %v6065, %v6539
  %v6541 = vpop.f32.mrb[0].mxu0
  %6542 = vmatprep.mubr.f32.mxu0 0.0
  %v6543 = vand.u32 %v3758, 4294901760
  %6544 = vmatmul.mubr.f32.gmra.mrb[0].mxu0 %v6543
  %v6545 = vpop.f32.mrb[0].mxu0
  %v6546 = vadd.f32 %v6073, %v6545
  %v6547 = vpop.f32.mrb[0].mxu0
  %6548 = vdwg.mxu0
  %6549 = vmatprep.subr.mxu0 0.0
  %v6550 = vand.u32 %v3552, 4294901760
  %6551 = vmatpush1.msra.mxu0 %v6550
  %6552 = vmatprep.subr.mxu0 0.0
  %v6553 = vand.u32 %v3553, 4294901760
  %6554 = vmatpush1.msra.mxu0 %v6553
  %6555 = vmatprep.subr.mxu0 0.0
  %v6556 = vand.u32 %v3554, 4294901760
  %6557 = vmatpush1.msra.mxu0 %v6556
  %6558 = vmatprep.subr.mxu0 0.0
  %v6559 = vand.u32 %v3555, 4294901760
  %6560 = vmatpush1.msra.mxu0 %v6559
  %6561 = vmatprep.subr.mxu0 0.0
  %v6562 = vand.u32 %v3556, 4294901760
  %6563 = vmatpush1.msra.mxu0 %v6562
  %6564 = vmatprep.subr.mxu0 0.0
  %v6565 = vand.u32 %v3557, 4294901760
  %6566 = vmatpush1.msra.mxu0 %v6565
  %6567 = vmatprep.subr.mxu0 0.0
  %v6568 = vand.u32 %v3558, 4294901760
  %6569 = vmatpush1.msra.mxu0 %v6568
  %6570 = vmatprep.subr.mxu0 0.0
  %v6571 = vand.u32 %v3559, 4294901760
  %6572 = vmatpush1.msra.mxu0 %v6571
  %6573 = vmatprep.subr.mxu0 0.0
  %6574 = vmatpush1.msra.mxu0 0.0
  %6575 = vmatprep.subr.mxu0 0.0
  %6576 = vmatpush1.msra.mxu0 0.0
  %6577 = vmatprep.subr.mxu0 0.0
  %6578 = vmatpush1.msra.mxu0 0.0
  %6579 = vmatprep.subr.mxu0 0.0
  %6580 = vmatpush1.msra.mxu0 0.0
  %6581 = vmatprep.subr.mxu0 0.0
  %6582 = vmatpush1.msra.mxu0 0.0
  %6583 = vmatprep.subr.mxu0 0.0
  %6584 = vmatpush1.msra.mxu0 0.0
  %6585 = vmatprep.subr.mxu0 0.0
  %6586 = vmatpush1.msra.mxu0 0.0
  %6587 = vmatprep.subr.mxu0 0.0
  %6588 = vmatpush1.msra.mxu0 0.0
  %6589 = vmatprep.subr.mxu0 0.0
  %6590 = vmatpush1.msra.mxu0 0.0
  %6591 = vmatprep.subr.mxu0 0.0
  %6592 = vmatpush1.msra.mxu0 0.0
  %6593 = vmatprep.subr.mxu0 0.0
  %6594 = vmatpush1.msra.mxu0 0.0
  %6595 = vmatprep.subr.mxu0 0.0
  %6596 = vmatpush1.msra.mxu0 0.0
  %6597 = vmatprep.subr.mxu0 0.0
  %6598 = vmatpush1.msra.mxu0 0.0
  %6599 = vmatprep.subr.mxu0 0.0
  %6600 = vmatpush1.msra.mxu0 0.0
  %6601 = vmatprep.subr.mxu0 0.0
  %6602 = vmatpush1.msra.mxu0 0.0
  %6603 = vmatprep.subr.mxu0 0.0
  %6604 = vmatpush1.msra.mxu0 0.0
  %6605 = vmatprep.subr.mxu0 0.0
  %6606 = vmatpush1.msra.mxu0 0.0
  %6607 = vmatprep.subr.mxu0 0.0
  %6608 = vmatpush1.msra.mxu0 0.0
  %6609 = vmatprep.subr.mxu0 0.0
  %6610 = vmatpush1.msra.mxu0 0.0
  %6611 = vmatprep.subr.mxu0 0.0
  %6612 = vmatpush1.msra.mxu0 0.0
  %6613 = vmatprep.subr.mxu0 0.0
  %6614 = vmatpush1.msra.mxu0 0.0
  %6615 = vmatprep.subr.mxu0 0.0
  %6616 = vmatpush1.msra.mxu0 0.0
  %6617 = vmatprep.subr.mxu0 0.0
  %6618 = vmatpush1.msra.mxu0 0.0
  %6619 = vmatprep.subr.mxu0 0.0
  %6620 = vmatpush1.msra.mxu0 0.0
  %6621 = vmatprep.mubr.f32.mxu0 0.0
  %v6622 = vand.u32 %v3569, 4294901760
  %6623 = vmatmul.mubr.f32.gmra.mrb[0].mxu0 %v6622
  %v6624 = vpop.f32.mrb[0].mxu0
  %v6625 = vadd.f32 %v6168, %v6624
  %v6626 = vpop.f32.mrb[0].mxu0
  %6627 = vmatprep.mubr.f32.mxu0 0.0
  %v6628 = vand.u32 %v3572, 4294901760
  %6629 = vmatmul.mubr.f32.gmra.mrb[0].mxu0 %v6628
  %v6630 = vpop.f32.mrb[0].mxu0
  %v6631 = vadd.f32 %v6174, %v6630
  %v6632 = vpop.f32.mrb[0].mxu0
  %6633 = vmatprep.mubr.f32.mxu0 0.0
  %v6634 = vand.u32 %v3575, 4294901760
  %6635 = vmatmul.mubr.f32.gmra.mrb[0].mxu0 %v6634
  %v6636 = vpop.f32.mrb[0].mxu0
  %v6637 = vadd.f32 %v6180, %v6636
  %v6638 = vpop.f32.mrb[0].mxu0
  %6639 = vmatprep.mubr.f32.mxu0 0.0
  %v6640 = vand.u32 %v3578, 4294901760
  %6641 = vmatmul.mubr.f32.gmra.mrb[0].mxu0 %v6640
  %v6642 = vpop.f32.mrb[0].mxu0
  %v6643 = vadd.f32 %v6186, %v6642
  %v6644 = vpop.f32.mrb[0].mxu0
  %6645 = vmatprep.mubr.f32.mxu0 0.0
  %v6646 = vand.u32 %v3581, 4294901760
  %6647 = vmatmul.mubr.f32.gmra.mrb[0].mxu0 %v6646
  %v6648 = vpop.f32.mrb[0].mxu0
  %v6649 = vadd.f32 %v6192, %v6648
  %v6650 = vpop.f32.mrb[0].mxu0
  %6651 = vmatprep.mubr.f32.mxu0 0.0
  %v6652 = vand.u32 %v3584, 4294901760
  %6653 = vmatmul.mubr.f32.gmra.mrb[0].mxu0 %v6652
  %v6654 = vpop.f32.mrb[0].mxu0
  %v6655 = vadd.f32 %v6198, %v6654
  %v6656 = vpop.f32.mrb[0].mxu0
  %6657 = vmatprep.mubr.f32.mxu0 0.0
  %v6658 = vand.u32 %v3587, 4294901760
  %6659 = vmatmul.mubr.f32.gmra.mrb[0].mxu0 %v6658
  %v6660 = vpop.f32.mrb[0].mxu0
  %v6661 = vadd.f32 %v6204, %v6660
  %v6662 = vpop.f32.mrb[0].mxu0
  %6663 = vmatprep.mubr.f32.mxu0 0.0
  %v6664 = vand.u32 %v3590, 4294901760
  %6665 = vmatmul.mubr.f32.gmra.mrb[0].mxu0 %v6664
  %v6666 = vpop.f32.mrb[0].mxu0
  %v6667 = vadd.f32 %v6210, %v6666
  %v6668 = vpop.f32.mrb[0].mxu0
  %6669 = vmatprep.mubr.f32.mxu0 0.0
  %v6670 = vand.u32 %v3593, 4294901760
  %6671 = vmatmul.mubr.f32.gmra.mrb[0].mxu0 %v6670
  %v6672 = vpop.f32.mrb[0].mxu0
  %v6673 = vadd.f32 %v6216, %v6672
  %v6674 = vpop.f32.mrb[0].mxu0
  %6675 = vmatprep.mubr.f32.mxu0 0.0
  %v6676 = vand.u32 %v3596, 4294901760
  %6677 = vmatmul.mubr.f32.gmra.mrb[0].mxu0 %v6676
  %v6678 = vpop.f32.mrb[0].mxu0
  %v6679 = vadd.f32 %v6222, %v6678
  %v6680 = vpop.f32.mrb[0].mxu0
  %6681 = vmatprep.mubr.f32.mxu0 0.0
  %v6682 = vand.u32 %v3599, 4294901760
  %6683 = vmatmul.mubr.f32.gmra.mrb[0].mxu0 %v6682
  %v6684 = vpop.f32.mrb[0].mxu0
  %v6685 = vadd.f32 %v6228, %v6684
  %v6686 = vpop.f32.mrb[0].mxu0
  %6687 = vmatprep.mubr.f32.mxu0 0.0
  %v6688 = vand.u32 %v3602, 4294901760
  %6689 = vmatmul.mubr.f32.gmra.mrb[0].mxu0 %v6688
  %v6690 = vpop.f32.mrb[0].mxu0
  %v6691 = vadd.f32 %v6234, %v6690
  %v6692 = vpop.f32.mrb[0].mxu0
  %6693 = vmatprep.mubr.f32.mxu0 0.0
  %v6694 = vand.u32 %v3605, 4294901760
  %6695 = vmatmul.mubr.f32.gmra.mrb[0].mxu0 %v6694
  %v6696 = vpop.f32.mrb[0].mxu0
  %v6697 = vadd.f32 %v6240, %v6696
  %v6698 = vpop.f32.mrb[0].mxu0
  %6699 = vmatprep.mubr.f32.mxu0 0.0
  %v6700 = vand.u32 %v3608, 4294901760
  %6701 = vmatmul.mubr.f32.gmra.mrb[0].mxu0 %v6700
  %v6702 = vpop.f32.mrb[0].mxu0
  %v6703 = vadd.f32 %v6246, %v6702
  %v6704 = vpop.f32.mrb[0].mxu0
  %6705 = vmatprep.mubr.f32.mxu0 0.0
  %v6706 = vand.u32 %v3611, 4294901760
  %6707 = vmatmul.mubr.f32.gmra.mrb[0].mxu0 %v6706
  %v6708 = vpop.f32.mrb[0].mxu0
  %v6709 = vadd.f32 %v6252, %v6708
  %v6710 = vpop.f32.mrb[0].mxu0
  %6711 = vmatprep.mubr.f32.mxu0 0.0
  %v6712 = vand.u32 %v3614, 4294901760
  %6713 = vmatmul.mubr.f32.gmra.mrb[0].mxu0 %v6712
  %v6714 = vpop.f32.mrb[0].mxu0
  %v6715 = vadd.f32 %v6258, %v6714
  %v6716 = vpop.f32.mrb[0].mxu0
  %6717 = vmatprep.mubr.f32.mxu0 0.0
  %v6718 = vand.u32 %v3617, 4294901760
  %6719 = vmatmul.mubr.f32.gmra.mrb[0].mxu0 %v6718
  %v6720 = vpop.f32.mrb[0].mxu0
  %v6721 = vadd.f32 %v6264, %v6720
  %v6722 = vpop.f32.mrb[0].mxu0
  %6723 = vmatprep.mubr.f32.mxu0 0.0
  %v6724 = vand.u32 %v3620, 4294901760
  %6725 = vmatmul.mubr.f32.gmra.mrb[0].mxu0 %v6724
  %v6726 = vpop.f32.mrb[0].mxu0
  %v6727 = vadd.f32 %v6270, %v6726
  %v6728 = vpop.f32.mrb[0].mxu0
  %6729 = vmatprep.mubr.f32.mxu0 0.0
  %v6730 = vand.u32 %v3623, 4294901760
  %6731 = vmatmul.mubr.f32.gmra.mrb[0].mxu0 %v6730
  %v6732 = vpop.f32.mrb[0].mxu0
  %v6733 = vadd.f32 %v6276, %v6732
  %v6734 = vpop.f32.mrb[0].mxu0
  %6735 = vmatprep.mubr.f32.mxu0 0.0
  %v6736 = vand.u32 %v3626, 4294901760
  %6737 = vmatmul.mubr.f32.gmra.mrb[0].mxu0 %v6736
  %v6738 = vpop.f32.mrb[0].mxu0
  %v6739 = vadd.f32 %v6282, %v6738
  %v6740 = vpop.f32.mrb[0].mxu0
  %6741 = vmatprep.mubr.f32.mxu0 0.0
  %v6742 = vand.u32 %v3629, 4294901760
  %6743 = vmatmul.mubr.f32.gmra.mrb[0].mxu0 %v6742
  %v6744 = vpop.f32.mrb[0].mxu0
  %v6745 = vadd.f32 %v6288, %v6744
  %v6746 = vpop.f32.mrb[0].mxu0
  %6747 = vmatprep.mubr.f32.mxu0 0.0
  %v6748 = vand.u32 %v3632, 4294901760
  %6749 = vmatmul.mubr.f32.gmra.mrb[0].mxu0 %v6748
  %v6750 = vpop.f32.mrb[0].mxu0
  %v6751 = vadd.f32 %v6294, %v6750
  %v6752 = vpop.f32.mrb[0].mxu0
  %6753 = vmatprep.mubr.f32.mxu0 0.0
  %v6754 = vand.u32 %v3635, 4294901760
  %6755 = vmatmul.mubr.f32.gmra.mrb[0].mxu0 %v6754
  %v6756 = vpop.f32.mrb[0].mxu0
  %v6757 = vadd.f32 %v6300, %v6756
  %v6758 = vpop.f32.mrb[0].mxu0
  %6759 = vmatprep.mubr.f32.mxu0 0.0
  %v6760 = vand.u32 %v3638, 4294901760
  %6761 = vmatmul.mubr.f32.gmra.mrb[0].mxu0 %v6760
  %v6762 = vpop.f32.mrb[0].mxu0
  %v6763 = vadd.f32 %v6306, %v6762
  %v6764 = vpop.f32.mrb[0].mxu0
  %6765 = vmatprep.mubr.f32.mxu0 0.0
  %v6766 = vand.u32 %v3641, 4294901760
  %6767 = vmatmul.mubr.f32.gmra.mrb[0].mxu0 %v6766
  %v6768 = vpop.f32.mrb[0].mxu0
  %v6769 = vadd.f32 %v6312, %v6768
  %v6770 = vpop.f32.mrb[0].mxu0
  %6771 = vmatprep.mubr.f32.mxu0 0.0
  %v6772 = vand.u32 %v3644, 4294901760
  %6773 = vmatmul.mubr.f32.gmra.mrb[0].mxu0 %v6772
  %v6774 = vpop.f32.mrb[0].mxu0
  %v6775 = vadd.f32 %v6318, %v6774
  %v6776 = vpop.f32.mrb[0].mxu0
  %6777 = vmatprep.mubr.f32.mxu0 0.0
  %v6778 = vand.u32 %v3647, 4294901760
  %6779 = vmatmul.mubr.f32.gmra.mrb[0].mxu0 %v6778
  %v6780 = vpop.f32.mrb[0].mxu0
  %v6781 = vadd.f32 %v6324, %v6780
  %v6782 = vpop.f32.mrb[0].mxu0
  %6783 = vmatprep.mubr.f32.mxu0 0.0
  %v6784 = vand.u32 %v3650, 4294901760
  %6785 = vmatmul.mubr.f32.gmra.mrb[0].mxu0 %v6784
  %v6786 = vpop.f32.mrb[0].mxu0
  %v6787 = vadd.f32 %v6330, %v6786
  %v6788 = vpop.f32.mrb[0].mxu0
  %6789 = vmatprep.mubr.f32.mxu0 0.0
  %v6790 = vand.u32 %v3653, 4294901760
  %6791 = vmatmul.mubr.f32.gmra.mrb[0].mxu0 %v6790
  %v6792 = vpop.f32.mrb[0].mxu0
  %v6793 = vadd.f32 %v6336, %v6792
  %v6794 = vpop.f32.mrb[0].mxu0
  %6795 = vmatprep.mubr.f32.mxu0 0.0
  %v6796 = vand.u32 %v3656, 4294901760
  %6797 = vmatmul.mubr.f32.gmra.mrb[0].mxu0 %v6796
  %v6798 = vpop.f32.mrb[0].mxu0
  %v6799 = vadd.f32 %v6342, %v6798
  %v6800 = vpop.f32.mrb[0].mxu0
  %6801 = vmatprep.mubr.f32.mxu0 0.0
  %v6802 = vand.u32 %v3659, 4294901760
  %6803 = vmatmul.mubr.f32.gmra.mrb[0].mxu0 %v6802
  %v6804 = vpop.f32.mrb[0].mxu0
  %v6805 = vadd.f32 %v6348, %v6804
  %v6806 = vpop.f32.mrb[0].mxu0
  %6807 = vmatprep.mubr.f32.mxu0 0.0
  %v6808 = vand.u32 %v3662, 4294901760
  %6809 = vmatmul.mubr.f32.gmra.mrb[0].mxu0 %v6808
  %v6810 = vpop.f32.mrb[0].mxu0
  %v6811 = vadd.f32 %v6354, %v6810
  %v6812 = vpop.f32.mrb[0].mxu0
  %6813 = vmatprep.mubr.f32.mxu0 0.0
  %v6814 = vand.u32 %v3665, 4294901760
  %6815 = vmatmul.mubr.f32.gmra.mrb[0].mxu0 %v6814
  %v6816 = vpop.f32.mrb[0].mxu0
  %v6817 = vadd.f32 %v6360, %v6816
  %v6818 = vpop.f32.mrb[0].mxu0
  %6819 = vmatprep.mubr.f32.mxu0 0.0
  %v6820 = vand.u32 %v3668, 4294901760
  %6821 = vmatmul.mubr.f32.gmra.mrb[0].mxu0 %v6820
  %v6822 = vpop.f32.mrb[0].mxu0
  %v6823 = vadd.f32 %v6366, %v6822
  %v6824 = vpop.f32.mrb[0].mxu0
  %6825 = vmatprep.mubr.f32.mxu0 0.0
  %v6826 = vand.u32 %v3671, 4294901760
  %6827 = vmatmul.mubr.f32.gmra.mrb[0].mxu0 %v6826
  %v6828 = vpop.f32.mrb[0].mxu0
  %v6829 = vadd.f32 %v6372, %v6828
  %v6830 = vpop.f32.mrb[0].mxu0
  %6831 = vmatprep.mubr.f32.mxu0 0.0
  %v6832 = vand.u32 %v3674, 4294901760
  %6833 = vmatmul.mubr.f32.gmra.mrb[0].mxu0 %v6832
  %v6834 = vpop.f32.mrb[0].mxu0
  %v6835 = vadd.f32 %v6378, %v6834
  %v6836 = vpop.f32.mrb[0].mxu0
  %6837 = vmatprep.mubr.f32.mxu0 0.0
  %v6838 = vand.u32 %v3677, 4294901760
  %6839 = vmatmul.mubr.f32.gmra.mrb[0].mxu0 %v6838
  %v6840 = vpop.f32.mrb[0].mxu0
  %v6841 = vadd.f32 %v6384, %v6840
  %v6842 = vpop.f32.mrb[0].mxu0
  %6843 = vmatprep.mubr.f32.mxu0 0.0
  %v6844 = vand.u32 %v3680, 4294901760
  %6845 = vmatmul.mubr.f32.gmra.mrb[0].mxu0 %v6844
  %v6846 = vpop.f32.mrb[0].mxu0
  %v6847 = vadd.f32 %v6390, %v6846
  %v6848 = vpop.f32.mrb[0].mxu0
  %6849 = vmatprep.mubr.f32.mxu0 0.0
  %v6850 = vand.u32 %v3683, 4294901760
  %6851 = vmatmul.mubr.f32.gmra.mrb[0].mxu0 %v6850
  %v6852 = vpop.f32.mrb[0].mxu0
  %v6853 = vadd.f32 %v6396, %v6852
  %v6854 = vpop.f32.mrb[0].mxu0
  %6855 = vmatprep.mubr.f32.mxu0 0.0
  %v6856 = vand.u32 %v3686, 4294901760
  %6857 = vmatmul.mubr.f32.gmra.mrb[0].mxu0 %v6856
  %v6858 = vpop.f32.mrb[0].mxu0
  %v6859 = vadd.f32 %v6402, %v6858
  %v6860 = vpop.f32.mrb[0].mxu0
  %6861 = vmatprep.mubr.f32.mxu0 0.0
  %v6862 = vand.u32 %v3689, 4294901760
  %6863 = vmatmul.mubr.f32.gmra.mrb[0].mxu0 %v6862
  %v6864 = vpop.f32.mrb[0].mxu0
  %v6865 = vadd.f32 %v6408, %v6864
  %v6866 = vpop.f32.mrb[0].mxu0
  %6867 = vmatprep.mubr.f32.mxu0 0.0
  %v6868 = vand.u32 %v3692, 4294901760
  %6869 = vmatmul.mubr.f32.gmra.mrb[0].mxu0 %v6868
  %v6870 = vpop.f32.mrb[0].mxu0
  %v6871 = vadd.f32 %v6414, %v6870
  %v6872 = vpop.f32.mrb[0].mxu0
  %6873 = vmatprep.mubr.f32.mxu0 0.0
  %v6874 = vand.u32 %v3695, 4294901760
  %6875 = vmatmul.mubr.f32.gmra.mrb[0].mxu0 %v6874
  %v6876 = vpop.f32.mrb[0].mxu0
  %v6877 = vadd.f32 %v6420, %v6876
  %v6878 = vpop.f32.mrb[0].mxu0
  %6879 = vmatprep.mubr.f32.mxu0 0.0
  %v6880 = vand.u32 %v3698, 4294901760
  %6881 = vmatmul.mubr.f32.gmra.mrb[0].mxu0 %v6880
  %v6882 = vpop.f32.mrb[0].mxu0
  %v6883 = vadd.f32 %v6426, %v6882
  %v6884 = vpop.f32.mrb[0].mxu0
  %6885 = vmatprep.mubr.f32.mxu0 0.0
  %v6886 = vand.u32 %v3701, 4294901760
  %6887 = vmatmul.mubr.f32.gmra.mrb[0].mxu0 %v6886
  %v6888 = vpop.f32.mrb[0].mxu0
  %v6889 = vadd.f32 %v6432, %v6888
  %v6890 = vpop.f32.mrb[0].mxu0
  %6891 = vmatprep.mubr.f32.mxu0 0.0
  %v6892 = vand.u32 %v3704, 4294901760
  %6893 = vmatmul.mubr.f32.gmra.mrb[0].mxu0 %v6892
  %v6894 = vpop.f32.mrb[0].mxu0
  %v6895 = vadd.f32 %v6438, %v6894
  %v6896 = vpop.f32.mrb[0].mxu0
  %6897 = vmatprep.mubr.f32.mxu0 0.0
  %v6898 = vand.u32 %v3707, 4294901760
  %6899 = vmatmul.mubr.f32.gmra.mrb[0].mxu0 %v6898
  %v6900 = vpop.f32.mrb[0].mxu0
  %v6901 = vadd.f32 %v6444, %v6900
  %v6902 = vpop.f32.mrb[0].mxu0
  %6903 = vmatprep.mubr.f32.mxu0 0.0
  %v6904 = vand.u32 %v3710, 4294901760
  %6905 = vmatmul.mubr.f32.gmra.mrb[0].mxu0 %v6904
  %v6906 = vpop.f32.mrb[0].mxu0
  %v6907 = vadd.f32 %v6450, %v6906
  %v6908 = vpop.f32.mrb[0].mxu0
  %6909 = vmatprep.mubr.f32.mxu0 0.0
  %v6910 = vand.u32 %v3713, 4294901760
  %6911 = vmatmul.mubr.f32.gmra.mrb[0].mxu0 %v6910
  %v6912 = vpop.f32.mrb[0].mxu0
  %v6913 = vadd.f32 %v6456, %v6912
  %v6914 = vpop.f32.mrb[0].mxu0
  %6915 = vmatprep.mubr.f32.mxu0 0.0
  %v6916 = vand.u32 %v3716, 4294901760
  %6917 = vmatmul.mubr.f32.gmra.mrb[0].mxu0 %v6916
  %v6918 = vpop.f32.mrb[0].mxu0
  %v6919 = vadd.f32 %v6462, %v6918
  %v6920 = vpop.f32.mrb[0].mxu0
  %6921 = vmatprep.mubr.f32.mxu0 0.0
  %v6922 = vand.u32 %v3719, 4294901760
  %6923 = vmatmul.mubr.f32.gmra.mrb[0].mxu0 %v6922
  %v6924 = vpop.f32.mrb[0].mxu0
  %v6925 = vadd.f32 %v6468, %v6924
  %v6926 = vpop.f32.mrb[0].mxu0
  %6927 = vmatprep.mubr.f32.mxu0 0.0
  %v6928 = vand.u32 %v3722, 4294901760
  %6929 = vmatmul.mubr.f32.gmra.mrb[0].mxu0 %v6928
  %v6930 = vpop.f32.mrb[0].mxu0
  %v6931 = vadd.f32 %v6474, %v6930
  %v6932 = vpop.f32.mrb[0].mxu0
  %6933 = vmatprep.mubr.f32.mxu0 0.0
  %v6934 = vand.u32 %v3725, 4294901760
  %6935 = vmatmul.mubr.f32.gmra.mrb[0].mxu0 %v6934
  %v6936 = vpop.f32.mrb[0].mxu0
  %v6937 = vadd.f32 %v6480, %v6936
  %v6938 = vpop.f32.mrb[0].mxu0
  %6939 = vmatprep.mubr.f32.mxu0 0.0
  %v6940 = vand.u32 %v3728, 4294901760
  %6941 = vmatmul.mubr.f32.gmra.mrb[0].mxu0 %v6940
  %v6942 = vpop.f32.mrb[0].mxu0
  %v6943 = vadd.f32 %v6486, %v6942
  %v6944 = vpop.f32.mrb[0].mxu0
  %6945 = vmatprep.mubr.f32.mxu0 0.0
  %v6946 = vand.u32 %v3731, 4294901760
  %6947 = vmatmul.mubr.f32.gmra.mrb[0].mxu0 %v6946
  %v6948 = vpop.f32.mrb[0].mxu0
  %v6949 = vadd.f32 %v6492, %v6948
  %v6950 = vpop.f32.mrb[0].mxu0
  %6951 = vmatprep.mubr.f32.mxu0 0.0
  %v6952 = vand.u32 %v3734, 4294901760
  %6953 = vmatmul.mubr.f32.gmra.mrb[0].mxu0 %v6952
  %v6954 = vpop.f32.mrb[0].mxu0
  %v6955 = vadd.f32 %v6498, %v6954
  %v6956 = vpop.f32.mrb[0].mxu0
  %6957 = vmatprep.mubr.f32.mxu0 0.0
  %v6958 = vand.u32 %v3737, 4294901760
  %6959 = vmatmul.mubr.f32.gmra.mrb[0].mxu0 %v6958
  %v6960 = vpop.f32.mrb[0].mxu0
  %v6961 = vadd.f32 %v6504, %v6960
  %v6962 = vpop.f32.mrb[0].mxu0
  %6963 = vmatprep.mubr.f32.mxu0 0.0
  %v6964 = vand.u32 %v3740, 4294901760
  %6965 = vmatmul.mubr.f32.gmra.mrb[0].mxu0 %v6964
  %v6966 = vpop.f32.mrb[0].mxu0
  %v6967 = vadd.f32 %v6510, %v6966
  %v6968 = vpop.f32.mrb[0].mxu0
  %6969 = vmatprep.mubr.f32.mxu0 0.0
  %v6970 = vand.u32 %v3743, 4294901760
  %6971 = vmatmul.mubr.f32.gmra.mrb[0].mxu0 %v6970
  %v6972 = vpop.f32.mrb[0].mxu0
  %v6973 = vadd.f32 %v6516, %v6972
  %v6974 = vpop.f32.mrb[0].mxu0
  %6975 = vmatprep.mubr.f32.mxu0 0.0
  %v6976 = vand.u32 %v3746, 4294901760
  %6977 = vmatmul.mubr.f32.gmra.mrb[0].mxu0 %v6976
  %v6978 = vpop.f32.mrb[0].mxu0
  %v6979 = vadd.f32 %v6522, %v6978
  %v6980 = vpop.f32.mrb[0].mxu0
  %6981 = vmatprep.mubr.f32.mxu0 0.0
  %v6982 = vand.u32 %v3749, 4294901760
  %6983 = vmatmul.mubr.f32.gmra.mrb[0].mxu0 %v6982
  %v6984 = vpop.f32.mrb[0].mxu0
  %v6985 = vadd.f32 %v6528, %v6984
  %v6986 = vpop.f32.mrb[0].mxu0
  %6987 = vmatprep.mubr.f32.mxu0 0.0
  %v6988 = vand.u32 %v3752, 4294901760
  %6989 = vmatmul.mubr.f32.gmra.mrb[0].mxu0 %v6988
  %v6990 = vpop.f32.mrb[0].mxu0
  %v6991 = vadd.f32 %v6534, %v6990
  %v6992 = vpop.f32.mrb[0].mxu0
  %6993 = vmatprep.mubr.f32.mxu0 0.0
  %v6994 = vand.u32 %v3755, 4294901760
  %6995 = vmatmul.mubr.f32.gmra.mrb[0].mxu0 %v6994
  %v6996 = vpop.f32.mrb[0].mxu0
  %v6997 = vadd.f32 %v6540, %v6996
  %v6998 = vpop.f32.mrb[0].mxu0
  %6999 = vmatprep.mubr.f32.mxu0 0.0
  %v7000 = vand.u32 %v3758, 4294901760
  %7001 = vmatmul.mubr.f32.gmra.mrb[0].mxu0 %v7000
  %v7002 = vpop.f32.mrb[0].mxu0
  %v7003 = vadd.f32 %v6546, %v7002
  %v7004 = vpop.f32.mrb[0].mxu0
  %7005 = vdwg.mxu0
  %v7006 = vmax.f32 %v6625, 0.0
  %v7007 = vmax.f32 %v6631, 0.0
  %v7008 = vmax.f32 %v6637, 0.0
  %v7009 = vmax.f32 %v6643, 0.0
  %v7010 = vmax.f32 %v6649, 0.0
  %v7011 = vmax.f32 %v6655, 0.0
  %v7012 = vmax.f32 %v6661, 0.0
  %v7013 = vmax.f32 %v6667, 0.0
  %v7014 = vmax.f32 %v6673, 0.0
  %v7015 = vmax.f32 %v6679, 0.0
  %v7016 = vmax.f32 %v6685, 0.0
  %v7017 = vmax.f32 %v6691, 0.0
  %v7018 = vmax.f32 %v6697, 0.0
  %v7019 = vmax.f32 %v6703, 0.0
  %v7020 = vmax.f32 %v6709, 0.0
  %v7021 = vmax.f32 %v6715, 0.0
  %v7022 = vmax.f32 %v6721, 0.0
  %v7023 = vmax.f32 %v6727, 0.0
  %v7024 = vmax.f32 %v6733, 0.0
  %v7025 = vmax.f32 %v6739, 0.0
  %v7026 = vmax.f32 %v6745, 0.0
  %v7027 = vmax.f32 %v6751, 0.0
  %v7028 = vmax.f32 %v6757, 0.0
  %v7029 = vmax.f32 %v6763, 0.0
  %v7030 = vmax.f32 %v6769, 0.0
  %v7031 = vmax.f32 %v6775, 0.0
  %v7032 = vmax.f32 %v6781, 0.0
  %v7033 = vmax.f32 %v6787, 0.0
  %v7034 = vmax.f32 %v6793, 0.0
  %v7035 = vmax.f32 %v6799, 0.0
  %v7036 = vmax.f32 %v6805, 0.0
  %v7037 = vmax.f32 %v6811, 0.0
  %v7038 = vmax.f32 %v6817, 0.0
  %v7039 = vmax.f32 %v6823, 0.0
  %v7040 = vmax.f32 %v6829, 0.0
  %v7041 = vmax.f32 %v6835, 0.0
  %v7042 = vmax.f32 %v6841, 0.0
  %v7043 = vmax.f32 %v6847, 0.0
  %v7044 = vmax.f32 %v6853, 0.0
  %v7045 = vmax.f32 %v6859, 0.0
  %v7046 = vmax.f32 %v6865, 0.0
  %v7047 = vmax.f32 %v6871, 0.0
  %v7048 = vmax.f32 %v6877, 0.0
  %v7049 = vmax.f32 %v6883, 0.0
  %v7050 = vmax.f32 %v6889, 0.0
  %v7051 = vmax.f32 %v6895, 0.0
  %v7052 = vmax.f32 %v6901, 0.0
  %v7053 = vmax.f32 %v6907, 0.0
  %v7054 = vmax.f32 %v6913, 0.0
  %v7055 = vmax.f32 %v6919, 0.0
  %v7056 = vmax.f32 %v6925, 0.0
  %v7057 = vmax.f32 %v6931, 0.0
  %v7058 = vmax.f32 %v6937, 0.0
  %v7059 = vmax.f32 %v6943, 0.0
  %v7060 = vmax.f32 %v6949, 0.0
  %v7061 = vmax.f32 %v6955, 0.0
  %v7062 = vmax.f32 %v6961, 0.0
  %v7063 = vmax.f32 %v6967, 0.0
  %v7064 = vmax.f32 %v6973, 0.0
  %v7065 = vmax.f32 %v6979, 0.0
  %v7066 = vmax.f32 %v6985, 0.0
  %v7067 = vmax.f32 %v6991, 0.0
  %v7068 = vmax.f32 %v6997, 0.0
  %v7069 = vmax.f32 %v7003, 0.0
  %v7070 = vld [vmem:[%s5] sm:$0xff]
  %v7071 = vld [vmem:[%s5 + $0x8] sm:$0xff]
  %v7072 = vld [vmem:[%s5 + $0x10] sm:$0xff]
  %v7073 = vld [vmem:[%s5 + $0x18] sm:$0xff]
  %v7074 = vld [vmem:[%s5 + $0x20] sm:$0xff]
  %v7075 = vld [vmem:[%s5 + $0x28] sm:$0xff]
  %v7076 = vld [vmem:[%s5 + $0x30] sm:$0xff]
  %v7077 = vld [vmem:[%s5 + $0x38] sm:$0xff]
  %v7078 = vld [vmem:[%s6] sm:$0x1]
  %v7080 = vlaneseq
  %v7081 = vshrl.u32 %v7080, 7
  %v7082 = vsub.s32 0, %v7081
  %v7083 = vrot.slane %v7078, %v7082
  %v7086 = vsel %vm3567, %v7006, 0
  %v7089 = vsel %vm3567, %v7007, 0
  %v7092 = vsel %vm3567, %v7008, 0
  %v7095 = vsel %vm3567, %v7009, 0
  %v7098 = vsel %vm3567, %v7010, 0
  %v7101 = vsel %vm3567, %v7011, 0
  %v7104 = vsel %vm3567, %v7012, 0
  %v7107 = vsel %vm3567, %v7013, 0
  %v7110 = vsel %vm3567, %v7014, 0
  %v7113 = vsel %vm3567, %v7015, 0
  %v7116 = vsel %vm3567, %v7016, 0
  %v7119 = vsel %vm3567, %v7017, 0
  %v7122 = vsel %vm3567, %v7018, 0
  %v7125 = vsel %vm3567, %v7019, 0
  %v7128 = vsel %vm3567, %v7020, 0
  %v7131 = vsel %vm3567, %v7021, 0
  %v7134 = vsel %vm3567, %v7022, 0
  %v7137 = vsel %vm3567, %v7023, 0
  %v7140 = vsel %vm3567, %v7024, 0
  %v7143 = vsel %vm3567, %v7025, 0
  %v7146 = vsel %vm3567, %v7026, 0
  %v7149 = vsel %vm3567, %v7027, 0
  %v7152 = vsel %vm3567, %v7028, 0
  %v7155 = vsel %vm3567, %v7029, 0
  %v7158 = vsel %vm3567, %v7030, 0
  %v7161 = vsel %vm3567, %v7031, 0
  %v7164 = vsel %vm3567, %v7032, 0
  %v7167 = vsel %vm3567, %v7033, 0
  %v7170 = vsel %vm3567, %v7034, 0
  %v7173 = vsel %vm3567, %v7035, 0
  %v7176 = vsel %vm3567, %v7036, 0
  %v7179 = vsel %vm3567, %v7037, 0
  %v7182 = vsel %vm3567, %v7038, 0
  %v7185 = vsel %vm3567, %v7039, 0
  %v7188 = vsel %vm3567, %v7040, 0
  %v7191 = vsel %vm3567, %v7041, 0
  %v7194 = vsel %vm3567, %v7042, 0
  %v7197 = vsel %vm3567, %v7043, 0
  %v7200 = vsel %vm3567, %v7044, 0
  %v7203 = vsel %vm3567, %v7045, 0
  %v7206 = vsel %vm3567, %v7046, 0
  %v7209 = vsel %vm3567, %v7047, 0
  %v7212 = vsel %vm3567, %v7048, 0
  %v7215 = vsel %vm3567, %v7049, 0
  %v7218 = vsel %vm3567, %v7050, 0
  %v7221 = vsel %vm3567, %v7051, 0
  %v7224 = vsel %vm3567, %v7052, 0
  %v7227 = vsel %vm3567, %v7053, 0
  %v7230 = vsel %vm3567, %v7054, 0
  %v7233 = vsel %vm3567, %v7055, 0
  %v7236 = vsel %vm3567, %v7056, 0
  %v7239 = vsel %vm3567, %v7057, 0
  %v7242 = vsel %vm3567, %v7058, 0
  %v7245 = vsel %vm3567, %v7059, 0
  %v7248 = vsel %vm3567, %v7060, 0
  %v7251 = vsel %vm3567, %v7061, 0
  %v7254 = vsel %vm3567, %v7062, 0
  %v7257 = vsel %vm3567, %v7063, 0
  %v7260 = vsel %vm3567, %v7064, 0
  %v7263 = vsel %vm3567, %v7065, 0
  %v7266 = vsel %vm3567, %v7066, 0
  %v7269 = vsel %vm3567, %v7067, 0
  %v7272 = vsel %vm3567, %v7068, 0
  %v7275 = vsel %vm3567, %v7069, 0
  %7277 = vmatprep.subr.mxu0 0.0
  %v7278 = vand.u32 %v7070, 4294901760
  %7279 = vmatpush1.msra.mxu0 %v7278
  %7280 = vmatprep.subr.mxu0 0.0
  %v7281 = vand.u32 %v7071, 4294901760
  %7282 = vmatpush1.msra.mxu0 %v7281
  %7283 = vmatprep.subr.mxu0 0.0
  %v7284 = vand.u32 %v7072, 4294901760
  %7285 = vmatpush1.msra.mxu0 %v7284
  %7286 = vmatprep.subr.mxu0 0.0
  %v7287 = vand.u32 %v7073, 4294901760
  %7288 = vmatpush1.msra.mxu0 %v7287
  %7289 = vmatprep.subr.mxu0 0.0
  %v7290 = vand.u32 %v7074, 4294901760
  %7291 = vmatpush1.msra.mxu0 %v7290
  %7292 = vmatprep.subr.mxu0 0.0
  %v7293 = vand.u32 %v7075, 4294901760
  %7294 = vmatpush1.msra.mxu0 %v7293
  %7295 = vmatprep.subr.mxu0 0.0
  %v7296 = vand.u32 %v7076, 4294901760
  %7297 = vmatpush1.msra.mxu0 %v7296
  %7298 = vmatprep.subr.mxu0 0.0
  %v7299 = vand.u32 %v7077, 4294901760
  %7300 = vmatpush1.msra.mxu0 %v7299
  %7301 = vmatprep.subr.mxu0 0.0
  %7302 = vmatpush1.msra.mxu0 0.0
  %7303 = vmatprep.subr.mxu0 0.0
  %7304 = vmatpush1.msra.mxu0 0.0
  %7305 = vmatprep.subr.mxu0 0.0
  %7306 = vmatpush1.msra.mxu0 0.0
  %7307 = vmatprep.subr.mxu0 0.0
  %7308 = vmatpush1.msra.mxu0 0.0
  %7309 = vmatprep.subr.mxu0 0.0
  %7310 = vmatpush1.msra.mxu0 0.0
  %7311 = vmatprep.subr.mxu0 0.0
  %7312 = vmatpush1.msra.mxu0 0.0
  %7313 = vmatprep.subr.mxu0 0.0
  %7314 = vmatpush1.msra.mxu0 0.0
  %7315 = vmatprep.subr.mxu0 0.0
  %7316 = vmatpush1.msra.mxu0 0.0
  %7317 = vmatprep.subr.mxu0 0.0
  %7318 = vmatpush1.msra.mxu0 0.0
  %7319 = vmatprep.subr.mxu0 0.0
  %7320 = vmatpush1.msra.mxu0 0.0
  %7321 = vmatprep.subr.mxu0 0.0
  %7322 = vmatpush1.msra.mxu0 0.0
  %7323 = vmatprep.subr.mxu0 0.0
  %7324 = vmatpush1.msra.mxu0 0.0
  %7325 = vmatprep.subr.mxu0 0.0
  %7326 = vmatpush1.msra.mxu0 0.0
  %7327 = vmatprep.subr.mxu0 0.0
  %7328 = vmatpush1.msra.mxu0 0.0
  %7329 = vmatprep.subr.mxu0 0.0
  %7330 = vmatpush1.msra.mxu0 0.0
  %7331 = vmatprep.subr.mxu0 0.0
  %7332 = vmatpush1.msra.mxu0 0.0
  %7333 = vmatprep.subr.mxu0 0.0
  %7334 = vmatpush1.msra.mxu0 0.0
  %7335 = vmatprep.subr.mxu0 0.0
  %7336 = vmatpush1.msra.mxu0 0.0
  %7337 = vmatprep.subr.mxu0 0.0
  %7338 = vmatpush1.msra.mxu0 0.0
  %7339 = vmatprep.subr.mxu0 0.0
  %7340 = vmatpush1.msra.mxu0 0.0
  %7341 = vmatprep.subr.mxu0 0.0
  %7342 = vmatpush1.msra.mxu0 0.0
  %7343 = vmatprep.subr.mxu0 0.0
  %7344 = vmatpush1.msra.mxu0 0.0
  %7345 = vmatprep.subr.mxu0 0.0
  %7346 = vmatpush1.msra.mxu0 0.0
  %7347 = vmatprep.subr.mxu0 0.0
  %7348 = vmatpush1.msra.mxu0 0.0
  %7349 = vmatprep.mubr.f32.mxu0 0.0
  %v7350 = vand.u32 %v7086, 4294901760
  %v7351 = vsub.f32 %v7086, %v7350
  %v7352 = vand.u32 %v7351, 4294901760
  %v7353 = vsub.f32 %v7351, %v7352
  %v7354 = vand.u32 %v7353, 4294901760
  %7355 = vmatmul.mubr.f32.gmra.mrb[0].mxu0 %v7354
  %v7356 = vpop.f32.mrb[0].mxu0
  %v7357 = vadd.f32 %v7083, %v7356
  %v7358 = vpop.f32.mrb[0].mxu0
  %7359 = vmatprep.mubr.f32.mxu0 0.0
  %v7360 = vand.u32 %v7089, 4294901760
  %v7361 = vsub.f32 %v7089, %v7360
  %v7362 = vand.u32 %v7361, 4294901760
  %v7363 = vsub.f32 %v7361, %v7362
  %v7364 = vand.u32 %v7363, 4294901760
  %7365 = vmatmul.mubr.f32.gmra.mrb[0].mxu0 %v7364
  %v7366 = vpop.f32.mrb[0].mxu0
  %v7367 = vadd.f32 %v7083, %v7366
  %v7368 = vpop.f32.mrb[0].mxu0
  %7369 = vmatprep.mubr.f32.mxu0 0.0
  %v7370 = vand.u32 %v7092, 4294901760
  %v7371 = vsub.f32 %v7092, %v7370
  %v7372 = vand.u32 %v7371, 4294901760
  %v7373 = vsub.f32 %v7371, %v7372
  %v7374 = vand.u32 %v7373, 4294901760
  %7375 = vmatmul.mubr.f32.gmra.mrb[0].mxu0 %v7374
  %v7376 = vpop.f32.mrb[0].mxu0
  %v7377 = vadd.f32 %v7083, %v7376
  %v7378 = vpop.f32.mrb[0].mxu0
  %7379 = vmatprep.mubr.f32.mxu0 0.0
  %v7380 = vand.u32 %v7095, 4294901760
  %v7381 = vsub.f32 %v7095, %v7380
  %v7382 = vand.u32 %v7381, 4294901760
  %v7383 = vsub.f32 %v7381, %v7382
  %v7384 = vand.u32 %v7383, 4294901760
  %7385 = vmatmul.mubr.f32.gmra.mrb[0].mxu0 %v7384
  %v7386 = vpop.f32.mrb[0].mxu0
  %v7387 = vadd.f32 %v7083, %v7386
  %v7388 = vpop.f32.mrb[0].mxu0
  %7389 = vmatprep.mubr.f32.mxu0 0.0
  %v7390 = vand.u32 %v7098, 4294901760
  %v7391 = vsub.f32 %v7098, %v7390
  %v7392 = vand.u32 %v7391, 4294901760
  %v7393 = vsub.f32 %v7391, %v7392
  %v7394 = vand.u32 %v7393, 4294901760
  %7395 = vmatmul.mubr.f32.gmra.mrb[0].mxu0 %v7394
  %v7396 = vpop.f32.mrb[0].mxu0
  %v7397 = vadd.f32 %v7083, %v7396
  %v7398 = vpop.f32.mrb[0].mxu0
  %7399 = vmatprep.mubr.f32.mxu0 0.0
  %v7400 = vand.u32 %v7101, 4294901760
  %v7401 = vsub.f32 %v7101, %v7400
  %v7402 = vand.u32 %v7401, 4294901760
  %v7403 = vsub.f32 %v7401, %v7402
  %v7404 = vand.u32 %v7403, 4294901760
  %7405 = vmatmul.mubr.f32.gmra.mrb[0].mxu0 %v7404
  %v7406 = vpop.f32.mrb[0].mxu0
  %v7407 = vadd.f32 %v7083, %v7406
  %v7408 = vpop.f32.mrb[0].mxu0
  %7409 = vmatprep.mubr.f32.mxu0 0.0
  %v7410 = vand.u32 %v7104, 4294901760
  %v7411 = vsub.f32 %v7104, %v7410
  %v7412 = vand.u32 %v7411, 4294901760
  %v7413 = vsub.f32 %v7411, %v7412
  %v7414 = vand.u32 %v7413, 4294901760
  %7415 = vmatmul.mubr.f32.gmra.mrb[0].mxu0 %v7414
  %v7416 = vpop.f32.mrb[0].mxu0
  %v7417 = vadd.f32 %v7083, %v7416
  %v7418 = vpop.f32.mrb[0].mxu0
  %7419 = vmatprep.mubr.f32.mxu0 0.0
  %v7420 = vand.u32 %v7107, 4294901760
  %v7421 = vsub.f32 %v7107, %v7420
  %v7422 = vand.u32 %v7421, 4294901760
  %v7423 = vsub.f32 %v7421, %v7422
  %v7424 = vand.u32 %v7423, 4294901760
  %7425 = vmatmul.mubr.f32.gmra.mrb[0].mxu0 %v7424
  %v7426 = vpop.f32.mrb[0].mxu0
  %v7427 = vadd.f32 %v7083, %v7426
  %v7428 = vpop.f32.mrb[0].mxu0
  %7429 = vmatprep.mubr.f32.mxu0 0.0
  %v7430 = vand.u32 %v7110, 4294901760
  %v7431 = vsub.f32 %v7110, %v7430
  %v7432 = vand.u32 %v7431, 4294901760
  %v7433 = vsub.f32 %v7431, %v7432
  %v7434 = vand.u32 %v7433, 4294901760
  %7435 = vmatmul.mubr.f32.gmra.mrb[0].mxu0 %v7434
  %v7436 = vpop.f32.mrb[0].mxu0
  %v7437 = vadd.f32 %v7083, %v7436
  %v7438 = vpop.f32.mrb[0].mxu0
  %7439 = vmatprep.mubr.f32.mxu0 0.0
  %v7440 = vand.u32 %v7113, 4294901760
  %v7441 = vsub.f32 %v7113, %v7440
  %v7442 = vand.u32 %v7441, 4294901760
  %v7443 = vsub.f32 %v7441, %v7442
  %v7444 = vand.u32 %v7443, 4294901760
  %7445 = vmatmul.mubr.f32.gmra.mrb[0].mxu0 %v7444
  %v7446 = vpop.f32.mrb[0].mxu0
  %v7447 = vadd.f32 %v7083, %v7446
  %v7448 = vpop.f32.mrb[0].mxu0
  %7449 = vmatprep.mubr.f32.mxu0 0.0
  %v7450 = vand.u32 %v7116, 4294901760
  %v7451 = vsub.f32 %v7116, %v7450
  %v7452 = vand.u32 %v7451, 4294901760
  %v7453 = vsub.f32 %v7451, %v7452
  %v7454 = vand.u32 %v7453, 4294901760
  %7455 = vmatmul.mubr.f32.gmra.mrb[0].mxu0 %v7454
  %v7456 = vpop.f32.mrb[0].mxu0
  %v7457 = vadd.f32 %v7083, %v7456
  %v7458 = vpop.f32.mrb[0].mxu0
  %7459 = vmatprep.mubr.f32.mxu0 0.0
  %v7460 = vand.u32 %v7119, 4294901760
  %v7461 = vsub.f32 %v7119, %v7460
  %v7462 = vand.u32 %v7461, 4294901760
  %v7463 = vsub.f32 %v7461, %v7462
  %v7464 = vand.u32 %v7463, 4294901760
  %7465 = vmatmul.mubr.f32.gmra.mrb[0].mxu0 %v7464
  %v7466 = vpop.f32.mrb[0].mxu0
  %v7467 = vadd.f32 %v7083, %v7466
  %v7468 = vpop.f32.mrb[0].mxu0
  %7469 = vmatprep.mubr.f32.mxu0 0.0
  %v7470 = vand.u32 %v7122, 4294901760
  %v7471 = vsub.f32 %v7122, %v7470
  %v7472 = vand.u32 %v7471, 4294901760
  %v7473 = vsub.f32 %v7471, %v7472
  %v7474 = vand.u32 %v7473, 4294901760
  %7475 = vmatmul.mubr.f32.gmra.mrb[0].mxu0 %v7474
  %v7476 = vpop.f32.mrb[0].mxu0
  %v7477 = vadd.f32 %v7083, %v7476
  %v7478 = vpop.f32.mrb[0].mxu0
  %7479 = vmatprep.mubr.f32.mxu0 0.0
  %v7480 = vand.u32 %v7125, 4294901760
  %v7481 = vsub.f32 %v7125, %v7480
  %v7482 = vand.u32 %v7481, 4294901760
  %v7483 = vsub.f32 %v7481, %v7482
  %v7484 = vand.u32 %v7483, 4294901760
  %7485 = vmatmul.mubr.f32.gmra.mrb[0].mxu0 %v7484
  %v7486 = vpop.f32.mrb[0].mxu0
  %v7487 = vadd.f32 %v7083, %v7486
  %v7488 = vpop.f32.mrb[0].mxu0
  %7489 = vmatprep.mubr.f32.mxu0 0.0
  %v7490 = vand.u32 %v7128, 4294901760
  %v7491 = vsub.f32 %v7128, %v7490
  %v7492 = vand.u32 %v7491, 4294901760
  %v7493 = vsub.f32 %v7491, %v7492
  %v7494 = vand.u32 %v7493, 4294901760
  %7495 = vmatmul.mubr.f32.gmra.mrb[0].mxu0 %v7494
  %v7496 = vpop.f32.mrb[0].mxu0
  %v7497 = vadd.f32 %v7083, %v7496
  %v7498 = vpop.f32.mrb[0].mxu0
  %7499 = vmatprep.mubr.f32.mxu0 0.0
  %v7500 = vand.u32 %v7131, 4294901760
  %v7501 = vsub.f32 %v7131, %v7500
  %v7502 = vand.u32 %v7501, 4294901760
  %v7503 = vsub.f32 %v7501, %v7502
  %v7504 = vand.u32 %v7503, 4294901760
  %7505 = vmatmul.mubr.f32.gmra.mrb[0].mxu0 %v7504
  %v7506 = vpop.f32.mrb[0].mxu0
  %v7507 = vadd.f32 %v7083, %v7506
  %v7508 = vpop.f32.mrb[0].mxu0
  %7509 = vmatprep.mubr.f32.mxu0 0.0
  %v7510 = vand.u32 %v7134, 4294901760
  %v7511 = vsub.f32 %v7134, %v7510
  %v7512 = vand.u32 %v7511, 4294901760
  %v7513 = vsub.f32 %v7511, %v7512
  %v7514 = vand.u32 %v7513, 4294901760
  %7515 = vmatmul.mubr.f32.gmra.mrb[0].mxu0 %v7514
  %v7516 = vpop.f32.mrb[0].mxu0
  %v7517 = vadd.f32 %v7083, %v7516
  %v7518 = vpop.f32.mrb[0].mxu0
  %7519 = vmatprep.mubr.f32.mxu0 0.0
  %v7520 = vand.u32 %v7137, 4294901760
  %v7521 = vsub.f32 %v7137, %v7520
  %v7522 = vand.u32 %v7521, 4294901760
  %v7523 = vsub.f32 %v7521, %v7522
  %v7524 = vand.u32 %v7523, 4294901760
  %7525 = vmatmul.mubr.f32.gmra.mrb[0].mxu0 %v7524
  %v7526 = vpop.f32.mrb[0].mxu0
  %v7527 = vadd.f32 %v7083, %v7526
  %v7528 = vpop.f32.mrb[0].mxu0
  %7529 = vmatprep.mubr.f32.mxu0 0.0
  %v7530 = vand.u32 %v7140, 4294901760
  %v7531 = vsub.f32 %v7140, %v7530
  %v7532 = vand.u32 %v7531, 4294901760
  %v7533 = vsub.f32 %v7531, %v7532
  %v7534 = vand.u32 %v7533, 4294901760
  %7535 = vmatmul.mubr.f32.gmra.mrb[0].mxu0 %v7534
  %v7536 = vpop.f32.mrb[0].mxu0
  %v7537 = vadd.f32 %v7083, %v7536
  %v7538 = vpop.f32.mrb[0].mxu0
  %7539 = vmatprep.mubr.f32.mxu0 0.0
  %v7540 = vand.u32 %v7143, 4294901760
  %v7541 = vsub.f32 %v7143, %v7540
  %v7542 = vand.u32 %v7541, 4294901760
  %v7543 = vsub.f32 %v7541, %v7542
  %v7544 = vand.u32 %v7543, 4294901760
  %7545 = vmatmul.mubr.f32.gmra.mrb[0].mxu0 %v7544
  %v7546 = vpop.f32.mrb[0].mxu0
  %v7547 = vadd.f32 %v7083, %v7546
  %v7548 = vpop.f32.mrb[0].mxu0
  %7549 = vmatprep.mubr.f32.mxu0 0.0
  %v7550 = vand.u32 %v7146, 4294901760
  %v7551 = vsub.f32 %v7146, %v7550
  %v7552 = vand.u32 %v7551, 4294901760
  %v7553 = vsub.f32 %v7551, %v7552
  %v7554 = vand.u32 %v7553, 4294901760
  %7555 = vmatmul.mubr.f32.gmra.mrb[0].mxu0 %v7554
  %v7556 = vpop.f32.mrb[0].mxu0
  %v7557 = vadd.f32 %v7083, %v7556
  %v7558 = vpop.f32.mrb[0].mxu0
  %7559 = vmatprep.mubr.f32.mxu0 0.0
  %v7560 = vand.u32 %v7149, 4294901760
  %v7561 = vsub.f32 %v7149, %v7560
  %v7562 = vand.u32 %v7561, 4294901760
  %v7563 = vsub.f32 %v7561, %v7562
  %v7564 = vand.u32 %v7563, 4294901760
  %7565 = vmatmul.mubr.f32.gmra.mrb[0].mxu0 %v7564
  %v7566 = vpop.f32.mrb[0].mxu0
  %v7567 = vadd.f32 %v7083, %v7566
  %v7568 = vpop.f32.mrb[0].mxu0
  %7569 = vmatprep.mubr.f32.mxu0 0.0
  %v7570 = vand.u32 %v7152, 4294901760
  %v7571 = vsub.f32 %v7152, %v7570
  %v7572 = vand.u32 %v7571, 4294901760
  %v7573 = vsub.f32 %v7571, %v7572
  %v7574 = vand.u32 %v7573, 4294901760
  %7575 = vmatmul.mubr.f32.gmra.mrb[0].mxu0 %v7574
  %v7576 = vpop.f32.mrb[0].mxu0
  %v7577 = vadd.f32 %v7083, %v7576
  %v7578 = vpop.f32.mrb[0].mxu0
  %7579 = vmatprep.mubr.f32.mxu0 0.0
  %v7580 = vand.u32 %v7155, 4294901760
  %v7581 = vsub.f32 %v7155, %v7580
  %v7582 = vand.u32 %v7581, 4294901760
  %v7583 = vsub.f32 %v7581, %v7582
  %v7584 = vand.u32 %v7583, 4294901760
  %7585 = vmatmul.mubr.f32.gmra.mrb[0].mxu0 %v7584
  %v7586 = vpop.f32.mrb[0].mxu0
  %v7587 = vadd.f32 %v7083, %v7586
  %v7588 = vpop.f32.mrb[0].mxu0
  %7589 = vmatprep.mubr.f32.mxu0 0.0
  %v7590 = vand.u32 %v7158, 4294901760
  %v7591 = vsub.f32 %v7158, %v7590
  %v7592 = vand.u32 %v7591, 4294901760
  %v7593 = vsub.f32 %v7591, %v7592
  %v7594 = vand.u32 %v7593, 4294901760
  %7595 = vmatmul.mubr.f32.gmra.mrb[0].mxu0 %v7594
  %v7596 = vpop.f32.mrb[0].mxu0
  %v7597 = vadd.f32 %v7083, %v7596
  %v7598 = vpop.f32.mrb[0].mxu0
  %7599 = vmatprep.mubr.f32.mxu0 0.0
  %v7600 = vand.u32 %v7161, 4294901760
  %v7601 = vsub.f32 %v7161, %v7600
  %v7602 = vand.u32 %v7601, 4294901760
  %v7603 = vsub.f32 %v7601, %v7602
  %v7604 = vand.u32 %v7603, 4294901760
  %7605 = vmatmul.mubr.f32.gmra.mrb[0].mxu0 %v7604
  %v7606 = vpop.f32.mrb[0].mxu0
  %v7607 = vadd.f32 %v7083, %v7606
  %v7608 = vpop.f32.mrb[0].mxu0
  %7609 = vmatprep.mubr.f32.mxu0 0.0
  %v7610 = vand.u32 %v7164, 4294901760
  %v7611 = vsub.f32 %v7164, %v7610
  %v7612 = vand.u32 %v7611, 4294901760
  %v7613 = vsub.f32 %v7611, %v7612
  %v7614 = vand.u32 %v7613, 4294901760
  %7615 = vmatmul.mubr.f32.gmra.mrb[0].mxu0 %v7614
  %v7616 = vpop.f32.mrb[0].mxu0
  %v7617 = vadd.f32 %v7083, %v7616
  %v7618 = vpop.f32.mrb[0].mxu0
  %7619 = vmatprep.mubr.f32.mxu0 0.0
  %v7620 = vand.u32 %v7167, 4294901760
  %v7621 = vsub.f32 %v7167, %v7620
  %v7622 = vand.u32 %v7621, 4294901760
  %v7623 = vsub.f32 %v7621, %v7622
  %v7624 = vand.u32 %v7623, 4294901760
  %7625 = vmatmul.mubr.f32.gmra.mrb[0].mxu0 %v7624
  %v7626 = vpop.f32.mrb[0].mxu0
  %v7627 = vadd.f32 %v7083, %v7626
  %v7628 = vpop.f32.mrb[0].mxu0
  %7629 = vmatprep.mubr.f32.mxu0 0.0
  %v7630 = vand.u32 %v7170, 4294901760
  %v7631 = vsub.f32 %v7170, %v7630
  %v7632 = vand.u32 %v7631, 4294901760
  %v7633 = vsub.f32 %v7631, %v7632
  %v7634 = vand.u32 %v7633, 4294901760
  %7635 = vmatmul.mubr.f32.gmra.mrb[0].mxu0 %v7634
  %v7636 = vpop.f32.mrb[0].mxu0
  %v7637 = vadd.f32 %v7083, %v7636
  %v7638 = vpop.f32.mrb[0].mxu0
  %7639 = vmatprep.mubr.f32.mxu0 0.0
  %v7640 = vand.u32 %v7173, 4294901760
  %v7641 = vsub.f32 %v7173, %v7640
  %v7642 = vand.u32 %v7641, 4294901760
  %v7643 = vsub.f32 %v7641, %v7642
  %v7644 = vand.u32 %v7643, 4294901760
  %7645 = vmatmul.mubr.f32.gmra.mrb[0].mxu0 %v7644
  %v7646 = vpop.f32.mrb[0].mxu0
  %v7647 = vadd.f32 %v7083, %v7646
  %v7648 = vpop.f32.mrb[0].mxu0
  %7649 = vmatprep.mubr.f32.mxu0 0.0
  %v7650 = vand.u32 %v7176, 4294901760
  %v7651 = vsub.f32 %v7176, %v7650
  %v7652 = vand.u32 %v7651, 4294901760
  %v7653 = vsub.f32 %v7651, %v7652
  %v7654 = vand.u32 %v7653, 4294901760
  %7655 = vmatmul.mubr.f32.gmra.mrb[0].mxu0 %v7654
  %v7656 = vpop.f32.mrb[0].mxu0
  %v7657 = vadd.f32 %v7083, %v7656
  %v7658 = vpop.f32.mrb[0].mxu0
  %7659 = vmatprep.mubr.f32.mxu0 0.0
  %v7660 = vand.u32 %v7179, 4294901760
  %v7661 = vsub.f32 %v7179, %v7660
  %v7662 = vand.u32 %v7661, 4294901760
  %v7663 = vsub.f32 %v7661, %v7662
  %v7664 = vand.u32 %v7663, 4294901760
  %7665 = vmatmul.mubr.f32.gmra.mrb[0].mxu0 %v7664
  %v7666 = vpop.f32.mrb[0].mxu0
  %v7667 = vadd.f32 %v7083, %v7666
  %v7668 = vpop.f32.mrb[0].mxu0
  %7669 = vmatprep.mubr.f32.mxu0 0.0
  %v7670 = vand.u32 %v7182, 4294901760
  %v7671 = vsub.f32 %v7182, %v7670
  %v7672 = vand.u32 %v7671, 4294901760
  %v7673 = vsub.f32 %v7671, %v7672
  %v7674 = vand.u32 %v7673, 4294901760
  %7675 = vmatmul.mubr.f32.gmra.mrb[0].mxu0 %v7674
  %v7676 = vpop.f32.mrb[0].mxu0
  %v7677 = vadd.f32 %v7083, %v7676
  %v7678 = vpop.f32.mrb[0].mxu0
  %7679 = vmatprep.mubr.f32.mxu0 0.0
  %v7680 = vand.u32 %v7185, 4294901760
  %v7681 = vsub.f32 %v7185, %v7680
  %v7682 = vand.u32 %v7681, 4294901760
  %v7683 = vsub.f32 %v7681, %v7682
  %v7684 = vand.u32 %v7683, 4294901760
  %7685 = vmatmul.mubr.f32.gmra.mrb[0].mxu0 %v7684
  %v7686 = vpop.f32.mrb[0].mxu0
  %v7687 = vadd.f32 %v7083, %v7686
  %v7688 = vpop.f32.mrb[0].mxu0
  %7689 = vmatprep.mubr.f32.mxu0 0.0
  %v7690 = vand.u32 %v7188, 4294901760
  %v7691 = vsub.f32 %v7188, %v7690
  %v7692 = vand.u32 %v7691, 4294901760
  %v7693 = vsub.f32 %v7691, %v7692
  %v7694 = vand.u32 %v7693, 4294901760
  %7695 = vmatmul.mubr.f32.gmra.mrb[0].mxu0 %v7694
  %v7696 = vpop.f32.mrb[0].mxu0
  %v7697 = vadd.f32 %v7083, %v7696
  %v7698 = vpop.f32.mrb[0].mxu0
  %7699 = vmatprep.mubr.f32.mxu0 0.0
  %v7700 = vand.u32 %v7191, 4294901760
  %v7701 = vsub.f32 %v7191, %v7700
  %v7702 = vand.u32 %v7701, 4294901760
  %v7703 = vsub.f32 %v7701, %v7702
  %v7704 = vand.u32 %v7703, 4294901760
  %7705 = vmatmul.mubr.f32.gmra.mrb[0].mxu0 %v7704
  %v7706 = vpop.f32.mrb[0].mxu0
  %v7707 = vadd.f32 %v7083, %v7706
  %v7708 = vpop.f32.mrb[0].mxu0
  %7709 = vmatprep.mubr.f32.mxu0 0.0
  %v7710 = vand.u32 %v7194, 4294901760
  %v7711 = vsub.f32 %v7194, %v7710
  %v7712 = vand.u32 %v7711, 4294901760
  %v7713 = vsub.f32 %v7711, %v7712
  %v7714 = vand.u32 %v7713, 4294901760
  %7715 = vmatmul.mubr.f32.gmra.mrb[0].mxu0 %v7714
  %v7716 = vpop.f32.mrb[0].mxu0
  %v7717 = vadd.f32 %v7083, %v7716
  %v7718 = vpop.f32.mrb[0].mxu0
  %7719 = vmatprep.mubr.f32.mxu0 0.0
  %v7720 = vand.u32 %v7197, 4294901760
  %v7721 = vsub.f32 %v7197, %v7720
  %v7722 = vand.u32 %v7721, 4294901760
  %v7723 = vsub.f32 %v7721, %v7722
  %v7724 = vand.u32 %v7723, 4294901760
  %7725 = vmatmul.mubr.f32.gmra.mrb[0].mxu0 %v7724
  %v7726 = vpop.f32.mrb[0].mxu0
  %v7727 = vadd.f32 %v7083, %v7726
  %v7728 = vpop.f32.mrb[0].mxu0
  %7729 = vmatprep.mubr.f32.mxu0 0.0
  %v7730 = vand.u32 %v7200, 4294901760
  %v7731 = vsub.f32 %v7200, %v7730
  %v7732 = vand.u32 %v7731, 4294901760
  %v7733 = vsub.f32 %v7731, %v7732
  %v7734 = vand.u32 %v7733, 4294901760
  %7735 = vmatmul.mubr.f32.gmra.mrb[0].mxu0 %v7734
  %v7736 = vpop.f32.mrb[0].mxu0
  %v7737 = vadd.f32 %v7083, %v7736
  %v7738 = vpop.f32.mrb[0].mxu0
  %7739 = vmatprep.mubr.f32.mxu0 0.0
  %v7740 = vand.u32 %v7203, 4294901760
  %v7741 = vsub.f32 %v7203, %v7740
  %v7742 = vand.u32 %v7741, 4294901760
  %v7743 = vsub.f32 %v7741, %v7742
  %v7744 = vand.u32 %v7743, 4294901760
  %7745 = vmatmul.mubr.f32.gmra.mrb[0].mxu0 %v7744
  %v7746 = vpop.f32.mrb[0].mxu0
  %v7747 = vadd.f32 %v7083, %v7746
  %v7748 = vpop.f32.mrb[0].mxu0
  %7749 = vmatprep.mubr.f32.mxu0 0.0
  %v7750 = vand.u32 %v7206, 4294901760
  %v7751 = vsub.f32 %v7206, %v7750
  %v7752 = vand.u32 %v7751, 4294901760
  %v7753 = vsub.f32 %v7751, %v7752
  %v7754 = vand.u32 %v7753, 4294901760
  %7755 = vmatmul.mubr.f32.gmra.mrb[0].mxu0 %v7754
  %v7756 = vpop.f32.mrb[0].mxu0
  %v7757 = vadd.f32 %v7083, %v7756
  %v7758 = vpop.f32.mrb[0].mxu0
  %7759 = vmatprep.mubr.f32.mxu0 0.0
  %v7760 = vand.u32 %v7209, 4294901760
  %v7761 = vsub.f32 %v7209, %v7760
  %v7762 = vand.u32 %v7761, 4294901760
  %v7763 = vsub.f32 %v7761, %v7762
  %v7764 = vand.u32 %v7763, 4294901760
  %7765 = vmatmul.mubr.f32.gmra.mrb[0].mxu0 %v7764
  %v7766 = vpop.f32.mrb[0].mxu0
  %v7767 = vadd.f32 %v7083, %v7766
  %v7768 = vpop.f32.mrb[0].mxu0
  %7769 = vmatprep.mubr.f32.mxu0 0.0
  %v7770 = vand.u32 %v7212, 4294901760
  %v7771 = vsub.f32 %v7212, %v7770
  %v7772 = vand.u32 %v7771, 4294901760
  %v7773 = vsub.f32 %v7771, %v7772
  %v7774 = vand.u32 %v7773, 4294901760
  %7775 = vmatmul.mubr.f32.gmra.mrb[0].mxu0 %v7774
  %v7776 = vpop.f32.mrb[0].mxu0
  %v7777 = vadd.f32 %v7083, %v7776
  %v7778 = vpop.f32.mrb[0].mxu0
  %7779 = vmatprep.mubr.f32.mxu0 0.0
  %v7780 = vand.u32 %v7215, 4294901760
  %v7781 = vsub.f32 %v7215, %v7780
  %v7782 = vand.u32 %v7781, 4294901760
  %v7783 = vsub.f32 %v7781, %v7782
  %v7784 = vand.u32 %v7783, 4294901760
  %7785 = vmatmul.mubr.f32.gmra.mrb[0].mxu0 %v7784
  %v7786 = vpop.f32.mrb[0].mxu0
  %v7787 = vadd.f32 %v7083, %v7786
  %v7788 = vpop.f32.mrb[0].mxu0
  %7789 = vmatprep.mubr.f32.mxu0 0.0
  %v7790 = vand.u32 %v7218, 4294901760
  %v7791 = vsub.f32 %v7218, %v7790
  %v7792 = vand.u32 %v7791, 4294901760
  %v7793 = vsub.f32 %v7791, %v7792
  %v7794 = vand.u32 %v7793, 4294901760
  %7795 = vmatmul.mubr.f32.gmra.mrb[0].mxu0 %v7794
  %v7796 = vpop.f32.mrb[0].mxu0
  %v7797 = vadd.f32 %v7083, %v7796
  %v7798 = vpop.f32.mrb[0].mxu0
  %7799 = vmatprep.mubr.f32.mxu0 0.0
  %v7800 = vand.u32 %v7221, 4294901760
  %v7801 = vsub.f32 %v7221, %v7800
  %v7802 = vand.u32 %v7801, 4294901760
  %v7803 = vsub.f32 %v7801, %v7802
  %v7804 = vand.u32 %v7803, 4294901760
  %7805 = vmatmul.mubr.f32.gmra.mrb[0].mxu0 %v7804
  %v7806 = vpop.f32.mrb[0].mxu0
  %v7807 = vadd.f32 %v7083, %v7806
  %v7808 = vpop.f32.mrb[0].mxu0
  %7809 = vmatprep.mubr.f32.mxu0 0.0
  %v7810 = vand.u32 %v7224, 4294901760
  %v7811 = vsub.f32 %v7224, %v7810
  %v7812 = vand.u32 %v7811, 4294901760
  %v7813 = vsub.f32 %v7811, %v7812
  %v7814 = vand.u32 %v7813, 4294901760
  %7815 = vmatmul.mubr.f32.gmra.mrb[0].mxu0 %v7814
  %v7816 = vpop.f32.mrb[0].mxu0
  %v7817 = vadd.f32 %v7083, %v7816
  %v7818 = vpop.f32.mrb[0].mxu0
  %7819 = vmatprep.mubr.f32.mxu0 0.0
  %v7820 = vand.u32 %v7227, 4294901760
  %v7821 = vsub.f32 %v7227, %v7820
  %v7822 = vand.u32 %v7821, 4294901760
  %v7823 = vsub.f32 %v7821, %v7822
  %v7824 = vand.u32 %v7823, 4294901760
  %7825 = vmatmul.mubr.f32.gmra.mrb[0].mxu0 %v7824
  %v7826 = vpop.f32.mrb[0].mxu0
  %v7827 = vadd.f32 %v7083, %v7826
  %v7828 = vpop.f32.mrb[0].mxu0
  %7829 = vmatprep.mubr.f32.mxu0 0.0
  %v7830 = vand.u32 %v7230, 4294901760
  %v7831 = vsub.f32 %v7230, %v7830
  %v7832 = vand.u32 %v7831, 4294901760
  %v7833 = vsub.f32 %v7831, %v7832
  %v7834 = vand.u32 %v7833, 4294901760
  %7835 = vmatmul.mubr.f32.gmra.mrb[0].mxu0 %v7834
  %v7836 = vpop.f32.mrb[0].mxu0
  %v7837 = vadd.f32 %v7083, %v7836
  %v7838 = vpop.f32.mrb[0].mxu0
  %7839 = vmatprep.mubr.f32.mxu0 0.0
  %v7840 = vand.u32 %v7233, 4294901760
  %v7841 = vsub.f32 %v7233, %v7840
  %v7842 = vand.u32 %v7841, 4294901760
  %v7843 = vsub.f32 %v7841, %v7842
  %v7844 = vand.u32 %v7843, 4294901760
  %7845 = vmatmul.mubr.f32.gmra.mrb[0].mxu0 %v7844
  %v7846 = vpop.f32.mrb[0].mxu0
  %v7847 = vadd.f32 %v7083, %v7846
  %v7848 = vpop.f32.mrb[0].mxu0
  %7849 = vmatprep.mubr.f32.mxu0 0.0
  %v7850 = vand.u32 %v7236, 4294901760
  %v7851 = vsub.f32 %v7236, %v7850
  %v7852 = vand.u32 %v7851, 4294901760
  %v7853 = vsub.f32 %v7851, %v7852
  %v7854 = vand.u32 %v7853, 4294901760
  %7855 = vmatmul.mubr.f32.gmra.mrb[0].mxu0 %v7854
  %v7856 = vpop.f32.mrb[0].mxu0
  %v7857 = vadd.f32 %v7083, %v7856
  %v7858 = vpop.f32.mrb[0].mxu0
  %7859 = vmatprep.mubr.f32.mxu0 0.0
  %v7860 = vand.u32 %v7239, 4294901760
  %v7861 = vsub.f32 %v7239, %v7860
  %v7862 = vand.u32 %v7861, 4294901760
  %v7863 = vsub.f32 %v7861, %v7862
  %v7864 = vand.u32 %v7863, 4294901760
  %7865 = vmatmul.mubr.f32.gmra.mrb[0].mxu0 %v7864
  %v7866 = vpop.f32.mrb[0].mxu0
  %v7867 = vadd.f32 %v7083, %v7866
  %v7868 = vpop.f32.mrb[0].mxu0
  %7869 = vmatprep.mubr.f32.mxu0 0.0
  %v7870 = vand.u32 %v7242, 4294901760
  %v7871 = vsub.f32 %v7242, %v7870
  %v7872 = vand.u32 %v7871, 4294901760
  %v7873 = vsub.f32 %v7871, %v7872
  %v7874 = vand.u32 %v7873, 4294901760
  %7875 = vmatmul.mubr.f32.gmra.mrb[0].mxu0 %v7874
  %v7876 = vpop.f32.mrb[0].mxu0
  %v7877 = vadd.f32 %v7083, %v7876
  %v7878 = vpop.f32.mrb[0].mxu0
  %7879 = vmatprep.mubr.f32.mxu0 0.0
  %v7880 = vand.u32 %v7245, 4294901760
  %v7881 = vsub.f32 %v7245, %v7880
  %v7882 = vand.u32 %v7881, 4294901760
  %v7883 = vsub.f32 %v7881, %v7882
  %v7884 = vand.u32 %v7883, 4294901760
  %7885 = vmatmul.mubr.f32.gmra.mrb[0].mxu0 %v7884
  %v7886 = vpop.f32.mrb[0].mxu0
  %v7887 = vadd.f32 %v7083, %v7886
  %v7888 = vpop.f32.mrb[0].mxu0
  %7889 = vmatprep.mubr.f32.mxu0 0.0
  %v7890 = vand.u32 %v7248, 4294901760
  %v7891 = vsub.f32 %v7248, %v7890
  %v7892 = vand.u32 %v7891, 4294901760
  %v7893 = vsub.f32 %v7891, %v7892
  %v7894 = vand.u32 %v7893, 4294901760
  %7895 = vmatmul.mubr.f32.gmra.mrb[0].mxu0 %v7894
  %v7896 = vpop.f32.mrb[0].mxu0
  %v7897 = vadd.f32 %v7083, %v7896
  %v7898 = vpop.f32.mrb[0].mxu0
  %7899 = vmatprep.mubr.f32.mxu0 0.0
  %v7900 = vand.u32 %v7251, 4294901760
  %v7901 = vsub.f32 %v7251, %v7900
  %v7902 = vand.u32 %v7901, 4294901760
  %v7903 = vsub.f32 %v7901, %v7902
  %v7904 = vand.u32 %v7903, 4294901760
  %7905 = vmatmul.mubr.f32.gmra.mrb[0].mxu0 %v7904
  %v7906 = vpop.f32.mrb[0].mxu0
  %v7907 = vadd.f32 %v7083, %v7906
  %v7908 = vpop.f32.mrb[0].mxu0
  %7909 = vmatprep.mubr.f32.mxu0 0.0
  %v7910 = vand.u32 %v7254, 4294901760
  %v7911 = vsub.f32 %v7254, %v7910
  %v7912 = vand.u32 %v7911, 4294901760
  %v7913 = vsub.f32 %v7911, %v7912
  %v7914 = vand.u32 %v7913, 4294901760
  %7915 = vmatmul.mubr.f32.gmra.mrb[0].mxu0 %v7914
  %v7916 = vpop.f32.mrb[0].mxu0
  %v7917 = vadd.f32 %v7083, %v7916
  %v7918 = vpop.f32.mrb[0].mxu0
  %7919 = vmatprep.mubr.f32.mxu0 0.0
  %v7920 = vand.u32 %v7257, 4294901760
  %v7921 = vsub.f32 %v7257, %v7920
  %v7922 = vand.u32 %v7921, 4294901760
  %v7923 = vsub.f32 %v7921, %v7922
  %v7924 = vand.u32 %v7923, 4294901760
  %7925 = vmatmul.mubr.f32.gmra.mrb[0].mxu0 %v7924
  %v7926 = vpop.f32.mrb[0].mxu0
  %v7927 = vadd.f32 %v7083, %v7926
  %v7928 = vpop.f32.mrb[0].mxu0
  %7929 = vmatprep.mubr.f32.mxu0 0.0
  %v7930 = vand.u32 %v7260, 4294901760
  %v7931 = vsub.f32 %v7260, %v7930
  %v7932 = vand.u32 %v7931, 4294901760
  %v7933 = vsub.f32 %v7931, %v7932
  %v7934 = vand.u32 %v7933, 4294901760
  %7935 = vmatmul.mubr.f32.gmra.mrb[0].mxu0 %v7934
  %v7936 = vpop.f32.mrb[0].mxu0
  %v7937 = vadd.f32 %v7083, %v7936
  %v7938 = vpop.f32.mrb[0].mxu0
  %7939 = vmatprep.mubr.f32.mxu0 0.0
  %v7940 = vand.u32 %v7263, 4294901760
  %v7941 = vsub.f32 %v7263, %v7940
  %v7942 = vand.u32 %v7941, 4294901760
  %v7943 = vsub.f32 %v7941, %v7942
  %v7944 = vand.u32 %v7943, 4294901760
  %7945 = vmatmul.mubr.f32.gmra.mrb[0].mxu0 %v7944
  %v7946 = vpop.f32.mrb[0].mxu0
  %v7947 = vadd.f32 %v7083, %v7946
  %v7948 = vpop.f32.mrb[0].mxu0
  %7949 = vmatprep.mubr.f32.mxu0 0.0
  %v7950 = vand.u32 %v7266, 4294901760
  %v7951 = vsub.f32 %v7266, %v7950
  %v7952 = vand.u32 %v7951, 4294901760
  %v7953 = vsub.f32 %v7951, %v7952
  %v7954 = vand.u32 %v7953, 4294901760
  %7955 = vmatmul.mubr.f32.gmra.mrb[0].mxu0 %v7954
  %v7956 = vpop.f32.mrb[0].mxu0
  %v7957 = vadd.f32 %v7083, %v7956
  %v7958 = vpop.f32.mrb[0].mxu0
  %7959 = vmatprep.mubr.f32.mxu0 0.0
  %v7960 = vand.u32 %v7269, 4294901760
  %v7961 = vsub.f32 %v7269, %v7960
  %v7962 = vand.u32 %v7961, 4294901760
  %v7963 = vsub.f32 %v7961, %v7962
  %v7964 = vand.u32 %v7963, 4294901760
  %7965 = vmatmul.mubr.f32.gmra.mrb[0].mxu0 %v7964
  %v7966 = vpop.f32.mrb[0].mxu0
  %v7967 = vadd.f32 %v7083, %v7966
  %v7968 = vpop.f32.mrb[0].mxu0
  %7969 = vmatprep.mubr.f32.mxu0 0.0
  %v7970 = vand.u32 %v7272, 4294901760
  %v7971 = vsub.f32 %v7272, %v7970
  %v7972 = vand.u32 %v7971, 4294901760
  %v7973 = vsub.f32 %v7971, %v7972
  %v7974 = vand.u32 %v7973, 4294901760
  %7975 = vmatmul.mubr.f32.gmra.mrb[0].mxu0 %v7974
  %v7976 = vpop.f32.mrb[0].mxu0
  %v7977 = vadd.f32 %v7083, %v7976
  %v7978 = vpop.f32.mrb[0].mxu0
  %7979 = vmatprep.mubr.f32.mxu0 0.0
  %v7980 = vand.u32 %v7275, 4294901760
  %v7981 = vsub.f32 %v7275, %v7980
  %v7982 = vand.u32 %v7981, 4294901760
  %v7983 = vsub.f32 %v7981, %v7982
  %v7984 = vand.u32 %v7983, 4294901760
  %7985 = vmatmul.mubr.f32.gmra.mrb[0].mxu0 %v7984
  %v7986 = vpop.f32.mrb[0].mxu0
  %v7987 = vadd.f32 %v7083, %v7986
  %v7988 = vpop.f32.mrb[0].mxu0
  %7989 = vdwg.mxu0
  %7990 = vmatprep.subr.mxu0 0.0
  %v7991 = vand.u32 %v7070, 4294901760
  %v7992 = vsub.f32 %v7070, %v7991
  %v7993 = vand.u32 %v7992, 4294901760
  %v7994 = vsub.f32 %v7992, %v7993
  %v7995 = vand.u32 %v7994, 4294901760
  %7996 = vmatpush1.msra.mxu0 %v7995
  %7997 = vmatprep.subr.mxu0 0.0
  %v7998 = vand.u32 %v7071, 4294901760
  %v7999 = vsub.f32 %v7071, %v7998
  %v8000 = vand.u32 %v7999, 4294901760
  %v8001 = vsub.f32 %v7999, %v8000
  %v8002 = vand.u32 %v8001, 4294901760
  %8003 = vmatpush1.msra.mxu0 %v8002
  %8004 = vmatprep.subr.mxu0 0.0
  %v8005 = vand.u32 %v7072, 4294901760
  %v8006 = vsub.f32 %v7072, %v8005
  %v8007 = vand.u32 %v8006, 4294901760
  %v8008 = vsub.f32 %v8006, %v8007
  %v8009 = vand.u32 %v8008, 4294901760
  %8010 = vmatpush1.msra.mxu0 %v8009
  %8011 = vmatprep.subr.mxu0 0.0
  %v8012 = vand.u32 %v7073, 4294901760
  %v8013 = vsub.f32 %v7073, %v8012
  %v8014 = vand.u32 %v8013, 4294901760
  %v8015 = vsub.f32 %v8013, %v8014
  %v8016 = vand.u32 %v8015, 4294901760
  %8017 = vmatpush1.msra.mxu0 %v8016
  %8018 = vmatprep.subr.mxu0 0.0
  %v8019 = vand.u32 %v7074, 4294901760
  %v8020 = vsub.f32 %v7074, %v8019
  %v8021 = vand.u32 %v8020, 4294901760
  %v8022 = vsub.f32 %v8020, %v8021
  %v8023 = vand.u32 %v8022, 4294901760
  %8024 = vmatpush1.msra.mxu0 %v8023
  %8025 = vmatprep.subr.mxu0 0.0
  %v8026 = vand.u32 %v7075, 4294901760
  %v8027 = vsub.f32 %v7075, %v8026
  %v8028 = vand.u32 %v8027, 4294901760
  %v8029 = vsub.f32 %v8027, %v8028
  %v8030 = vand.u32 %v8029, 4294901760
  %8031 = vmatpush1.msra.mxu0 %v8030
  %8032 = vmatprep.subr.mxu0 0.0
  %v8033 = vand.u32 %v7076, 4294901760
  %v8034 = vsub.f32 %v7076, %v8033
  %v8035 = vand.u32 %v8034, 4294901760
  %v8036 = vsub.f32 %v8034, %v8035
  %v8037 = vand.u32 %v8036, 4294901760
  %8038 = vmatpush1.msra.mxu0 %v8037
  %8039 = vmatprep.subr.mxu0 0.0
  %v8040 = vand.u32 %v7077, 4294901760
  %v8041 = vsub.f32 %v7077, %v8040
  %v8042 = vand.u32 %v8041, 4294901760
  %v8043 = vsub.f32 %v8041, %v8042
  %v8044 = vand.u32 %v8043, 4294901760
  %8045 = vmatpush1.msra.mxu0 %v8044
  %8046 = vmatprep.subr.mxu0 0.0
  %8047 = vmatpush1.msra.mxu0 0.0
  %8048 = vmatprep.subr.mxu0 0.0
  %8049 = vmatpush1.msra.mxu0 0.0
  %8050 = vmatprep.subr.mxu0 0.0
  %8051 = vmatpush1.msra.mxu0 0.0
  %8052 = vmatprep.subr.mxu0 0.0
  %8053 = vmatpush1.msra.mxu0 0.0
  %8054 = vmatprep.subr.mxu0 0.0
  %8055 = vmatpush1.msra.mxu0 0.0
  %8056 = vmatprep.subr.mxu0 0.0
  %8057 = vmatpush1.msra.mxu0 0.0
  %8058 = vmatprep.subr.mxu0 0.0
  %8059 = vmatpush1.msra.mxu0 0.0
  %8060 = vmatprep.subr.mxu0 0.0
  %8061 = vmatpush1.msra.mxu0 0.0
  %8062 = vmatprep.subr.mxu0 0.0
  %8063 = vmatpush1.msra.mxu0 0.0
  %8064 = vmatprep.subr.mxu0 0.0
  %8065 = vmatpush1.msra.mxu0 0.0
  %8066 = vmatprep.subr.mxu0 0.0
  %8067 = vmatpush1.msra.mxu0 0.0
  %8068 = vmatprep.subr.mxu0 0.0
  %8069 = vmatpush1.msra.mxu0 0.0
  %8070 = vmatprep.subr.mxu0 0.0
  %8071 = vmatpush1.msra.mxu0 0.0
  %8072 = vmatprep.subr.mxu0 0.0
  %8073 = vmatpush1.msra.mxu0 0.0
  %8074 = vmatprep.subr.mxu0 0.0
  %8075 = vmatpush1.msra.mxu0 0.0
  %8076 = vmatprep.subr.mxu0 0.0
  %8077 = vmatpush1.msra.mxu0 0.0
  %8078 = vmatprep.subr.mxu0 0.0
  %8079 = vmatpush1.msra.mxu0 0.0
  %8080 = vmatprep.subr.mxu0 0.0
  %8081 = vmatpush1.msra.mxu0 0.0
  %8082 = vmatprep.subr.mxu0 0.0
  %8083 = vmatpush1.msra.mxu0 0.0
  %8084 = vmatprep.subr.mxu0 0.0
  %8085 = vmatpush1.msra.mxu0 0.0
  %8086 = vmatprep.subr.mxu0 0.0
  %8087 = vmatpush1.msra.mxu0 0.0
  %8088 = vmatprep.subr.mxu0 0.0
  %8089 = vmatpush1.msra.mxu0 0.0
  %8090 = vmatprep.subr.mxu0 0.0
  %8091 = vmatpush1.msra.mxu0 0.0
  %8092 = vmatprep.subr.mxu0 0.0
  %8093 = vmatpush1.msra.mxu0 0.0
  %8094 = vmatprep.mubr.f32.mxu0 0.0
  %v8095 = vand.u32 %v7086, 4294901760
  %8096 = vmatmul.mubr.f32.gmra.mrb[0].mxu0 %v8095
  %v8097 = vpop.f32.mrb[0].mxu0
  %v8098 = vadd.f32 %v7357, %v8097
  %v8099 = vpop.f32.mrb[0].mxu0
  %8100 = vmatprep.mubr.f32.mxu0 0.0
  %v8101 = vand.u32 %v7089, 4294901760
  %8102 = vmatmul.mubr.f32.gmra.mrb[0].mxu0 %v8101
  %v8103 = vpop.f32.mrb[0].mxu0
  %v8104 = vadd.f32 %v7367, %v8103
  %v8105 = vpop.f32.mrb[0].mxu0
  %8106 = vmatprep.mubr.f32.mxu0 0.0
  %v8107 = vand.u32 %v7092, 4294901760
  %8108 = vmatmul.mubr.f32.gmra.mrb[0].mxu0 %v8107
  %v8109 = vpop.f32.mrb[0].mxu0
  %v8110 = vadd.f32 %v7377, %v8109
  %v8111 = vpop.f32.mrb[0].mxu0
  %8112 = vmatprep.mubr.f32.mxu0 0.0
  %v8113 = vand.u32 %v7095, 4294901760
  %8114 = vmatmul.mubr.f32.gmra.mrb[0].mxu0 %v8113
  %v8115 = vpop.f32.mrb[0].mxu0
  %v8116 = vadd.f32 %v7387, %v8115
  %v8117 = vpop.f32.mrb[0].mxu0
  %8118 = vmatprep.mubr.f32.mxu0 0.0
  %v8119 = vand.u32 %v7098, 4294901760
  %8120 = vmatmul.mubr.f32.gmra.mrb[0].mxu0 %v8119
  %v8121 = vpop.f32.mrb[0].mxu0
  %v8122 = vadd.f32 %v7397, %v8121
  %v8123 = vpop.f32.mrb[0].mxu0
  %8124 = vmatprep.mubr.f32.mxu0 0.0
  %v8125 = vand.u32 %v7101, 4294901760
  %8126 = vmatmul.mubr.f32.gmra.mrb[0].mxu0 %v8125
  %v8127 = vpop.f32.mrb[0].mxu0
  %v8128 = vadd.f32 %v7407, %v8127
  %v8129 = vpop.f32.mrb[0].mxu0
  %8130 = vmatprep.mubr.f32.mxu0 0.0
  %v8131 = vand.u32 %v7104, 4294901760
  %8132 = vmatmul.mubr.f32.gmra.mrb[0].mxu0 %v8131
  %v8133 = vpop.f32.mrb[0].mxu0
  %v8134 = vadd.f32 %v7417, %v8133
  %v8135 = vpop.f32.mrb[0].mxu0
  %8136 = vmatprep.mubr.f32.mxu0 0.0
  %v8137 = vand.u32 %v7107, 4294901760
  %8138 = vmatmul.mubr.f32.gmra.mrb[0].mxu0 %v8137
  %v8139 = vpop.f32.mrb[0].mxu0
  %v8140 = vadd.f32 %v7427, %v8139
  %v8141 = vpop.f32.mrb[0].mxu0
  %8142 = vmatprep.mubr.f32.mxu0 0.0
  %v8143 = vand.u32 %v7110, 4294901760
  %8144 = vmatmul.mubr.f32.gmra.mrb[0].mxu0 %v8143
  %v8145 = vpop.f32.mrb[0].mxu0
  %v8146 = vadd.f32 %v7437, %v8145
  %v8147 = vpop.f32.mrb[0].mxu0
  %8148 = vmatprep.mubr.f32.mxu0 0.0
  %v8149 = vand.u32 %v7113, 4294901760
  %8150 = vmatmul.mubr.f32.gmra.mrb[0].mxu0 %v8149
  %v8151 = vpop.f32.mrb[0].mxu0
  %v8152 = vadd.f32 %v7447, %v8151
  %v8153 = vpop.f32.mrb[0].mxu0
  %8154 = vmatprep.mubr.f32.mxu0 0.0
  %v8155 = vand.u32 %v7116, 4294901760
  %8156 = vmatmul.mubr.f32.gmra.mrb[0].mxu0 %v8155
  %v8157 = vpop.f32.mrb[0].mxu0
  %v8158 = vadd.f32 %v7457, %v8157
  %v8159 = vpop.f32.mrb[0].mxu0
  %8160 = vmatprep.mubr.f32.mxu0 0.0
  %v8161 = vand.u32 %v7119, 4294901760
  %8162 = vmatmul.mubr.f32.gmra.mrb[0].mxu0 %v8161
  %v8163 = vpop.f32.mrb[0].mxu0
  %v8164 = vadd.f32 %v7467, %v8163
  %v8165 = vpop.f32.mrb[0].mxu0
  %8166 = vmatprep.mubr.f32.mxu0 0.0
  %v8167 = vand.u32 %v7122, 4294901760
  %8168 = vmatmul.mubr.f32.gmra.mrb[0].mxu0 %v8167
  %v8169 = vpop.f32.mrb[0].mxu0
  %v8170 = vadd.f32 %v7477, %v8169
  %v8171 = vpop.f32.mrb[0].mxu0
  %8172 = vmatprep.mubr.f32.mxu0 0.0
  %v8173 = vand.u32 %v7125, 4294901760
  %8174 = vmatmul.mubr.f32.gmra.mrb[0].mxu0 %v8173
  %v8175 = vpop.f32.mrb[0].mxu0
  %v8176 = vadd.f32 %v7487, %v8175
  %v8177 = vpop.f32.mrb[0].mxu0
  %8178 = vmatprep.mubr.f32.mxu0 0.0
  %v8179 = vand.u32 %v7128, 4294901760
  %8180 = vmatmul.mubr.f32.gmra.mrb[0].mxu0 %v8179
  %v8181 = vpop.f32.mrb[0].mxu0
  %v8182 = vadd.f32 %v7497, %v8181
  %v8183 = vpop.f32.mrb[0].mxu0
  %8184 = vmatprep.mubr.f32.mxu0 0.0
  %v8185 = vand.u32 %v7131, 4294901760
  %8186 = vmatmul.mubr.f32.gmra.mrb[0].mxu0 %v8185
  %v8187 = vpop.f32.mrb[0].mxu0
  %v8188 = vadd.f32 %v7507, %v8187
  %v8189 = vpop.f32.mrb[0].mxu0
  %8190 = vmatprep.mubr.f32.mxu0 0.0
  %v8191 = vand.u32 %v7134, 4294901760
  %8192 = vmatmul.mubr.f32.gmra.mrb[0].mxu0 %v8191
  %v8193 = vpop.f32.mrb[0].mxu0
  %v8194 = vadd.f32 %v7517, %v8193
  %v8195 = vpop.f32.mrb[0].mxu0
  %8196 = vmatprep.mubr.f32.mxu0 0.0
  %v8197 = vand.u32 %v7137, 4294901760
  %8198 = vmatmul.mubr.f32.gmra.mrb[0].mxu0 %v8197
  %v8199 = vpop.f32.mrb[0].mxu0
  %v8200 = vadd.f32 %v7527, %v8199
  %v8201 = vpop.f32.mrb[0].mxu0
  %8202 = vmatprep.mubr.f32.mxu0 0.0
  %v8203 = vand.u32 %v7140, 4294901760
  %8204 = vmatmul.mubr.f32.gmra.mrb[0].mxu0 %v8203
  %v8205 = vpop.f32.mrb[0].mxu0
  %v8206 = vadd.f32 %v7537, %v8205
  %v8207 = vpop.f32.mrb[0].mxu0
  %8208 = vmatprep.mubr.f32.mxu0 0.0
  %v8209 = vand.u32 %v7143, 4294901760
  %8210 = vmatmul.mubr.f32.gmra.mrb[0].mxu0 %v8209
  %v8211 = vpop.f32.mrb[0].mxu0
  %v8212 = vadd.f32 %v7547, %v8211
  %v8213 = vpop.f32.mrb[0].mxu0
  %8214 = vmatprep.mubr.f32.mxu0 0.0
  %v8215 = vand.u32 %v7146, 4294901760
  %8216 = vmatmul.mubr.f32.gmra.mrb[0].mxu0 %v8215
  %v8217 = vpop.f32.mrb[0].mxu0
  %v8218 = vadd.f32 %v7557, %v8217
  %v8219 = vpop.f32.mrb[0].mxu0
  %8220 = vmatprep.mubr.f32.mxu0 0.0
  %v8221 = vand.u32 %v7149, 4294901760
  %8222 = vmatmul.mubr.f32.gmra.mrb[0].mxu0 %v8221
  %v8223 = vpop.f32.mrb[0].mxu0
  %v8224 = vadd.f32 %v7567, %v8223
  %v8225 = vpop.f32.mrb[0].mxu0
  %8226 = vmatprep.mubr.f32.mxu0 0.0
  %v8227 = vand.u32 %v7152, 4294901760
  %8228 = vmatmul.mubr.f32.gmra.mrb[0].mxu0 %v8227
  %v8229 = vpop.f32.mrb[0].mxu0
  %v8230 = vadd.f32 %v7577, %v8229
  %v8231 = vpop.f32.mrb[0].mxu0
  %8232 = vmatprep.mubr.f32.mxu0 0.0
  %v8233 = vand.u32 %v7155, 4294901760
  %8234 = vmatmul.mubr.f32.gmra.mrb[0].mxu0 %v8233
  %v8235 = vpop.f32.mrb[0].mxu0
  %v8236 = vadd.f32 %v7587, %v8235
  %v8237 = vpop.f32.mrb[0].mxu0
  %8238 = vmatprep.mubr.f32.mxu0 0.0
  %v8239 = vand.u32 %v7158, 4294901760
  %8240 = vmatmul.mubr.f32.gmra.mrb[0].mxu0 %v8239
  %v8241 = vpop.f32.mrb[0].mxu0
  %v8242 = vadd.f32 %v7597, %v8241
  %v8243 = vpop.f32.mrb[0].mxu0
  %8244 = vmatprep.mubr.f32.mxu0 0.0
  %v8245 = vand.u32 %v7161, 4294901760
  %8246 = vmatmul.mubr.f32.gmra.mrb[0].mxu0 %v8245
  %v8247 = vpop.f32.mrb[0].mxu0
  %v8248 = vadd.f32 %v7607, %v8247
  %v8249 = vpop.f32.mrb[0].mxu0
  %8250 = vmatprep.mubr.f32.mxu0 0.0
  %v8251 = vand.u32 %v7164, 4294901760
  %8252 = vmatmul.mubr.f32.gmra.mrb[0].mxu0 %v8251
  %v8253 = vpop.f32.mrb[0].mxu0
  %v8254 = vadd.f32 %v7617, %v8253
  %v8255 = vpop.f32.mrb[0].mxu0
  %8256 = vmatprep.mubr.f32.mxu0 0.0
  %v8257 = vand.u32 %v7167, 4294901760
  %8258 = vmatmul.mubr.f32.gmra.mrb[0].mxu0 %v8257
  %v8259 = vpop.f32.mrb[0].mxu0
  %v8260 = vadd.f32 %v7627, %v8259
  %v8261 = vpop.f32.mrb[0].mxu0
  %8262 = vmatprep.mubr.f32.mxu0 0.0
  %v8263 = vand.u32 %v7170, 4294901760
  %8264 = vmatmul.mubr.f32.gmra.mrb[0].mxu0 %v8263
  %v8265 = vpop.f32.mrb[0].mxu0
  %v8266 = vadd.f32 %v7637, %v8265
  %v8267 = vpop.f32.mrb[0].mxu0
  %8268 = vmatprep.mubr.f32.mxu0 0.0
  %v8269 = vand.u32 %v7173, 4294901760
  %8270 = vmatmul.mubr.f32.gmra.mrb[0].mxu0 %v8269
  %v8271 = vpop.f32.mrb[0].mxu0
  %v8272 = vadd.f32 %v7647, %v8271
  %v8273 = vpop.f32.mrb[0].mxu0
  %8274 = vmatprep.mubr.f32.mxu0 0.0
  %v8275 = vand.u32 %v7176, 4294901760
  %8276 = vmatmul.mubr.f32.gmra.mrb[0].mxu0 %v8275
  %v8277 = vpop.f32.mrb[0].mxu0
  %v8278 = vadd.f32 %v7657, %v8277
  %v8279 = vpop.f32.mrb[0].mxu0
  %8280 = vmatprep.mubr.f32.mxu0 0.0
  %v8281 = vand.u32 %v7179, 4294901760
  %8282 = vmatmul.mubr.f32.gmra.mrb[0].mxu0 %v8281
  %v8283 = vpop.f32.mrb[0].mxu0
  %v8284 = vadd.f32 %v7667, %v8283
  %v8285 = vpop.f32.mrb[0].mxu0
  %8286 = vmatprep.mubr.f32.mxu0 0.0
  %v8287 = vand.u32 %v7182, 4294901760
  %8288 = vmatmul.mubr.f32.gmra.mrb[0].mxu0 %v8287
  %v8289 = vpop.f32.mrb[0].mxu0
  %v8290 = vadd.f32 %v7677, %v8289
  %v8291 = vpop.f32.mrb[0].mxu0
  %8292 = vmatprep.mubr.f32.mxu0 0.0
  %v8293 = vand.u32 %v7185, 4294901760
  %8294 = vmatmul.mubr.f32.gmra.mrb[0].mxu0 %v8293
  %v8295 = vpop.f32.mrb[0].mxu0
  %v8296 = vadd.f32 %v7687, %v8295
  %v8297 = vpop.f32.mrb[0].mxu0
  %8298 = vmatprep.mubr.f32.mxu0 0.0
  %v8299 = vand.u32 %v7188, 4294901760
  %8300 = vmatmul.mubr.f32.gmra.mrb[0].mxu0 %v8299
  %v8301 = vpop.f32.mrb[0].mxu0
  %v8302 = vadd.f32 %v7697, %v8301
  %v8303 = vpop.f32.mrb[0].mxu0
  %8304 = vmatprep.mubr.f32.mxu0 0.0
  %v8305 = vand.u32 %v7191, 4294901760
  %8306 = vmatmul.mubr.f32.gmra.mrb[0].mxu0 %v8305
  %v8307 = vpop.f32.mrb[0].mxu0
  %v8308 = vadd.f32 %v7707, %v8307
  %v8309 = vpop.f32.mrb[0].mxu0
  %8310 = vmatprep.mubr.f32.mxu0 0.0
  %v8311 = vand.u32 %v7194, 4294901760
  %8312 = vmatmul.mubr.f32.gmra.mrb[0].mxu0 %v8311
  %v8313 = vpop.f32.mrb[0].mxu0
  %v8314 = vadd.f32 %v7717, %v8313
  %v8315 = vpop.f32.mrb[0].mxu0
  %8316 = vmatprep.mubr.f32.mxu0 0.0
  %v8317 = vand.u32 %v7197, 4294901760
  %8318 = vmatmul.mubr.f32.gmra.mrb[0].mxu0 %v8317
  %v8319 = vpop.f32.mrb[0].mxu0
  %v8320 = vadd.f32 %v7727, %v8319
  %v8321 = vpop.f32.mrb[0].mxu0
  %8322 = vmatprep.mubr.f32.mxu0 0.0
  %v8323 = vand.u32 %v7200, 4294901760
  %8324 = vmatmul.mubr.f32.gmra.mrb[0].mxu0 %v8323
  %v8325 = vpop.f32.mrb[0].mxu0
  %v8326 = vadd.f32 %v7737, %v8325
  %v8327 = vpop.f32.mrb[0].mxu0
  %8328 = vmatprep.mubr.f32.mxu0 0.0
  %v8329 = vand.u32 %v7203, 4294901760
  %8330 = vmatmul.mubr.f32.gmra.mrb[0].mxu0 %v8329
  %v8331 = vpop.f32.mrb[0].mxu0
  %v8332 = vadd.f32 %v7747, %v8331
  %v8333 = vpop.f32.mrb[0].mxu0
  %8334 = vmatprep.mubr.f32.mxu0 0.0
  %v8335 = vand.u32 %v7206, 4294901760
  %8336 = vmatmul.mubr.f32.gmra.mrb[0].mxu0 %v8335
  %v8337 = vpop.f32.mrb[0].mxu0
  %v8338 = vadd.f32 %v7757, %v8337
  %v8339 = vpop.f32.mrb[0].mxu0
  %8340 = vmatprep.mubr.f32.mxu0 0.0
  %v8341 = vand.u32 %v7209, 4294901760
  %8342 = vmatmul.mubr.f32.gmra.mrb[0].mxu0 %v8341
  %v8343 = vpop.f32.mrb[0].mxu0
  %v8344 = vadd.f32 %v7767, %v8343
  %v8345 = vpop.f32.mrb[0].mxu0
  %8346 = vmatprep.mubr.f32.mxu0 0.0
  %v8347 = vand.u32 %v7212, 4294901760
  %8348 = vmatmul.mubr.f32.gmra.mrb[0].mxu0 %v8347
  %v8349 = vpop.f32.mrb[0].mxu0
  %v8350 = vadd.f32 %v7777, %v8349
  %v8351 = vpop.f32.mrb[0].mxu0
  %8352 = vmatprep.mubr.f32.mxu0 0.0
  %v8353 = vand.u32 %v7215, 4294901760
  %8354 = vmatmul.mubr.f32.gmra.mrb[0].mxu0 %v8353
  %v8355 = vpop.f32.mrb[0].mxu0
  %v8356 = vadd.f32 %v7787, %v8355
  %v8357 = vpop.f32.mrb[0].mxu0
  %8358 = vmatprep.mubr.f32.mxu0 0.0
  %v8359 = vand.u32 %v7218, 4294901760
  %8360 = vmatmul.mubr.f32.gmra.mrb[0].mxu0 %v8359
  %v8361 = vpop.f32.mrb[0].mxu0
  %v8362 = vadd.f32 %v7797, %v8361
  %v8363 = vpop.f32.mrb[0].mxu0
  %8364 = vmatprep.mubr.f32.mxu0 0.0
  %v8365 = vand.u32 %v7221, 4294901760
  %8366 = vmatmul.mubr.f32.gmra.mrb[0].mxu0 %v8365
  %v8367 = vpop.f32.mrb[0].mxu0
  %v8368 = vadd.f32 %v7807, %v8367
  %v8369 = vpop.f32.mrb[0].mxu0
  %8370 = vmatprep.mubr.f32.mxu0 0.0
  %v8371 = vand.u32 %v7224, 4294901760
  %8372 = vmatmul.mubr.f32.gmra.mrb[0].mxu0 %v8371
  %v8373 = vpop.f32.mrb[0].mxu0
  %v8374 = vadd.f32 %v7817, %v8373
  %v8375 = vpop.f32.mrb[0].mxu0
  %8376 = vmatprep.mubr.f32.mxu0 0.0
  %v8377 = vand.u32 %v7227, 4294901760
  %8378 = vmatmul.mubr.f32.gmra.mrb[0].mxu0 %v8377
  %v8379 = vpop.f32.mrb[0].mxu0
  %v8380 = vadd.f32 %v7827, %v8379
  %v8381 = vpop.f32.mrb[0].mxu0
  %8382 = vmatprep.mubr.f32.mxu0 0.0
  %v8383 = vand.u32 %v7230, 4294901760
  %8384 = vmatmul.mubr.f32.gmra.mrb[0].mxu0 %v8383
  %v8385 = vpop.f32.mrb[0].mxu0
  %v8386 = vadd.f32 %v7837, %v8385
  %v8387 = vpop.f32.mrb[0].mxu0
  %8388 = vmatprep.mubr.f32.mxu0 0.0
  %v8389 = vand.u32 %v7233, 4294901760
  %8390 = vmatmul.mubr.f32.gmra.mrb[0].mxu0 %v8389
  %v8391 = vpop.f32.mrb[0].mxu0
  %v8392 = vadd.f32 %v7847, %v8391
  %v8393 = vpop.f32.mrb[0].mxu0
  %8394 = vmatprep.mubr.f32.mxu0 0.0
  %v8395 = vand.u32 %v7236, 4294901760
  %8396 = vmatmul.mubr.f32.gmra.mrb[0].mxu0 %v8395
  %v8397 = vpop.f32.mrb[0].mxu0
  %v8398 = vadd.f32 %v7857, %v8397
  %v8399 = vpop.f32.mrb[0].mxu0
  %8400 = vmatprep.mubr.f32.mxu0 0.0
  %v8401 = vand.u32 %v7239, 4294901760
  %8402 = vmatmul.mubr.f32.gmra.mrb[0].mxu0 %v8401
  %v8403 = vpop.f32.mrb[0].mxu0
  %v8404 = vadd.f32 %v7867, %v8403
  %v8405 = vpop.f32.mrb[0].mxu0
  %8406 = vmatprep.mubr.f32.mxu0 0.0
  %v8407 = vand.u32 %v7242, 4294901760
  %8408 = vmatmul.mubr.f32.gmra.mrb[0].mxu0 %v8407
  %v8409 = vpop.f32.mrb[0].mxu0
  %v8410 = vadd.f32 %v7877, %v8409
  %v8411 = vpop.f32.mrb[0].mxu0
  %8412 = vmatprep.mubr.f32.mxu0 0.0
  %v8413 = vand.u32 %v7245, 4294901760
  %8414 = vmatmul.mubr.f32.gmra.mrb[0].mxu0 %v8413
  %v8415 = vpop.f32.mrb[0].mxu0
  %v8416 = vadd.f32 %v7887, %v8415
  %v8417 = vpop.f32.mrb[0].mxu0
  %8418 = vmatprep.mubr.f32.mxu0 0.0
  %v8419 = vand.u32 %v7248, 4294901760
  %8420 = vmatmul.mubr.f32.gmra.mrb[0].mxu0 %v8419
  %v8421 = vpop.f32.mrb[0].mxu0
  %v8422 = vadd.f32 %v7897, %v8421
  %v8423 = vpop.f32.mrb[0].mxu0
  %8424 = vmatprep.mubr.f32.mxu0 0.0
  %v8425 = vand.u32 %v7251, 4294901760
  %8426 = vmatmul.mubr.f32.gmra.mrb[0].mxu0 %v8425
  %v8427 = vpop.f32.mrb[0].mxu0
  %v8428 = vadd.f32 %v7907, %v8427
  %v8429 = vpop.f32.mrb[0].mxu0
  %8430 = vmatprep.mubr.f32.mxu0 0.0
  %v8431 = vand.u32 %v7254, 4294901760
  %8432 = vmatmul.mubr.f32.gmra.mrb[0].mxu0 %v8431
  %v8433 = vpop.f32.mrb[0].mxu0
  %v8434 = vadd.f32 %v7917, %v8433
  %v8435 = vpop.f32.mrb[0].mxu0
  %8436 = vmatprep.mubr.f32.mxu0 0.0
  %v8437 = vand.u32 %v7257, 4294901760
  %8438 = vmatmul.mubr.f32.gmra.mrb[0].mxu0 %v8437
  %v8439 = vpop.f32.mrb[0].mxu0
  %v8440 = vadd.f32 %v7927, %v8439
  %v8441 = vpop.f32.mrb[0].mxu0
  %8442 = vmatprep.mubr.f32.mxu0 0.0
  %v8443 = vand.u32 %v7260, 4294901760
  %8444 = vmatmul.mubr.f32.gmra.mrb[0].mxu0 %v8443
  %v8445 = vpop.f32.mrb[0].mxu0
  %v8446 = vadd.f32 %v7937, %v8445
  %v8447 = vpop.f32.mrb[0].mxu0
  %8448 = vmatprep.mubr.f32.mxu0 0.0
  %v8449 = vand.u32 %v7263, 4294901760
  %8450 = vmatmul.mubr.f32.gmra.mrb[0].mxu0 %v8449
  %v8451 = vpop.f32.mrb[0].mxu0
  %v8452 = vadd.f32 %v7947, %v8451
  %v8453 = vpop.f32.mrb[0].mxu0
  %8454 = vmatprep.mubr.f32.mxu0 0.0
  %v8455 = vand.u32 %v7266, 4294901760
  %8456 = vmatmul.mubr.f32.gmra.mrb[0].mxu0 %v8455
  %v8457 = vpop.f32.mrb[0].mxu0
  %v8458 = vadd.f32 %v7957, %v8457
  %v8459 = vpop.f32.mrb[0].mxu0
  %8460 = vmatprep.mubr.f32.mxu0 0.0
  %v8461 = vand.u32 %v7269, 4294901760
  %8462 = vmatmul.mubr.f32.gmra.mrb[0].mxu0 %v8461
  %v8463 = vpop.f32.mrb[0].mxu0
  %v8464 = vadd.f32 %v7967, %v8463
  %v8465 = vpop.f32.mrb[0].mxu0
  %8466 = vmatprep.mubr.f32.mxu0 0.0
  %v8467 = vand.u32 %v7272, 4294901760
  %8468 = vmatmul.mubr.f32.gmra.mrb[0].mxu0 %v8467
  %v8469 = vpop.f32.mrb[0].mxu0
  %v8470 = vadd.f32 %v7977, %v8469
  %v8471 = vpop.f32.mrb[0].mxu0
  %8472 = vmatprep.mubr.f32.mxu0 0.0
  %v8473 = vand.u32 %v7275, 4294901760
  %8474 = vmatmul.mubr.f32.gmra.mrb[0].mxu0 %v8473
  %v8475 = vpop.f32.mrb[0].mxu0
  %v8476 = vadd.f32 %v7987, %v8475
  %v8477 = vpop.f32.mrb[0].mxu0
  %8478 = vdwg.mxu0
  %8479 = vmatprep.subr.mxu0 0.0
  %v8480 = vand.u32 %v7070, 4294901760
  %v8481 = vsub.f32 %v7070, %v8480
  %8482 = vmatpush1.msra.mxu0 %v8481
  %8483 = vmatprep.subr.mxu0 0.0
  %v8484 = vand.u32 %v7071, 4294901760
  %v8485 = vsub.f32 %v7071, %v8484
  %8486 = vmatpush1.msra.mxu0 %v8485
  %8487 = vmatprep.subr.mxu0 0.0
  %v8488 = vand.u32 %v7072, 4294901760
  %v8489 = vsub.f32 %v7072, %v8488
  %8490 = vmatpush1.msra.mxu0 %v8489
  %8491 = vmatprep.subr.mxu0 0.0
  %v8492 = vand.u32 %v7073, 4294901760
  %v8493 = vsub.f32 %v7073, %v8492
  %8494 = vmatpush1.msra.mxu0 %v8493
  %8495 = vmatprep.subr.mxu0 0.0
  %v8496 = vand.u32 %v7074, 4294901760
  %v8497 = vsub.f32 %v7074, %v8496
  %8498 = vmatpush1.msra.mxu0 %v8497
  %8499 = vmatprep.subr.mxu0 0.0
  %v8500 = vand.u32 %v7075, 4294901760
  %v8501 = vsub.f32 %v7075, %v8500
  %8502 = vmatpush1.msra.mxu0 %v8501
  %8503 = vmatprep.subr.mxu0 0.0
  %v8504 = vand.u32 %v7076, 4294901760
  %v8505 = vsub.f32 %v7076, %v8504
  %8506 = vmatpush1.msra.mxu0 %v8505
  %8507 = vmatprep.subr.mxu0 0.0
  %v8508 = vand.u32 %v7077, 4294901760
  %v8509 = vsub.f32 %v7077, %v8508
  %8510 = vmatpush1.msra.mxu0 %v8509
  %8511 = vmatprep.subr.mxu0 0.0
  %8512 = vmatpush1.msra.mxu0 0.0
  %8513 = vmatprep.subr.mxu0 0.0
  %8514 = vmatpush1.msra.mxu0 0.0
  %8515 = vmatprep.subr.mxu0 0.0
  %8516 = vmatpush1.msra.mxu0 0.0
  %8517 = vmatprep.subr.mxu0 0.0
  %8518 = vmatpush1.msra.mxu0 0.0
  %8519 = vmatprep.subr.mxu0 0.0
  %8520 = vmatpush1.msra.mxu0 0.0
  %8521 = vmatprep.subr.mxu0 0.0
  %8522 = vmatpush1.msra.mxu0 0.0
  %8523 = vmatprep.subr.mxu0 0.0
  %8524 = vmatpush1.msra.mxu0 0.0
  %8525 = vmatprep.subr.mxu0 0.0
  %8526 = vmatpush1.msra.mxu0 0.0
  %8527 = vmatprep.subr.mxu0 0.0
  %8528 = vmatpush1.msra.mxu0 0.0
  %8529 = vmatprep.subr.mxu0 0.0
  %8530 = vmatpush1.msra.mxu0 0.0
  %8531 = vmatprep.subr.mxu0 0.0
  %8532 = vmatpush1.msra.mxu0 0.0
  %8533 = vmatprep.subr.mxu0 0.0
  %8534 = vmatpush1.msra.mxu0 0.0
  %8535 = vmatprep.subr.mxu0 0.0
  %8536 = vmatpush1.msra.mxu0 0.0
  %8537 = vmatprep.subr.mxu0 0.0
  %8538 = vmatpush1.msra.mxu0 0.0
  %8539 = vmatprep.subr.mxu0 0.0
  %8540 = vmatpush1.msra.mxu0 0.0
  %8541 = vmatprep.subr.mxu0 0.0
  %8542 = vmatpush1.msra.mxu0 0.0
  %8543 = vmatprep.subr.mxu0 0.0
  %8544 = vmatpush1.msra.mxu0 0.0
  %8545 = vmatprep.subr.mxu0 0.0
  %8546 = vmatpush1.msra.mxu0 0.0
  %8547 = vmatprep.subr.mxu0 0.0
  %8548 = vmatpush1.msra.mxu0 0.0
  %8549 = vmatprep.subr.mxu0 0.0
  %8550 = vmatpush1.msra.mxu0 0.0
  %8551 = vmatprep.subr.mxu0 0.0
  %8552 = vmatpush1.msra.mxu0 0.0
  %8553 = vmatprep.subr.mxu0 0.0
  %8554 = vmatpush1.msra.mxu0 0.0
  %8555 = vmatprep.subr.mxu0 0.0
  %8556 = vmatpush1.msra.mxu0 0.0
  %8557 = vmatprep.subr.mxu0 0.0
  %8558 = vmatpush1.msra.mxu0 0.0
  %8559 = vmatprep.mubr.f32.mxu0 0.0
  %v8560 = vand.u32 %v7086, 4294901760
  %v8561 = vsub.f32 %v7086, %v8560
  %8562 = vmatmul.mubr.f32.gmra.mrb[0].mxu0 %v8561
  %v8563 = vpop.f32.mrb[0].mxu0
  %v8564 = vadd.f32 %v8098, %v8563
  %v8565 = vpop.f32.mrb[0].mxu0
  %8566 = vmatprep.mubr.f32.mxu0 0.0
  %v8567 = vand.u32 %v7089, 4294901760
  %v8568 = vsub.f32 %v7089, %v8567
  %8569 = vmatmul.mubr.f32.gmra.mrb[0].mxu0 %v8568
  %v8570 = vpop.f32.mrb[0].mxu0
  %v8571 = vadd.f32 %v8104, %v8570
  %v8572 = vpop.f32.mrb[0].mxu0
  %8573 = vmatprep.mubr.f32.mxu0 0.0
  %v8574 = vand.u32 %v7092, 4294901760
  %v8575 = vsub.f32 %v7092, %v8574
  %8576 = vmatmul.mubr.f32.gmra.mrb[0].mxu0 %v8575
  %v8577 = vpop.f32.mrb[0].mxu0
  %v8578 = vadd.f32 %v8110, %v8577
  %v8579 = vpop.f32.mrb[0].mxu0
  %8580 = vmatprep.mubr.f32.mxu0 0.0
  %v8581 = vand.u32 %v7095, 4294901760
  %v8582 = vsub.f32 %v7095, %v8581
  %8583 = vmatmul.mubr.f32.gmra.mrb[0].mxu0 %v8582
  %v8584 = vpop.f32.mrb[0].mxu0
  %v8585 = vadd.f32 %v8116, %v8584
  %v8586 = vpop.f32.mrb[0].mxu0
  %8587 = vmatprep.mubr.f32.mxu0 0.0
  %v8588 = vand.u32 %v7098, 4294901760
  %v8589 = vsub.f32 %v7098, %v8588
  %8590 = vmatmul.mubr.f32.gmra.mrb[0].mxu0 %v8589
  %v8591 = vpop.f32.mrb[0].mxu0
  %v8592 = vadd.f32 %v8122, %v8591
  %v8593 = vpop.f32.mrb[0].mxu0
  %8594 = vmatprep.mubr.f32.mxu0 0.0
  %v8595 = vand.u32 %v7101, 4294901760
  %v8596 = vsub.f32 %v7101, %v8595
  %8597 = vmatmul.mubr.f32.gmra.mrb[0].mxu0 %v8596
  %v8598 = vpop.f32.mrb[0].mxu0
  %v8599 = vadd.f32 %v8128, %v8598
  %v8600 = vpop.f32.mrb[0].mxu0
  %8601 = vmatprep.mubr.f32.mxu0 0.0
  %v8602 = vand.u32 %v7104, 4294901760
  %v8603 = vsub.f32 %v7104, %v8602
  %8604 = vmatmul.mubr.f32.gmra.mrb[0].mxu0 %v8603
  %v8605 = vpop.f32.mrb[0].mxu0
  %v8606 = vadd.f32 %v8134, %v8605
  %v8607 = vpop.f32.mrb[0].mxu0
  %8608 = vmatprep.mubr.f32.mxu0 0.0
  %v8609 = vand.u32 %v7107, 4294901760
  %v8610 = vsub.f32 %v7107, %v8609
  %8611 = vmatmul.mubr.f32.gmra.mrb[0].mxu0 %v8610
  %v8612 = vpop.f32.mrb[0].mxu0
  %v8613 = vadd.f32 %v8140, %v8612
  %v8614 = vpop.f32.mrb[0].mxu0
  %8615 = vmatprep.mubr.f32.mxu0 0.0
  %v8616 = vand.u32 %v7110, 4294901760
  %v8617 = vsub.f32 %v7110, %v8616
  %8618 = vmatmul.mubr.f32.gmra.mrb[0].mxu0 %v8617
  %v8619 = vpop.f32.mrb[0].mxu0
  %v8620 = vadd.f32 %v8146, %v8619
  %v8621 = vpop.f32.mrb[0].mxu0
  %8622 = vmatprep.mubr.f32.mxu0 0.0
  %v8623 = vand.u32 %v7113, 4294901760
  %v8624 = vsub.f32 %v7113, %v8623
  %8625 = vmatmul.mubr.f32.gmra.mrb[0].mxu0 %v8624
  %v8626 = vpop.f32.mrb[0].mxu0
  %v8627 = vadd.f32 %v8152, %v8626
  %v8628 = vpop.f32.mrb[0].mxu0
  %8629 = vmatprep.mubr.f32.mxu0 0.0
  %v8630 = vand.u32 %v7116, 4294901760
  %v8631 = vsub.f32 %v7116, %v8630
  %8632 = vmatmul.mubr.f32.gmra.mrb[0].mxu0 %v8631
  %v8633 = vpop.f32.mrb[0].mxu0
  %v8634 = vadd.f32 %v8158, %v8633
  %v8635 = vpop.f32.mrb[0].mxu0
  %8636 = vmatprep.mubr.f32.mxu0 0.0
  %v8637 = vand.u32 %v7119, 4294901760
  %v8638 = vsub.f32 %v7119, %v8637
  %8639 = vmatmul.mubr.f32.gmra.mrb[0].mxu0 %v8638
  %v8640 = vpop.f32.mrb[0].mxu0
  %v8641 = vadd.f32 %v8164, %v8640
  %v8642 = vpop.f32.mrb[0].mxu0
  %8643 = vmatprep.mubr.f32.mxu0 0.0
  %v8644 = vand.u32 %v7122, 4294901760
  %v8645 = vsub.f32 %v7122, %v8644
  %8646 = vmatmul.mubr.f32.gmra.mrb[0].mxu0 %v8645
  %v8647 = vpop.f32.mrb[0].mxu0
  %v8648 = vadd.f32 %v8170, %v8647
  %v8649 = vpop.f32.mrb[0].mxu0
  %8650 = vmatprep.mubr.f32.mxu0 0.0
  %v8651 = vand.u32 %v7125, 4294901760
  %v8652 = vsub.f32 %v7125, %v8651
  %8653 = vmatmul.mubr.f32.gmra.mrb[0].mxu0 %v8652
  %v8654 = vpop.f32.mrb[0].mxu0
  %v8655 = vadd.f32 %v8176, %v8654
  %v8656 = vpop.f32.mrb[0].mxu0
  %8657 = vmatprep.mubr.f32.mxu0 0.0
  %v8658 = vand.u32 %v7128, 4294901760
  %v8659 = vsub.f32 %v7128, %v8658
  %8660 = vmatmul.mubr.f32.gmra.mrb[0].mxu0 %v8659
  %v8661 = vpop.f32.mrb[0].mxu0
  %v8662 = vadd.f32 %v8182, %v8661
  %v8663 = vpop.f32.mrb[0].mxu0
  %8664 = vmatprep.mubr.f32.mxu0 0.0
  %v8665 = vand.u32 %v7131, 4294901760
  %v8666 = vsub.f32 %v7131, %v8665
  %8667 = vmatmul.mubr.f32.gmra.mrb[0].mxu0 %v8666
  %v8668 = vpop.f32.mrb[0].mxu0
  %v8669 = vadd.f32 %v8188, %v8668
  %v8670 = vpop.f32.mrb[0].mxu0
  %8671 = vmatprep.mubr.f32.mxu0 0.0
  %v8672 = vand.u32 %v7134, 4294901760
  %v8673 = vsub.f32 %v7134, %v8672
  %8674 = vmatmul.mubr.f32.gmra.mrb[0].mxu0 %v8673
  %v8675 = vpop.f32.mrb[0].mxu0
  %v8676 = vadd.f32 %v8194, %v8675
  %v8677 = vpop.f32.mrb[0].mxu0
  %8678 = vmatprep.mubr.f32.mxu0 0.0
  %v8679 = vand.u32 %v7137, 4294901760
  %v8680 = vsub.f32 %v7137, %v8679
  %8681 = vmatmul.mubr.f32.gmra.mrb[0].mxu0 %v8680
  %v8682 = vpop.f32.mrb[0].mxu0
  %v8683 = vadd.f32 %v8200, %v8682
  %v8684 = vpop.f32.mrb[0].mxu0
  %8685 = vmatprep.mubr.f32.mxu0 0.0
  %v8686 = vand.u32 %v7140, 4294901760
  %v8687 = vsub.f32 %v7140, %v8686
  %8688 = vmatmul.mubr.f32.gmra.mrb[0].mxu0 %v8687
  %v8689 = vpop.f32.mrb[0].mxu0
  %v8690 = vadd.f32 %v8206, %v8689
  %v8691 = vpop.f32.mrb[0].mxu0
  %8692 = vmatprep.mubr.f32.mxu0 0.0
  %v8693 = vand.u32 %v7143, 4294901760
  %v8694 = vsub.f32 %v7143, %v8693
  %8695 = vmatmul.mubr.f32.gmra.mrb[0].mxu0 %v8694
  %v8696 = vpop.f32.mrb[0].mxu0
  %v8697 = vadd.f32 %v8212, %v8696
  %v8698 = vpop.f32.mrb[0].mxu0
  %8699 = vmatprep.mubr.f32.mxu0 0.0
  %v8700 = vand.u32 %v7146, 4294901760
  %v8701 = vsub.f32 %v7146, %v8700
  %8702 = vmatmul.mubr.f32.gmra.mrb[0].mxu0 %v8701
  %v8703 = vpop.f32.mrb[0].mxu0
  %v8704 = vadd.f32 %v8218, %v8703
  %v8705 = vpop.f32.mrb[0].mxu0
  %8706 = vmatprep.mubr.f32.mxu0 0.0
  %v8707 = vand.u32 %v7149, 4294901760
  %v8708 = vsub.f32 %v7149, %v8707
  %8709 = vmatmul.mubr.f32.gmra.mrb[0].mxu0 %v8708
  %v8710 = vpop.f32.mrb[0].mxu0
  %v8711 = vadd.f32 %v8224, %v8710
  %v8712 = vpop.f32.mrb[0].mxu0
  %8713 = vmatprep.mubr.f32.mxu0 0.0
  %v8714 = vand.u32 %v7152, 4294901760
  %v8715 = vsub.f32 %v7152, %v8714
  %8716 = vmatmul.mubr.f32.gmra.mrb[0].mxu0 %v8715
  %v8717 = vpop.f32.mrb[0].mxu0
  %v8718 = vadd.f32 %v8230, %v8717
  %v8719 = vpop.f32.mrb[0].mxu0
  %8720 = vmatprep.mubr.f32.mxu0 0.0
  %v8721 = vand.u32 %v7155, 4294901760
  %v8722 = vsub.f32 %v7155, %v8721
  %8723 = vmatmul.mubr.f32.gmra.mrb[0].mxu0 %v8722
  %v8724 = vpop.f32.mrb[0].mxu0
  %v8725 = vadd.f32 %v8236, %v8724
  %v8726 = vpop.f32.mrb[0].mxu0
  %8727 = vmatprep.mubr.f32.mxu0 0.0
  %v8728 = vand.u32 %v7158, 4294901760
  %v8729 = vsub.f32 %v7158, %v8728
  %8730 = vmatmul.mubr.f32.gmra.mrb[0].mxu0 %v8729
  %v8731 = vpop.f32.mrb[0].mxu0
  %v8732 = vadd.f32 %v8242, %v8731
  %v8733 = vpop.f32.mrb[0].mxu0
  %8734 = vmatprep.mubr.f32.mxu0 0.0
  %v8735 = vand.u32 %v7161, 4294901760
  %v8736 = vsub.f32 %v7161, %v8735
  %8737 = vmatmul.mubr.f32.gmra.mrb[0].mxu0 %v8736
  %v8738 = vpop.f32.mrb[0].mxu0
  %v8739 = vadd.f32 %v8248, %v8738
  %v8740 = vpop.f32.mrb[0].mxu0
  %8741 = vmatprep.mubr.f32.mxu0 0.0
  %v8742 = vand.u32 %v7164, 4294901760
  %v8743 = vsub.f32 %v7164, %v8742
  %8744 = vmatmul.mubr.f32.gmra.mrb[0].mxu0 %v8743
  %v8745 = vpop.f32.mrb[0].mxu0
  %v8746 = vadd.f32 %v8254, %v8745
  %v8747 = vpop.f32.mrb[0].mxu0
  %8748 = vmatprep.mubr.f32.mxu0 0.0
  %v8749 = vand.u32 %v7167, 4294901760
  %v8750 = vsub.f32 %v7167, %v8749
  %8751 = vmatmul.mubr.f32.gmra.mrb[0].mxu0 %v8750
  %v8752 = vpop.f32.mrb[0].mxu0
  %v8753 = vadd.f32 %v8260, %v8752
  %v8754 = vpop.f32.mrb[0].mxu0
  %8755 = vmatprep.mubr.f32.mxu0 0.0
  %v8756 = vand.u32 %v7170, 4294901760
  %v8757 = vsub.f32 %v7170, %v8756
  %8758 = vmatmul.mubr.f32.gmra.mrb[0].mxu0 %v8757
  %v8759 = vpop.f32.mrb[0].mxu0
  %v8760 = vadd.f32 %v8266, %v8759
  %v8761 = vpop.f32.mrb[0].mxu0
  %8762 = vmatprep.mubr.f32.mxu0 0.0
  %v8763 = vand.u32 %v7173, 4294901760
  %v8764 = vsub.f32 %v7173, %v8763
  %8765 = vmatmul.mubr.f32.gmra.mrb[0].mxu0 %v8764
  %v8766 = vpop.f32.mrb[0].mxu0
  %v8767 = vadd.f32 %v8272, %v8766
  %v8768 = vpop.f32.mrb[0].mxu0
  %8769 = vmatprep.mubr.f32.mxu0 0.0
  %v8770 = vand.u32 %v7176, 4294901760
  %v8771 = vsub.f32 %v7176, %v8770
  %8772 = vmatmul.mubr.f32.gmra.mrb[0].mxu0 %v8771
  %v8773 = vpop.f32.mrb[0].mxu0
  %v8774 = vadd.f32 %v8278, %v8773
  %v8775 = vpop.f32.mrb[0].mxu0
  %8776 = vmatprep.mubr.f32.mxu0 0.0
  %v8777 = vand.u32 %v7179, 4294901760
  %v8778 = vsub.f32 %v7179, %v8777
  %8779 = vmatmul.mubr.f32.gmra.mrb[0].mxu0 %v8778
  %v8780 = vpop.f32.mrb[0].mxu0
  %v8781 = vadd.f32 %v8284, %v8780
  %v8782 = vpop.f32.mrb[0].mxu0
  %8783 = vmatprep.mubr.f32.mxu0 0.0
  %v8784 = vand.u32 %v7182, 4294901760
  %v8785 = vsub.f32 %v7182, %v8784
  %8786 = vmatmul.mubr.f32.gmra.mrb[0].mxu0 %v8785
  %v8787 = vpop.f32.mrb[0].mxu0
  %v8788 = vadd.f32 %v8290, %v8787
  %v8789 = vpop.f32.mrb[0].mxu0
  %8790 = vmatprep.mubr.f32.mxu0 0.0
  %v8791 = vand.u32 %v7185, 4294901760
  %v8792 = vsub.f32 %v7185, %v8791
  %8793 = vmatmul.mubr.f32.gmra.mrb[0].mxu0 %v8792
  %v8794 = vpop.f32.mrb[0].mxu0
  %v8795 = vadd.f32 %v8296, %v8794
  %v8796 = vpop.f32.mrb[0].mxu0
  %8797 = vmatprep.mubr.f32.mxu0 0.0
  %v8798 = vand.u32 %v7188, 4294901760
  %v8799 = vsub.f32 %v7188, %v8798
  %8800 = vmatmul.mubr.f32.gmra.mrb[0].mxu0 %v8799
  %v8801 = vpop.f32.mrb[0].mxu0
  %v8802 = vadd.f32 %v8302, %v8801
  %v8803 = vpop.f32.mrb[0].mxu0
  %8804 = vmatprep.mubr.f32.mxu0 0.0
  %v8805 = vand.u32 %v7191, 4294901760
  %v8806 = vsub.f32 %v7191, %v8805
  %8807 = vmatmul.mubr.f32.gmra.mrb[0].mxu0 %v8806
  %v8808 = vpop.f32.mrb[0].mxu0
  %v8809 = vadd.f32 %v8308, %v8808
  %v8810 = vpop.f32.mrb[0].mxu0
  %8811 = vmatprep.mubr.f32.mxu0 0.0
  %v8812 = vand.u32 %v7194, 4294901760
  %v8813 = vsub.f32 %v7194, %v8812
  %8814 = vmatmul.mubr.f32.gmra.mrb[0].mxu0 %v8813
  %v8815 = vpop.f32.mrb[0].mxu0
  %v8816 = vadd.f32 %v8314, %v8815
  %v8817 = vpop.f32.mrb[0].mxu0
  %8818 = vmatprep.mubr.f32.mxu0 0.0
  %v8819 = vand.u32 %v7197, 4294901760
  %v8820 = vsub.f32 %v7197, %v8819
  %8821 = vmatmul.mubr.f32.gmra.mrb[0].mxu0 %v8820
  %v8822 = vpop.f32.mrb[0].mxu0
  %v8823 = vadd.f32 %v8320, %v8822
  %v8824 = vpop.f32.mrb[0].mxu0
  %8825 = vmatprep.mubr.f32.mxu0 0.0
  %v8826 = vand.u32 %v7200, 4294901760
  %v8827 = vsub.f32 %v7200, %v8826
  %8828 = vmatmul.mubr.f32.gmra.mrb[0].mxu0 %v8827
  %v8829 = vpop.f32.mrb[0].mxu0
  %v8830 = vadd.f32 %v8326, %v8829
  %v8831 = vpop.f32.mrb[0].mxu0
  %8832 = vmatprep.mubr.f32.mxu0 0.0
  %v8833 = vand.u32 %v7203, 4294901760
  %v8834 = vsub.f32 %v7203, %v8833
  %8835 = vmatmul.mubr.f32.gmra.mrb[0].mxu0 %v8834
  %v8836 = vpop.f32.mrb[0].mxu0
  %v8837 = vadd.f32 %v8332, %v8836
  %v8838 = vpop.f32.mrb[0].mxu0
  %8839 = vmatprep.mubr.f32.mxu0 0.0
  %v8840 = vand.u32 %v7206, 4294901760
  %v8841 = vsub.f32 %v7206, %v8840
  %8842 = vmatmul.mubr.f32.gmra.mrb[0].mxu0 %v8841
  %v8843 = vpop.f32.mrb[0].mxu0
  %v8844 = vadd.f32 %v8338, %v8843
  %v8845 = vpop.f32.mrb[0].mxu0
  %8846 = vmatprep.mubr.f32.mxu0 0.0
  %v8847 = vand.u32 %v7209, 4294901760
  %v8848 = vsub.f32 %v7209, %v8847
  %8849 = vmatmul.mubr.f32.gmra.mrb[0].mxu0 %v8848
  %v8850 = vpop.f32.mrb[0].mxu0
  %v8851 = vadd.f32 %v8344, %v8850
  %v8852 = vpop.f32.mrb[0].mxu0
  %8853 = vmatprep.mubr.f32.mxu0 0.0
  %v8854 = vand.u32 %v7212, 4294901760
  %v8855 = vsub.f32 %v7212, %v8854
  %8856 = vmatmul.mubr.f32.gmra.mrb[0].mxu0 %v8855
  %v8857 = vpop.f32.mrb[0].mxu0
  %v8858 = vadd.f32 %v8350, %v8857
  %v8859 = vpop.f32.mrb[0].mxu0
  %8860 = vmatprep.mubr.f32.mxu0 0.0
  %v8861 = vand.u32 %v7215, 4294901760
  %v8862 = vsub.f32 %v7215, %v8861
  %8863 = vmatmul.mubr.f32.gmra.mrb[0].mxu0 %v8862
  %v8864 = vpop.f32.mrb[0].mxu0
  %v8865 = vadd.f32 %v8356, %v8864
  %v8866 = vpop.f32.mrb[0].mxu0
  %8867 = vmatprep.mubr.f32.mxu0 0.0
  %v8868 = vand.u32 %v7218, 4294901760
  %v8869 = vsub.f32 %v7218, %v8868
  %8870 = vmatmul.mubr.f32.gmra.mrb[0].mxu0 %v8869
  %v8871 = vpop.f32.mrb[0].mxu0
  %v8872 = vadd.f32 %v8362, %v8871
  %v8873 = vpop.f32.mrb[0].mxu0
  %8874 = vmatprep.mubr.f32.mxu0 0.0
  %v8875 = vand.u32 %v7221, 4294901760
  %v8876 = vsub.f32 %v7221, %v8875
  %8877 = vmatmul.mubr.f32.gmra.mrb[0].mxu0 %v8876
  %v8878 = vpop.f32.mrb[0].mxu0
  %v8879 = vadd.f32 %v8368, %v8878
  %v8880 = vpop.f32.mrb[0].mxu0
  %8881 = vmatprep.mubr.f32.mxu0 0.0
  %v8882 = vand.u32 %v7224, 4294901760
  %v8883 = vsub.f32 %v7224, %v8882
  %8884 = vmatmul.mubr.f32.gmra.mrb[0].mxu0 %v8883
  %v8885 = vpop.f32.mrb[0].mxu0
  %v8886 = vadd.f32 %v8374, %v8885
  %v8887 = vpop.f32.mrb[0].mxu0
  %8888 = vmatprep.mubr.f32.mxu0 0.0
  %v8889 = vand.u32 %v7227, 4294901760
  %v8890 = vsub.f32 %v7227, %v8889
  %8891 = vmatmul.mubr.f32.gmra.mrb[0].mxu0 %v8890
  %v8892 = vpop.f32.mrb[0].mxu0
  %v8893 = vadd.f32 %v8380, %v8892
  %v8894 = vpop.f32.mrb[0].mxu0
  %8895 = vmatprep.mubr.f32.mxu0 0.0
  %v8896 = vand.u32 %v7230, 4294901760
  %v8897 = vsub.f32 %v7230, %v8896
  %8898 = vmatmul.mubr.f32.gmra.mrb[0].mxu0 %v8897
  %v8899 = vpop.f32.mrb[0].mxu0
  %v8900 = vadd.f32 %v8386, %v8899
  %v8901 = vpop.f32.mrb[0].mxu0
  %8902 = vmatprep.mubr.f32.mxu0 0.0
  %v8903 = vand.u32 %v7233, 4294901760
  %v8904 = vsub.f32 %v7233, %v8903
  %8905 = vmatmul.mubr.f32.gmra.mrb[0].mxu0 %v8904
  %v8906 = vpop.f32.mrb[0].mxu0
  %v8907 = vadd.f32 %v8392, %v8906
  %v8908 = vpop.f32.mrb[0].mxu0
  %8909 = vmatprep.mubr.f32.mxu0 0.0
  %v8910 = vand.u32 %v7236, 4294901760
  %v8911 = vsub.f32 %v7236, %v8910
  %8912 = vmatmul.mubr.f32.gmra.mrb[0].mxu0 %v8911
  %v8913 = vpop.f32.mrb[0].mxu0
  %v8914 = vadd.f32 %v8398, %v8913
  %v8915 = vpop.f32.mrb[0].mxu0
  %8916 = vmatprep.mubr.f32.mxu0 0.0
  %v8917 = vand.u32 %v7239, 4294901760
  %v8918 = vsub.f32 %v7239, %v8917
  %8919 = vmatmul.mubr.f32.gmra.mrb[0].mxu0 %v8918
  %v8920 = vpop.f32.mrb[0].mxu0
  %v8921 = vadd.f32 %v8404, %v8920
  %v8922 = vpop.f32.mrb[0].mxu0
  %8923 = vmatprep.mubr.f32.mxu0 0.0
  %v8924 = vand.u32 %v7242, 4294901760
  %v8925 = vsub.f32 %v7242, %v8924
  %8926 = vmatmul.mubr.f32.gmra.mrb[0].mxu0 %v8925
  %v8927 = vpop.f32.mrb[0].mxu0
  %v8928 = vadd.f32 %v8410, %v8927
  %v8929 = vpop.f32.mrb[0].mxu0
  %8930 = vmatprep.mubr.f32.mxu0 0.0
  %v8931 = vand.u32 %v7245, 4294901760
  %v8932 = vsub.f32 %v7245, %v8931
  %8933 = vmatmul.mubr.f32.gmra.mrb[0].mxu0 %v8932
  %v8934 = vpop.f32.mrb[0].mxu0
  %v8935 = vadd.f32 %v8416, %v8934
  %v8936 = vpop.f32.mrb[0].mxu0
  %8937 = vmatprep.mubr.f32.mxu0 0.0
  %v8938 = vand.u32 %v7248, 4294901760
  %v8939 = vsub.f32 %v7248, %v8938
  %8940 = vmatmul.mubr.f32.gmra.mrb[0].mxu0 %v8939
  %v8941 = vpop.f32.mrb[0].mxu0
  %v8942 = vadd.f32 %v8422, %v8941
  %v8943 = vpop.f32.mrb[0].mxu0
  %8944 = vmatprep.mubr.f32.mxu0 0.0
  %v8945 = vand.u32 %v7251, 4294901760
  %v8946 = vsub.f32 %v7251, %v8945
  %8947 = vmatmul.mubr.f32.gmra.mrb[0].mxu0 %v8946
  %v8948 = vpop.f32.mrb[0].mxu0
  %v8949 = vadd.f32 %v8428, %v8948
  %v8950 = vpop.f32.mrb[0].mxu0
  %8951 = vmatprep.mubr.f32.mxu0 0.0
  %v8952 = vand.u32 %v7254, 4294901760
  %v8953 = vsub.f32 %v7254, %v8952
  %8954 = vmatmul.mubr.f32.gmra.mrb[0].mxu0 %v8953
  %v8955 = vpop.f32.mrb[0].mxu0
  %v8956 = vadd.f32 %v8434, %v8955
  %v8957 = vpop.f32.mrb[0].mxu0
  %8958 = vmatprep.mubr.f32.mxu0 0.0
  %v8959 = vand.u32 %v7257, 4294901760
  %v8960 = vsub.f32 %v7257, %v8959
  %8961 = vmatmul.mubr.f32.gmra.mrb[0].mxu0 %v8960
  %v8962 = vpop.f32.mrb[0].mxu0
  %v8963 = vadd.f32 %v8440, %v8962
  %v8964 = vpop.f32.mrb[0].mxu0
  %8965 = vmatprep.mubr.f32.mxu0 0.0
  %v8966 = vand.u32 %v7260, 4294901760
  %v8967 = vsub.f32 %v7260, %v8966
  %8968 = vmatmul.mubr.f32.gmra.mrb[0].mxu0 %v8967
  %v8969 = vpop.f32.mrb[0].mxu0
  %v8970 = vadd.f32 %v8446, %v8969
  %v8971 = vpop.f32.mrb[0].mxu0
  %8972 = vmatprep.mubr.f32.mxu0 0.0
  %v8973 = vand.u32 %v7263, 4294901760
  %v8974 = vsub.f32 %v7263, %v8973
  %8975 = vmatmul.mubr.f32.gmra.mrb[0].mxu0 %v8974
  %v8976 = vpop.f32.mrb[0].mxu0
  %v8977 = vadd.f32 %v8452, %v8976
  %v8978 = vpop.f32.mrb[0].mxu0
  %8979 = vmatprep.mubr.f32.mxu0 0.0
  %v8980 = vand.u32 %v7266, 4294901760
  %v8981 = vsub.f32 %v7266, %v8980
  %8982 = vmatmul.mubr.f32.gmra.mrb[0].mxu0 %v8981
  %v8983 = vpop.f32.mrb[0].mxu0
  %v8984 = vadd.f32 %v8458, %v8983
  %v8985 = vpop.f32.mrb[0].mxu0
  %8986 = vmatprep.mubr.f32.mxu0 0.0
  %v8987 = vand.u32 %v7269, 4294901760
  %v8988 = vsub.f32 %v7269, %v8987
  %8989 = vmatmul.mubr.f32.gmra.mrb[0].mxu0 %v8988
  %v8990 = vpop.f32.mrb[0].mxu0
  %v8991 = vadd.f32 %v8464, %v8990
  %v8992 = vpop.f32.mrb[0].mxu0
  %8993 = vmatprep.mubr.f32.mxu0 0.0
  %v8994 = vand.u32 %v7272, 4294901760
  %v8995 = vsub.f32 %v7272, %v8994
  %8996 = vmatmul.mubr.f32.gmra.mrb[0].mxu0 %v8995
  %v8997 = vpop.f32.mrb[0].mxu0
  %v8998 = vadd.f32 %v8470, %v8997
  %v8999 = vpop.f32.mrb[0].mxu0
  %9000 = vmatprep.mubr.f32.mxu0 0.0
  %v9001 = vand.u32 %v7275, 4294901760
  %v9002 = vsub.f32 %v7275, %v9001
  %9003 = vmatmul.mubr.f32.gmra.mrb[0].mxu0 %v9002
  %v9004 = vpop.f32.mrb[0].mxu0
  %v9005 = vadd.f32 %v8476, %v9004
  %v9006 = vpop.f32.mrb[0].mxu0
  %9007 = vdwg.mxu0
  %9008 = vmatprep.subr.mxu0 0.0
  %v9009 = vand.u32 %v7070, 4294901760
  %9010 = vmatpush1.msra.mxu0 %v9009
  %9011 = vmatprep.subr.mxu0 0.0
  %v9012 = vand.u32 %v7071, 4294901760
  %9013 = vmatpush1.msra.mxu0 %v9012
  %9014 = vmatprep.subr.mxu0 0.0
  %v9015 = vand.u32 %v7072, 4294901760
  %9016 = vmatpush1.msra.mxu0 %v9015
  %9017 = vmatprep.subr.mxu0 0.0
  %v9018 = vand.u32 %v7073, 4294901760
  %9019 = vmatpush1.msra.mxu0 %v9018
  %9020 = vmatprep.subr.mxu0 0.0
  %v9021 = vand.u32 %v7074, 4294901760
  %9022 = vmatpush1.msra.mxu0 %v9021
  %9023 = vmatprep.subr.mxu0 0.0
  %v9024 = vand.u32 %v7075, 4294901760
  %9025 = vmatpush1.msra.mxu0 %v9024
  %9026 = vmatprep.subr.mxu0 0.0
  %v9027 = vand.u32 %v7076, 4294901760
  %9028 = vmatpush1.msra.mxu0 %v9027
  %9029 = vmatprep.subr.mxu0 0.0
  %v9030 = vand.u32 %v7077, 4294901760
  %9031 = vmatpush1.msra.mxu0 %v9030
  %9032 = vmatprep.subr.mxu0 0.0
  %9033 = vmatpush1.msra.mxu0 0.0
  %9034 = vmatprep.subr.mxu0 0.0
  %9035 = vmatpush1.msra.mxu0 0.0
  %9036 = vmatprep.subr.mxu0 0.0
  %9037 = vmatpush1.msra.mxu0 0.0
  %9038 = vmatprep.subr.mxu0 0.0
  %9039 = vmatpush1.msra.mxu0 0.0
  %9040 = vmatprep.subr.mxu0 0.0
  %9041 = vmatpush1.msra.mxu0 0.0
  %9042 = vmatprep.subr.mxu0 0.0
  %9043 = vmatpush1.msra.mxu0 0.0
  %9044 = vmatprep.subr.mxu0 0.0
  %9045 = vmatpush1.msra.mxu0 0.0
  %9046 = vmatprep.subr.mxu0 0.0
  %9047 = vmatpush1.msra.mxu0 0.0
  %9048 = vmatprep.subr.mxu0 0.0
  %9049 = vmatpush1.msra.mxu0 0.0
  %9050 = vmatprep.subr.mxu0 0.0
  %9051 = vmatpush1.msra.mxu0 0.0
  %9052 = vmatprep.subr.mxu0 0.0
  %9053 = vmatpush1.msra.mxu0 0.0
  %9054 = vmatprep.subr.mxu0 0.0
  %9055 = vmatpush1.msra.mxu0 0.0
  %9056 = vmatprep.subr.mxu0 0.0
  %9057 = vmatpush1.msra.mxu0 0.0
  %9058 = vmatprep.subr.mxu0 0.0
  %9059 = vmatpush1.msra.mxu0 0.0
  %9060 = vmatprep.subr.mxu0 0.0
  %9061 = vmatpush1.msra.mxu0 0.0
  %9062 = vmatprep.subr.mxu0 0.0
  %9063 = vmatpush1.msra.mxu0 0.0
  %9064 = vmatprep.subr.mxu0 0.0
  %9065 = vmatpush1.msra.mxu0 0.0
  %9066 = vmatprep.subr.mxu0 0.0
  %9067 = vmatpush1.msra.mxu0 0.0
  %9068 = vmatprep.subr.mxu0 0.0
  %9069 = vmatpush1.msra.mxu0 0.0
  %9070 = vmatprep.subr.mxu0 0.0
  %9071 = vmatpush1.msra.mxu0 0.0
  %9072 = vmatprep.subr.mxu0 0.0
  %9073 = vmatpush1.msra.mxu0 0.0
  %9074 = vmatprep.subr.mxu0 0.0
  %9075 = vmatpush1.msra.mxu0 0.0
  %9076 = vmatprep.subr.mxu0 0.0
  %9077 = vmatpush1.msra.mxu0 0.0
  %9078 = vmatprep.subr.mxu0 0.0
  %9079 = vmatpush1.msra.mxu0 0.0
  %9080 = vmatprep.mubr.f32.mxu0 0.0
  %v9081 = vand.u32 %v7086, 4294901760
  %v9082 = vsub.f32 %v7086, %v9081
  %v9083 = vand.u32 %v9082, 4294901760
  %9084 = vmatmul.mubr.f32.gmra.mrb[0].mxu0 %v9083
  %v9085 = vpop.f32.mrb[0].mxu0
  %v9086 = vadd.f32 %v8564, %v9085
  %v9087 = vpop.f32.mrb[0].mxu0
  %9088 = vmatprep.mubr.f32.mxu0 0.0
  %v9089 = vand.u32 %v7089, 4294901760
  %v9090 = vsub.f32 %v7089, %v9089
  %v9091 = vand.u32 %v9090, 4294901760
  %9092 = vmatmul.mubr.f32.gmra.mrb[0].mxu0 %v9091
  %v9093 = vpop.f32.mrb[0].mxu0
  %v9094 = vadd.f32 %v8571, %v9093
  %v9095 = vpop.f32.mrb[0].mxu0
  %9096 = vmatprep.mubr.f32.mxu0 0.0
  %v9097 = vand.u32 %v7092, 4294901760
  %v9098 = vsub.f32 %v7092, %v9097
  %v9099 = vand.u32 %v9098, 4294901760
  %9100 = vmatmul.mubr.f32.gmra.mrb[0].mxu0 %v9099
  %v9101 = vpop.f32.mrb[0].mxu0
  %v9102 = vadd.f32 %v8578, %v9101
  %v9103 = vpop.f32.mrb[0].mxu0
  %9104 = vmatprep.mubr.f32.mxu0 0.0
  %v9105 = vand.u32 %v7095, 4294901760
  %v9106 = vsub.f32 %v7095, %v9105
  %v9107 = vand.u32 %v9106, 4294901760
  %9108 = vmatmul.mubr.f32.gmra.mrb[0].mxu0 %v9107
  %v9109 = vpop.f32.mrb[0].mxu0
  %v9110 = vadd.f32 %v8585, %v9109
  %v9111 = vpop.f32.mrb[0].mxu0
  %9112 = vmatprep.mubr.f32.mxu0 0.0
  %v9113 = vand.u32 %v7098, 4294901760
  %v9114 = vsub.f32 %v7098, %v9113
  %v9115 = vand.u32 %v9114, 4294901760
  %9116 = vmatmul.mubr.f32.gmra.mrb[0].mxu0 %v9115
  %v9117 = vpop.f32.mrb[0].mxu0
  %v9118 = vadd.f32 %v8592, %v9117
  %v9119 = vpop.f32.mrb[0].mxu0
  %9120 = vmatprep.mubr.f32.mxu0 0.0
  %v9121 = vand.u32 %v7101, 4294901760
  %v9122 = vsub.f32 %v7101, %v9121
  %v9123 = vand.u32 %v9122, 4294901760
  %9124 = vmatmul.mubr.f32.gmra.mrb[0].mxu0 %v9123
  %v9125 = vpop.f32.mrb[0].mxu0
  %v9126 = vadd.f32 %v8599, %v9125
  %v9127 = vpop.f32.mrb[0].mxu0
  %9128 = vmatprep.mubr.f32.mxu0 0.0
  %v9129 = vand.u32 %v7104, 4294901760
  %v9130 = vsub.f32 %v7104, %v9129
  %v9131 = vand.u32 %v9130, 4294901760
  %9132 = vmatmul.mubr.f32.gmra.mrb[0].mxu0 %v9131
  %v9133 = vpop.f32.mrb[0].mxu0
  %v9134 = vadd.f32 %v8606, %v9133
  %v9135 = vpop.f32.mrb[0].mxu0
  %9136 = vmatprep.mubr.f32.mxu0 0.0
  %v9137 = vand.u32 %v7107, 4294901760
  %v9138 = vsub.f32 %v7107, %v9137
  %v9139 = vand.u32 %v9138, 4294901760
  %9140 = vmatmul.mubr.f32.gmra.mrb[0].mxu0 %v9139
  %v9141 = vpop.f32.mrb[0].mxu0
  %v9142 = vadd.f32 %v8613, %v9141
  %v9143 = vpop.f32.mrb[0].mxu0
  %9144 = vmatprep.mubr.f32.mxu0 0.0
  %v9145 = vand.u32 %v7110, 4294901760
  %v9146 = vsub.f32 %v7110, %v9145
  %v9147 = vand.u32 %v9146, 4294901760
  %9148 = vmatmul.mubr.f32.gmra.mrb[0].mxu0 %v9147
  %v9149 = vpop.f32.mrb[0].mxu0
  %v9150 = vadd.f32 %v8620, %v9149
  %v9151 = vpop.f32.mrb[0].mxu0
  %9152 = vmatprep.mubr.f32.mxu0 0.0
  %v9153 = vand.u32 %v7113, 4294901760
  %v9154 = vsub.f32 %v7113, %v9153
  %v9155 = vand.u32 %v9154, 4294901760
  %9156 = vmatmul.mubr.f32.gmra.mrb[0].mxu0 %v9155
  %v9157 = vpop.f32.mrb[0].mxu0
  %v9158 = vadd.f32 %v8627, %v9157
  %v9159 = vpop.f32.mrb[0].mxu0
  %9160 = vmatprep.mubr.f32.mxu0 0.0
  %v9161 = vand.u32 %v7116, 4294901760
  %v9162 = vsub.f32 %v7116, %v9161
  %v9163 = vand.u32 %v9162, 4294901760
  %9164 = vmatmul.mubr.f32.gmra.mrb[0].mxu0 %v9163
  %v9165 = vpop.f32.mrb[0].mxu0
  %v9166 = vadd.f32 %v8634, %v9165
  %v9167 = vpop.f32.mrb[0].mxu0
  %9168 = vmatprep.mubr.f32.mxu0 0.0
  %v9169 = vand.u32 %v7119, 4294901760
  %v9170 = vsub.f32 %v7119, %v9169
  %v9171 = vand.u32 %v9170, 4294901760
  %9172 = vmatmul.mubr.f32.gmra.mrb[0].mxu0 %v9171
  %v9173 = vpop.f32.mrb[0].mxu0
  %v9174 = vadd.f32 %v8641, %v9173
  %v9175 = vpop.f32.mrb[0].mxu0
  %9176 = vmatprep.mubr.f32.mxu0 0.0
  %v9177 = vand.u32 %v7122, 4294901760
  %v9178 = vsub.f32 %v7122, %v9177
  %v9179 = vand.u32 %v9178, 4294901760
  %9180 = vmatmul.mubr.f32.gmra.mrb[0].mxu0 %v9179
  %v9181 = vpop.f32.mrb[0].mxu0
  %v9182 = vadd.f32 %v8648, %v9181
  %v9183 = vpop.f32.mrb[0].mxu0
  %9184 = vmatprep.mubr.f32.mxu0 0.0
  %v9185 = vand.u32 %v7125, 4294901760
  %v9186 = vsub.f32 %v7125, %v9185
  %v9187 = vand.u32 %v9186, 4294901760
  %9188 = vmatmul.mubr.f32.gmra.mrb[0].mxu0 %v9187
  %v9189 = vpop.f32.mrb[0].mxu0
  %v9190 = vadd.f32 %v8655, %v9189
  %v9191 = vpop.f32.mrb[0].mxu0
  %9192 = vmatprep.mubr.f32.mxu0 0.0
  %v9193 = vand.u32 %v7128, 4294901760
  %v9194 = vsub.f32 %v7128, %v9193
  %v9195 = vand.u32 %v9194, 4294901760
  %9196 = vmatmul.mubr.f32.gmra.mrb[0].mxu0 %v9195
  %v9197 = vpop.f32.mrb[0].mxu0
  %v9198 = vadd.f32 %v8662, %v9197
  %v9199 = vpop.f32.mrb[0].mxu0
  %9200 = vmatprep.mubr.f32.mxu0 0.0
  %v9201 = vand.u32 %v7131, 4294901760
  %v9202 = vsub.f32 %v7131, %v9201
  %v9203 = vand.u32 %v9202, 4294901760
  %9204 = vmatmul.mubr.f32.gmra.mrb[0].mxu0 %v9203
  %v9205 = vpop.f32.mrb[0].mxu0
  %v9206 = vadd.f32 %v8669, %v9205
  %v9207 = vpop.f32.mrb[0].mxu0
  %9208 = vmatprep.mubr.f32.mxu0 0.0
  %v9209 = vand.u32 %v7134, 4294901760
  %v9210 = vsub.f32 %v7134, %v9209
  %v9211 = vand.u32 %v9210, 4294901760
  %9212 = vmatmul.mubr.f32.gmra.mrb[0].mxu0 %v9211
  %v9213 = vpop.f32.mrb[0].mxu0
  %v9214 = vadd.f32 %v8676, %v9213
  %v9215 = vpop.f32.mrb[0].mxu0
  %9216 = vmatprep.mubr.f32.mxu0 0.0
  %v9217 = vand.u32 %v7137, 4294901760
  %v9218 = vsub.f32 %v7137, %v9217
  %v9219 = vand.u32 %v9218, 4294901760
  %9220 = vmatmul.mubr.f32.gmra.mrb[0].mxu0 %v9219
  %v9221 = vpop.f32.mrb[0].mxu0
  %v9222 = vadd.f32 %v8683, %v9221
  %v9223 = vpop.f32.mrb[0].mxu0
  %9224 = vmatprep.mubr.f32.mxu0 0.0
  %v9225 = vand.u32 %v7140, 4294901760
  %v9226 = vsub.f32 %v7140, %v9225
  %v9227 = vand.u32 %v9226, 4294901760
  %9228 = vmatmul.mubr.f32.gmra.mrb[0].mxu0 %v9227
  %v9229 = vpop.f32.mrb[0].mxu0
  %v9230 = vadd.f32 %v8690, %v9229
  %v9231 = vpop.f32.mrb[0].mxu0
  %9232 = vmatprep.mubr.f32.mxu0 0.0
  %v9233 = vand.u32 %v7143, 4294901760
  %v9234 = vsub.f32 %v7143, %v9233
  %v9235 = vand.u32 %v9234, 4294901760
  %9236 = vmatmul.mubr.f32.gmra.mrb[0].mxu0 %v9235
  %v9237 = vpop.f32.mrb[0].mxu0
  %v9238 = vadd.f32 %v8697, %v9237
  %v9239 = vpop.f32.mrb[0].mxu0
  %9240 = vmatprep.mubr.f32.mxu0 0.0
  %v9241 = vand.u32 %v7146, 4294901760
  %v9242 = vsub.f32 %v7146, %v9241
  %v9243 = vand.u32 %v9242, 4294901760
  %9244 = vmatmul.mubr.f32.gmra.mrb[0].mxu0 %v9243
  %v9245 = vpop.f32.mrb[0].mxu0
  %v9246 = vadd.f32 %v8704, %v9245
  %v9247 = vpop.f32.mrb[0].mxu0
  %9248 = vmatprep.mubr.f32.mxu0 0.0
  %v9249 = vand.u32 %v7149, 4294901760
  %v9250 = vsub.f32 %v7149, %v9249
  %v9251 = vand.u32 %v9250, 4294901760
  %9252 = vmatmul.mubr.f32.gmra.mrb[0].mxu0 %v9251
  %v9253 = vpop.f32.mrb[0].mxu0
  %v9254 = vadd.f32 %v8711, %v9253
  %v9255 = vpop.f32.mrb[0].mxu0
  %9256 = vmatprep.mubr.f32.mxu0 0.0
  %v9257 = vand.u32 %v7152, 4294901760
  %v9258 = vsub.f32 %v7152, %v9257
  %v9259 = vand.u32 %v9258, 4294901760
  %9260 = vmatmul.mubr.f32.gmra.mrb[0].mxu0 %v9259
  %v9261 = vpop.f32.mrb[0].mxu0
  %v9262 = vadd.f32 %v8718, %v9261
  %v9263 = vpop.f32.mrb[0].mxu0
  %9264 = vmatprep.mubr.f32.mxu0 0.0
  %v9265 = vand.u32 %v7155, 4294901760
  %v9266 = vsub.f32 %v7155, %v9265
  %v9267 = vand.u32 %v9266, 4294901760
  %9268 = vmatmul.mubr.f32.gmra.mrb[0].mxu0 %v9267
  %v9269 = vpop.f32.mrb[0].mxu0
  %v9270 = vadd.f32 %v8725, %v9269
  %v9271 = vpop.f32.mrb[0].mxu0
  %9272 = vmatprep.mubr.f32.mxu0 0.0
  %v9273 = vand.u32 %v7158, 4294901760
  %v9274 = vsub.f32 %v7158, %v9273
  %v9275 = vand.u32 %v9274, 4294901760
  %9276 = vmatmul.mubr.f32.gmra.mrb[0].mxu0 %v9275
  %v9277 = vpop.f32.mrb[0].mxu0
  %v9278 = vadd.f32 %v8732, %v9277
  %v9279 = vpop.f32.mrb[0].mxu0
  %9280 = vmatprep.mubr.f32.mxu0 0.0
  %v9281 = vand.u32 %v7161, 4294901760
  %v9282 = vsub.f32 %v7161, %v9281
  %v9283 = vand.u32 %v9282, 4294901760
  %9284 = vmatmul.mubr.f32.gmra.mrb[0].mxu0 %v9283
  %v9285 = vpop.f32.mrb[0].mxu0
  %v9286 = vadd.f32 %v8739, %v9285
  %v9287 = vpop.f32.mrb[0].mxu0
  %9288 = vmatprep.mubr.f32.mxu0 0.0
  %v9289 = vand.u32 %v7164, 4294901760
  %v9290 = vsub.f32 %v7164, %v9289
  %v9291 = vand.u32 %v9290, 4294901760
  %9292 = vmatmul.mubr.f32.gmra.mrb[0].mxu0 %v9291
  %v9293 = vpop.f32.mrb[0].mxu0
  %v9294 = vadd.f32 %v8746, %v9293
  %v9295 = vpop.f32.mrb[0].mxu0
  %9296 = vmatprep.mubr.f32.mxu0 0.0
  %v9297 = vand.u32 %v7167, 4294901760
  %v9298 = vsub.f32 %v7167, %v9297
  %v9299 = vand.u32 %v9298, 4294901760
  %9300 = vmatmul.mubr.f32.gmra.mrb[0].mxu0 %v9299
  %v9301 = vpop.f32.mrb[0].mxu0
  %v9302 = vadd.f32 %v8753, %v9301
  %v9303 = vpop.f32.mrb[0].mxu0
  %9304 = vmatprep.mubr.f32.mxu0 0.0
  %v9305 = vand.u32 %v7170, 4294901760
  %v9306 = vsub.f32 %v7170, %v9305
  %v9307 = vand.u32 %v9306, 4294901760
  %9308 = vmatmul.mubr.f32.gmra.mrb[0].mxu0 %v9307
  %v9309 = vpop.f32.mrb[0].mxu0
  %v9310 = vadd.f32 %v8760, %v9309
  %v9311 = vpop.f32.mrb[0].mxu0
  %9312 = vmatprep.mubr.f32.mxu0 0.0
  %v9313 = vand.u32 %v7173, 4294901760
  %v9314 = vsub.f32 %v7173, %v9313
  %v9315 = vand.u32 %v9314, 4294901760
  %9316 = vmatmul.mubr.f32.gmra.mrb[0].mxu0 %v9315
  %v9317 = vpop.f32.mrb[0].mxu0
  %v9318 = vadd.f32 %v8767, %v9317
  %v9319 = vpop.f32.mrb[0].mxu0
  %9320 = vmatprep.mubr.f32.mxu0 0.0
  %v9321 = vand.u32 %v7176, 4294901760
  %v9322 = vsub.f32 %v7176, %v9321
  %v9323 = vand.u32 %v9322, 4294901760
  %9324 = vmatmul.mubr.f32.gmra.mrb[0].mxu0 %v9323
  %v9325 = vpop.f32.mrb[0].mxu0
  %v9326 = vadd.f32 %v8774, %v9325
  %v9327 = vpop.f32.mrb[0].mxu0
  %9328 = vmatprep.mubr.f32.mxu0 0.0
  %v9329 = vand.u32 %v7179, 4294901760
  %v9330 = vsub.f32 %v7179, %v9329
  %v9331 = vand.u32 %v9330, 4294901760
  %9332 = vmatmul.mubr.f32.gmra.mrb[0].mxu0 %v9331
  %v9333 = vpop.f32.mrb[0].mxu0
  %v9334 = vadd.f32 %v8781, %v9333
  %v9335 = vpop.f32.mrb[0].mxu0
  %9336 = vmatprep.mubr.f32.mxu0 0.0
  %v9337 = vand.u32 %v7182, 4294901760
  %v9338 = vsub.f32 %v7182, %v9337
  %v9339 = vand.u32 %v9338, 4294901760
  %9340 = vmatmul.mubr.f32.gmra.mrb[0].mxu0 %v9339
  %v9341 = vpop.f32.mrb[0].mxu0
  %v9342 = vadd.f32 %v8788, %v9341
  %v9343 = vpop.f32.mrb[0].mxu0
  %9344 = vmatprep.mubr.f32.mxu0 0.0
  %v9345 = vand.u32 %v7185, 4294901760
  %v9346 = vsub.f32 %v7185, %v9345
  %v9347 = vand.u32 %v9346, 4294901760
  %9348 = vmatmul.mubr.f32.gmra.mrb[0].mxu0 %v9347
  %v9349 = vpop.f32.mrb[0].mxu0
  %v9350 = vadd.f32 %v8795, %v9349
  %v9351 = vpop.f32.mrb[0].mxu0
  %9352 = vmatprep.mubr.f32.mxu0 0.0
  %v9353 = vand.u32 %v7188, 4294901760
  %v9354 = vsub.f32 %v7188, %v9353
  %v9355 = vand.u32 %v9354, 4294901760
  %9356 = vmatmul.mubr.f32.gmra.mrb[0].mxu0 %v9355
  %v9357 = vpop.f32.mrb[0].mxu0
  %v9358 = vadd.f32 %v8802, %v9357
  %v9359 = vpop.f32.mrb[0].mxu0
  %9360 = vmatprep.mubr.f32.mxu0 0.0
  %v9361 = vand.u32 %v7191, 4294901760
  %v9362 = vsub.f32 %v7191, %v9361
  %v9363 = vand.u32 %v9362, 4294901760
  %9364 = vmatmul.mubr.f32.gmra.mrb[0].mxu0 %v9363
  %v9365 = vpop.f32.mrb[0].mxu0
  %v9366 = vadd.f32 %v8809, %v9365
  %v9367 = vpop.f32.mrb[0].mxu0
  %9368 = vmatprep.mubr.f32.mxu0 0.0
  %v9369 = vand.u32 %v7194, 4294901760
  %v9370 = vsub.f32 %v7194, %v9369
  %v9371 = vand.u32 %v9370, 4294901760
  %9372 = vmatmul.mubr.f32.gmra.mrb[0].mxu0 %v9371
  %v9373 = vpop.f32.mrb[0].mxu0
  %v9374 = vadd.f32 %v8816, %v9373
  %v9375 = vpop.f32.mrb[0].mxu0
  %9376 = vmatprep.mubr.f32.mxu0 0.0
  %v9377 = vand.u32 %v7197, 4294901760
  %v9378 = vsub.f32 %v7197, %v9377
  %v9379 = vand.u32 %v9378, 4294901760
  %9380 = vmatmul.mubr.f32.gmra.mrb[0].mxu0 %v9379
  %v9381 = vpop.f32.mrb[0].mxu0
  %v9382 = vadd.f32 %v8823, %v9381
  %v9383 = vpop.f32.mrb[0].mxu0
  %9384 = vmatprep.mubr.f32.mxu0 0.0
  %v9385 = vand.u32 %v7200, 4294901760
  %v9386 = vsub.f32 %v7200, %v9385
  %v9387 = vand.u32 %v9386, 4294901760
  %9388 = vmatmul.mubr.f32.gmra.mrb[0].mxu0 %v9387
  %v9389 = vpop.f32.mrb[0].mxu0
  %v9390 = vadd.f32 %v8830, %v9389
  %v9391 = vpop.f32.mrb[0].mxu0
  %9392 = vmatprep.mubr.f32.mxu0 0.0
  %v9393 = vand.u32 %v7203, 4294901760
  %v9394 = vsub.f32 %v7203, %v9393
  %v9395 = vand.u32 %v9394, 4294901760
  %9396 = vmatmul.mubr.f32.gmra.mrb[0].mxu0 %v9395
  %v9397 = vpop.f32.mrb[0].mxu0
  %v9398 = vadd.f32 %v8837, %v9397
  %v9399 = vpop.f32.mrb[0].mxu0
  %9400 = vmatprep.mubr.f32.mxu0 0.0
  %v9401 = vand.u32 %v7206, 4294901760
  %v9402 = vsub.f32 %v7206, %v9401
  %v9403 = vand.u32 %v9402, 4294901760
  %9404 = vmatmul.mubr.f32.gmra.mrb[0].mxu0 %v9403
  %v9405 = vpop.f32.mrb[0].mxu0
  %v9406 = vadd.f32 %v8844, %v9405
  %v9407 = vpop.f32.mrb[0].mxu0
  %9408 = vmatprep.mubr.f32.mxu0 0.0
  %v9409 = vand.u32 %v7209, 4294901760
  %v9410 = vsub.f32 %v7209, %v9409
  %v9411 = vand.u32 %v9410, 4294901760
  %9412 = vmatmul.mubr.f32.gmra.mrb[0].mxu0 %v9411
  %v9413 = vpop.f32.mrb[0].mxu0
  %v9414 = vadd.f32 %v8851, %v9413
  %v9415 = vpop.f32.mrb[0].mxu0
  %9416 = vmatprep.mubr.f32.mxu0 0.0
  %v9417 = vand.u32 %v7212, 4294901760
  %v9418 = vsub.f32 %v7212, %v9417
  %v9419 = vand.u32 %v9418, 4294901760
  %9420 = vmatmul.mubr.f32.gmra.mrb[0].mxu0 %v9419
  %v9421 = vpop.f32.mrb[0].mxu0
  %v9422 = vadd.f32 %v8858, %v9421
  %v9423 = vpop.f32.mrb[0].mxu0
  %9424 = vmatprep.mubr.f32.mxu0 0.0
  %v9425 = vand.u32 %v7215, 4294901760
  %v9426 = vsub.f32 %v7215, %v9425
  %v9427 = vand.u32 %v9426, 4294901760
  %9428 = vmatmul.mubr.f32.gmra.mrb[0].mxu0 %v9427
  %v9429 = vpop.f32.mrb[0].mxu0
  %v9430 = vadd.f32 %v8865, %v9429
  %v9431 = vpop.f32.mrb[0].mxu0
  %9432 = vmatprep.mubr.f32.mxu0 0.0
  %v9433 = vand.u32 %v7218, 4294901760
  %v9434 = vsub.f32 %v7218, %v9433
  %v9435 = vand.u32 %v9434, 4294901760
  %9436 = vmatmul.mubr.f32.gmra.mrb[0].mxu0 %v9435
  %v9437 = vpop.f32.mrb[0].mxu0
  %v9438 = vadd.f32 %v8872, %v9437
  %v9439 = vpop.f32.mrb[0].mxu0
  %9440 = vmatprep.mubr.f32.mxu0 0.0
  %v9441 = vand.u32 %v7221, 4294901760
  %v9442 = vsub.f32 %v7221, %v9441
  %v9443 = vand.u32 %v9442, 4294901760
  %9444 = vmatmul.mubr.f32.gmra.mrb[0].mxu0 %v9443
  %v9445 = vpop.f32.mrb[0].mxu0
  %v9446 = vadd.f32 %v8879, %v9445
  %v9447 = vpop.f32.mrb[0].mxu0
  %9448 = vmatprep.mubr.f32.mxu0 0.0
  %v9449 = vand.u32 %v7224, 4294901760
  %v9450 = vsub.f32 %v7224, %v9449
  %v9451 = vand.u32 %v9450, 4294901760
  %9452 = vmatmul.mubr.f32.gmra.mrb[0].mxu0 %v9451
  %v9453 = vpop.f32.mrb[0].mxu0
  %v9454 = vadd.f32 %v8886, %v9453
  %v9455 = vpop.f32.mrb[0].mxu0
  %9456 = vmatprep.mubr.f32.mxu0 0.0
  %v9457 = vand.u32 %v7227, 4294901760
  %v9458 = vsub.f32 %v7227, %v9457
  %v9459 = vand.u32 %v9458, 4294901760
  %9460 = vmatmul.mubr.f32.gmra.mrb[0].mxu0 %v9459
  %v9461 = vpop.f32.mrb[0].mxu0
  %v9462 = vadd.f32 %v8893, %v9461
  %v9463 = vpop.f32.mrb[0].mxu0
  %9464 = vmatprep.mubr.f32.mxu0 0.0
  %v9465 = vand.u32 %v7230, 4294901760
  %v9466 = vsub.f32 %v7230, %v9465
  %v9467 = vand.u32 %v9466, 4294901760
  %9468 = vmatmul.mubr.f32.gmra.mrb[0].mxu0 %v9467
  %v9469 = vpop.f32.mrb[0].mxu0
  %v9470 = vadd.f32 %v8900, %v9469
  %v9471 = vpop.f32.mrb[0].mxu0
  %9472 = vmatprep.mubr.f32.mxu0 0.0
  %v9473 = vand.u32 %v7233, 4294901760
  %v9474 = vsub.f32 %v7233, %v9473
  %v9475 = vand.u32 %v9474, 4294901760
  %9476 = vmatmul.mubr.f32.gmra.mrb[0].mxu0 %v9475
  %v9477 = vpop.f32.mrb[0].mxu0
  %v9478 = vadd.f32 %v8907, %v9477
  %v9479 = vpop.f32.mrb[0].mxu0
  %9480 = vmatprep.mubr.f32.mxu0 0.0
  %v9481 = vand.u32 %v7236, 4294901760
  %v9482 = vsub.f32 %v7236, %v9481
  %v9483 = vand.u32 %v9482, 4294901760
  %9484 = vmatmul.mubr.f32.gmra.mrb[0].mxu0 %v9483
  %v9485 = vpop.f32.mrb[0].mxu0
  %v9486 = vadd.f32 %v8914, %v9485
  %v9487 = vpop.f32.mrb[0].mxu0
  %9488 = vmatprep.mubr.f32.mxu0 0.0
  %v9489 = vand.u32 %v7239, 4294901760
  %v9490 = vsub.f32 %v7239, %v9489
  %v9491 = vand.u32 %v9490, 4294901760
  %9492 = vmatmul.mubr.f32.gmra.mrb[0].mxu0 %v9491
  %v9493 = vpop.f32.mrb[0].mxu0
  %v9494 = vadd.f32 %v8921, %v9493
  %v9495 = vpop.f32.mrb[0].mxu0
  %9496 = vmatprep.mubr.f32.mxu0 0.0
  %v9497 = vand.u32 %v7242, 4294901760
  %v9498 = vsub.f32 %v7242, %v9497
  %v9499 = vand.u32 %v9498, 4294901760
  %9500 = vmatmul.mubr.f32.gmra.mrb[0].mxu0 %v9499
  %v9501 = vpop.f32.mrb[0].mxu0
  %v9502 = vadd.f32 %v8928, %v9501
  %v9503 = vpop.f32.mrb[0].mxu0
  %9504 = vmatprep.mubr.f32.mxu0 0.0
  %v9505 = vand.u32 %v7245, 4294901760
  %v9506 = vsub.f32 %v7245, %v9505
  %v9507 = vand.u32 %v9506, 4294901760
  %9508 = vmatmul.mubr.f32.gmra.mrb[0].mxu0 %v9507
  %v9509 = vpop.f32.mrb[0].mxu0
  %v9510 = vadd.f32 %v8935, %v9509
  %v9511 = vpop.f32.mrb[0].mxu0
  %9512 = vmatprep.mubr.f32.mxu0 0.0
  %v9513 = vand.u32 %v7248, 4294901760
  %v9514 = vsub.f32 %v7248, %v9513
  %v9515 = vand.u32 %v9514, 4294901760
  %9516 = vmatmul.mubr.f32.gmra.mrb[0].mxu0 %v9515
  %v9517 = vpop.f32.mrb[0].mxu0
  %v9518 = vadd.f32 %v8942, %v9517
  %v9519 = vpop.f32.mrb[0].mxu0
  %9520 = vmatprep.mubr.f32.mxu0 0.0
  %v9521 = vand.u32 %v7251, 4294901760
  %v9522 = vsub.f32 %v7251, %v9521
  %v9523 = vand.u32 %v9522, 4294901760
  %9524 = vmatmul.mubr.f32.gmra.mrb[0].mxu0 %v9523
  %v9525 = vpop.f32.mrb[0].mxu0
  %v9526 = vadd.f32 %v8949, %v9525
  %v9527 = vpop.f32.mrb[0].mxu0
  %9528 = vmatprep.mubr.f32.mxu0 0.0
  %v9529 = vand.u32 %v7254, 4294901760
  %v9530 = vsub.f32 %v7254, %v9529
  %v9531 = vand.u32 %v9530, 4294901760
  %9532 = vmatmul.mubr.f32.gmra.mrb[0].mxu0 %v9531
  %v9533 = vpop.f32.mrb[0].mxu0
  %v9534 = vadd.f32 %v8956, %v9533
  %v9535 = vpop.f32.mrb[0].mxu0
  %9536 = vmatprep.mubr.f32.mxu0 0.0
  %v9537 = vand.u32 %v7257, 4294901760
  %v9538 = vsub.f32 %v7257, %v9537
  %v9539 = vand.u32 %v9538, 4294901760
  %9540 = vmatmul.mubr.f32.gmra.mrb[0].mxu0 %v9539
  %v9541 = vpop.f32.mrb[0].mxu0
  %v9542 = vadd.f32 %v8963, %v9541
  %v9543 = vpop.f32.mrb[0].mxu0
  %9544 = vmatprep.mubr.f32.mxu0 0.0
  %v9545 = vand.u32 %v7260, 4294901760
  %v9546 = vsub.f32 %v7260, %v9545
  %v9547 = vand.u32 %v9546, 4294901760
  %9548 = vmatmul.mubr.f32.gmra.mrb[0].mxu0 %v9547
  %v9549 = vpop.f32.mrb[0].mxu0
  %v9550 = vadd.f32 %v8970, %v9549
  %v9551 = vpop.f32.mrb[0].mxu0
  %9552 = vmatprep.mubr.f32.mxu0 0.0
  %v9553 = vand.u32 %v7263, 4294901760
  %v9554 = vsub.f32 %v7263, %v9553
  %v9555 = vand.u32 %v9554, 4294901760
  %9556 = vmatmul.mubr.f32.gmra.mrb[0].mxu0 %v9555
  %v9557 = vpop.f32.mrb[0].mxu0
  %v9558 = vadd.f32 %v8977, %v9557
  %v9559 = vpop.f32.mrb[0].mxu0
  %9560 = vmatprep.mubr.f32.mxu0 0.0
  %v9561 = vand.u32 %v7266, 4294901760
  %v9562 = vsub.f32 %v7266, %v9561
  %v9563 = vand.u32 %v9562, 4294901760
  %9564 = vmatmul.mubr.f32.gmra.mrb[0].mxu0 %v9563
  %v9565 = vpop.f32.mrb[0].mxu0
  %v9566 = vadd.f32 %v8984, %v9565
  %v9567 = vpop.f32.mrb[0].mxu0
  %9568 = vmatprep.mubr.f32.mxu0 0.0
  %v9569 = vand.u32 %v7269, 4294901760
  %v9570 = vsub.f32 %v7269, %v9569
  %v9571 = vand.u32 %v9570, 4294901760
  %9572 = vmatmul.mubr.f32.gmra.mrb[0].mxu0 %v9571
  %v9573 = vpop.f32.mrb[0].mxu0
  %v9574 = vadd.f32 %v8991, %v9573
  %v9575 = vpop.f32.mrb[0].mxu0
  %9576 = vmatprep.mubr.f32.mxu0 0.0
  %v9577 = vand.u32 %v7272, 4294901760
  %v9578 = vsub.f32 %v7272, %v9577
  %v9579 = vand.u32 %v9578, 4294901760
  %9580 = vmatmul.mubr.f32.gmra.mrb[0].mxu0 %v9579
  %v9581 = vpop.f32.mrb[0].mxu0
  %v9582 = vadd.f32 %v8998, %v9581
  %v9583 = vpop.f32.mrb[0].mxu0
  %9584 = vmatprep.mubr.f32.mxu0 0.0
  %v9585 = vand.u32 %v7275, 4294901760
  %v9586 = vsub.f32 %v7275, %v9585
  %v9587 = vand.u32 %v9586, 4294901760
  %9588 = vmatmul.mubr.f32.gmra.mrb[0].mxu0 %v9587
  %v9589 = vpop.f32.mrb[0].mxu0
  %v9590 = vadd.f32 %v9005, %v9589
  %v9591 = vpop.f32.mrb[0].mxu0
  %9592 = vdwg.mxu0
  %9593 = vmatprep.subr.mxu0 0.0
  %v9594 = vand.u32 %v7070, 4294901760
  %v9595 = vsub.f32 %v7070, %v9594
  %v9596 = vand.u32 %v9595, 4294901760
  %9597 = vmatpush1.msra.mxu0 %v9596
  %9598 = vmatprep.subr.mxu0 0.0
  %v9599 = vand.u32 %v7071, 4294901760
  %v9600 = vsub.f32 %v7071, %v9599
  %v9601 = vand.u32 %v9600, 4294901760
  %9602 = vmatpush1.msra.mxu0 %v9601
  %9603 = vmatprep.subr.mxu0 0.0
  %v9604 = vand.u32 %v7072, 4294901760
  %v9605 = vsub.f32 %v7072, %v9604
  %v9606 = vand.u32 %v9605, 4294901760
  %9607 = vmatpush1.msra.mxu0 %v9606
  %9608 = vmatprep.subr.mxu0 0.0
  %v9609 = vand.u32 %v7073, 4294901760
  %v9610 = vsub.f32 %v7073, %v9609
  %v9611 = vand.u32 %v9610, 4294901760
  %9612 = vmatpush1.msra.mxu0 %v9611
  %9613 = vmatprep.subr.mxu0 0.0
  %v9614 = vand.u32 %v7074, 4294901760
  %v9615 = vsub.f32 %v7074, %v9614
  %v9616 = vand.u32 %v9615, 4294901760
  %9617 = vmatpush1.msra.mxu0 %v9616
  %9618 = vmatprep.subr.mxu0 0.0
  %v9619 = vand.u32 %v7075, 4294901760
  %v9620 = vsub.f32 %v7075, %v9619
  %v9621 = vand.u32 %v9620, 4294901760
  %9622 = vmatpush1.msra.mxu0 %v9621
  %9623 = vmatprep.subr.mxu0 0.0
  %v9624 = vand.u32 %v7076, 4294901760
  %v9625 = vsub.f32 %v7076, %v9624
  %v9626 = vand.u32 %v9625, 4294901760
  %9627 = vmatpush1.msra.mxu0 %v9626
  %9628 = vmatprep.subr.mxu0 0.0
  %v9629 = vand.u32 %v7077, 4294901760
  %v9630 = vsub.f32 %v7077, %v9629
  %v9631 = vand.u32 %v9630, 4294901760
  %9632 = vmatpush1.msra.mxu0 %v9631
  %9633 = vmatprep.subr.mxu0 0.0
  %9634 = vmatpush1.msra.mxu0 0.0
  %9635 = vmatprep.subr.mxu0 0.0
  %9636 = vmatpush1.msra.mxu0 0.0
  %9637 = vmatprep.subr.mxu0 0.0
  %9638 = vmatpush1.msra.mxu0 0.0
  %9639 = vmatprep.subr.mxu0 0.0
  %9640 = vmatpush1.msra.mxu0 0.0
  %9641 = vmatprep.subr.mxu0 0.0
  %9642 = vmatpush1.msra.mxu0 0.0
  %9643 = vmatprep.subr.mxu0 0.0
  %9644 = vmatpush1.msra.mxu0 0.0
  %9645 = vmatprep.subr.mxu0 0.0
  %9646 = vmatpush1.msra.mxu0 0.0
  %9647 = vmatprep.subr.mxu0 0.0
  %9648 = vmatpush1.msra.mxu0 0.0
  %9649 = vmatprep.subr.mxu0 0.0
  %9650 = vmatpush1.msra.mxu0 0.0
  %9651 = vmatprep.subr.mxu0 0.0
  %9652 = vmatpush1.msra.mxu0 0.0
  %9653 = vmatprep.subr.mxu0 0.0
  %9654 = vmatpush1.msra.mxu0 0.0
  %9655 = vmatprep.subr.mxu0 0.0
  %9656 = vmatpush1.msra.mxu0 0.0
  %9657 = vmatprep.subr.mxu0 0.0
  %9658 = vmatpush1.msra.mxu0 0.0
  %9659 = vmatprep.subr.mxu0 0.0
  %9660 = vmatpush1.msra.mxu0 0.0
  %9661 = vmatprep.subr.mxu0 0.0
  %9662 = vmatpush1.msra.mxu0 0.0
  %9663 = vmatprep.subr.mxu0 0.0
  %9664 = vmatpush1.msra.mxu0 0.0
  %9665 = vmatprep.subr.mxu0 0.0
  %9666 = vmatpush1.msra.mxu0 0.0
  %9667 = vmatprep.subr.mxu0 0.0
  %9668 = vmatpush1.msra.mxu0 0.0
  %9669 = vmatprep.subr.mxu0 0.0
  %9670 = vmatpush1.msra.mxu0 0.0
  %9671 = vmatprep.subr.mxu0 0.0
  %9672 = vmatpush1.msra.mxu0 0.0
  %9673 = vmatprep.subr.mxu0 0.0
  %9674 = vmatpush1.msra.mxu0 0.0
  %9675 = vmatprep.subr.mxu0 0.0
  %9676 = vmatpush1.msra.mxu0 0.0
  %9677 = vmatprep.subr.mxu0 0.0
  %9678 = vmatpush1.msra.mxu0 0.0
  %9679 = vmatprep.subr.mxu0 0.0
  %9680 = vmatpush1.msra.mxu0 0.0
  %9681 = vmatprep.mubr.f32.mxu0 0.0
  %v9682 = vand.u32 %v7086, 4294901760
  %9683 = vmatmul.mubr.f32.gmra.mrb[0].mxu0 %v9682
  %v9684 = vpop.f32.mrb[0].mxu0
  %v9685 = vadd.f32 %v9086, %v9684
  %v9686 = vpop.f32.mrb[0].mxu0
  %9687 = vmatprep.mubr.f32.mxu0 0.0
  %v9688 = vand.u32 %v7089, 4294901760
  %9689 = vmatmul.mubr.f32.gmra.mrb[0].mxu0 %v9688
  %v9690 = vpop.f32.mrb[0].mxu0
  %v9691 = vadd.f32 %v9094, %v9690
  %v9692 = vpop.f32.mrb[0].mxu0
  %9693 = vmatprep.mubr.f32.mxu0 0.0
  %v9694 = vand.u32 %v7092, 4294901760
  %9695 = vmatmul.mubr.f32.gmra.mrb[0].mxu0 %v9694
  %v9696 = vpop.f32.mrb[0].mxu0
  %v9697 = vadd.f32 %v9102, %v9696
  %v9698 = vpop.f32.mrb[0].mxu0
  %9699 = vmatprep.mubr.f32.mxu0 0.0
  %v9700 = vand.u32 %v7095, 4294901760
  %9701 = vmatmul.mubr.f32.gmra.mrb[0].mxu0 %v9700
  %v9702 = vpop.f32.mrb[0].mxu0
  %v9703 = vadd.f32 %v9110, %v9702
  %v9704 = vpop.f32.mrb[0].mxu0
  %9705 = vmatprep.mubr.f32.mxu0 0.0
  %v9706 = vand.u32 %v7098, 4294901760
  %9707 = vmatmul.mubr.f32.gmra.mrb[0].mxu0 %v9706
  %v9708 = vpop.f32.mrb[0].mxu0
  %v9709 = vadd.f32 %v9118, %v9708
  %v9710 = vpop.f32.mrb[0].mxu0
  %9711 = vmatprep.mubr.f32.mxu0 0.0
  %v9712 = vand.u32 %v7101, 4294901760
  %9713 = vmatmul.mubr.f32.gmra.mrb[0].mxu0 %v9712
  %v9714 = vpop.f32.mrb[0].mxu0
  %v9715 = vadd.f32 %v9126, %v9714
  %v9716 = vpop.f32.mrb[0].mxu0
  %9717 = vmatprep.mubr.f32.mxu0 0.0
  %v9718 = vand.u32 %v7104, 4294901760
  %9719 = vmatmul.mubr.f32.gmra.mrb[0].mxu0 %v9718
  %v9720 = vpop.f32.mrb[0].mxu0
  %v9721 = vadd.f32 %v9134, %v9720
  %v9722 = vpop.f32.mrb[0].mxu0
  %9723 = vmatprep.mubr.f32.mxu0 0.0
  %v9724 = vand.u32 %v7107, 4294901760
  %9725 = vmatmul.mubr.f32.gmra.mrb[0].mxu0 %v9724
  %v9726 = vpop.f32.mrb[0].mxu0
  %v9727 = vadd.f32 %v9142, %v9726
  %v9728 = vpop.f32.mrb[0].mxu0
  %9729 = vmatprep.mubr.f32.mxu0 0.0
  %v9730 = vand.u32 %v7110, 4294901760
  %9731 = vmatmul.mubr.f32.gmra.mrb[0].mxu0 %v9730
  %v9732 = vpop.f32.mrb[0].mxu0
  %v9733 = vadd.f32 %v9150, %v9732
  %v9734 = vpop.f32.mrb[0].mxu0
  %9735 = vmatprep.mubr.f32.mxu0 0.0
  %v9736 = vand.u32 %v7113, 4294901760
  %9737 = vmatmul.mubr.f32.gmra.mrb[0].mxu0 %v9736
  %v9738 = vpop.f32.mrb[0].mxu0
  %v9739 = vadd.f32 %v9158, %v9738
  %v9740 = vpop.f32.mrb[0].mxu0
  %9741 = vmatprep.mubr.f32.mxu0 0.0
  %v9742 = vand.u32 %v7116, 4294901760
  %9743 = vmatmul.mubr.f32.gmra.mrb[0].mxu0 %v9742
  %v9744 = vpop.f32.mrb[0].mxu0
  %v9745 = vadd.f32 %v9166, %v9744
  %v9746 = vpop.f32.mrb[0].mxu0
  %9747 = vmatprep.mubr.f32.mxu0 0.0
  %v9748 = vand.u32 %v7119, 4294901760
  %9749 = vmatmul.mubr.f32.gmra.mrb[0].mxu0 %v9748
  %v9750 = vpop.f32.mrb[0].mxu0
  %v9751 = vadd.f32 %v9174, %v9750
  %v9752 = vpop.f32.mrb[0].mxu0
  %9753 = vmatprep.mubr.f32.mxu0 0.0
  %v9754 = vand.u32 %v7122, 4294901760
  %9755 = vmatmul.mubr.f32.gmra.mrb[0].mxu0 %v9754
  %v9756 = vpop.f32.mrb[0].mxu0
  %v9757 = vadd.f32 %v9182, %v9756
  %v9758 = vpop.f32.mrb[0].mxu0
  %9759 = vmatprep.mubr.f32.mxu0 0.0
  %v9760 = vand.u32 %v7125, 4294901760
  %9761 = vmatmul.mubr.f32.gmra.mrb[0].mxu0 %v9760
  %v9762 = vpop.f32.mrb[0].mxu0
  %v9763 = vadd.f32 %v9190, %v9762
  %v9764 = vpop.f32.mrb[0].mxu0
  %9765 = vmatprep.mubr.f32.mxu0 0.0
  %v9766 = vand.u32 %v7128, 4294901760
  %9767 = vmatmul.mubr.f32.gmra.mrb[0].mxu0 %v9766
  %v9768 = vpop.f32.mrb[0].mxu0
  %v9769 = vadd.f32 %v9198, %v9768
  %v9770 = vpop.f32.mrb[0].mxu0
  %9771 = vmatprep.mubr.f32.mxu0 0.0
  %v9772 = vand.u32 %v7131, 4294901760
  %9773 = vmatmul.mubr.f32.gmra.mrb[0].mxu0 %v9772
  %v9774 = vpop.f32.mrb[0].mxu0
  %v9775 = vadd.f32 %v9206, %v9774
  %v9776 = vpop.f32.mrb[0].mxu0
  %9777 = vmatprep.mubr.f32.mxu0 0.0
  %v9778 = vand.u32 %v7134, 4294901760
  %9779 = vmatmul.mubr.f32.gmra.mrb[0].mxu0 %v9778
  %v9780 = vpop.f32.mrb[0].mxu0
  %v9781 = vadd.f32 %v9214, %v9780
  %v9782 = vpop.f32.mrb[0].mxu0
  %9783 = vmatprep.mubr.f32.mxu0 0.0
  %v9784 = vand.u32 %v7137, 4294901760
  %9785 = vmatmul.mubr.f32.gmra.mrb[0].mxu0 %v9784
  %v9786 = vpop.f32.mrb[0].mxu0
  %v9787 = vadd.f32 %v9222, %v9786
  %v9788 = vpop.f32.mrb[0].mxu0
  %9789 = vmatprep.mubr.f32.mxu0 0.0
  %v9790 = vand.u32 %v7140, 4294901760
  %9791 = vmatmul.mubr.f32.gmra.mrb[0].mxu0 %v9790
  %v9792 = vpop.f32.mrb[0].mxu0
  %v9793 = vadd.f32 %v9230, %v9792
  %v9794 = vpop.f32.mrb[0].mxu0
  %9795 = vmatprep.mubr.f32.mxu0 0.0
  %v9796 = vand.u32 %v7143, 4294901760
  %9797 = vmatmul.mubr.f32.gmra.mrb[0].mxu0 %v9796
  %v9798 = vpop.f32.mrb[0].mxu0
  %v9799 = vadd.f32 %v9238, %v9798
  %v9800 = vpop.f32.mrb[0].mxu0
  %9801 = vmatprep.mubr.f32.mxu0 0.0
  %v9802 = vand.u32 %v7146, 4294901760
  %9803 = vmatmul.mubr.f32.gmra.mrb[0].mxu0 %v9802
  %v9804 = vpop.f32.mrb[0].mxu0
  %v9805 = vadd.f32 %v9246, %v9804
  %v9806 = vpop.f32.mrb[0].mxu0
  %9807 = vmatprep.mubr.f32.mxu0 0.0
  %v9808 = vand.u32 %v7149, 4294901760
  %9809 = vmatmul.mubr.f32.gmra.mrb[0].mxu0 %v9808
  %v9810 = vpop.f32.mrb[0].mxu0
  %v9811 = vadd.f32 %v9254, %v9810
  %v9812 = vpop.f32.mrb[0].mxu0
  %9813 = vmatprep.mubr.f32.mxu0 0.0
  %v9814 = vand.u32 %v7152, 4294901760
  %9815 = vmatmul.mubr.f32.gmra.mrb[0].mxu0 %v9814
  %v9816 = vpop.f32.mrb[0].mxu0
  %v9817 = vadd.f32 %v9262, %v9816
  %v9818 = vpop.f32.mrb[0].mxu0
  %9819 = vmatprep.mubr.f32.mxu0 0.0
  %v9820 = vand.u32 %v7155, 4294901760
  %9821 = vmatmul.mubr.f32.gmra.mrb[0].mxu0 %v9820
  %v9822 = vpop.f32.mrb[0].mxu0
  %v9823 = vadd.f32 %v9270, %v9822
  %v9824 = vpop.f32.mrb[0].mxu0
  %9825 = vmatprep.mubr.f32.mxu0 0.0
  %v9826 = vand.u32 %v7158, 4294901760
  %9827 = vmatmul.mubr.f32.gmra.mrb[0].mxu0 %v9826
  %v9828 = vpop.f32.mrb[0].mxu0
  %v9829 = vadd.f32 %v9278, %v9828
  %v9830 = vpop.f32.mrb[0].mxu0
  %9831 = vmatprep.mubr.f32.mxu0 0.0
  %v9832 = vand.u32 %v7161, 4294901760
  %9833 = vmatmul.mubr.f32.gmra.mrb[0].mxu0 %v9832
  %v9834 = vpop.f32.mrb[0].mxu0
  %v9835 = vadd.f32 %v9286, %v9834
  %v9836 = vpop.f32.mrb[0].mxu0
  %9837 = vmatprep.mubr.f32.mxu0 0.0
  %v9838 = vand.u32 %v7164, 4294901760
  %9839 = vmatmul.mubr.f32.gmra.mrb[0].mxu0 %v9838
  %v9840 = vpop.f32.mrb[0].mxu0
  %v9841 = vadd.f32 %v9294, %v9840
  %v9842 = vpop.f32.mrb[0].mxu0
  %9843 = vmatprep.mubr.f32.mxu0 0.0
  %v9844 = vand.u32 %v7167, 4294901760
  %9845 = vmatmul.mubr.f32.gmra.mrb[0].mxu0 %v9844
  %v9846 = vpop.f32.mrb[0].mxu0
  %v9847 = vadd.f32 %v9302, %v9846
  %v9848 = vpop.f32.mrb[0].mxu0
  %9849 = vmatprep.mubr.f32.mxu0 0.0
  %v9850 = vand.u32 %v7170, 4294901760
  %9851 = vmatmul.mubr.f32.gmra.mrb[0].mxu0 %v9850
  %v9852 = vpop.f32.mrb[0].mxu0
  %v9853 = vadd.f32 %v9310, %v9852
  %v9854 = vpop.f32.mrb[0].mxu0
  %9855 = vmatprep.mubr.f32.mxu0 0.0
  %v9856 = vand.u32 %v7173, 4294901760
  %9857 = vmatmul.mubr.f32.gmra.mrb[0].mxu0 %v9856
  %v9858 = vpop.f32.mrb[0].mxu0
  %v9859 = vadd.f32 %v9318, %v9858
  %v9860 = vpop.f32.mrb[0].mxu0
  %9861 = vmatprep.mubr.f32.mxu0 0.0
  %v9862 = vand.u32 %v7176, 4294901760
  %9863 = vmatmul.mubr.f32.gmra.mrb[0].mxu0 %v9862
  %v9864 = vpop.f32.mrb[0].mxu0
  %v9865 = vadd.f32 %v9326, %v9864
  %v9866 = vpop.f32.mrb[0].mxu0
  %9867 = vmatprep.mubr.f32.mxu0 0.0
  %v9868 = vand.u32 %v7179, 4294901760
  %9869 = vmatmul.mubr.f32.gmra.mrb[0].mxu0 %v9868
  %v9870 = vpop.f32.mrb[0].mxu0
  %v9871 = vadd.f32 %v9334, %v9870
  %v9872 = vpop.f32.mrb[0].mxu0
  %9873 = vmatprep.mubr.f32.mxu0 0.0
  %v9874 = vand.u32 %v7182, 4294901760
  %9875 = vmatmul.mubr.f32.gmra.mrb[0].mxu0 %v9874
  %v9876 = vpop.f32.mrb[0].mxu0
  %v9877 = vadd.f32 %v9342, %v9876
  %v9878 = vpop.f32.mrb[0].mxu0
  %9879 = vmatprep.mubr.f32.mxu0 0.0
  %v9880 = vand.u32 %v7185, 4294901760
  %9881 = vmatmul.mubr.f32.gmra.mrb[0].mxu0 %v9880
  %v9882 = vpop.f32.mrb[0].mxu0
  %v9883 = vadd.f32 %v9350, %v9882
  %v9884 = vpop.f32.mrb[0].mxu0
  %9885 = vmatprep.mubr.f32.mxu0 0.0
  %v9886 = vand.u32 %v7188, 4294901760
  %9887 = vmatmul.mubr.f32.gmra.mrb[0].mxu0 %v9886
  %v9888 = vpop.f32.mrb[0].mxu0
  %v9889 = vadd.f32 %v9358, %v9888
  %v9890 = vpop.f32.mrb[0].mxu0
  %9891 = vmatprep.mubr.f32.mxu0 0.0
  %v9892 = vand.u32 %v7191, 4294901760
  %9893 = vmatmul.mubr.f32.gmra.mrb[0].mxu0 %v9892
  %v9894 = vpop.f32.mrb[0].mxu0
  %v9895 = vadd.f32 %v9366, %v9894
  %v9896 = vpop.f32.mrb[0].mxu0
  %9897 = vmatprep.mubr.f32.mxu0 0.0
  %v9898 = vand.u32 %v7194, 4294901760
  %9899 = vmatmul.mubr.f32.gmra.mrb[0].mxu0 %v9898
  %v9900 = vpop.f32.mrb[0].mxu0
  %v9901 = vadd.f32 %v9374, %v9900
  %v9902 = vpop.f32.mrb[0].mxu0
  %9903 = vmatprep.mubr.f32.mxu0 0.0
  %v9904 = vand.u32 %v7197, 4294901760
  %9905 = vmatmul.mubr.f32.gmra.mrb[0].mxu0 %v9904
  %v9906 = vpop.f32.mrb[0].mxu0
  %v9907 = vadd.f32 %v9382, %v9906
  %v9908 = vpop.f32.mrb[0].mxu0
  %9909 = vmatprep.mubr.f32.mxu0 0.0
  %v9910 = vand.u32 %v7200, 4294901760
  %9911 = vmatmul.mubr.f32.gmra.mrb[0].mxu0 %v9910
  %v9912 = vpop.f32.mrb[0].mxu0
  %v9913 = vadd.f32 %v9390, %v9912
  %v9914 = vpop.f32.mrb[0].mxu0
  %9915 = vmatprep.mubr.f32.mxu0 0.0
  %v9916 = vand.u32 %v7203, 4294901760
  %9917 = vmatmul.mubr.f32.gmra.mrb[0].mxu0 %v9916
  %v9918 = vpop.f32.mrb[0].mxu0
  %v9919 = vadd.f32 %v9398, %v9918
  %v9920 = vpop.f32.mrb[0].mxu0
  %9921 = vmatprep.mubr.f32.mxu0 0.0
  %v9922 = vand.u32 %v7206, 4294901760
  %9923 = vmatmul.mubr.f32.gmra.mrb[0].mxu0 %v9922
  %v9924 = vpop.f32.mrb[0].mxu0
  %v9925 = vadd.f32 %v9406, %v9924
  %v9926 = vpop.f32.mrb[0].mxu0
  %9927 = vmatprep.mubr.f32.mxu0 0.0
  %v9928 = vand.u32 %v7209, 4294901760
  %9929 = vmatmul.mubr.f32.gmra.mrb[0].mxu0 %v9928
  %v9930 = vpop.f32.mrb[0].mxu0
  %v9931 = vadd.f32 %v9414, %v9930
  %v9932 = vpop.f32.mrb[0].mxu0
  %9933 = vmatprep.mubr.f32.mxu0 0.0
  %v9934 = vand.u32 %v7212, 4294901760
  %9935 = vmatmul.mubr.f32.gmra.mrb[0].mxu0 %v9934
  %v9936 = vpop.f32.mrb[0].mxu0
  %v9937 = vadd.f32 %v9422, %v9936
  %v9938 = vpop.f32.mrb[0].mxu0
  %9939 = vmatprep.mubr.f32.mxu0 0.0
  %v9940 = vand.u32 %v7215, 4294901760
  %9941 = vmatmul.mubr.f32.gmra.mrb[0].mxu0 %v9940
  %v9942 = vpop.f32.mrb[0].mxu0
  %v9943 = vadd.f32 %v9430, %v9942
  %v9944 = vpop.f32.mrb[0].mxu0
  %9945 = vmatprep.mubr.f32.mxu0 0.0
  %v9946 = vand.u32 %v7218, 4294901760
  %9947 = vmatmul.mubr.f32.gmra.mrb[0].mxu0 %v9946
  %v9948 = vpop.f32.mrb[0].mxu0
  %v9949 = vadd.f32 %v9438, %v9948
  %v9950 = vpop.f32.mrb[0].mxu0
  %9951 = vmatprep.mubr.f32.mxu0 0.0
  %v9952 = vand.u32 %v7221, 4294901760
  %9953 = vmatmul.mubr.f32.gmra.mrb[0].mxu0 %v9952
  %v9954 = vpop.f32.mrb[0].mxu0
  %v9955 = vadd.f32 %v9446, %v9954
  %v9956 = vpop.f32.mrb[0].mxu0
  %9957 = vmatprep.mubr.f32.mxu0 0.0
  %v9958 = vand.u32 %v7224, 4294901760
  %9959 = vmatmul.mubr.f32.gmra.mrb[0].mxu0 %v9958
  %v9960 = vpop.f32.mrb[0].mxu0
  %v9961 = vadd.f32 %v9454, %v9960
  %v9962 = vpop.f32.mrb[0].mxu0
  %9963 = vmatprep.mubr.f32.mxu0 0.0
  %v9964 = vand.u32 %v7227, 4294901760
  %9965 = vmatmul.mubr.f32.gmra.mrb[0].mxu0 %v9964
  %v9966 = vpop.f32.mrb[0].mxu0
  %v9967 = vadd.f32 %v9462, %v9966
  %v9968 = vpop.f32.mrb[0].mxu0
  %9969 = vmatprep.mubr.f32.mxu0 0.0
  %v9970 = vand.u32 %v7230, 4294901760
  %9971 = vmatmul.mubr.f32.gmra.mrb[0].mxu0 %v9970
  %v9972 = vpop.f32.mrb[0].mxu0
  %v9973 = vadd.f32 %v9470, %v9972
  %v9974 = vpop.f32.mrb[0].mxu0
  %9975 = vmatprep.mubr.f32.mxu0 0.0
  %v9976 = vand.u32 %v7233, 4294901760
  %9977 = vmatmul.mubr.f32.gmra.mrb[0].mxu0 %v9976
  %v9978 = vpop.f32.mrb[0].mxu0
  %v9979 = vadd.f32 %v9478, %v9978
  %v9980 = vpop.f32.mrb[0].mxu0
  %9981 = vmatprep.mubr.f32.mxu0 0.0
  %v9982 = vand.u32 %v7236, 4294901760
  %9983 = vmatmul.mubr.f32.gmra.mrb[0].mxu0 %v9982
  %v9984 = vpop.f32.mrb[0].mxu0
  %v9985 = vadd.f32 %v9486, %v9984
  %v9986 = vpop.f32.mrb[0].mxu0
  %9987 = vmatprep.mubr.f32.mxu0 0.0
  %v9988 = vand.u32 %v7239, 4294901760
  %9989 = vmatmul.mubr.f32.gmra.mrb[0].mxu0 %v9988
  %v9990 = vpop.f32.mrb[0].mxu0
  %v9991 = vadd.f32 %v9494, %v9990
  %v9992 = vpop.f32.mrb[0].mxu0
  %9993 = vmatprep.mubr.f32.mxu0 0.0
  %v9994 = vand.u32 %v7242, 4294901760
  %9995 = vmatmul.mubr.f32.gmra.mrb[0].mxu0 %v9994
  %v9996 = vpop.f32.mrb[0].mxu0
  %v9997 = vadd.f32 %v9502, %v9996
  %v9998 = vpop.f32.mrb[0].mxu0
  %9999 = vmatprep.mubr.f32.mxu0 0.0
  %v10000 = vand.u32 %v7245, 4294901760
  %10001 = vmatmul.mubr.f32.gmra.mrb[0].mxu0 %v10000
  %v10002 = vpop.f32.mrb[0].mxu0
  %v10003 = vadd.f32 %v9510, %v10002
  %v10004 = vpop.f32.mrb[0].mxu0
  %10005 = vmatprep.mubr.f32.mxu0 0.0
  %v10006 = vand.u32 %v7248, 4294901760
  %10007 = vmatmul.mubr.f32.gmra.mrb[0].mxu0 %v10006
  %v10008 = vpop.f32.mrb[0].mxu0
  %v10009 = vadd.f32 %v9518, %v10008
  %v10010 = vpop.f32.mrb[0].mxu0
  %10011 = vmatprep.mubr.f32.mxu0 0.0
  %v10012 = vand.u32 %v7251, 4294901760
  %10013 = vmatmul.mubr.f32.gmra.mrb[0].mxu0 %v10012
  %v10014 = vpop.f32.mrb[0].mxu0
  %v10015 = vadd.f32 %v9526, %v10014
  %v10016 = vpop.f32.mrb[0].mxu0
  %10017 = vmatprep.mubr.f32.mxu0 0.0
  %v10018 = vand.u32 %v7254, 4294901760
  %10019 = vmatmul.mubr.f32.gmra.mrb[0].mxu0 %v10018
  %v10020 = vpop.f32.mrb[0].mxu0
  %v10021 = vadd.f32 %v9534, %v10020
  %v10022 = vpop.f32.mrb[0].mxu0
  %10023 = vmatprep.mubr.f32.mxu0 0.0
  %v10024 = vand.u32 %v7257, 4294901760
  %10025 = vmatmul.mubr.f32.gmra.mrb[0].mxu0 %v10024
  %v10026 = vpop.f32.mrb[0].mxu0
  %v10027 = vadd.f32 %v9542, %v10026
  %v10028 = vpop.f32.mrb[0].mxu0
  %10029 = vmatprep.mubr.f32.mxu0 0.0
  %v10030 = vand.u32 %v7260, 4294901760
  %10031 = vmatmul.mubr.f32.gmra.mrb[0].mxu0 %v10030
  %v10032 = vpop.f32.mrb[0].mxu0
  %v10033 = vadd.f32 %v9550, %v10032
  %v10034 = vpop.f32.mrb[0].mxu0
  %10035 = vmatprep.mubr.f32.mxu0 0.0
  %v10036 = vand.u32 %v7263, 4294901760
  %10037 = vmatmul.mubr.f32.gmra.mrb[0].mxu0 %v10036
  %v10038 = vpop.f32.mrb[0].mxu0
  %v10039 = vadd.f32 %v9558, %v10038
  %v10040 = vpop.f32.mrb[0].mxu0
  %10041 = vmatprep.mubr.f32.mxu0 0.0
  %v10042 = vand.u32 %v7266, 4294901760
  %10043 = vmatmul.mubr.f32.gmra.mrb[0].mxu0 %v10042
  %v10044 = vpop.f32.mrb[0].mxu0
  %v10045 = vadd.f32 %v9566, %v10044
  %v10046 = vpop.f32.mrb[0].mxu0
  %10047 = vmatprep.mubr.f32.mxu0 0.0
  %v10048 = vand.u32 %v7269, 4294901760
  %10049 = vmatmul.mubr.f32.gmra.mrb[0].mxu0 %v10048
  %v10050 = vpop.f32.mrb[0].mxu0
  %v10051 = vadd.f32 %v9574, %v10050
  %v10052 = vpop.f32.mrb[0].mxu0
  %10053 = vmatprep.mubr.f32.mxu0 0.0
  %v10054 = vand.u32 %v7272, 4294901760
  %10055 = vmatmul.mubr.f32.gmra.mrb[0].mxu0 %v10054
  %v10056 = vpop.f32.mrb[0].mxu0
  %v10057 = vadd.f32 %v9582, %v10056
  %v10058 = vpop.f32.mrb[0].mxu0
  %10059 = vmatprep.mubr.f32.mxu0 0.0
  %v10060 = vand.u32 %v7275, 4294901760
  %10061 = vmatmul.mubr.f32.gmra.mrb[0].mxu0 %v10060
  %v10062 = vpop.f32.mrb[0].mxu0
  %v10063 = vadd.f32 %v9590, %v10062
  %v10064 = vpop.f32.mrb[0].mxu0
  %10065 = vdwg.mxu0
  %10066 = vmatprep.subr.mxu0 0.0
  %v10067 = vand.u32 %v7070, 4294901760
  %10068 = vmatpush1.msra.mxu0 %v10067
  %10069 = vmatprep.subr.mxu0 0.0
  %v10070 = vand.u32 %v7071, 4294901760
  %10071 = vmatpush1.msra.mxu0 %v10070
  %10072 = vmatprep.subr.mxu0 0.0
  %v10073 = vand.u32 %v7072, 4294901760
  %10074 = vmatpush1.msra.mxu0 %v10073
  %10075 = vmatprep.subr.mxu0 0.0
  %v10076 = vand.u32 %v7073, 4294901760
  %10077 = vmatpush1.msra.mxu0 %v10076
  %10078 = vmatprep.subr.mxu0 0.0
  %v10079 = vand.u32 %v7074, 4294901760
  %10080 = vmatpush1.msra.mxu0 %v10079
  %10081 = vmatprep.subr.mxu0 0.0
  %v10082 = vand.u32 %v7075, 4294901760
  %10083 = vmatpush1.msra.mxu0 %v10082
  %10084 = vmatprep.subr.mxu0 0.0
  %v10085 = vand.u32 %v7076, 4294901760
  %10086 = vmatpush1.msra.mxu0 %v10085
  %10087 = vmatprep.subr.mxu0 0.0
  %v10088 = vand.u32 %v7077, 4294901760
  %10089 = vmatpush1.msra.mxu0 %v10088
  %10090 = vmatprep.subr.mxu0 0.0
  %10091 = vmatpush1.msra.mxu0 0.0
  %10092 = vmatprep.subr.mxu0 0.0
  %10093 = vmatpush1.msra.mxu0 0.0
  %10094 = vmatprep.subr.mxu0 0.0
  %10095 = vmatpush1.msra.mxu0 0.0
  %10096 = vmatprep.subr.mxu0 0.0
  %10097 = vmatpush1.msra.mxu0 0.0
  %10098 = vmatprep.subr.mxu0 0.0
  %10099 = vmatpush1.msra.mxu0 0.0
  %10100 = vmatprep.subr.mxu0 0.0
  %10101 = vmatpush1.msra.mxu0 0.0
  %10102 = vmatprep.subr.mxu0 0.0
  %10103 = vmatpush1.msra.mxu0 0.0
  %10104 = vmatprep.subr.mxu0 0.0
  %10105 = vmatpush1.msra.mxu0 0.0
  %10106 = vmatprep.subr.mxu0 0.0
  %10107 = vmatpush1.msra.mxu0 0.0
  %10108 = vmatprep.subr.mxu0 0.0
  %10109 = vmatpush1.msra.mxu0 0.0
  %10110 = vmatprep.subr.mxu0 0.0
  %10111 = vmatpush1.msra.mxu0 0.0
  %10112 = vmatprep.subr.mxu0 0.0
  %10113 = vmatpush1.msra.mxu0 0.0
  %10114 = vmatprep.subr.mxu0 0.0
  %10115 = vmatpush1.msra.mxu0 0.0
  %10116 = vmatprep.subr.mxu0 0.0
  %10117 = vmatpush1.msra.mxu0 0.0
  %10118 = vmatprep.subr.mxu0 0.0
  %10119 = vmatpush1.msra.mxu0 0.0
  %10120 = vmatprep.subr.mxu0 0.0
  %10121 = vmatpush1.msra.mxu0 0.0
  %10122 = vmatprep.subr.mxu0 0.0
  %10123 = vmatpush1.msra.mxu0 0.0
  %10124 = vmatprep.subr.mxu0 0.0
  %10125 = vmatpush1.msra.mxu0 0.0
  %10126 = vmatprep.subr.mxu0 0.0
  %10127 = vmatpush1.msra.mxu0 0.0
  %10128 = vmatprep.subr.mxu0 0.0
  %10129 = vmatpush1.msra.mxu0 0.0
  %10130 = vmatprep.subr.mxu0 0.0
  %10131 = vmatpush1.msra.mxu0 0.0
  %10132 = vmatprep.subr.mxu0 0.0
  %10133 = vmatpush1.msra.mxu0 0.0
  %10134 = vmatprep.subr.mxu0 0.0
  %10135 = vmatpush1.msra.mxu0 0.0
  %10136 = vmatprep.subr.mxu0 0.0
  %10137 = vmatpush1.msra.mxu0 0.0
  %10138 = vmatprep.mubr.f32.mxu0 0.0
  %v10139 = vand.u32 %v7086, 4294901760
  %10140 = vmatmul.mubr.f32.gmra.mrb[0].mxu0 %v10139
  %v10141 = vpop.f32.mrb[0].mxu0
  %v10142 = vadd.f32 %v9685, %v10141
  %v10143 = vpop.f32.mrb[0].mxu0
  %10144 = vmatprep.mubr.f32.mxu0 0.0
  %v10145 = vand.u32 %v7089, 4294901760
  %10146 = vmatmul.mubr.f32.gmra.mrb[0].mxu0 %v10145
  %v10147 = vpop.f32.mrb[0].mxu0
  %v10148 = vadd.f32 %v9691, %v10147
  %v10149 = vpop.f32.mrb[0].mxu0
  %10150 = vmatprep.mubr.f32.mxu0 0.0
  %v10151 = vand.u32 %v7092, 4294901760
  %10152 = vmatmul.mubr.f32.gmra.mrb[0].mxu0 %v10151
  %v10153 = vpop.f32.mrb[0].mxu0
  %v10154 = vadd.f32 %v9697, %v10153
  %v10155 = vpop.f32.mrb[0].mxu0
  %10156 = vmatprep.mubr.f32.mxu0 0.0
  %v10157 = vand.u32 %v7095, 4294901760
  %10158 = vmatmul.mubr.f32.gmra.mrb[0].mxu0 %v10157
  %v10159 = vpop.f32.mrb[0].mxu0
  %v10160 = vadd.f32 %v9703, %v10159
  %v10161 = vpop.f32.mrb[0].mxu0
  %10162 = vmatprep.mubr.f32.mxu0 0.0
  %v10163 = vand.u32 %v7098, 4294901760
  %10164 = vmatmul.mubr.f32.gmra.mrb[0].mxu0 %v10163
  %v10165 = vpop.f32.mrb[0].mxu0
  %v10166 = vadd.f32 %v9709, %v10165
  %v10167 = vpop.f32.mrb[0].mxu0
  %10168 = vmatprep.mubr.f32.mxu0 0.0
  %v10169 = vand.u32 %v7101, 4294901760
  %10170 = vmatmul.mubr.f32.gmra.mrb[0].mxu0 %v10169
  %v10171 = vpop.f32.mrb[0].mxu0
  %v10172 = vadd.f32 %v9715, %v10171
  %v10173 = vpop.f32.mrb[0].mxu0
  %10174 = vmatprep.mubr.f32.mxu0 0.0
  %v10175 = vand.u32 %v7104, 4294901760
  %10176 = vmatmul.mubr.f32.gmra.mrb[0].mxu0 %v10175
  %v10177 = vpop.f32.mrb[0].mxu0
  %v10178 = vadd.f32 %v9721, %v10177
  %v10179 = vpop.f32.mrb[0].mxu0
  %10180 = vmatprep.mubr.f32.mxu0 0.0
  %v10181 = vand.u32 %v7107, 4294901760
  %10182 = vmatmul.mubr.f32.gmra.mrb[0].mxu0 %v10181
  %v10183 = vpop.f32.mrb[0].mxu0
  %v10184 = vadd.f32 %v9727, %v10183
  %v10185 = vpop.f32.mrb[0].mxu0
  %10186 = vmatprep.mubr.f32.mxu0 0.0
  %v10187 = vand.u32 %v7110, 4294901760
  %10188 = vmatmul.mubr.f32.gmra.mrb[0].mxu0 %v10187
  %v10189 = vpop.f32.mrb[0].mxu0
  %v10190 = vadd.f32 %v9733, %v10189
  %v10191 = vpop.f32.mrb[0].mxu0
  %10192 = vmatprep.mubr.f32.mxu0 0.0
  %v10193 = vand.u32 %v7113, 4294901760
  %10194 = vmatmul.mubr.f32.gmra.mrb[0].mxu0 %v10193
  %v10195 = vpop.f32.mrb[0].mxu0
  %v10196 = vadd.f32 %v9739, %v10195
  %v10197 = vpop.f32.mrb[0].mxu0
  %10198 = vmatprep.mubr.f32.mxu0 0.0
  %v10199 = vand.u32 %v7116, 4294901760
  %10200 = vmatmul.mubr.f32.gmra.mrb[0].mxu0 %v10199
  %v10201 = vpop.f32.mrb[0].mxu0
  %v10202 = vadd.f32 %v9745, %v10201
  %v10203 = vpop.f32.mrb[0].mxu0
  %10204 = vmatprep.mubr.f32.mxu0 0.0
  %v10205 = vand.u32 %v7119, 4294901760
  %10206 = vmatmul.mubr.f32.gmra.mrb[0].mxu0 %v10205
  %v10207 = vpop.f32.mrb[0].mxu0
  %v10208 = vadd.f32 %v9751, %v10207
  %v10209 = vpop.f32.mrb[0].mxu0
  %10210 = vmatprep.mubr.f32.mxu0 0.0
  %v10211 = vand.u32 %v7122, 4294901760
  %10212 = vmatmul.mubr.f32.gmra.mrb[0].mxu0 %v10211
  %v10213 = vpop.f32.mrb[0].mxu0
  %v10214 = vadd.f32 %v9757, %v10213
  %v10215 = vpop.f32.mrb[0].mxu0
  %10216 = vmatprep.mubr.f32.mxu0 0.0
  %v10217 = vand.u32 %v7125, 4294901760
  %10218 = vmatmul.mubr.f32.gmra.mrb[0].mxu0 %v10217
  %v10219 = vpop.f32.mrb[0].mxu0
  %v10220 = vadd.f32 %v9763, %v10219
  %v10221 = vpop.f32.mrb[0].mxu0
  %10222 = vmatprep.mubr.f32.mxu0 0.0
  %v10223 = vand.u32 %v7128, 4294901760
  %10224 = vmatmul.mubr.f32.gmra.mrb[0].mxu0 %v10223
  %v10225 = vpop.f32.mrb[0].mxu0
  %v10226 = vadd.f32 %v9769, %v10225
  %v10227 = vpop.f32.mrb[0].mxu0
  %10228 = vmatprep.mubr.f32.mxu0 0.0
  %v10229 = vand.u32 %v7131, 4294901760
  %10230 = vmatmul.mubr.f32.gmra.mrb[0].mxu0 %v10229
  %v10231 = vpop.f32.mrb[0].mxu0
  %v10232 = vadd.f32 %v9775, %v10231
  %v10233 = vpop.f32.mrb[0].mxu0
  %10234 = vmatprep.mubr.f32.mxu0 0.0
  %v10235 = vand.u32 %v7134, 4294901760
  %10236 = vmatmul.mubr.f32.gmra.mrb[0].mxu0 %v10235
  %v10237 = vpop.f32.mrb[0].mxu0
  %v10238 = vadd.f32 %v9781, %v10237
  %v10239 = vpop.f32.mrb[0].mxu0
  %10240 = vmatprep.mubr.f32.mxu0 0.0
  %v10241 = vand.u32 %v7137, 4294901760
  %10242 = vmatmul.mubr.f32.gmra.mrb[0].mxu0 %v10241
  %v10243 = vpop.f32.mrb[0].mxu0
  %v10244 = vadd.f32 %v9787, %v10243
  %v10245 = vpop.f32.mrb[0].mxu0
  %10246 = vmatprep.mubr.f32.mxu0 0.0
  %v10247 = vand.u32 %v7140, 4294901760
  %10248 = vmatmul.mubr.f32.gmra.mrb[0].mxu0 %v10247
  %v10249 = vpop.f32.mrb[0].mxu0
  %v10250 = vadd.f32 %v9793, %v10249
  %v10251 = vpop.f32.mrb[0].mxu0
  %10252 = vmatprep.mubr.f32.mxu0 0.0
  %v10253 = vand.u32 %v7143, 4294901760
  %10254 = vmatmul.mubr.f32.gmra.mrb[0].mxu0 %v10253
  %v10255 = vpop.f32.mrb[0].mxu0
  %v10256 = vadd.f32 %v9799, %v10255
  %v10257 = vpop.f32.mrb[0].mxu0
  %10258 = vmatprep.mubr.f32.mxu0 0.0
  %v10259 = vand.u32 %v7146, 4294901760
  %10260 = vmatmul.mubr.f32.gmra.mrb[0].mxu0 %v10259
  %v10261 = vpop.f32.mrb[0].mxu0
  %v10262 = vadd.f32 %v9805, %v10261
  %v10263 = vpop.f32.mrb[0].mxu0
  %10264 = vmatprep.mubr.f32.mxu0 0.0
  %v10265 = vand.u32 %v7149, 4294901760
  %10266 = vmatmul.mubr.f32.gmra.mrb[0].mxu0 %v10265
  %v10267 = vpop.f32.mrb[0].mxu0
  %v10268 = vadd.f32 %v9811, %v10267
  %v10269 = vpop.f32.mrb[0].mxu0
  %10270 = vmatprep.mubr.f32.mxu0 0.0
  %v10271 = vand.u32 %v7152, 4294901760
  %10272 = vmatmul.mubr.f32.gmra.mrb[0].mxu0 %v10271
  %v10273 = vpop.f32.mrb[0].mxu0
  %v10274 = vadd.f32 %v9817, %v10273
  %v10275 = vpop.f32.mrb[0].mxu0
  %10276 = vmatprep.mubr.f32.mxu0 0.0
  %v10277 = vand.u32 %v7155, 4294901760
  %10278 = vmatmul.mubr.f32.gmra.mrb[0].mxu0 %v10277
  %v10279 = vpop.f32.mrb[0].mxu0
  %v10280 = vadd.f32 %v9823, %v10279
  %v10281 = vpop.f32.mrb[0].mxu0
  %10282 = vmatprep.mubr.f32.mxu0 0.0
  %v10283 = vand.u32 %v7158, 4294901760
  %10284 = vmatmul.mubr.f32.gmra.mrb[0].mxu0 %v10283
  %v10285 = vpop.f32.mrb[0].mxu0
  %v10286 = vadd.f32 %v9829, %v10285
  %v10287 = vpop.f32.mrb[0].mxu0
  %10288 = vmatprep.mubr.f32.mxu0 0.0
  %v10289 = vand.u32 %v7161, 4294901760
  %10290 = vmatmul.mubr.f32.gmra.mrb[0].mxu0 %v10289
  %v10291 = vpop.f32.mrb[0].mxu0
  %v10292 = vadd.f32 %v9835, %v10291
  %v10293 = vpop.f32.mrb[0].mxu0
  %10294 = vmatprep.mubr.f32.mxu0 0.0
  %v10295 = vand.u32 %v7164, 4294901760
  %10296 = vmatmul.mubr.f32.gmra.mrb[0].mxu0 %v10295
  %v10297 = vpop.f32.mrb[0].mxu0
  %v10298 = vadd.f32 %v9841, %v10297
  %v10299 = vpop.f32.mrb[0].mxu0
  %10300 = vmatprep.mubr.f32.mxu0 0.0
  %v10301 = vand.u32 %v7167, 4294901760
  %10302 = vmatmul.mubr.f32.gmra.mrb[0].mxu0 %v10301
  %v10303 = vpop.f32.mrb[0].mxu0
  %v10304 = vadd.f32 %v9847, %v10303
  %v10305 = vpop.f32.mrb[0].mxu0
  %10306 = vmatprep.mubr.f32.mxu0 0.0
  %v10307 = vand.u32 %v7170, 4294901760
  %10308 = vmatmul.mubr.f32.gmra.mrb[0].mxu0 %v10307
  %v10309 = vpop.f32.mrb[0].mxu0
  %v10310 = vadd.f32 %v9853, %v10309
  %v10311 = vpop.f32.mrb[0].mxu0
  %10312 = vmatprep.mubr.f32.mxu0 0.0
  %v10313 = vand.u32 %v7173, 4294901760
  %10314 = vmatmul.mubr.f32.gmra.mrb[0].mxu0 %v10313
  %v10315 = vpop.f32.mrb[0].mxu0
  %v10316 = vadd.f32 %v9859, %v10315
  %v10317 = vpop.f32.mrb[0].mxu0
  %10318 = vmatprep.mubr.f32.mxu0 0.0
  %v10319 = vand.u32 %v7176, 4294901760
  %10320 = vmatmul.mubr.f32.gmra.mrb[0].mxu0 %v10319
  %v10321 = vpop.f32.mrb[0].mxu0
  %v10322 = vadd.f32 %v9865, %v10321
  %v10323 = vpop.f32.mrb[0].mxu0
  %10324 = vmatprep.mubr.f32.mxu0 0.0
  %v10325 = vand.u32 %v7179, 4294901760
  %10326 = vmatmul.mubr.f32.gmra.mrb[0].mxu0 %v10325
  %v10327 = vpop.f32.mrb[0].mxu0
  %v10328 = vadd.f32 %v9871, %v10327
  %v10329 = vpop.f32.mrb[0].mxu0
  %10330 = vmatprep.mubr.f32.mxu0 0.0
  %v10331 = vand.u32 %v7182, 4294901760
  %10332 = vmatmul.mubr.f32.gmra.mrb[0].mxu0 %v10331
  %v10333 = vpop.f32.mrb[0].mxu0
  %v10334 = vadd.f32 %v9877, %v10333
  %v10335 = vpop.f32.mrb[0].mxu0
  %10336 = vmatprep.mubr.f32.mxu0 0.0
  %v10337 = vand.u32 %v7185, 4294901760
  %10338 = vmatmul.mubr.f32.gmra.mrb[0].mxu0 %v10337
  %v10339 = vpop.f32.mrb[0].mxu0
  %v10340 = vadd.f32 %v9883, %v10339
  %v10341 = vpop.f32.mrb[0].mxu0
  %10342 = vmatprep.mubr.f32.mxu0 0.0
  %v10343 = vand.u32 %v7188, 4294901760
  %10344 = vmatmul.mubr.f32.gmra.mrb[0].mxu0 %v10343
  %v10345 = vpop.f32.mrb[0].mxu0
  %v10346 = vadd.f32 %v9889, %v10345
  %v10347 = vpop.f32.mrb[0].mxu0
  %10348 = vmatprep.mubr.f32.mxu0 0.0
  %v10349 = vand.u32 %v7191, 4294901760
  %10350 = vmatmul.mubr.f32.gmra.mrb[0].mxu0 %v10349
  %v10351 = vpop.f32.mrb[0].mxu0
  %v10352 = vadd.f32 %v9895, %v10351
  %v10353 = vpop.f32.mrb[0].mxu0
  %10354 = vmatprep.mubr.f32.mxu0 0.0
  %v10355 = vand.u32 %v7194, 4294901760
  %10356 = vmatmul.mubr.f32.gmra.mrb[0].mxu0 %v10355
  %v10357 = vpop.f32.mrb[0].mxu0
  %v10358 = vadd.f32 %v9901, %v10357
  %v10359 = vpop.f32.mrb[0].mxu0
  %10360 = vmatprep.mubr.f32.mxu0 0.0
  %v10361 = vand.u32 %v7197, 4294901760
  %10362 = vmatmul.mubr.f32.gmra.mrb[0].mxu0 %v10361
  %v10363 = vpop.f32.mrb[0].mxu0
  %v10364 = vadd.f32 %v9907, %v10363
  %v10365 = vpop.f32.mrb[0].mxu0
  %10366 = vmatprep.mubr.f32.mxu0 0.0
  %v10367 = vand.u32 %v7200, 4294901760
  %10368 = vmatmul.mubr.f32.gmra.mrb[0].mxu0 %v10367
  %v10369 = vpop.f32.mrb[0].mxu0
  %v10370 = vadd.f32 %v9913, %v10369
  %v10371 = vpop.f32.mrb[0].mxu0
  %10372 = vmatprep.mubr.f32.mxu0 0.0
  %v10373 = vand.u32 %v7203, 4294901760
  %10374 = vmatmul.mubr.f32.gmra.mrb[0].mxu0 %v10373
  %v10375 = vpop.f32.mrb[0].mxu0
  %v10376 = vadd.f32 %v9919, %v10375
  %v10377 = vpop.f32.mrb[0].mxu0
  %10378 = vmatprep.mubr.f32.mxu0 0.0
  %v10379 = vand.u32 %v7206, 4294901760
  %10380 = vmatmul.mubr.f32.gmra.mrb[0].mxu0 %v10379
  %v10381 = vpop.f32.mrb[0].mxu0
  %v10382 = vadd.f32 %v9925, %v10381
  %v10383 = vpop.f32.mrb[0].mxu0
  %10384 = vmatprep.mubr.f32.mxu0 0.0
  %v10385 = vand.u32 %v7209, 4294901760
  %10386 = vmatmul.mubr.f32.gmra.mrb[0].mxu0 %v10385
  %v10387 = vpop.f32.mrb[0].mxu0
  %v10388 = vadd.f32 %v9931, %v10387
  %v10389 = vpop.f32.mrb[0].mxu0
  %10390 = vmatprep.mubr.f32.mxu0 0.0
  %v10391 = vand.u32 %v7212, 4294901760
  %10392 = vmatmul.mubr.f32.gmra.mrb[0].mxu0 %v10391
  %v10393 = vpop.f32.mrb[0].mxu0
  %v10394 = vadd.f32 %v9937, %v10393
  %v10395 = vpop.f32.mrb[0].mxu0
  %10396 = vmatprep.mubr.f32.mxu0 0.0
  %v10397 = vand.u32 %v7215, 4294901760
  %10398 = vmatmul.mubr.f32.gmra.mrb[0].mxu0 %v10397
  %v10399 = vpop.f32.mrb[0].mxu0
  %v10400 = vadd.f32 %v9943, %v10399
  %v10401 = vpop.f32.mrb[0].mxu0
  %10402 = vmatprep.mubr.f32.mxu0 0.0
  %v10403 = vand.u32 %v7218, 4294901760
  %10404 = vmatmul.mubr.f32.gmra.mrb[0].mxu0 %v10403
  %v10405 = vpop.f32.mrb[0].mxu0
  %v10406 = vadd.f32 %v9949, %v10405
  %v10407 = vpop.f32.mrb[0].mxu0
  %10408 = vmatprep.mubr.f32.mxu0 0.0
  %v10409 = vand.u32 %v7221, 4294901760
  %10410 = vmatmul.mubr.f32.gmra.mrb[0].mxu0 %v10409
  %v10411 = vpop.f32.mrb[0].mxu0
  %v10412 = vadd.f32 %v9955, %v10411
  %v10413 = vpop.f32.mrb[0].mxu0
  %10414 = vmatprep.mubr.f32.mxu0 0.0
  %v10415 = vand.u32 %v7224, 4294901760
  %10416 = vmatmul.mubr.f32.gmra.mrb[0].mxu0 %v10415
  %v10417 = vpop.f32.mrb[0].mxu0
  %v10418 = vadd.f32 %v9961, %v10417
  %v10419 = vpop.f32.mrb[0].mxu0
  %10420 = vmatprep.mubr.f32.mxu0 0.0
  %v10421 = vand.u32 %v7227, 4294901760
  %10422 = vmatmul.mubr.f32.gmra.mrb[0].mxu0 %v10421
  %v10423 = vpop.f32.mrb[0].mxu0
  %v10424 = vadd.f32 %v9967, %v10423
  %v10425 = vpop.f32.mrb[0].mxu0
  %10426 = vmatprep.mubr.f32.mxu0 0.0
  %v10427 = vand.u32 %v7230, 4294901760
  %10428 = vmatmul.mubr.f32.gmra.mrb[0].mxu0 %v10427
  %v10429 = vpop.f32.mrb[0].mxu0
  %v10430 = vadd.f32 %v9973, %v10429
  %v10431 = vpop.f32.mrb[0].mxu0
  %10432 = vmatprep.mubr.f32.mxu0 0.0
  %v10433 = vand.u32 %v7233, 4294901760
  %10434 = vmatmul.mubr.f32.gmra.mrb[0].mxu0 %v10433
  %v10435 = vpop.f32.mrb[0].mxu0
  %v10436 = vadd.f32 %v9979, %v10435
  %v10437 = vpop.f32.mrb[0].mxu0
  %10438 = vmatprep.mubr.f32.mxu0 0.0
  %v10439 = vand.u32 %v7236, 4294901760
  %10440 = vmatmul.mubr.f32.gmra.mrb[0].mxu0 %v10439
  %v10441 = vpop.f32.mrb[0].mxu0
  %v10442 = vadd.f32 %v9985, %v10441
  %v10443 = vpop.f32.mrb[0].mxu0
  %10444 = vmatprep.mubr.f32.mxu0 0.0
  %v10445 = vand.u32 %v7239, 4294901760
  %10446 = vmatmul.mubr.f32.gmra.mrb[0].mxu0 %v10445
  %v10447 = vpop.f32.mrb[0].mxu0
  %v10448 = vadd.f32 %v9991, %v10447
  %v10449 = vpop.f32.mrb[0].mxu0
  %10450 = vmatprep.mubr.f32.mxu0 0.0
  %v10451 = vand.u32 %v7242, 4294901760
  %10452 = vmatmul.mubr.f32.gmra.mrb[0].mxu0 %v10451
  %v10453 = vpop.f32.mrb[0].mxu0
  %v10454 = vadd.f32 %v9997, %v10453
  %v10455 = vpop.f32.mrb[0].mxu0
  %10456 = vmatprep.mubr.f32.mxu0 0.0
  %v10457 = vand.u32 %v7245, 4294901760
  %10458 = vmatmul.mubr.f32.gmra.mrb[0].mxu0 %v10457
  %v10459 = vpop.f32.mrb[0].mxu0
  %v10460 = vadd.f32 %v10003, %v10459
  %v10461 = vpop.f32.mrb[0].mxu0
  %10462 = vmatprep.mubr.f32.mxu0 0.0
  %v10463 = vand.u32 %v7248, 4294901760
  %10464 = vmatmul.mubr.f32.gmra.mrb[0].mxu0 %v10463
  %v10465 = vpop.f32.mrb[0].mxu0
  %v10466 = vadd.f32 %v10009, %v10465
  %v10467 = vpop.f32.mrb[0].mxu0
  %10468 = vmatprep.mubr.f32.mxu0 0.0
  %v10469 = vand.u32 %v7251, 4294901760
  %10470 = vmatmul.mubr.f32.gmra.mrb[0].mxu0 %v10469
  %v10471 = vpop.f32.mrb[0].mxu0
  %v10472 = vadd.f32 %v10015, %v10471
  %v10473 = vpop.f32.mrb[0].mxu0
  %10474 = vmatprep.mubr.f32.mxu0 0.0
  %v10475 = vand.u32 %v7254, 4294901760
  %10476 = vmatmul.mubr.f32.gmra.mrb[0].mxu0 %v10475
  %v10477 = vpop.f32.mrb[0].mxu0
  %v10478 = vadd.f32 %v10021, %v10477
  %v10479 = vpop.f32.mrb[0].mxu0
  %10480 = vmatprep.mubr.f32.mxu0 0.0
  %v10481 = vand.u32 %v7257, 4294901760
  %10482 = vmatmul.mubr.f32.gmra.mrb[0].mxu0 %v10481
  %v10483 = vpop.f32.mrb[0].mxu0
  %v10484 = vadd.f32 %v10027, %v10483
  %v10485 = vpop.f32.mrb[0].mxu0
  %10486 = vmatprep.mubr.f32.mxu0 0.0
  %v10487 = vand.u32 %v7260, 4294901760
  %10488 = vmatmul.mubr.f32.gmra.mrb[0].mxu0 %v10487
  %v10489 = vpop.f32.mrb[0].mxu0
  %v10490 = vadd.f32 %v10033, %v10489
  %v10491 = vpop.f32.mrb[0].mxu0
  %10492 = vmatprep.mubr.f32.mxu0 0.0
  %v10493 = vand.u32 %v7263, 4294901760
  %10494 = vmatmul.mubr.f32.gmra.mrb[0].mxu0 %v10493
  %v10495 = vpop.f32.mrb[0].mxu0
  %v10496 = vadd.f32 %v10039, %v10495
  %v10497 = vpop.f32.mrb[0].mxu0
  %10498 = vmatprep.mubr.f32.mxu0 0.0
  %v10499 = vand.u32 %v7266, 4294901760
  %10500 = vmatmul.mubr.f32.gmra.mrb[0].mxu0 %v10499
  %v10501 = vpop.f32.mrb[0].mxu0
  %v10502 = vadd.f32 %v10045, %v10501
  %v10503 = vpop.f32.mrb[0].mxu0
  %10504 = vmatprep.mubr.f32.mxu0 0.0
  %v10505 = vand.u32 %v7269, 4294901760
  %10506 = vmatmul.mubr.f32.gmra.mrb[0].mxu0 %v10505
  %v10507 = vpop.f32.mrb[0].mxu0
  %v10508 = vadd.f32 %v10051, %v10507
  %v10509 = vpop.f32.mrb[0].mxu0
  %10510 = vmatprep.mubr.f32.mxu0 0.0
  %v10511 = vand.u32 %v7272, 4294901760
  %10512 = vmatmul.mubr.f32.gmra.mrb[0].mxu0 %v10511
  %v10513 = vpop.f32.mrb[0].mxu0
  %v10514 = vadd.f32 %v10057, %v10513
  %v10515 = vpop.f32.mrb[0].mxu0
  %10516 = vmatprep.mubr.f32.mxu0 0.0
  %v10517 = vand.u32 %v7275, 4294901760
  %10518 = vmatmul.mubr.f32.gmra.mrb[0].mxu0 %v10517
  %v10519 = vpop.f32.mrb[0].mxu0
  %v10520 = vadd.f32 %v10063, %v10519
  %v10521 = vpop.f32.mrb[0].mxu0
  %10522 = vdwg.mxu0
  %vm10523 = vcmask 130048
  %10524 = vst.msk [vmem:[%s7] sm:$0xff] %vm10523, %v10142
  %10525 = vst.msk [vmem:[%s7 + $0x8] sm:$0xff] %vm10523, %v10148
  %10526 = vst.msk [vmem:[%s7 + $0x10] sm:$0xff] %vm10523, %v10154
  %10527 = vst.msk [vmem:[%s7 + $0x18] sm:$0xff] %vm10523, %v10160
  %10528 = vst.msk [vmem:[%s7 + $0x20] sm:$0xff] %vm10523, %v10166
  %10529 = vst.msk [vmem:[%s7 + $0x28] sm:$0xff] %vm10523, %v10172
  %10530 = vst.msk [vmem:[%s7 + $0x30] sm:$0xff] %vm10523, %v10178
  %10531 = vst.msk [vmem:[%s7 + $0x38] sm:$0xff] %vm10523, %v10184
  %10532 = vst.msk [vmem:[%s7 + $0x40] sm:$0xff] %vm10523, %v10190
  %10533 = vst.msk [vmem:[%s7 + $0x48] sm:$0xff] %vm10523, %v10196
  %10534 = vst.msk [vmem:[%s7 + $0x50] sm:$0xff] %vm10523, %v10202
  %10535 = vst.msk [vmem:[%s7 + $0x58] sm:$0xff] %vm10523, %v10208
  %10536 = vst.msk [vmem:[%s7 + $0x60] sm:$0xff] %vm10523, %v10214
  %10537 = vst.msk [vmem:[%s7 + $0x68] sm:$0xff] %vm10523, %v10220
  %10538 = vst.msk [vmem:[%s7 + $0x70] sm:$0xff] %vm10523, %v10226
  %10539 = vst.msk [vmem:[%s7 + $0x78] sm:$0xff] %vm10523, %v10232
  %10540 = vst.msk [vmem:[%s7 + $0x80] sm:$0xff] %vm10523, %v10238
  %10541 = vst.msk [vmem:[%s7 + $0x88] sm:$0xff] %vm10523, %v10244
  %10542 = vst.msk [vmem:[%s7 + $0x90] sm:$0xff] %vm10523, %v10250
  %10543 = vst.msk [vmem:[%s7 + $0x98] sm:$0xff] %vm10523, %v10256
  %10544 = vst.msk [vmem:[%s7 + $0xa0] sm:$0xff] %vm10523, %v10262
  %10545 = vst.msk [vmem:[%s7 + $0xa8] sm:$0xff] %vm10523, %v10268
  %10546 = vst.msk [vmem:[%s7 + $0xb0] sm:$0xff] %vm10523, %v10274
  %10547 = vst.msk [vmem:[%s7 + $0xb8] sm:$0xff] %vm10523, %v10280
  %10548 = vst.msk [vmem:[%s7 + $0xc0] sm:$0xff] %vm10523, %v10286
  %10549 = vst.msk [vmem:[%s7 + $0xc8] sm:$0xff] %vm10523, %v10292
  %10550 = vst.msk [vmem:[%s7 + $0xd0] sm:$0xff] %vm10523, %v10298
  %10551 = vst.msk [vmem:[%s7 + $0xd8] sm:$0xff] %vm10523, %v10304
  %10552 = vst.msk [vmem:[%s7 + $0xe0] sm:$0xff] %vm10523, %v10310
  %10553 = vst.msk [vmem:[%s7 + $0xe8] sm:$0xff] %vm10523, %v10316
  %10554 = vst.msk [vmem:[%s7 + $0xf0] sm:$0xff] %vm10523, %v10322
  %10555 = vst.msk [vmem:[%s7 + $0xf8] sm:$0xff] %vm10523, %v10328
  %10556 = vst.msk [vmem:[%s7 + $0x100] sm:$0xff] %vm10523, %v10334
  %10557 = vst.msk [vmem:[%s7 + $0x108] sm:$0xff] %vm10523, %v10340
  %10558 = vst.msk [vmem:[%s7 + $0x110] sm:$0xff] %vm10523, %v10346
  %10559 = vst.msk [vmem:[%s7 + $0x118] sm:$0xff] %vm10523, %v10352
  %10560 = vst.msk [vmem:[%s7 + $0x120] sm:$0xff] %vm10523, %v10358
  %10561 = vst.msk [vmem:[%s7 + $0x128] sm:$0xff] %vm10523, %v10364
  %10562 = vst.msk [vmem:[%s7 + $0x130] sm:$0xff] %vm10523, %v10370
  %10563 = vst.msk [vmem:[%s7 + $0x138] sm:$0xff] %vm10523, %v10376
  %10564 = vst.msk [vmem:[%s7 + $0x140] sm:$0xff] %vm10523, %v10382
  %10565 = vst.msk [vmem:[%s7 + $0x148] sm:$0xff] %vm10523, %v10388
  %10566 = vst.msk [vmem:[%s7 + $0x150] sm:$0xff] %vm10523, %v10394
  %10567 = vst.msk [vmem:[%s7 + $0x158] sm:$0xff] %vm10523, %v10400
  %10568 = vst.msk [vmem:[%s7 + $0x160] sm:$0xff] %vm10523, %v10406
  %10569 = vst.msk [vmem:[%s7 + $0x168] sm:$0xff] %vm10523, %v10412
  %10570 = vst.msk [vmem:[%s7 + $0x170] sm:$0xff] %vm10523, %v10418
  %10571 = vst.msk [vmem:[%s7 + $0x178] sm:$0xff] %vm10523, %v10424
  %10572 = vst.msk [vmem:[%s7 + $0x180] sm:$0xff] %vm10523, %v10430
  %10573 = vst.msk [vmem:[%s7 + $0x188] sm:$0xff] %vm10523, %v10436
  %10574 = vst.msk [vmem:[%s7 + $0x190] sm:$0xff] %vm10523, %v10442
  %10575 = vst.msk [vmem:[%s7 + $0x198] sm:$0xff] %vm10523, %v10448
  %10576 = vst.msk [vmem:[%s7 + $0x1a0] sm:$0xff] %vm10523, %v10454
  %10577 = vst.msk [vmem:[%s7 + $0x1a8] sm:$0xff] %vm10523, %v10460
  %10578 = vst.msk [vmem:[%s7 + $0x1b0] sm:$0xff] %vm10523, %v10466
  %10579 = vst.msk [vmem:[%s7 + $0x1b8] sm:$0xff] %vm10523, %v10472
  %10580 = vst.msk [vmem:[%s7 + $0x1c0] sm:$0xff] %vm10523, %v10478
  %10581 = vst.msk [vmem:[%s7 + $0x1c8] sm:$0xff] %vm10523, %v10484
  %10582 = vst.msk [vmem:[%s7 + $0x1d0] sm:$0xff] %vm10523, %v10490
  %10583 = vst.msk [vmem:[%s7 + $0x1d8] sm:$0xff] %vm10523, %v10496
  %10584 = vst.msk [vmem:[%s7 + $0x1e0] sm:$0xff] %vm10523, %v10502
  %10585 = vst.msk [vmem:[%s7 + $0x1e8] sm:$0xff] %vm10523, %v10508
  %10586 = vst.msk [vmem:[%s7 + $0x1f0] sm:$0xff] %vm10523, %v10514
  %10587 = vst.msk [vmem:[%s7 + $0x1f8] sm:$0xff] %vm10523, %v10520
  // Predicated region
  $region30: #{mlp_forward.1} parent=0 // pred_check
    _
  $region31: #{mlp_forward.1} parent=0 // pred_check_branch
    %10589 = sbr.rel (0) target = $region33
  $region32: #{mlp_forward.1} parent=0 // pred_region
    _
  $region33: #{mlp_forward.1} parent=0 // pred_fallthru
    _
  // Predicated region
  $region34: #{mlp_forward.1} parent=0 // pred_check
    _
  $region35: #{mlp_forward.1} parent=0 // pred_check_branch
    %10591 = sbr.rel (0) target = $region37
  $region36: #{mlp_forward.1} parent=0 // pred_region
    _
  $region37: #{mlp_forward.1} parent=0 // pred_fallthru
    _

</llo_original>
